<compile_context>
chip_gen: v7x
topology: tpu7x:2x2x1
jax: 0.10.0
libtpu: 0.0.40
codegen_flags: <defaults>
</compile_context>

<pallas_src>
import functools
import math

import jax
import jax.numpy as jnp
import numpy as np
from jax.experimental import pallas as pl
from jax.experimental.pallas import tpu as pltpu


_LANE = 128          # lane width: pad output feature dims to multiples of this
_SUBLANE = 8         # sublane multiple for batch rows
_MAX_BCHUNK = 128    # batch rows per grid step (review: use the MXU M dim)
_MASK_NEG = -1e9     # additive attention-mask value (finite, NaN-safe)
_LN_EPS = 1e-12      # BERT LayerNorm epsilon
_GELU_C = 0.7978845608028654  # sqrt(2/pi)


def _round_up(x, m):
    return ((x + m - 1) // m) * m


# Shared math helpers (used identically by the kernel and the JAX reference).
def _layer_norm(x, gamma, beta):
    mu = jnp.mean(x, axis=-1, keepdims=True)
    xc = x - mu
    var = jnp.mean(xc * xc, axis=-1, keepdims=True)
    return xc * jax.lax.rsqrt(var + _LN_EPS) * gamma + beta


def _softmax_last(x):
    x = x - jnp.max(x, axis=-1, keepdims=True)
    e = jnp.exp(x)
    return e / jnp.sum(e, axis=-1, keepdims=True)


def _gelu(x):
    return 0.5 * x * (1.0 + jnp.tanh(_GELU_C * (x + 0.044715 * x * x * x)))


# -----------------------------------------------------------------------------
# Pallas kernel: one invocation handles one batch chunk end-to-end
# (embeddings LN, all encoder layers, pooler, slot + intent heads).
# -----------------------------------------------------------------------------
def _bert_encoder_kernel(
    x_ref,        # (Bc, T, H)   f32   gathered word embeddings
    pe_ref,       # (T, H)       f32   position + token-type embeddings
    bias_ref,     # (Bc, T)      f32   additive attention mask (0 / -1e9)
    lne_g_ref,    # (1, H)       f32   embedding LayerNorm gamma
    lne_b_ref,    # (1, H)       f32   embedding LayerNorm beta
    wqkv_ref,     # (L, H, 3H)   bf16  [Wq^T | Wk^T | Wv^T]
    bqkv_ref,     # (L, 1, 3H)   f32
    wo_ref,       # (L, H, H)    bf16  attention output proj W^T
    bo_ref,       # (L, 1, H)    f32
    ln1_g_ref,    # (L, 1, H)    f32
    ln1_b_ref,    # (L, 1, H)    f32
    wi_ref,       # (L, H, F)    bf16  FFN in W^T
    bi_ref,       # (L, 1, F)    f32
    wo2_ref,      # (L, F, H)    bf16  FFN out W^T
    bo2_ref,      # (L, 1, H)    f32
    ln2_g_ref,    # (L, 1, H)    f32
    ln2_b_ref,    # (L, 1, H)    f32
    wp_ref,       # (H, H)       bf16  pooler W^T
    bp_ref,       # (1, H)       f32
    wslot_ref,    # (H, Sp)      bf16  slot_out W^T (lane-padded)
    bslot_ref,    # (1, Sp)      f32
    wint_ref,     # (H, Ip)      bf16  intent_out W^T (lane-padded)
    bint_ref,     # (1, Ip)      f32
    slots_ref,    # (Bc, T, Sp)  f32   OUT: slot logits
    intent_ref,   # (Bc, Ip)     f32   OUT: intent logits
    *, num_heads, num_layers,
):
    f32, bf16 = jnp.float32, jnp.bfloat16
    Bc, T, H = x_ref.shape
    dh = H // num_heads
    scale = 1.0 / math.sqrt(dh)

    # --- Embeddings: word + (position + token-type), LayerNorm (dropout = id).
    h = x_ref[...] + pe_ref[...][None, :, :]
    h = _layer_norm(h, lne_g_ref[...], lne_b_ref[...])

    # Hoisted once: additive padding mask broadcast over query positions.
    attn_bias = bias_ref[...][:, None, :]                         # (Bc, 1, T)

    for l in range(num_layers):
        # --- Self-attention: fused QKV matmul (bf16 operands, f32 accum).
        wqkv = wqkv_ref[l]                                        # (H, 3H)
        wo_t = wo_ref[l]                                          # (H, H)
        x2 = h.reshape(Bc * T, H).astype(bf16)
        qkv = jnp.dot(x2, wqkv, preferred_element_type=f32) + bqkv_ref[l]

        attn = jnp.zeros((Bc * T, H), f32)
        for hd in range(num_heads):
            lo = hd * dh
            q = qkv[:, lo:lo + dh].reshape(Bc, T, dh)
            k = qkv[:, H + lo:H + lo + dh].reshape(Bc, T, dh)
            v = qkv[:, 2 * H + lo:2 * H + lo + dh].reshape(Bc, T, dh)
            s = jnp.einsum("bqd,bkd->bqk", q.astype(bf16), k.astype(bf16),
                           preferred_element_type=f32) * scale + attn_bias
            p = _softmax_last(s)                                   # f32
            ctx = jnp.einsum("bqk,bkd->bqd", p.astype(bf16), v.astype(bf16),
                             preferred_element_type=f32)
            # Per-head slice of W_o^T: equivalent to concat(heads) @ W_o^T,
            # avoids an in-kernel concatenate/relayout.
            attn = attn + jnp.dot(ctx.reshape(Bc * T, dh).astype(bf16),
                                  wo_t[lo:lo + dh, :],
                                  preferred_element_type=f32)
        attn = attn + bo_ref[l]
        h = _layer_norm(attn.reshape(Bc, T, H) + h, ln1_g_ref[l], ln1_b_ref[l])

        # --- Feed-forward (GELU), residual + LayerNorm (dropout = identity).
        x2 = h.reshape(Bc * T, H).astype(bf16)
        inter = jnp.dot(x2, wi_ref[l], preferred_element_type=f32) + bi_ref[l]
        inter = _gelu(inter)
        ffn = jnp.dot(inter.astype(bf16), wo2_ref[l],
                      preferred_element_type=f32) + bo2_ref[l]
        h = _layer_norm(ffn.reshape(Bc, T, H) + h, ln2_g_ref[l], ln2_b_ref[l])

    # --- Pooler: tanh(Linear(h[:, 0])) ; intent head on pooled output.
    cls = h[:, 0, :]                                               # (Bc, H)
    pooled = jnp.tanh(jnp.dot(cls.astype(bf16), wp_ref[...],
                              preferred_element_type=f32) + bp_ref[...])
    intent_ref[...] = jnp.dot(pooled.astype(bf16), wint_ref[...],
                              preferred_element_type=f32) + bint_ref[...]

    # --- Slot head on every position: one lane-dense (Bc*T, H) @ (H, Sp) matmul.
    h_all = h.reshape(Bc * T, H).astype(bf16)
    slots = jnp.dot(h_all, wslot_ref[...],
                    preferred_element_type=f32) + bslot_ref[...]
    slots_ref[...] = slots.reshape(Bc, T, slots_ref.shape[-1])


# -----------------------------------------------------------------------------
# Wrapper: embedding gather, padding to hardware-friendly shapes, pallas_call.
# -----------------------------------------------------------------------------
def bert_ias_forward(utterances, attention_mask, params, *, num_heads):
    """Forward pass matching BERT.forward (dropout = identity at inference).

    utterances:     (B, T) int32 token ids
    attention_mask: (B, T) {0,1}
    returns:        slots (B, out_slot, T), intent (B, out_int)
    """
    f32, bf16 = jnp.float32, jnp.bfloat16
    word_emb = params["word_emb"]
    B, T = utterances.shape
    H = word_emb.shape[1]
    L = params["wq"].shape[0]
    F = params["wi"].shape[1]
    S = params["w_slot"].shape[0]
    I = params["w_int"].shape[0]
    assert H % _LANE == 0 and F % _LANE == 0 and H % num_heads == 0

    Sp = _round_up(S, _LANE)
    Ip = _round_up(I, _LANE)
    Bc = min(_MAX_BCHUNK, _round_up(B, _SUBLANE))   # large batch chunks (review)
    Bp = _round_up(B, Bc)
    n_chunks = Bp // Bc

    # Glue: embedding gather + batch padding (zero rows are fully inert).
    # TODO(synk): at bert-base scale, move this gather in-kernel (scalar
    # prefetch + row DMA) instead of materializing it in HBM first.
    x = jnp.take(word_emb, utterances, axis=0).astype(f32)        # (B, T, H)
    x = jnp.pad(x, ((0, Bp - B), (0, 0), (0, 0)))                 # (Bp, T, H)
    pe = (params["pos_emb"][:T] + params["type_emb"][0][None, :]).astype(f32)

    # Additive attention bias (HF-style), only (B, T) — no Hp-broadcast mask.
    bias = (1.0 - attention_mask.astype(f32)) * _MASK_NEG          # (B, T)
    bias = jnp.pad(bias, ((0, Bp - B), (0, 0)))                    # pad rows: 0

    # Weights: transpose to x @ W^T layout, bf16 operands, f32 biases.
    wqkv_t = jnp.concatenate(
        [jnp.transpose(params["wq"], (0, 2, 1)),
         jnp.transpose(params["wk"], (0, 2, 1)),
         jnp.transpose(params["wv"], (0, 2, 1))], axis=2).astype(bf16)  # (L,H,3H)
    bqkv = jnp.concatenate(
        [params["bq"], params["bk"], params["bv"]], axis=1)[:, None, :].astype(f32)
    wo_t = jnp.transpose(params["wo"], (0, 2, 1)).astype(bf16)     # (L, H, H)
    bo_r = params["bo"][:, None, :].astype(f32)
    wi_t = jnp.transpose(params["wi"], (0, 2, 1)).astype(bf16)     # (L, H, F)
    bi_r = params["bi"][:, None, :].astype(f32)
    wo2_t = jnp.transpose(params["wo2"], (0, 2, 1)).astype(bf16)   # (L, F, H)
    bo2_r = params["bo2"][:, None, :].astype(f32)
    ln1_g = params["ln1_g"][:, None, :].astype(f32)
    ln1_b = params["ln1_b"][:, None, :].astype(f32)
    ln2_g = params["ln2_g"][:, None, :].astype(f32)
    ln2_b = params["ln2_b"][:, None, :].astype(f32)
    lne_g = params["ln_emb_g"].reshape(1, H).astype(f32)
    lne_b = params["ln_emb_b"].reshape(1, H).astype(f32)
    wp_t = params["wp"].T.astype(bf16)
    bp_r = params["bp"].reshape(1, H).astype(f32)
    # Lane-pad the head outputs to 128 so output stores are unmasked vst.
    wslot_t = jnp.pad(params["w_slot"].T, ((0, 0), (0, Sp - S))).astype(bf16)
    bslot_r = jnp.pad(params["b_slot"], (0, Sp - S)).reshape(1, Sp).astype(f32)
    wint_t = jnp.pad(params["w_int"].T, ((0, 0), (0, Ip - I))).astype(bf16)
    bint_r = jnp.pad(params["b_int"], (0, Ip - I)).reshape(1, Ip).astype(f32)

    def resident(arr):
        shape = arr.shape
        return pl.BlockSpec(shape, lambda b: (0,) * len(shape))

    inputs = (x, pe, bias, lne_g, lne_b,
              wqkv_t, bqkv, wo_t, bo_r, ln1_g, ln1_b,
              wi_t, bi_r, wo2_t, bo2_r, ln2_g, ln2_b,
              wp_t, bp_r, wslot_t, bslot_r, wint_t, bint_r)

    in_specs = [
        pl.BlockSpec((Bc, T, H), lambda b: (b, 0, 0)),   # word embeddings
        resident(pe),
        pl.BlockSpec((Bc, T), lambda b: (b, 0)),         # attention bias
    ] + [resident(a) for a in inputs[3:]]

    grid_spec = pltpu.PrefetchScalarGridSpec(
        num_scalar_prefetch=0,
        # Independent batch chunks; "parallel" lets v7x shard them across its
        # two TensorCores once the batch yields >= 2 chunks.
        grid=(n_chunks,),
        in_specs=in_specs,
        out_specs=[
            pl.BlockSpec((Bc, T, Sp), lambda b: (b, 0, 0)),
            pl.BlockSpec((Bc, Ip), lambda b: (b, 0)),
        ],
    )

    slots_p, intent_p = pl.pallas_call(
        functools.partial(_bert_encoder_kernel,
                          num_heads=num_heads, num_layers=L),
        out_shape=(
            jax.ShapeDtypeStruct((Bp, T, Sp), jnp.float32),
            jax.ShapeDtypeStruct((Bp, Ip), jnp.float32),
        ),
        grid_spec=grid_spec,
        compiler_params=pltpu.CompilerParams(
            dimension_semantics=("parallel",),
        ),
    )(*inputs)

    # Strip padding; slots -> (B, out_slot, T) matching `slots.permute(0, 2, 1)`.
    slots = jnp.transpose(slots_p[:B, :, :S], (0, 2, 1))
    intent = intent_p[:B, :I]
    return slots, intent


# -----------------------------------------------------------------------------
# Pure-JAX reference mirroring the same forward (same bf16/f32 precision policy).
# -----------------------------------------------------------------------------
def reference_forward(utterances, attention_mask, params, *, num_heads):
    f32, bf16 = jnp.float32, jnp.bfloat16
    H = params["word_emb"].shape[1]
    B, T = utterances.shape
    L = params["wq"].shape[0]
    dh = H // num_heads
    scale = 1.0 / math.sqrt(dh)

    def mm(a, w_t, b=None):
        out = jnp.dot(a.astype(bf16), w_t.astype(bf16), preferred_element_type=f32)
        return out if b is None else out + b

    x = jnp.take(params["word_emb"], utterances, axis=0).astype(f32)
    pe = params["pos_emb"][:T] + params["type_emb"][0][None, :]
    h = _layer_norm(x + pe[None], params["ln_emb_g"], params["ln_emb_b"])
    bias = (1.0 - attention_mask.astype(f32)) * _MASK_NEG          # (B, T)

    for l in range(L):
        x2 = h.reshape(B * T, H)
        q = mm(x2, params["wq"][l].T, params["bq"][l]).reshape(B, T, num_heads, dh)
        k = mm(x2, params["wk"][l].T, params["bk"][l]).reshape(B, T, num_heads, dh)
        v = mm(x2, params["wv"][l].T, params["bv"][l]).reshape(B, T, num_heads, dh)
        s = jnp.einsum("bqhd,bkhd->bhqk", q.astype(bf16), k.astype(bf16),
                       preferred_element_type=f32) * scale + bias[:, None, None, :]
        p = _softmax_last(s)
        ctx = jnp.einsum("bhqk,bkhd->bqhd", p.astype(bf16), v.astype(bf16),
                         preferred_element_type=f32).reshape(B, T, H)
        attn = mm(ctx.reshape(B * T, H), params["wo"][l].T,
                  params["bo"][l]).reshape(B, T, H)
        h = _layer_norm(attn + h, params["ln1_g"][l], params["ln1_b"][l])
        inter = _gelu(mm(h.reshape(B * T, H), params["wi"][l].T, params["bi"][l]))
        ffn = mm(inter, params["wo2"][l].T, params["bo2"][l]).reshape(B, T, H)
        h = _layer_norm(ffn + h, params["ln2_g"][l], params["ln2_b"][l])

    pooled = jnp.tanh(mm(h[:, 0, :], params["wp"].T, params["bp"]))
    slots = mm(h.reshape(B * T, H), params["w_slot"].T,
               params["b_slot"]).reshape(B, T, -1)
    intent = mm(pooled, params["w_int"].T, params["b_int"])
    return jnp.transpose(slots, (0, 2, 1)), intent


if __name__ == "__main__":
    # Small, module-consistent shapes (hid_size lane-aligned; bert-base would
    # be hid=768, 12 heads, 12 layers — same code path, bigger numbers).
    hid_size, n_head, n_layer, ffn_size = 128, 2, 2, 256
    vocab_len, max_pos = 64, 16
    out_slot, out_int = 9, 5
    B, T = 2, 8
    pad_index = 0

    keys = iter(jax.random.split(jax.random.PRNGKey(0), 64))

    def init(shape, scale=0.02):
        return jax.random.normal(next(keys), shape, jnp.float32) * scale

    word_emb = init((vocab_len, hid_size)).at[pad_index].set(0.0)
    params = {
        "word_emb": word_emb,
        "pos_emb": init((max_pos, hid_size)),
        "type_emb": init((2, hid_size)),
        "ln_emb_g": jnp.ones((hid_size,), jnp.float32),
        "ln_emb_b": jnp.zeros((hid_size,), jnp.float32),
        "wp": init((hid_size, hid_size)), "bp": init((hid_size,)),
        "w_slot": init((out_slot, hid_size), 0.05), "b_slot": init((out_slot,)),
        "w_int": init((out_int, hid_size), 0.05), "b_int": init((out_int,)),
    }
    layer = {k: [] for k in ["wq", "bq", "wk", "bk", "wv", "bv", "wo", "bo",
                             "wi", "bi", "wo2", "bo2",
                             "ln1_g", "ln1_b", "ln2_g", "ln2_b"]}
    for _ in range(n_layer):
        layer["wq"].append(init((hid_size, hid_size)))
        layer["bq"].append(init((hid_size,)))
        layer["wk"].append(init((hid_size, hid_size)))
        layer["bk"].append(init((hid_size,)))
        layer["wv"].append(init((hid_size, hid_size)))
        layer["bv"].append(init((hid_size,)))
        layer["wo"].append(init((hid_size, hid_size)))
        layer["bo"].append(init((hid_size,)))
        layer["wi"].append(init((ffn_size, hid_size)))
        layer["bi"].append(init((ffn_size,)))
        layer["wo2"].append(init((hid_size, ffn_size)))
        layer["bo2"].append(init((hid_size,)))
        layer["ln1_g"].append(jnp.ones((hid_size,), jnp.float32))
        layer["ln1_b"].append(jnp.zeros((hid_size,), jnp.float32))
        layer["ln2_g"].append(jnp.ones((hid_size,), jnp.float32))
        layer["ln2_b"].append(jnp.zeros((hid_size,), jnp.float32))
    params.update({k: jnp.stack(v, axis=0) for k, v in layer.items()})

    # Deterministic inputs: descending lengths, padded positions = pad_index.
    seq_lengths = jnp.array([8, 5], dtype=jnp.int32)
    attention_mask = (jnp.arange(T, dtype=jnp.int32)[None, :]
                      < seq_lengths[:, None]).astype(jnp.int32)
    utterance = jax.random.randint(next(keys), (B, T), 1, vocab_len, jnp.int32)
    utterance = jnp.where(attention_mask == 1, utterance, pad_index)

    fwd = jax.jit(functools.partial(bert_ias_forward, params=params,
                                    num_heads=n_head))
    slots, intent = fwd(utterance, attention_mask)
    jax.block_until_ready((slots, intent))

    slots_ref, intent_ref = reference_forward(utterance, attention_mask, params,
                                              num_heads=n_head)

    assert slots.shape == (B, out_slot, T), slots.shape
    assert intent.shape == (B, out_int), intent.shape
    np.testing.assert_allclose(np.asarray(slots), np.asarray(slots_ref),
                               rtol=1e-2, atol=1e-2)
    np.testing.assert_allclose(np.asarray(intent), np.asarray(intent_ref),
                               rtol=1e-2, atol=1e-2)

    print("KERNEL_OK")
</pallas_src>

<mosaic_0001>
module attributes {stable_mosaic.version = 11 : i64} {
  func.func @_bert_encoder_kernel(%arg0: i32, %arg1: memref<8x8x128xf32, #tpu.memory_space<vmem>>, %arg2: memref<8x128xf32, #tpu.memory_space<vmem>>, %arg3: memref<8x8xf32, #tpu.memory_space<vmem>>, %arg4: memref<1x128xf32, #tpu.memory_space<vmem>>, %arg5: memref<1x128xf32, #tpu.memory_space<vmem>>, %arg6: memref<2x128x384xbf16, #tpu.memory_space<vmem>>, %arg7: memref<2x1x384xf32, #tpu.memory_space<vmem>>, %arg8: memref<2x128x128xbf16, #tpu.memory_space<vmem>>, %arg9: memref<2x1x128xf32, #tpu.memory_space<vmem>>, %arg10: memref<2x1x128xf32, #tpu.memory_space<vmem>>, %arg11: memref<2x1x128xf32, #tpu.memory_space<vmem>>, %arg12: memref<2x128x256xbf16, #tpu.memory_space<vmem>>, %arg13: memref<2x1x256xf32, #tpu.memory_space<vmem>>, %arg14: memref<2x256x128xbf16, #tpu.memory_space<vmem>>, %arg15: memref<2x1x128xf32, #tpu.memory_space<vmem>>, %arg16: memref<2x1x128xf32, #tpu.memory_space<vmem>>, %arg17: memref<2x1x128xf32, #tpu.memory_space<vmem>>, %arg18: memref<128x128xbf16, #tpu.memory_space<vmem>>, %arg19: memref<1x128xf32, #tpu.memory_space<vmem>>, %arg20: memref<128x128xbf16, #tpu.memory_space<vmem>>, %arg21: memref<1x128xf32, #tpu.memory_space<vmem>>, %arg22: memref<128x128xbf16, #tpu.memory_space<vmem>>, %arg23: memref<1x128xf32, #tpu.memory_space<vmem>>, %arg24: memref<8x8x128xf32, #tpu.memory_space<vmem>>, %arg25: memref<8x128xf32, #tpu.memory_space<vmem>>) attributes {dimension_semantics = [#tpu.dimension_semantics<parallel>], iteration_bounds = array<i64: 1>, scalar_prefetch = 0 : i64, scratch_operands = 0 : i64, tpu.core_type = #tpu.core_type<tc>, window_params = [{transform_indices = @transform_0, window_bounds = array<i64: 8, 8, 128>}, {pipeline_mode = #tpu.pipeline_mode<synchronous>, transform_indices = @transform_1, window_bounds = array<i64: 8, 128>}, {transform_indices = @transform_2, window_bounds = array<i64: 8, 8>}, {pipeline_mode = #tpu.pipeline_mode<synchronous>, transform_indices = @transform_3, window_bounds = array<i64: 1, 128>}, {pipeline_mode = #tpu.pipeline_mode<synchronous>, transform_indices = @transform_4, window_bounds = array<i64: 1, 128>}, {pipeline_mode = #tpu.pipeline_mode<synchronous>, transform_indices = @transform_5, window_bounds = array<i64: 2, 128, 384>}, {pipeline_mode = #tpu.pipeline_mode<synchronous>, transform_indices = @transform_6, window_bounds = array<i64: 2, 1, 384>}, {pipeline_mode = #tpu.pipeline_mode<synchronous>, transform_indices = @transform_7, window_bounds = array<i64: 2, 128, 128>}, {pipeline_mode = #tpu.pipeline_mode<synchronous>, transform_indices = @transform_8, window_bounds = array<i64: 2, 1, 128>}, {pipeline_mode = #tpu.pipeline_mode<synchronous>, transform_indices = @transform_9, window_bounds = array<i64: 2, 1, 128>}, {pipeline_mode = #tpu.pipeline_mode<synchronous>, transform_indices = @transform_10, window_bounds = array<i64: 2, 1, 128>}, {pipeline_mode = #tpu.pipeline_mode<synchronous>, transform_indices = @transform_11, window_bounds = array<i64: 2, 128, 256>}, {pipeline_mode = #tpu.pipeline_mode<synchronous>, transform_indices = @transform_12, window_bounds = array<i64: 2, 1, 256>}, {pipeline_mode = #tpu.pipeline_mode<synchronous>, transform_indices = @transform_13, window_bounds = array<i64: 2, 256, 128>}, {pipeline_mode = #tpu.pipeline_mode<synchronous>, transform_indices = @transform_14, window_bounds = array<i64: 2, 1, 128>}, {pipeline_mode = #tpu.pipeline_mode<synchronous>, transform_indices = @transform_15, window_bounds = array<i64: 2, 1, 128>}, {pipeline_mode = #tpu.pipeline_mode<synchronous>, transform_indices = @transform_16, window_bounds = array<i64: 2, 1, 128>}, {pipeline_mode = #tpu.pipeline_mode<synchronous>, transform_indices = @transform_17, window_bounds = array<i64: 128, 128>}, {pipeline_mode = #tpu.pipeline_mode<synchronous>, transform_indices = @transform_18, window_bounds = array<i64: 1, 128>}, {pipeline_mode = #tpu.pipeline_mode<synchronous>, transform_indices = @transform_19, window_bounds = array<i64: 128, 128>}, {pipeline_mode = #tpu.pipeline_mode<synchronous>, transform_indices = @transform_20, window_bounds = array<i64: 1, 128>}, {pipeline_mode = #tpu.pipeline_mode<synchronous>, transform_indices = @transform_21, window_bounds = array<i64: 128, 128>}, {pipeline_mode = #tpu.pipeline_mode<synchronous>, transform_indices = @transform_22, window_bounds = array<i64: 1, 128>}, {transform_indices = @transform_23, window_bounds = array<i64: 8, 8, 128>}, {transform_indices = @transform_24, window_bounds = array<i64: 8, 128>}]} {
    %c0 = arith.constant 0 : index
    %c0_0 = arith.constant 0 : index
    %c0_1 = arith.constant 0 : index
    %0 = vector.load %arg1[%c0, %c0_0, %c0_1] : memref<8x8x128xf32, #tpu.memory_space<vmem>>, vector<8x8x128xf32>
    %c0_2 = arith.constant 0 : index
    %c0_3 = arith.constant 0 : index
    %1 = vector.load %arg2[%c0_2, %c0_3] : memref<8x128xf32, #tpu.memory_space<vmem>>, vector<8x128xf32>
    %2 = vector.shape_cast %1 : vector<8x128xf32> to vector<1x8x128xf32>
    %3 = vector.broadcast %2 : vector<1x8x128xf32> to vector<8x8x128xf32>
    %4 = arith.addf %0, %3 : vector<8x8x128xf32>
    %c0_4 = arith.constant 0 : index
    %c0_5 = arith.constant 0 : index
    %5 = vector.load %arg4[%c0_4, %c0_5] : memref<1x128xf32, #tpu.memory_space<vmem>>, vector<1x128xf32>
    %c0_6 = arith.constant 0 : index
    %c0_7 = arith.constant 0 : index
    %6 = vector.load %arg5[%c0_6, %c0_7] : memref<1x128xf32, #tpu.memory_space<vmem>>, vector<1x128xf32>
    %cst = arith.constant dense<0.000000e+00> : vector<8x8xf32>
    %7 = vector.multi_reduction <add>, %4, %cst [2] : vector<8x8x128xf32> to vector<8x8xf32>
    %8 = vector.shape_cast %7 : vector<8x8xf32> to vector<8x8x1xf32>
    %cst_8 = arith.constant 1.280000e+02 : f32
    %9 = vector.broadcast %cst_8 : f32 to vector<8x8x1xf32>
    %10 = arith.divf %8, %9 : vector<8x8x1xf32>
    %11 = vector.broadcast %10 : vector<8x8x1xf32> to vector<8x8x128xf32>
    %12 = arith.subf %4, %11 : vector<8x8x128xf32>
    %13 = arith.mulf %12, %12 : vector<8x8x128xf32>
    %cst_9 = arith.constant dense<0.000000e+00> : vector<8x8xf32>
    %14 = vector.multi_reduction <add>, %13, %cst_9 [2] : vector<8x8x128xf32> to vector<8x8xf32>
    %15 = vector.shape_cast %14 : vector<8x8xf32> to vector<8x8x1xf32>
    %cst_10 = arith.constant 1.280000e+02 : f32
    %16 = vector.broadcast %cst_10 : f32 to vector<8x8x1xf32>
    %17 = arith.divf %15, %16 : vector<8x8x1xf32>
    %cst_11 = arith.constant 9.99999996E-13 : f32
    %18 = vector.broadcast %cst_11 : f32 to vector<8x8x1xf32>
    %19 = arith.addf %17, %18 : vector<8x8x1xf32>
    %20 = math.rsqrt %19 : vector<8x8x1xf32>
    %21 = vector.broadcast %20 : vector<8x8x1xf32> to vector<8x8x128xf32>
    %22 = arith.mulf %12, %21 : vector<8x8x128xf32>
    %23 = vector.shape_cast %5 : vector<1x128xf32> to vector<1x1x128xf32>
    %24 = vector.broadcast %23 : vector<1x1x128xf32> to vector<8x8x128xf32>
    %25 = arith.mulf %22, %24 : vector<8x8x128xf32>
    %26 = vector.shape_cast %6 : vector<1x128xf32> to vector<1x1x128xf32>
    %27 = vector.broadcast %26 : vector<1x1x128xf32> to vector<8x8x128xf32>
    %28 = arith.addf %25, %27 : vector<8x8x128xf32>
    %c0_12 = arith.constant 0 : index
    %c0_13 = arith.constant 0 : index
    %29 = vector.load %arg3[%c0_12, %c0_13] : memref<8x8xf32, #tpu.memory_space<vmem>>, vector<8x8xf32>
    %30 = vector.shape_cast %29 : vector<8x8xf32> to vector<8x1x8xf32>
    %c0_14 = arith.constant 0 : index
    %c0_15 = arith.constant 0 : index
    %c0_16 = arith.constant 0 : index
    %31 = vector.load %arg6[%c0_14, %c0_15, %c0_16] : memref<2x128x384xbf16, #tpu.memory_space<vmem>>, vector<1x128x384xbf16>
    %32 = vector.shape_cast %31 : vector<1x128x384xbf16> to vector<128x384xbf16>
    %c0_17 = arith.constant 0 : index
    %c0_18 = arith.constant 0 : index
    %c0_19 = arith.constant 0 : index
    %33 = vector.load %arg8[%c0_17, %c0_18, %c0_19] : memref<2x128x128xbf16, #tpu.memory_space<vmem>>, vector<1x128x128xbf16>
    %34 = vector.shape_cast %33 : vector<1x128x128xbf16> to vector<128x128xbf16>
    %35 = vector.shape_cast %28 : vector<8x8x128xf32> to vector<64x128xf32>
    %36 = arith.truncf %35 : vector<64x128xf32> to vector<64x128xbf16>
    %cst_20 = arith.constant dense<0.000000e+00> : vector<64x384xf32>
    %37 = tpu.matmul %36, %32, %cst_20 {dimension_numbers = #tpu.dot_dimension_numbers<[1], [0], [0], [1], [0, 0, 1, 1], [], []>} : vector<64x128xbf16>, vector<128x384xbf16>, vector<64x384xf32> -> vector<64x384xf32>
    %c0_21 = arith.constant 0 : index
    %c0_22 = arith.constant 0 : index
    %c0_23 = arith.constant 0 : index
    %38 = vector.load %arg7[%c0_21, %c0_22, %c0_23] : memref<2x1x384xf32, #tpu.memory_space<vmem>>, vector<1x1x384xf32>
    %39 = vector.shape_cast %38 : vector<1x1x384xf32> to vector<1x384xf32>
    %40 = vector.broadcast %39 : vector<1x384xf32> to vector<64x384xf32>
    %41 = arith.addf %37, %40 : vector<64x384xf32>
    %cst_24 = arith.constant 0.000000e+00 : f32
    %42 = vector.broadcast %cst_24 : f32 to vector<64x128xf32>
    %43 = vector.extract_strided_slice %41 {offsets = [0, 0], sizes = [64, 64], strides = [1, 1]} : vector<64x384xf32> to vector<64x64xf32>
    %44 = vector.shape_cast %43 : vector<64x64xf32> to vector<8x8x64xf32>
    %45 = vector.extract_strided_slice %41 {offsets = [0, 128], sizes = [64, 64], strides = [1, 1]} : vector<64x384xf32> to vector<64x64xf32>
    %46 = vector.shape_cast %45 : vector<64x64xf32> to vector<8x8x64xf32>
    %47 = vector.extract_strided_slice %41 {offsets = [0, 256], sizes = [64, 64], strides = [1, 1]} : vector<64x384xf32> to vector<64x64xf32>
    %48 = vector.shape_cast %47 : vector<64x64xf32> to vector<8x8x64xf32>
    %49 = arith.truncf %44 : vector<8x8x64xf32> to vector<8x8x64xbf16>
    %50 = arith.truncf %46 : vector<8x8x64xf32> to vector<8x8x64xbf16>
    "tpu.trace_start"() <{level = 10 : i32, message = "bqd,bkd->bqk"}> : () -> ()
    %cst_25 = arith.constant dense<0.000000e+00> : vector<8x8x8xf32>
    %51 = tpu.matmul %49, %50, %cst_25 {dimension_numbers = #tpu.dot_dimension_numbers<[2], [2], [1], [1], [0, 0, 0, 1, 1, 1], [0], [0]>} : vector<8x8x64xbf16>, vector<8x8x64xbf16>, vector<8x8x8xf32> -> vector<8x8x8xf32>
    "tpu.trace_stop"() : () -> ()
    %cst_26 = arith.constant 1.250000e-01 : f32
    %52 = vector.broadcast %cst_26 : f32 to vector<8x8x8xf32>
    %53 = arith.mulf %51, %52 : vector<8x8x8xf32>
    %54 = vector.broadcast %30 : vector<8x1x8xf32> to vector<8x8x8xf32>
    %55 = arith.addf %53, %54 : vector<8x8x8xf32>
    %cst_27 = arith.constant dense<0xFF800000> : vector<8x8xf32>
    %56 = vector.multi_reduction <maximumf>, %55, %cst_27 [2] : vector<8x8x8xf32> to vector<8x8xf32>
    %57 = vector.shape_cast %56 : vector<8x8xf32> to vector<8x8x1xf32>
    %58 = vector.broadcast %57 : vector<8x8x1xf32> to vector<8x8x8xf32>
    %59 = arith.subf %55, %58 : vector<8x8x8xf32>
    %60 = math.exp %59 : vector<8x8x8xf32>
    %cst_28 = arith.constant dense<0.000000e+00> : vector<8x8xf32>
    %61 = vector.multi_reduction <add>, %60, %cst_28 [2] : vector<8x8x8xf32> to vector<8x8xf32>
    %62 = vector.shape_cast %61 : vector<8x8xf32> to vector<8x8x1xf32>
    %63 = vector.broadcast %62 : vector<8x8x1xf32> to vector<8x8x8xf32>
    %64 = arith.divf %60, %63 : vector<8x8x8xf32>
    %65 = arith.truncf %64 : vector<8x8x8xf32> to vector<8x8x8xbf16>
    %66 = arith.truncf %48 : vector<8x8x64xf32> to vector<8x8x64xbf16>
    "tpu.trace_start"() <{level = 10 : i32, message = "bqk,bkd->bqd"}> : () -> ()
    %cst_29 = arith.constant dense<0.000000e+00> : vector<8x8x64xf32>
    %67 = tpu.matmul %65, %66, %cst_29 {dimension_numbers = #tpu.dot_dimension_numbers<[2], [1], [1], [2], [0, 0, 0, 1, 1, 2], [0], [0]>} : vector<8x8x8xbf16>, vector<8x8x64xbf16>, vector<8x8x64xf32> -> vector<8x8x64xf32>
    "tpu.trace_stop"() : () -> ()
    %68 = vector.shape_cast %67 : vector<8x8x64xf32> to vector<64x64xf32>
    %69 = arith.truncf %68 : vector<64x64xf32> to vector<64x64xbf16>
    %70 = vector.extract_strided_slice %34 {offsets = [0, 0], sizes = [64, 128], strides = [1, 1]} : vector<128x128xbf16> to vector<64x128xbf16>
    %cst_30 = arith.constant dense<0.000000e+00> : vector<64x128xf32>
    %71 = tpu.matmul %69, %70, %cst_30 {dimension_numbers = #tpu.dot_dimension_numbers<[1], [0], [0], [1], [0, 0, 1, 1], [], []>} : vector<64x64xbf16>, vector<64x128xbf16>, vector<64x128xf32> -> vector<64x128xf32>
    %72 = arith.addf %42, %71 : vector<64x128xf32>
    %73 = vector.extract_strided_slice %41 {offsets = [0, 64], sizes = [64, 64], strides = [1, 1]} : vector<64x384xf32> to vector<64x64xf32>
    %74 = vector.shape_cast %73 : vector<64x64xf32> to vector<8x8x64xf32>
    %75 = vector.extract_strided_slice %41 {offsets = [0, 192], sizes = [64, 64], strides = [1, 1]} : vector<64x384xf32> to vector<64x64xf32>
    %76 = vector.shape_cast %75 : vector<64x64xf32> to vector<8x8x64xf32>
    %77 = vector.extract_strided_slice %41 {offsets = [0, 320], sizes = [64, 64], strides = [1, 1]} : vector<64x384xf32> to vector<64x64xf32>
    %78 = vector.shape_cast %77 : vector<64x64xf32> to vector<8x8x64xf32>
    %79 = arith.truncf %74 : vector<8x8x64xf32> to vector<8x8x64xbf16>
    %80 = arith.truncf %76 : vector<8x8x64xf32> to vector<8x8x64xbf16>
    "tpu.trace_start"() <{level = 10 : i32, message = "bqd,bkd->bqk"}> : () -> ()
    %cst_31 = arith.constant dense<0.000000e+00> : vector<8x8x8xf32>
    %81 = tpu.matmul %79, %80, %cst_31 {dimension_numbers = #tpu.dot_dimension_numbers<[2], [2], [1], [1], [0, 0, 0, 1, 1, 1], [0], [0]>} : vector<8x8x64xbf16>, vector<8x8x64xbf16>, vector<8x8x8xf32> -> vector<8x8x8xf32>
    "tpu.trace_stop"() : () -> ()
    %cst_32 = arith.constant 1.250000e-01 : f32
    %82 = vector.broadcast %cst_32 : f32 to vector<8x8x8xf32>
    %83 = arith.mulf %81, %82 : vector<8x8x8xf32>
    %84 = vector.broadcast %30 : vector<8x1x8xf32> to vector<8x8x8xf32>
    %85 = arith.addf %83, %84 : vector<8x8x8xf32>
    %cst_33 = arith.constant dense<0xFF800000> : vector<8x8xf32>
    %86 = vector.multi_reduction <maximumf>, %85, %cst_33 [2] : vector<8x8x8xf32> to vector<8x8xf32>
    %87 = vector.shape_cast %86 : vector<8x8xf32> to vector<8x8x1xf32>
    %88 = vector.broadcast %87 : vector<8x8x1xf32> to vector<8x8x8xf32>
    %89 = arith.subf %85, %88 : vector<8x8x8xf32>
    %90 = math.exp %89 : vector<8x8x8xf32>
    %cst_34 = arith.constant dense<0.000000e+00> : vector<8x8xf32>
    %91 = vector.multi_reduction <add>, %90, %cst_34 [2] : vector<8x8x8xf32> to vector<8x8xf32>
    %92 = vector.shape_cast %91 : vector<8x8xf32> to vector<8x8x1xf32>
    %93 = vector.broadcast %92 : vector<8x8x1xf32> to vector<8x8x8xf32>
    %94 = arith.divf %90, %93 : vector<8x8x8xf32>
    %95 = arith.truncf %94 : vector<8x8x8xf32> to vector<8x8x8xbf16>
    %96 = arith.truncf %78 : vector<8x8x64xf32> to vector<8x8x64xbf16>
    "tpu.trace_start"() <{level = 10 : i32, message = "bqk,bkd->bqd"}> : () -> ()
    %cst_35 = arith.constant dense<0.000000e+00> : vector<8x8x64xf32>
    %97 = tpu.matmul %95, %96, %cst_35 {dimension_numbers = #tpu.dot_dimension_numbers<[2], [1], [1], [2], [0, 0, 0, 1, 1, 2], [0], [0]>} : vector<8x8x8xbf16>, vector<8x8x64xbf16>, vector<8x8x64xf32> -> vector<8x8x64xf32>
    "tpu.trace_stop"() : () -> ()
    %98 = vector.shape_cast %97 : vector<8x8x64xf32> to vector<64x64xf32>
    %99 = arith.truncf %98 : vector<64x64xf32> to vector<64x64xbf16>
    %100 = vector.extract_strided_slice %34 {offsets = [64, 0], sizes = [64, 128], strides = [1, 1]} : vector<128x128xbf16> to vector<64x128xbf16>
    %cst_36 = arith.constant dense<0.000000e+00> : vector<64x128xf32>
    %101 = tpu.matmul %99, %100, %cst_36 {dimension_numbers = #tpu.dot_dimension_numbers<[1], [0], [0], [1], [0, 0, 1, 1], [], []>} : vector<64x64xbf16>, vector<64x128xbf16>, vector<64x128xf32> -> vector<64x128xf32>
    %102 = arith.addf %72, %101 : vector<64x128xf32>
    %c0_37 = arith.constant 0 : index
    %c0_38 = arith.constant 0 : index
    %c0_39 = arith.constant 0 : index
    %103 = vector.load %arg9[%c0_37, %c0_38, %c0_39] : memref<2x1x128xf32, #tpu.memory_space<vmem>>, vector<1x1x128xf32>
    %104 = vector.shape_cast %103 : vector<1x1x128xf32> to vector<1x128xf32>
    %105 = vector.broadcast %104 : vector<1x128xf32> to vector<64x128xf32>
    %106 = arith.addf %102, %105 : vector<64x128xf32>
    %107 = vector.shape_cast %106 : vector<64x128xf32> to vector<8x8x128xf32>
    %108 = arith.addf %107, %28 : vector<8x8x128xf32>
    %c0_40 = arith.constant 0 : index
    %c0_41 = arith.constant 0 : index
    %c0_42 = arith.constant 0 : index
    %109 = vector.load %arg10[%c0_40, %c0_41, %c0_42] : memref<2x1x128xf32, #tpu.memory_space<vmem>>, vector<1x1x128xf32>
    %110 = vector.shape_cast %109 : vector<1x1x128xf32> to vector<1x128xf32>
    %c0_43 = arith.constant 0 : index
    %c0_44 = arith.constant 0 : index
    %c0_45 = arith.constant 0 : index
    %111 = vector.load %arg11[%c0_43, %c0_44, %c0_45] : memref<2x1x128xf32, #tpu.memory_space<vmem>>, vector<1x1x128xf32>
    %112 = vector.shape_cast %111 : vector<1x1x128xf32> to vector<1x128xf32>
    %cst_46 = arith.constant dense<0.000000e+00> : vector<8x8xf32>
    %113 = vector.multi_reduction <add>, %108, %cst_46 [2] : vector<8x8x128xf32> to vector<8x8xf32>
    %114 = vector.shape_cast %113 : vector<8x8xf32> to vector<8x8x1xf32>
    %cst_47 = arith.constant 1.280000e+02 : f32
    %115 = vector.broadcast %cst_47 : f32 to vector<8x8x1xf32>
    %116 = arith.divf %114, %115 : vector<8x8x1xf32>
    %117 = vector.broadcast %116 : vector<8x8x1xf32> to vector<8x8x128xf32>
    %118 = arith.subf %108, %117 : vector<8x8x128xf32>
    %119 = arith.mulf %118, %118 : vector<8x8x128xf32>
    %cst_48 = arith.constant dense<0.000000e+00> : vector<8x8xf32>
    %120 = vector.multi_reduction <add>, %119, %cst_48 [2] : vector<8x8x128xf32> to vector<8x8xf32>
    %121 = vector.shape_cast %120 : vector<8x8xf32> to vector<8x8x1xf32>
    %cst_49 = arith.constant 1.280000e+02 : f32
    %122 = vector.broadcast %cst_49 : f32 to vector<8x8x1xf32>
    %123 = arith.divf %121, %122 : vector<8x8x1xf32>
    %cst_50 = arith.constant 9.99999996E-13 : f32
    %124 = vector.broadcast %cst_50 : f32 to vector<8x8x1xf32>
    %125 = arith.addf %123, %124 : vector<8x8x1xf32>
    %126 = math.rsqrt %125 : vector<8x8x1xf32>
    %127 = vector.broadcast %126 : vector<8x8x1xf32> to vector<8x8x128xf32>
    %128 = arith.mulf %118, %127 : vector<8x8x128xf32>
    %129 = vector.shape_cast %110 : vector<1x128xf32> to vector<1x1x128xf32>
    %130 = vector.broadcast %129 : vector<1x1x128xf32> to vector<8x8x128xf32>
    %131 = arith.mulf %128, %130 : vector<8x8x128xf32>
    %132 = vector.shape_cast %112 : vector<1x128xf32> to vector<1x1x128xf32>
    %133 = vector.broadcast %132 : vector<1x1x128xf32> to vector<8x8x128xf32>
    %134 = arith.addf %131, %133 : vector<8x8x128xf32>
    %135 = vector.shape_cast %134 : vector<8x8x128xf32> to vector<64x128xf32>
    %136 = arith.truncf %135 : vector<64x128xf32> to vector<64x128xbf16>
    %c0_51 = arith.constant 0 : index
    %c0_52 = arith.constant 0 : index
    %c0_53 = arith.constant 0 : index
    %137 = vector.load %arg12[%c0_51, %c0_52, %c0_53] : memref<2x128x256xbf16, #tpu.memory_space<vmem>>, vector<1x128x256xbf16>
    %138 = vector.shape_cast %137 : vector<1x128x256xbf16> to vector<128x256xbf16>
    %cst_54 = arith.constant dense<0.000000e+00> : vector<64x256xf32>
    %139 = tpu.matmul %136, %138, %cst_54 {dimension_numbers = #tpu.dot_dimension_numbers<[1], [0], [0], [1], [0, 0, 1, 1], [], []>} : vector<64x128xbf16>, vector<128x256xbf16>, vector<64x256xf32> -> vector<64x256xf32>
    %c0_55 = arith.constant 0 : index
    %c0_56 = arith.constant 0 : index
    %c0_57 = arith.constant 0 : index
    %140 = vector.load %arg13[%c0_55, %c0_56, %c0_57] : memref<2x1x256xf32, #tpu.memory_space<vmem>>, vector<1x1x256xf32>
    %141 = vector.shape_cast %140 : vector<1x1x256xf32> to vector<1x256xf32>
    %142 = vector.broadcast %141 : vector<1x256xf32> to vector<64x256xf32>
    %143 = arith.addf %139, %142 : vector<64x256xf32>
    %cst_58 = arith.constant 5.000000e-01 : f32
    %144 = vector.broadcast %cst_58 : f32 to vector<64x256xf32>
    %145 = arith.mulf %144, %143 : vector<64x256xf32>
    %cst_59 = arith.constant 4.471500e-02 : f32
    %146 = vector.broadcast %cst_59 : f32 to vector<64x256xf32>
    %147 = arith.mulf %146, %143 : vector<64x256xf32>
    %148 = arith.mulf %147, %143 : vector<64x256xf32>
    %149 = arith.mulf %148, %143 : vector<64x256xf32>
    %150 = arith.addf %143, %149 : vector<64x256xf32>
    %cst_60 = arith.constant 0.797884583 : f32
    %151 = vector.broadcast %cst_60 : f32 to vector<64x256xf32>
    %152 = arith.mulf %151, %150 : vector<64x256xf32>
    %153 = math.tanh %152 : vector<64x256xf32>
    %cst_61 = arith.constant 1.000000e+00 : f32
    %154 = vector.broadcast %cst_61 : f32 to vector<64x256xf32>
    %155 = arith.addf %154, %153 : vector<64x256xf32>
    %156 = arith.mulf %145, %155 : vector<64x256xf32>
    %157 = arith.truncf %156 : vector<64x256xf32> to vector<64x256xbf16>
    %c0_62 = arith.constant 0 : index
    %c0_63 = arith.constant 0 : index
    %c0_64 = arith.constant 0 : index
    %158 = vector.load %arg14[%c0_62, %c0_63, %c0_64] : memref<2x256x128xbf16, #tpu.memory_space<vmem>>, vector<1x256x128xbf16>
    %159 = vector.shape_cast %158 : vector<1x256x128xbf16> to vector<256x128xbf16>
    %cst_65 = arith.constant dense<0.000000e+00> : vector<64x128xf32>
    %160 = tpu.matmul %157, %159, %cst_65 {dimension_numbers = #tpu.dot_dimension_numbers<[1], [0], [0], [1], [0, 0, 1, 1], [], []>} : vector<64x256xbf16>, vector<256x128xbf16>, vector<64x128xf32> -> vector<64x128xf32>
    %c0_66 = arith.constant 0 : index
    %c0_67 = arith.constant 0 : index
    %c0_68 = arith.constant 0 : index
    %161 = vector.load %arg15[%c0_66, %c0_67, %c0_68] : memref<2x1x128xf32, #tpu.memory_space<vmem>>, vector<1x1x128xf32>
    %162 = vector.shape_cast %161 : vector<1x1x128xf32> to vector<1x128xf32>
    %163 = vector.broadcast %162 : vector<1x128xf32> to vector<64x128xf32>
    %164 = arith.addf %160, %163 : vector<64x128xf32>
    %165 = vector.shape_cast %164 : vector<64x128xf32> to vector<8x8x128xf32>
    %166 = arith.addf %165, %134 : vector<8x8x128xf32>
    %c0_69 = arith.constant 0 : index
    %c0_70 = arith.constant 0 : index
    %c0_71 = arith.constant 0 : index
    %167 = vector.load %arg16[%c0_69, %c0_70, %c0_71] : memref<2x1x128xf32, #tpu.memory_space<vmem>>, vector<1x1x128xf32>
    %168 = vector.shape_cast %167 : vector<1x1x128xf32> to vector<1x128xf32>
    %c0_72 = arith.constant 0 : index
    %c0_73 = arith.constant 0 : index
    %c0_74 = arith.constant 0 : index
    %169 = vector.load %arg17[%c0_72, %c0_73, %c0_74] : memref<2x1x128xf32, #tpu.memory_space<vmem>>, vector<1x1x128xf32>
    %170 = vector.shape_cast %169 : vector<1x1x128xf32> to vector<1x128xf32>
    %cst_75 = arith.constant dense<0.000000e+00> : vector<8x8xf32>
    %171 = vector.multi_reduction <add>, %166, %cst_75 [2] : vector<8x8x128xf32> to vector<8x8xf32>
    %172 = vector.shape_cast %171 : vector<8x8xf32> to vector<8x8x1xf32>
    %cst_76 = arith.constant 1.280000e+02 : f32
    %173 = vector.broadcast %cst_76 : f32 to vector<8x8x1xf32>
    %174 = arith.divf %172, %173 : vector<8x8x1xf32>
    %175 = vector.broadcast %174 : vector<8x8x1xf32> to vector<8x8x128xf32>
    %176 = arith.subf %166, %175 : vector<8x8x128xf32>
    %177 = arith.mulf %176, %176 : vector<8x8x128xf32>
    %cst_77 = arith.constant dense<0.000000e+00> : vector<8x8xf32>
    %178 = vector.multi_reduction <add>, %177, %cst_77 [2] : vector<8x8x128xf32> to vector<8x8xf32>
    %179 = vector.shape_cast %178 : vector<8x8xf32> to vector<8x8x1xf32>
    %cst_78 = arith.constant 1.280000e+02 : f32
    %180 = vector.broadcast %cst_78 : f32 to vector<8x8x1xf32>
    %181 = arith.divf %179, %180 : vector<8x8x1xf32>
    %cst_79 = arith.constant 9.99999996E-13 : f32
    %182 = vector.broadcast %cst_79 : f32 to vector<8x8x1xf32>
    %183 = arith.addf %181, %182 : vector<8x8x1xf32>
    %184 = math.rsqrt %183 : vector<8x8x1xf32>
    %185 = vector.broadcast %184 : vector<8x8x1xf32> to vector<8x8x128xf32>
    %186 = arith.mulf %176, %185 : vector<8x8x128xf32>
    %187 = vector.shape_cast %168 : vector<1x128xf32> to vector<1x1x128xf32>
    %188 = vector.broadcast %187 : vector<1x1x128xf32> to vector<8x8x128xf32>
    %189 = arith.mulf %186, %188 : vector<8x8x128xf32>
    %190 = vector.shape_cast %170 : vector<1x128xf32> to vector<1x1x128xf32>
    %191 = vector.broadcast %190 : vector<1x1x128xf32> to vector<8x8x128xf32>
    %192 = arith.addf %189, %191 : vector<8x8x128xf32>
    %c1 = arith.constant 1 : index
    %c0_80 = arith.constant 0 : index
    %c0_81 = arith.constant 0 : index
    %193 = vector.load %arg6[%c1, %c0_80, %c0_81] : memref<2x128x384xbf16, #tpu.memory_space<vmem>>, vector<1x128x384xbf16>
    %194 = vector.shape_cast %193 : vector<1x128x384xbf16> to vector<128x384xbf16>
    %c1_82 = arith.constant 1 : index
    %c0_83 = arith.constant 0 : index
    %c0_84 = arith.constant 0 : index
    %195 = vector.load %arg8[%c1_82, %c0_83, %c0_84] : memref<2x128x128xbf16, #tpu.memory_space<vmem>>, vector<1x128x128xbf16>
    %196 = vector.shape_cast %195 : vector<1x128x128xbf16> to vector<128x128xbf16>
    %197 = vector.shape_cast %192 : vector<8x8x128xf32> to vector<64x128xf32>
    %198 = arith.truncf %197 : vector<64x128xf32> to vector<64x128xbf16>
    %cst_85 = arith.constant dense<0.000000e+00> : vector<64x384xf32>
    %199 = tpu.matmul %198, %194, %cst_85 {dimension_numbers = #tpu.dot_dimension_numbers<[1], [0], [0], [1], [0, 0, 1, 1], [], []>} : vector<64x128xbf16>, vector<128x384xbf16>, vector<64x384xf32> -> vector<64x384xf32>
    %c1_86 = arith.constant 1 : index
    %c0_87 = arith.constant 0 : index
    %c0_88 = arith.constant 0 : index
    %200 = vector.load %arg7[%c1_86, %c0_87, %c0_88] : memref<2x1x384xf32, #tpu.memory_space<vmem>>, vector<1x1x384xf32>
    %201 = vector.shape_cast %200 : vector<1x1x384xf32> to vector<1x384xf32>
    %202 = vector.broadcast %201 : vector<1x384xf32> to vector<64x384xf32>
    %203 = arith.addf %199, %202 : vector<64x384xf32>
    %cst_89 = arith.constant 0.000000e+00 : f32
    %204 = vector.broadcast %cst_89 : f32 to vector<64x128xf32>
    %205 = vector.extract_strided_slice %203 {offsets = [0, 0], sizes = [64, 64], strides = [1, 1]} : vector<64x384xf32> to vector<64x64xf32>
    %206 = vector.shape_cast %205 : vector<64x64xf32> to vector<8x8x64xf32>
    %207 = vector.extract_strided_slice %203 {offsets = [0, 128], sizes = [64, 64], strides = [1, 1]} : vector<64x384xf32> to vector<64x64xf32>
    %208 = vector.shape_cast %207 : vector<64x64xf32> to vector<8x8x64xf32>
    %209 = vector.extract_strided_slice %203 {offsets = [0, 256], sizes = [64, 64], strides = [1, 1]} : vector<64x384xf32> to vector<64x64xf32>
    %210 = vector.shape_cast %209 : vector<64x64xf32> to vector<8x8x64xf32>
    %211 = arith.truncf %206 : vector<8x8x64xf32> to vector<8x8x64xbf16>
    %212 = arith.truncf %208 : vector<8x8x64xf32> to vector<8x8x64xbf16>
    "tpu.trace_start"() <{level = 10 : i32, message = "bqd,bkd->bqk"}> : () -> ()
    %cst_90 = arith.constant dense<0.000000e+00> : vector<8x8x8xf32>
    %213 = tpu.matmul %211, %212, %cst_90 {dimension_numbers = #tpu.dot_dimension_numbers<[2], [2], [1], [1], [0, 0, 0, 1, 1, 1], [0], [0]>} : vector<8x8x64xbf16>, vector<8x8x64xbf16>, vector<8x8x8xf32> -> vector<8x8x8xf32>
    "tpu.trace_stop"() : () -> ()
    %cst_91 = arith.constant 1.250000e-01 : f32
    %214 = vector.broadcast %cst_91 : f32 to vector<8x8x8xf32>
    %215 = arith.mulf %213, %214 : vector<8x8x8xf32>
    %216 = vector.broadcast %30 : vector<8x1x8xf32> to vector<8x8x8xf32>
    %217 = arith.addf %215, %216 : vector<8x8x8xf32>
    %cst_92 = arith.constant dense<0xFF800000> : vector<8x8xf32>
    %218 = vector.multi_reduction <maximumf>, %217, %cst_92 [2] : vector<8x8x8xf32> to vector<8x8xf32>
    %219 = vector.shape_cast %218 : vector<8x8xf32> to vector<8x8x1xf32>
    %220 = vector.broadcast %219 : vector<8x8x1xf32> to vector<8x8x8xf32>
    %221 = arith.subf %217, %220 : vector<8x8x8xf32>
    %222 = math.exp %221 : vector<8x8x8xf32>
    %cst_93 = arith.constant dense<0.000000e+00> : vector<8x8xf32>
    %223 = vector.multi_reduction <add>, %222, %cst_93 [2] : vector<8x8x8xf32> to vector<8x8xf32>
    %224 = vector.shape_cast %223 : vector<8x8xf32> to vector<8x8x1xf32>
    %225 = vector.broadcast %224 : vector<8x8x1xf32> to vector<8x8x8xf32>
    %226 = arith.divf %222, %225 : vector<8x8x8xf32>
    %227 = arith.truncf %226 : vector<8x8x8xf32> to vector<8x8x8xbf16>
    %228 = arith.truncf %210 : vector<8x8x64xf32> to vector<8x8x64xbf16>
    "tpu.trace_start"() <{level = 10 : i32, message = "bqk,bkd->bqd"}> : () -> ()
    %cst_94 = arith.constant dense<0.000000e+00> : vector<8x8x64xf32>
    %229 = tpu.matmul %227, %228, %cst_94 {dimension_numbers = #tpu.dot_dimension_numbers<[2], [1], [1], [2], [0, 0, 0, 1, 1, 2], [0], [0]>} : vector<8x8x8xbf16>, vector<8x8x64xbf16>, vector<8x8x64xf32> -> vector<8x8x64xf32>
    "tpu.trace_stop"() : () -> ()
    %230 = vector.shape_cast %229 : vector<8x8x64xf32> to vector<64x64xf32>
    %231 = arith.truncf %230 : vector<64x64xf32> to vector<64x64xbf16>
    %232 = vector.extract_strided_slice %196 {offsets = [0, 0], sizes = [64, 128], strides = [1, 1]} : vector<128x128xbf16> to vector<64x128xbf16>
    %cst_95 = arith.constant dense<0.000000e+00> : vector<64x128xf32>
    %233 = tpu.matmul %231, %232, %cst_95 {dimension_numbers = #tpu.dot_dimension_numbers<[1], [0], [0], [1], [0, 0, 1, 1], [], []>} : vector<64x64xbf16>, vector<64x128xbf16>, vector<64x128xf32> -> vector<64x128xf32>
    %234 = arith.addf %204, %233 : vector<64x128xf32>
    %235 = vector.extract_strided_slice %203 {offsets = [0, 64], sizes = [64, 64], strides = [1, 1]} : vector<64x384xf32> to vector<64x64xf32>
    %236 = vector.shape_cast %235 : vector<64x64xf32> to vector<8x8x64xf32>
    %237 = vector.extract_strided_slice %203 {offsets = [0, 192], sizes = [64, 64], strides = [1, 1]} : vector<64x384xf32> to vector<64x64xf32>
    %238 = vector.shape_cast %237 : vector<64x64xf32> to vector<8x8x64xf32>
    %239 = vector.extract_strided_slice %203 {offsets = [0, 320], sizes = [64, 64], strides = [1, 1]} : vector<64x384xf32> to vector<64x64xf32>
    %240 = vector.shape_cast %239 : vector<64x64xf32> to vector<8x8x64xf32>
    %241 = arith.truncf %236 : vector<8x8x64xf32> to vector<8x8x64xbf16>
    %242 = arith.truncf %238 : vector<8x8x64xf32> to vector<8x8x64xbf16>
    "tpu.trace_start"() <{level = 10 : i32, message = "bqd,bkd->bqk"}> : () -> ()
    %cst_96 = arith.constant dense<0.000000e+00> : vector<8x8x8xf32>
    %243 = tpu.matmul %241, %242, %cst_96 {dimension_numbers = #tpu.dot_dimension_numbers<[2], [2], [1], [1], [0, 0, 0, 1, 1, 1], [0], [0]>} : vector<8x8x64xbf16>, vector<8x8x64xbf16>, vector<8x8x8xf32> -> vector<8x8x8xf32>
    "tpu.trace_stop"() : () -> ()
    %cst_97 = arith.constant 1.250000e-01 : f32
    %244 = vector.broadcast %cst_97 : f32 to vector<8x8x8xf32>
    %245 = arith.mulf %243, %244 : vector<8x8x8xf32>
    %246 = vector.broadcast %30 : vector<8x1x8xf32> to vector<8x8x8xf32>
    %247 = arith.addf %245, %246 : vector<8x8x8xf32>
    %cst_98 = arith.constant dense<0xFF800000> : vector<8x8xf32>
    %248 = vector.multi_reduction <maximumf>, %247, %cst_98 [2] : vector<8x8x8xf32> to vector<8x8xf32>
    %249 = vector.shape_cast %248 : vector<8x8xf32> to vector<8x8x1xf32>
    %250 = vector.broadcast %249 : vector<8x8x1xf32> to vector<8x8x8xf32>
    %251 = arith.subf %247, %250 : vector<8x8x8xf32>
    %252 = math.exp %251 : vector<8x8x8xf32>
    %cst_99 = arith.constant dense<0.000000e+00> : vector<8x8xf32>
    %253 = vector.multi_reduction <add>, %252, %cst_99 [2] : vector<8x8x8xf32> to vector<8x8xf32>
    %254 = vector.shape_cast %253 : vector<8x8xf32> to vector<8x8x1xf32>
    %255 = vector.broadcast %254 : vector<8x8x1xf32> to vector<8x8x8xf32>
    %256 = arith.divf %252, %255 : vector<8x8x8xf32>
    %257 = arith.truncf %256 : vector<8x8x8xf32> to vector<8x8x8xbf16>
    %258 = arith.truncf %240 : vector<8x8x64xf32> to vector<8x8x64xbf16>
    "tpu.trace_start"() <{level = 10 : i32, message = "bqk,bkd->bqd"}> : () -> ()
    %cst_100 = arith.constant dense<0.000000e+00> : vector<8x8x64xf32>
    %259 = tpu.matmul %257, %258, %cst_100 {dimension_numbers = #tpu.dot_dimension_numbers<[2], [1], [1], [2], [0, 0, 0, 1, 1, 2], [0], [0]>} : vector<8x8x8xbf16>, vector<8x8x64xbf16>, vector<8x8x64xf32> -> vector<8x8x64xf32>
    "tpu.trace_stop"() : () -> ()
    %260 = vector.shape_cast %259 : vector<8x8x64xf32> to vector<64x64xf32>
    %261 = arith.truncf %260 : vector<64x64xf32> to vector<64x64xbf16>
    %262 = vector.extract_strided_slice %196 {offsets = [64, 0], sizes = [64, 128], strides = [1, 1]} : vector<128x128xbf16> to vector<64x128xbf16>
    %cst_101 = arith.constant dense<0.000000e+00> : vector<64x128xf32>
    %263 = tpu.matmul %261, %262, %cst_101 {dimension_numbers = #tpu.dot_dimension_numbers<[1], [0], [0], [1], [0, 0, 1, 1], [], []>} : vector<64x64xbf16>, vector<64x128xbf16>, vector<64x128xf32> -> vector<64x128xf32>
    %264 = arith.addf %234, %263 : vector<64x128xf32>
    %c1_102 = arith.constant 1 : index
    %c0_103 = arith.constant 0 : index
    %c0_104 = arith.constant 0 : index
    %265 = vector.load %arg9[%c1_102, %c0_103, %c0_104] : memref<2x1x128xf32, #tpu.memory_space<vmem>>, vector<1x1x128xf32>
    %266 = vector.shape_cast %265 : vector<1x1x128xf32> to vector<1x128xf32>
    %267 = vector.broadcast %266 : vector<1x128xf32> to vector<64x128xf32>
    %268 = arith.addf %264, %267 : vector<64x128xf32>
    %269 = vector.shape_cast %268 : vector<64x128xf32> to vector<8x8x128xf32>
    %270 = arith.addf %269, %192 : vector<8x8x128xf32>
    %c1_105 = arith.constant 1 : index
    %c0_106 = arith.constant 0 : index
    %c0_107 = arith.constant 0 : index
    %271 = vector.load %arg10[%c1_105, %c0_106, %c0_107] : memref<2x1x128xf32, #tpu.memory_space<vmem>>, vector<1x1x128xf32>
    %272 = vector.shape_cast %271 : vector<1x1x128xf32> to vector<1x128xf32>
    %c1_108 = arith.constant 1 : index
    %c0_109 = arith.constant 0 : index
    %c0_110 = arith.constant 0 : index
    %273 = vector.load %arg11[%c1_108, %c0_109, %c0_110] : memref<2x1x128xf32, #tpu.memory_space<vmem>>, vector<1x1x128xf32>
    %274 = vector.shape_cast %273 : vector<1x1x128xf32> to vector<1x128xf32>
    %cst_111 = arith.constant dense<0.000000e+00> : vector<8x8xf32>
    %275 = vector.multi_reduction <add>, %270, %cst_111 [2] : vector<8x8x128xf32> to vector<8x8xf32>
    %276 = vector.shape_cast %275 : vector<8x8xf32> to vector<8x8x1xf32>
    %cst_112 = arith.constant 1.280000e+02 : f32
    %277 = vector.broadcast %cst_112 : f32 to vector<8x8x1xf32>
    %278 = arith.divf %276, %277 : vector<8x8x1xf32>
    %279 = vector.broadcast %278 : vector<8x8x1xf32> to vector<8x8x128xf32>
    %280 = arith.subf %270, %279 : vector<8x8x128xf32>
    %281 = arith.mulf %280, %280 : vector<8x8x128xf32>
    %cst_113 = arith.constant dense<0.000000e+00> : vector<8x8xf32>
    %282 = vector.multi_reduction <add>, %281, %cst_113 [2] : vector<8x8x128xf32> to vector<8x8xf32>
    %283 = vector.shape_cast %282 : vector<8x8xf32> to vector<8x8x1xf32>
    %cst_114 = arith.constant 1.280000e+02 : f32
    %284 = vector.broadcast %cst_114 : f32 to vector<8x8x1xf32>
    %285 = arith.divf %283, %284 : vector<8x8x1xf32>
    %cst_115 = arith.constant 9.99999996E-13 : f32
    %286 = vector.broadcast %cst_115 : f32 to vector<8x8x1xf32>
    %287 = arith.addf %285, %286 : vector<8x8x1xf32>
    %288 = math.rsqrt %287 : vector<8x8x1xf32>
    %289 = vector.broadcast %288 : vector<8x8x1xf32> to vector<8x8x128xf32>
    %290 = arith.mulf %280, %289 : vector<8x8x128xf32>
    %291 = vector.shape_cast %272 : vector<1x128xf32> to vector<1x1x128xf32>
    %292 = vector.broadcast %291 : vector<1x1x128xf32> to vector<8x8x128xf32>
    %293 = arith.mulf %290, %292 : vector<8x8x128xf32>
    %294 = vector.shape_cast %274 : vector<1x128xf32> to vector<1x1x128xf32>
    %295 = vector.broadcast %294 : vector<1x1x128xf32> to vector<8x8x128xf32>
    %296 = arith.addf %293, %295 : vector<8x8x128xf32>
    %297 = vector.shape_cast %296 : vector<8x8x128xf32> to vector<64x128xf32>
    %298 = arith.truncf %297 : vector<64x128xf32> to vector<64x128xbf16>
    %c1_116 = arith.constant 1 : index
    %c0_117 = arith.constant 0 : index
    %c0_118 = arith.constant 0 : index
    %299 = vector.load %arg12[%c1_116, %c0_117, %c0_118] : memref<2x128x256xbf16, #tpu.memory_space<vmem>>, vector<1x128x256xbf16>
    %300 = vector.shape_cast %299 : vector<1x128x256xbf16> to vector<128x256xbf16>
    %cst_119 = arith.constant dense<0.000000e+00> : vector<64x256xf32>
    %301 = tpu.matmul %298, %300, %cst_119 {dimension_numbers = #tpu.dot_dimension_numbers<[1], [0], [0], [1], [0, 0, 1, 1], [], []>} : vector<64x128xbf16>, vector<128x256xbf16>, vector<64x256xf32> -> vector<64x256xf32>
    %c1_120 = arith.constant 1 : index
    %c0_121 = arith.constant 0 : index
    %c0_122 = arith.constant 0 : index
    %302 = vector.load %arg13[%c1_120, %c0_121, %c0_122] : memref<2x1x256xf32, #tpu.memory_space<vmem>>, vector<1x1x256xf32>
    %303 = vector.shape_cast %302 : vector<1x1x256xf32> to vector<1x256xf32>
    %304 = vector.broadcast %303 : vector<1x256xf32> to vector<64x256xf32>
    %305 = arith.addf %301, %304 : vector<64x256xf32>
    %cst_123 = arith.constant 5.000000e-01 : f32
    %306 = vector.broadcast %cst_123 : f32 to vector<64x256xf32>
    %307 = arith.mulf %306, %305 : vector<64x256xf32>
    %cst_124 = arith.constant 4.471500e-02 : f32
    %308 = vector.broadcast %cst_124 : f32 to vector<64x256xf32>
    %309 = arith.mulf %308, %305 : vector<64x256xf32>
    %310 = arith.mulf %309, %305 : vector<64x256xf32>
    %311 = arith.mulf %310, %305 : vector<64x256xf32>
    %312 = arith.addf %305, %311 : vector<64x256xf32>
    %cst_125 = arith.constant 0.797884583 : f32
    %313 = vector.broadcast %cst_125 : f32 to vector<64x256xf32>
    %314 = arith.mulf %313, %312 : vector<64x256xf32>
    %315 = math.tanh %314 : vector<64x256xf32>
    %cst_126 = arith.constant 1.000000e+00 : f32
    %316 = vector.broadcast %cst_126 : f32 to vector<64x256xf32>
    %317 = arith.addf %316, %315 : vector<64x256xf32>
    %318 = arith.mulf %307, %317 : vector<64x256xf32>
    %319 = arith.truncf %318 : vector<64x256xf32> to vector<64x256xbf16>
    %c1_127 = arith.constant 1 : index
    %c0_128 = arith.constant 0 : index
    %c0_129 = arith.constant 0 : index
    %320 = vector.load %arg14[%c1_127, %c0_128, %c0_129] : memref<2x256x128xbf16, #tpu.memory_space<vmem>>, vector<1x256x128xbf16>
    %321 = vector.shape_cast %320 : vector<1x256x128xbf16> to vector<256x128xbf16>
    %cst_130 = arith.constant dense<0.000000e+00> : vector<64x128xf32>
    %322 = tpu.matmul %319, %321, %cst_130 {dimension_numbers = #tpu.dot_dimension_numbers<[1], [0], [0], [1], [0, 0, 1, 1], [], []>} : vector<64x256xbf16>, vector<256x128xbf16>, vector<64x128xf32> -> vector<64x128xf32>
    %c1_131 = arith.constant 1 : index
    %c0_132 = arith.constant 0 : index
    %c0_133 = arith.constant 0 : index
    %323 = vector.load %arg15[%c1_131, %c0_132, %c0_133] : memref<2x1x128xf32, #tpu.memory_space<vmem>>, vector<1x1x128xf32>
    %324 = vector.shape_cast %323 : vector<1x1x128xf32> to vector<1x128xf32>
    %325 = vector.broadcast %324 : vector<1x128xf32> to vector<64x128xf32>
    %326 = arith.addf %322, %325 : vector<64x128xf32>
    %327 = vector.shape_cast %326 : vector<64x128xf32> to vector<8x8x128xf32>
    %328 = arith.addf %327, %296 : vector<8x8x128xf32>
    %c1_134 = arith.constant 1 : index
    %c0_135 = arith.constant 0 : index
    %c0_136 = arith.constant 0 : index
    %329 = vector.load %arg16[%c1_134, %c0_135, %c0_136] : memref<2x1x128xf32, #tpu.memory_space<vmem>>, vector<1x1x128xf32>
    %330 = vector.shape_cast %329 : vector<1x1x128xf32> to vector<1x128xf32>
    %c1_137 = arith.constant 1 : index
    %c0_138 = arith.constant 0 : index
    %c0_139 = arith.constant 0 : index
    %331 = vector.load %arg17[%c1_137, %c0_138, %c0_139] : memref<2x1x128xf32, #tpu.memory_space<vmem>>, vector<1x1x128xf32>
    %332 = vector.shape_cast %331 : vector<1x1x128xf32> to vector<1x128xf32>
    %cst_140 = arith.constant dense<0.000000e+00> : vector<8x8xf32>
    %333 = vector.multi_reduction <add>, %328, %cst_140 [2] : vector<8x8x128xf32> to vector<8x8xf32>
    %334 = vector.shape_cast %333 : vector<8x8xf32> to vector<8x8x1xf32>
    %cst_141 = arith.constant 1.280000e+02 : f32
    %335 = vector.broadcast %cst_141 : f32 to vector<8x8x1xf32>
    %336 = arith.divf %334, %335 : vector<8x8x1xf32>
    %337 = vector.broadcast %336 : vector<8x8x1xf32> to vector<8x8x128xf32>
    %338 = arith.subf %328, %337 : vector<8x8x128xf32>
    %339 = arith.mulf %338, %338 : vector<8x8x128xf32>
    %cst_142 = arith.constant dense<0.000000e+00> : vector<8x8xf32>
    %340 = vector.multi_reduction <add>, %339, %cst_142 [2] : vector<8x8x128xf32> to vector<8x8xf32>
    %341 = vector.shape_cast %340 : vector<8x8xf32> to vector<8x8x1xf32>
    %cst_143 = arith.constant 1.280000e+02 : f32
    %342 = vector.broadcast %cst_143 : f32 to vector<8x8x1xf32>
    %343 = arith.divf %341, %342 : vector<8x8x1xf32>
    %cst_144 = arith.constant 9.99999996E-13 : f32
    %344 = vector.broadcast %cst_144 : f32 to vector<8x8x1xf32>
    %345 = arith.addf %343, %344 : vector<8x8x1xf32>
    %346 = math.rsqrt %345 : vector<8x8x1xf32>
    %347 = vector.broadcast %346 : vector<8x8x1xf32> to vector<8x8x128xf32>
    %348 = arith.mulf %338, %347 : vector<8x8x128xf32>
    %349 = vector.shape_cast %330 : vector<1x128xf32> to vector<1x1x128xf32>
    %350 = vector.broadcast %349 : vector<1x1x128xf32> to vector<8x8x128xf32>
    %351 = arith.mulf %348, %350 : vector<8x8x128xf32>
    %352 = vector.shape_cast %332 : vector<1x128xf32> to vector<1x1x128xf32>
    %353 = vector.broadcast %352 : vector<1x1x128xf32> to vector<8x8x128xf32>
    %354 = arith.addf %351, %353 : vector<8x8x128xf32>
    %355 = vector.extract_strided_slice %354 {offsets = [0, 0, 0], sizes = [8, 1, 128], strides = [1, 1, 1]} : vector<8x8x128xf32> to vector<8x1x128xf32>
    %356 = vector.shape_cast %355 : vector<8x1x128xf32> to vector<8x128xf32>
    %357 = arith.truncf %356 : vector<8x128xf32> to vector<8x128xbf16>
    %c0_145 = arith.constant 0 : index
    %c0_146 = arith.constant 0 : index
    %358 = vector.load %arg18[%c0_145, %c0_146] : memref<128x128xbf16, #tpu.memory_space<vmem>>, vector<128x128xbf16>
    %cst_147 = arith.constant dense<0.000000e+00> : vector<8x128xf32>
    %359 = tpu.matmul %357, %358, %cst_147 {dimension_numbers = #tpu.dot_dimension_numbers<[1], [0], [0], [1], [0, 0, 1, 1], [], []>} : vector<8x128xbf16>, vector<128x128xbf16>, vector<8x128xf32> -> vector<8x128xf32>
    %c0_148 = arith.constant 0 : index
    %c0_149 = arith.constant 0 : index
    %360 = vector.load %arg19[%c0_148, %c0_149] : memref<1x128xf32, #tpu.memory_space<vmem>>, vector<1x128xf32>
    %361 = vector.broadcast %360 : vector<1x128xf32> to vector<8x128xf32>
    %362 = arith.addf %359, %361 : vector<8x128xf32>
    %363 = math.tanh %362 : vector<8x128xf32>
    %364 = arith.truncf %363 : vector<8x128xf32> to vector<8x128xbf16>
    %c0_150 = arith.constant 0 : index
    %c0_151 = arith.constant 0 : index
    %365 = vector.load %arg22[%c0_150, %c0_151] : memref<128x128xbf16, #tpu.memory_space<vmem>>, vector<128x128xbf16>
    %cst_152 = arith.constant dense<0.000000e+00> : vector<8x128xf32>
    %366 = tpu.matmul %364, %365, %cst_152 {dimension_numbers = #tpu.dot_dimension_numbers<[1], [0], [0], [1], [0, 0, 1, 1], [], []>} : vector<8x128xbf16>, vector<128x128xbf16>, vector<8x128xf32> -> vector<8x128xf32>
    %c0_153 = arith.constant 0 : index
    %c0_154 = arith.constant 0 : index
    %367 = vector.load %arg23[%c0_153, %c0_154] : memref<1x128xf32, #tpu.memory_space<vmem>>, vector<1x128xf32>
    %368 = vector.broadcast %367 : vector<1x128xf32> to vector<8x128xf32>
    %369 = arith.addf %366, %368 : vector<8x128xf32>
    %c0_155 = arith.constant 0 : index
    %c0_156 = arith.constant 0 : index
    %370 = vector.load %arg25[%c0_155, %c0_156] : memref<8x128xf32, #tpu.memory_space<vmem>>, vector<8x128xf32>
    tpu.vector_store %arg25[%c0_155, %c0_156], %369 {strides = array<i32>} : memref<8x128xf32, #tpu.memory_space<vmem>>, vector<8x128xf32>,
    %371 = vector.shape_cast %354 : vector<8x8x128xf32> to vector<64x128xf32>
    %372 = arith.truncf %371 : vector<64x128xf32> to vector<64x128xbf16>
    %c0_157 = arith.constant 0 : index
    %c0_158 = arith.constant 0 : index
    %373 = vector.load %arg20[%c0_157, %c0_158] : memref<128x128xbf16, #tpu.memory_space<vmem>>, vector<128x128xbf16>
    %cst_159 = arith.constant dense<0.000000e+00> : vector<64x128xf32>
    %374 = tpu.matmul %372, %373, %cst_159 {dimension_numbers = #tpu.dot_dimension_numbers<[1], [0], [0], [1], [0, 0, 1, 1], [], []>} : vector<64x128xbf16>, vector<128x128xbf16>, vector<64x128xf32> -> vector<64x128xf32>
    %c0_160 = arith.constant 0 : index
    %c0_161 = arith.constant 0 : index
    %375 = vector.load %arg21[%c0_160, %c0_161] : memref<1x128xf32, #tpu.memory_space<vmem>>, vector<1x128xf32>
    %376 = vector.broadcast %375 : vector<1x128xf32> to vector<64x128xf32>
    %377 = arith.addf %374, %376 : vector<64x128xf32>
    %378 = vector.shape_cast %377 : vector<64x128xf32> to vector<8x8x128xf32>
    %c0_162 = arith.constant 0 : index
    %c0_163 = arith.constant 0 : index
    %c0_164 = arith.constant 0 : index
    %379 = vector.load %arg24[%c0_162, %c0_163, %c0_164] : memref<8x8x128xf32, #tpu.memory_space<vmem>>, vector<8x8x128xf32>
    tpu.vector_store %arg24[%c0_162, %c0_163, %c0_164], %378 {strides = array<i32>} : memref<8x8x128xf32, #tpu.memory_space<vmem>>, vector<8x8x128xf32>,
    return
  }
  func.func @transform_0(%arg0: i32) -> (i32, i32, i32) {
    %c0_i32 = arith.constant 0 : i32
    %c0_i32_0 = arith.constant 0 : i32
    %c0_i32_1 = arith.constant 0 : i32
    return %arg0, %c0_i32, %c0_i32_0 : i32, i32, i32
  }
  func.func @transform_1(%arg0: i32) -> (i32, i32) {
    %c0_i32 = arith.constant 0 : i32
    %c0_i32_0 = arith.constant 0 : i32
    %c0_i32_1 = arith.constant 0 : i32
    return %c0_i32, %c0_i32_0 : i32, i32
  }
  func.func @transform_2(%arg0: i32) -> (i32, i32) {
    %c0_i32 = arith.constant 0 : i32
    %c0_i32_0 = arith.constant 0 : i32
    return %arg0, %c0_i32 : i32, i32
  }
  func.func @transform_3(%arg0: i32) -> (i32, i32) {
    %c0_i32 = arith.constant 0 : i32
    %c0_i32_0 = arith.constant 0 : i32
    %c0_i32_1 = arith.constant 0 : i32
    return %c0_i32, %c0_i32_0 : i32, i32
  }
  func.func @transform_4(%arg0: i32) -> (i32, i32) {
    %c0_i32 = arith.constant 0 : i32
    %c0_i32_0 = arith.constant 0 : i32
    %c0_i32_1 = arith.constant 0 : i32
    return %c0_i32, %c0_i32_0 : i32, i32
  }
  func.func @transform_5(%arg0: i32) -> (i32, i32, i32) {
    %c0_i32 = arith.constant 0 : i32
    %c0_i32_0 = arith.constant 0 : i32
    %c0_i32_1 = arith.constant 0 : i32
    %c0_i32_2 = arith.constant 0 : i32
    return %c0_i32, %c0_i32_0, %c0_i32_1 : i32, i32, i32
  }
  func.func @transform_6(%arg0: i32) -> (i32, i32, i32) {
    %c0_i32 = arith.constant 0 : i32
    %c0_i32_0 = arith.constant 0 : i32
    %c0_i32_1 = arith.constant 0 : i32
    %c0_i32_2 = arith.constant 0 : i32
    return %c0_i32, %c0_i32_0, %c0_i32_1 : i32, i32, i32
  }
  func.func @transform_7(%arg0: i32) -> (i32, i32, i32) {
    %c0_i32 = arith.constant 0 : i32
    %c0_i32_0 = arith.constant 0 : i32
    %c0_i32_1 = arith.constant 0 : i32
    %c0_i32_2 = arith.constant 0 : i32
    return %c0_i32, %c0_i32_0, %c0_i32_1 : i32, i32, i32
  }
  func.func @transform_8(%arg0: i32) -> (i32, i32, i32) {
    %c0_i32 = arith.constant 0 : i32
    %c0_i32_0 = arith.constant 0 : i32
    %c0_i32_1 = arith.constant 0 : i32
    %c0_i32_2 = arith.constant 0 : i32
    return %c0_i32, %c0_i32_0, %c0_i32_1 : i32, i32, i32
  }
  func.func @transform_9(%arg0: i32) -> (i32, i32, i32) {
    %c0_i32 = arith.constant 0 : i32
    %c0_i32_0 = arith.constant 0 : i32
    %c0_i32_1 = arith.constant 0 : i32
    %c0_i32_2 = arith.constant 0 : i32
    return %c0_i32, %c0_i32_0, %c0_i32_1 : i32, i32, i32
  }
  func.func @transform_10(%arg0: i32) -> (i32, i32, i32) {
    %c0_i32 = arith.constant 0 : i32
    %c0_i32_0 = arith.constant 0 : i32
    %c0_i32_1 = arith.constant 0 : i32
    %c0_i32_2 = arith.constant 0 : i32
    return %c0_i32, %c0_i32_0, %c0_i32_1 : i32, i32, i32
  }
  func.func @transform_11(%arg0: i32) -> (i32, i32, i32) {
    %c0_i32 = arith.constant 0 : i32
    %c0_i32_0 = arith.constant 0 : i32
    %c0_i32_1 = arith.constant 0 : i32
    %c0_i32_2 = arith.constant 0 : i32
    return %c0_i32, %c0_i32_0, %c0_i32_1 : i32, i32, i32
  }
  func.func @transform_12(%arg0: i32) -> (i32, i32, i32) {
    %c0_i32 = arith.constant 0 : i32
    %c0_i32_0 = arith.constant 0 : i32
    %c0_i32_1 = arith.constant 0 : i32
    %c0_i32_2 = arith.constant 0 : i32
    return %c0_i32, %c0_i32_0, %c0_i32_1 : i32, i32, i32
  }
  func.func @transform_13(%arg0: i32) -> (i32, i32, i32) {
    %c0_i32 = arith.constant 0 : i32
    %c0_i32_0 = arith.constant 0 : i32
    %c0_i32_1 = arith.constant 0 : i32
    %c0_i32_2 = arith.constant 0 : i32
    return %c0_i32, %c0_i32_0, %c0_i32_1 : i32, i32, i32
  }
  func.func @transform_14(%arg0: i32) -> (i32, i32, i32) {
    %c0_i32 = arith.constant 0 : i32
    %c0_i32_0 = arith.constant 0 : i32
    %c0_i32_1 = arith.constant 0 : i32
    %c0_i32_2 = arith.constant 0 : i32
    return %c0_i32, %c0_i32_0, %c0_i32_1 : i32, i32, i32
  }
  func.func @transform_15(%arg0: i32) -> (i32, i32, i32) {
    %c0_i32 = arith.constant 0 : i32
    %c0_i32_0 = arith.constant 0 : i32
    %c0_i32_1 = arith.constant 0 : i32
    %c0_i32_2 = arith.constant 0 : i32
    return %c0_i32, %c0_i32_0, %c0_i32_1 : i32, i32, i32
  }
  func.func @transform_16(%arg0: i32) -> (i32, i32, i32) {
    %c0_i32 = arith.constant 0 : i32
    %c0_i32_0 = arith.constant 0 : i32
    %c0_i32_1 = arith.constant 0 : i32
    %c0_i32_2 = arith.constant 0 : i32
    return %c0_i32, %c0_i32_0, %c0_i32_1 : i32, i32, i32
  }
  func.func @transform_17(%arg0: i32) -> (i32, i32) {
    %c0_i32 = arith.constant 0 : i32
    %c0_i32_0 = arith.constant 0 : i32
    %c0_i32_1 = arith.constant 0 : i32
    return %c0_i32, %c0_i32_0 : i32, i32
  }
  func.func @transform_18(%arg0: i32) -> (i32, i32) {
    %c0_i32 = arith.constant 0 : i32
    %c0_i32_0 = arith.constant 0 : i32
    %c0_i32_1 = arith.constant 0 : i32
    return %c0_i32, %c0_i32_0 : i32, i32
  }
  func.func @transform_19(%arg0: i32) -> (i32, i32) {
    %c0_i32 = arith.constant 0 : i32
    %c0_i32_0 = arith.constant 0 : i32
    %c0_i32_1 = arith.constant 0 : i32
    return %c0_i32, %c0_i32_0 : i32, i32
  }
  func.func @transform_20(%arg0: i32) -> (i32, i32) {
    %c0_i32 = arith.constant 0 : i32
    %c0_i32_0 = arith.constant 0 : i32
    %c0_i32_1 = arith.constant 0 : i32
    return %c0_i32, %c0_i32_0 : i32, i32
  }
  func.func @transform_21(%arg0: i32) -> (i32, i32) {
    %c0_i32 = arith.constant 0 : i32
    %c0_i32_0 = arith.constant 0 : i32
    %c0_i32_1 = arith.constant 0 : i32
    return %c0_i32, %c0_i32_0 : i32, i32
  }
  func.func @transform_22(%arg0: i32) -> (i32, i32) {
    %c0_i32 = arith.constant 0 : i32
    %c0_i32_0 = arith.constant 0 : i32
    %c0_i32_1 = arith.constant 0 : i32
    return %c0_i32, %c0_i32_0 : i32, i32
  }
  func.func @transform_23(%arg0: i32) -> (i32, i32, i32) {
    %c0_i32 = arith.constant 0 : i32
    %c0_i32_0 = arith.constant 0 : i32
    %c0_i32_1 = arith.constant 0 : i32
    return %arg0, %c0_i32, %c0_i32_0 : i32, i32, i32
  }
  func.func @transform_24(%arg0: i32) -> (i32, i32) {
    %c0_i32 = arith.constant 0 : i32
    %c0_i32_0 = arith.constant 0 : i32
    return %arg0, %c0_i32 : i32, i32
  }
}

</mosaic_0001>

<llo_original>
// kernel: bert_ias_forward.1
$region0: #{bert_ias_forward.1}
  #allocation0 [shape = 'u32[]', space=smem, size = 0x4, offset = 0x4, fixed_abs, tag = 'smem constant byte address 0x4 - core index']
  #allocation1 [shape = 'u32[144,128]{1,0:T(1,128)}', space=vmem, size = 0x12000, scoped, tag = 'internal scratch']
  %s0 = inlined_call_operand.vmem [shape: f32[8,8,128], index: 0, kind: input, shape index: {}]
  %s1 = inlined_call_operand.vmem [shape: f32[8,128], index: 1, kind: input, shape index: {}]
  %s2 = inlined_call_operand.vmem [shape: f32[8,8], index: 2, kind: input, shape index: {}]
  %s3 = inlined_call_operand.vmem [shape: f32[1,128], index: 3, kind: input, shape index: {}]
  %s4 = inlined_call_operand.vmem [shape: f32[1,128], index: 4, kind: input, shape index: {}]
  %s5 = inlined_call_operand.vmem [shape: bf16[2,128,384], index: 5, kind: input, shape index: {}]
  %s6 = inlined_call_operand.vmem [shape: f32[2,1,384], index: 6, kind: input, shape index: {}]
  %s7 = inlined_call_operand.vmem [shape: bf16[2,128,128], index: 7, kind: input, shape index: {}]
  %s8 = inlined_call_operand.vmem [shape: f32[2,1,128], index: 8, kind: input, shape index: {}]
  %s9 = inlined_call_operand.vmem [shape: f32[2,1,128], index: 9, kind: input, shape index: {}, may-alias: {9,15}]
  %s10 = inlined_call_operand.vmem [shape: f32[2,1,128], index: 10, kind: input, shape index: {}, may-alias: {10,16}]
  %s11 = inlined_call_operand.vmem [shape: bf16[2,128,256], index: 11, kind: input, shape index: {}]
  %s12 = inlined_call_operand.vmem [shape: f32[2,1,256], index: 12, kind: input, shape index: {}]
  %s13 = inlined_call_operand.vmem [shape: bf16[2,256,128], index: 13, kind: input, shape index: {}]
  %s14 = inlined_call_operand.vmem [shape: f32[2,1,128], index: 14, kind: input, shape index: {}]
  %s15 = inlined_call_operand.vmem [shape: f32[2,1,128], index: 15, kind: input, shape index: {}, may-alias: {9,15}]
  %s16 = inlined_call_operand.vmem [shape: f32[2,1,128], index: 16, kind: input, shape index: {}, may-alias: {10,16}]
  %s17 = inlined_call_operand.vmem [shape: bf16[128,128], index: 17, kind: input, shape index: {}]
  %s18 = inlined_call_operand.vmem [shape: f32[1,128], index: 18, kind: input, shape index: {}]
  %s19 = inlined_call_operand.vmem [shape: bf16[128,128], index: 19, kind: input, shape index: {}]
  %s20 = inlined_call_operand.vmem [shape: f32[1,128], index: 20, kind: input, shape index: {}]
  %s21 = inlined_call_operand.vmem [shape: bf16[128,128], index: 21, kind: input, shape index: {}]
  %s22 = inlined_call_operand.vmem [shape: f32[1,128], index: 22, kind: input, shape index: {}]
  %s23 = inlined_call_operand.vmem [shape: f32[8,8,128], index: 23, kind: output, shape index: {0}]
  %s24 = inlined_call_operand.vmem [shape: f32[8,128], index: 24, kind: output, shape index: {1}]
  %25 = xla_tuple %s23, %s24
  %s26 = sld [smem:[#allocation0]]
  $region110: #{bert_ias_forward.1} parent=0
    _
  %s28 = ssub.s32 1, %s26
  %s29 = scalar_select 0, %s28, %s26
  // Predicated region
  $region2: #{bert_ias_forward.1} parent=0 // pred_check
    _
  $region3: #{bert_ias_forward.1} parent=0 // pred_check_branch
    %31 = sbr.rel (0) target = $region5
  $region4: #{bert_ias_forward.1} parent=0 // pred_region
    _
  $region5: #{bert_ias_forward.1} parent=0 // pred_fallthru
    _
  // Predicated region
  $region6: #{bert_ias_forward.1} parent=0 // pred_check
    _
  $region7: #{bert_ias_forward.1} parent=0 // pred_check_branch
    %33 = sbr.rel (0) target = $region9
  $region8: #{bert_ias_forward.1} parent=0 // pred_region
    _
  $region9: #{bert_ias_forward.1} parent=0 // pred_fallthru
    _
  // Predicated region
  $region10: #{bert_ias_forward.1} parent=0 // pred_check
    _
  $region11: #{bert_ias_forward.1} parent=0 // pred_check_branch
    %35 = sbr.rel (0) target = $region13
  $region12: #{bert_ias_forward.1} parent=0 // pred_region
    _
  $region13: #{bert_ias_forward.1} parent=0 // pred_fallthru
    _
  // Predicated region
  $region14: #{bert_ias_forward.1} parent=0 // pred_check
    _
  $region15: #{bert_ias_forward.1} parent=0 // pred_check_branch
    %37 = sbr.rel (0) target = $region17
  $region16: #{bert_ias_forward.1} parent=0 // pred_region
    _
  $region17: #{bert_ias_forward.1} parent=0 // pred_fallthru
    _
  // Predicated region
  $region18: #{bert_ias_forward.1} parent=0 // pred_check
    _
  $region19: #{bert_ias_forward.1} parent=0 // pred_check_branch
    %39 = sbr.rel (0) target = $region21
  $region20: #{bert_ias_forward.1} parent=0 // pred_region
    _
  $region21: #{bert_ias_forward.1} parent=0 // pred_fallthru
    _
  // Predicated region
  $region22: #{bert_ias_forward.1} parent=0 // pred_check
    _
  $region23: #{bert_ias_forward.1} parent=0 // pred_check_branch
    %41 = sbr.rel (0) target = $region25
  $region24: #{bert_ias_forward.1} parent=0 // pred_region
    _
  $region25: #{bert_ias_forward.1} parent=0 // pred_fallthru
    _
  // Predicated region
  $region26: #{bert_ias_forward.1} parent=0 // pred_check
    _
  $region27: #{bert_ias_forward.1} parent=0 // pred_check_branch
    %43 = sbr.rel (0) target = $region29
  $region28: #{bert_ias_forward.1} parent=0 // pred_region
    _
  $region29: #{bert_ias_forward.1} parent=0 // pred_fallthru
    _
  // Predicated region
  $region30: #{bert_ias_forward.1} parent=0 // pred_check
    _
  $region31: #{bert_ias_forward.1} parent=0 // pred_check_branch
    %45 = sbr.rel (0) target = $region33
  $region32: #{bert_ias_forward.1} parent=0 // pred_region
    _
  $region33: #{bert_ias_forward.1} parent=0 // pred_fallthru
    _
  // Predicated region
  $region34: #{bert_ias_forward.1} parent=0 // pred_check
    _
  $region35: #{bert_ias_forward.1} parent=0 // pred_check_branch
    %47 = sbr.rel (0) target = $region37
  $region36: #{bert_ias_forward.1} parent=0 // pred_region
    _
  $region37: #{bert_ias_forward.1} parent=0 // pred_fallthru
    _
  // Predicated region
  $region38: #{bert_ias_forward.1} parent=0 // pred_check
    _
  $region39: #{bert_ias_forward.1} parent=0 // pred_check_branch
    %49 = sbr.rel (0) target = $region41
  $region40: #{bert_ias_forward.1} parent=0 // pred_region
    _
  $region41: #{bert_ias_forward.1} parent=0 // pred_fallthru
    _
  // Predicated region
  $region42: #{bert_ias_forward.1} parent=0 // pred_check
    _
  $region43: #{bert_ias_forward.1} parent=0 // pred_check_branch
    %51 = sbr.rel (0) target = $region45
  $region44: #{bert_ias_forward.1} parent=0 // pred_region
    _
  $region45: #{bert_ias_forward.1} parent=0 // pred_fallthru
    _
  // Predicated region
  $region46: #{bert_ias_forward.1} parent=0 // pred_check
    _
  $region47: #{bert_ias_forward.1} parent=0 // pred_check_branch
    %53 = sbr.rel (0) target = $region49
  $region48: #{bert_ias_forward.1} parent=0 // pred_region
    _
  $region49: #{bert_ias_forward.1} parent=0 // pred_fallthru
    _
  // Predicated region
  $region50: #{bert_ias_forward.1} parent=0 // pred_check
    _
  $region51: #{bert_ias_forward.1} parent=0 // pred_check_branch
    %55 = sbr.rel (0) target = $region53
  $region52: #{bert_ias_forward.1} parent=0 // pred_region
    _
  $region53: #{bert_ias_forward.1} parent=0 // pred_fallthru
    _
  // Predicated region
  $region54: #{bert_ias_forward.1} parent=0 // pred_check
    _
  $region55: #{bert_ias_forward.1} parent=0 // pred_check_branch
    %57 = sbr.rel (0) target = $region57
  $region56: #{bert_ias_forward.1} parent=0 // pred_region
    _
  $region57: #{bert_ias_forward.1} parent=0 // pred_fallthru
    _
  // Predicated region
  $region58: #{bert_ias_forward.1} parent=0 // pred_check
    _
  $region59: #{bert_ias_forward.1} parent=0 // pred_check_branch
    %59 = sbr.rel (0) target = $region61
  $region60: #{bert_ias_forward.1} parent=0 // pred_region
    _
  $region61: #{bert_ias_forward.1} parent=0 // pred_fallthru
    _
  // Predicated region
  $region62: #{bert_ias_forward.1} parent=0 // pred_check
    _
  $region63: #{bert_ias_forward.1} parent=0 // pred_check_branch
    %61 = sbr.rel (0) target = $region65
  $region64: #{bert_ias_forward.1} parent=0 // pred_region
    _
  $region65: #{bert_ias_forward.1} parent=0 // pred_fallthru
    _
  // Predicated region
  $region66: #{bert_ias_forward.1} parent=0 // pred_check
    _
  $region67: #{bert_ias_forward.1} parent=0 // pred_check_branch
    %63 = sbr.rel (0) target = $region69
  $region68: #{bert_ias_forward.1} parent=0 // pred_region
    _
  $region69: #{bert_ias_forward.1} parent=0 // pred_fallthru
    _
  // Predicated region
  $region70: #{bert_ias_forward.1} parent=0 // pred_check
    _
  $region71: #{bert_ias_forward.1} parent=0 // pred_check_branch
    %65 = sbr.rel (0) target = $region73
  $region72: #{bert_ias_forward.1} parent=0 // pred_region
    _
  $region73: #{bert_ias_forward.1} parent=0 // pred_fallthru
    _
  // Predicated region
  $region74: #{bert_ias_forward.1} parent=0 // pred_check
    _
  $region75: #{bert_ias_forward.1} parent=0 // pred_check_branch
    %67 = sbr.rel (0) target = $region77
  $region76: #{bert_ias_forward.1} parent=0 // pred_region
    _
  $region77: #{bert_ias_forward.1} parent=0 // pred_fallthru
    _
  // Predicated region
  $region78: #{bert_ias_forward.1} parent=0 // pred_check
    _
  $region79: #{bert_ias_forward.1} parent=0 // pred_check_branch
    %69 = sbr.rel (0) target = $region81
  $region80: #{bert_ias_forward.1} parent=0 // pred_region
    _
  $region81: #{bert_ias_forward.1} parent=0 // pred_fallthru
    _
  // Predicated region
  $region82: #{bert_ias_forward.1} parent=0 // pred_check
    _
  $region83: #{bert_ias_forward.1} parent=0 // pred_check_branch
    %71 = sbr.rel (0) target = $region85
  $region84: #{bert_ias_forward.1} parent=0 // pred_region
    _
  $region85: #{bert_ias_forward.1} parent=0 // pred_fallthru
    _
  // Predicated region
  $region86: #{bert_ias_forward.1} parent=0 // pred_check
    _
  $region87: #{bert_ias_forward.1} parent=0 // pred_check_branch
    %73 = sbr.rel (0) target = $region89
  $region88: #{bert_ias_forward.1} parent=0 // pred_region
    _
  $region89: #{bert_ias_forward.1} parent=0 // pred_fallthru
    _
  // Predicated region
  $region90: #{bert_ias_forward.1} parent=0 // pred_check
    _
  $region91: #{bert_ias_forward.1} parent=0 // pred_check_branch
    %75 = sbr.rel (0) target = $region93
  $region92: #{bert_ias_forward.1} parent=0 // pred_region
    _
  $region93: #{bert_ias_forward.1} parent=0 // pred_fallthru
    _
  %v77 = vld [vmem:[%s0] sm:$0xff]
  %v78 = vld [vmem:[%s0 + $0x8] sm:$0xff]
  %v79 = vld [vmem:[%s0 + $0x10] sm:$0xff]
  %v80 = vld [vmem:[%s0 + $0x18] sm:$0xff]
  %v81 = vld [vmem:[%s0 + $0x20] sm:$0xff]
  %v82 = vld [vmem:[%s0 + $0x28] sm:$0xff]
  %v83 = vld [vmem:[%s0 + $0x30] sm:$0xff]
  %v84 = vld [vmem:[%s0 + $0x38] sm:$0xff]
  %v85 = vld [vmem:[%s1] sm:$0xff]
  %v86 = vadd.f32 %v77, %v85
  %v87 = vadd.f32 %v78, %v85
  %v88 = vadd.f32 %v79, %v85
  %v89 = vadd.f32 %v80, %v85
  %v90 = vadd.f32 %v81, %v85
  %v91 = vadd.f32 %v82, %v85
  %v92 = vadd.f32 %v83, %v85
  %v93 = vadd.f32 %v84, %v85
  %v94 = vld [vmem:[%s3] sm:$0x1]
  %v95 = vld [vmem:[%s4] sm:$0x1]
  %96 = vadd.xlane.f32.xlu0 %v86
  %v97 = vpop.xlane.xlu0 %96
  %98 = vadd.xlane.f32.xlu0 %v87
  %v99 = vpop.xlane.xlu0 %98
  %100 = vadd.xlane.f32.xlu0 %v88
  %v101 = vpop.xlane.xlu0 %100
  %102 = vadd.xlane.f32.xlu0 %v89
  %v103 = vpop.xlane.xlu0 %102
  %104 = vadd.xlane.f32.xlu0 %v90
  %v105 = vpop.xlane.xlu0 %104
  %106 = vadd.xlane.f32.xlu0 %v91
  %v107 = vpop.xlane.xlu0 %106
  %108 = vadd.xlane.f32.xlu0 %v92
  %v109 = vpop.xlane.xlu0 %108
  %110 = vadd.xlane.f32.xlu0 %v93
  %v111 = vpop.xlane.xlu0 %110
  %v112 = vrcp.pop 128.0
  %v113 = vmul.f32 %v97, %v112
  %v114 = vmul.f32 %v99, %v112
  %v115 = vmul.f32 %v101, %v112
  %v116 = vmul.f32 %v103, %v112
  %v117 = vmul.f32 %v105, %v112
  %v118 = vmul.f32 %v107, %v112
  %v119 = vmul.f32 %v109, %v112
  %v120 = vmul.f32 %v111, %v112
  %v121 = vsub.f32 %v86, %v113
  %v122 = vsub.f32 %v87, %v114
  %v123 = vsub.f32 %v88, %v115
  %v124 = vsub.f32 %v89, %v116
  %v125 = vsub.f32 %v90, %v117
  %v126 = vsub.f32 %v91, %v118
  %v127 = vsub.f32 %v92, %v119
  %v128 = vsub.f32 %v93, %v120
  %v129 = vmul.f32 %v121, %v121
  %v130 = vmul.f32 %v122, %v122
  %v131 = vmul.f32 %v123, %v123
  %v132 = vmul.f32 %v124, %v124
  %v133 = vmul.f32 %v125, %v125
  %v134 = vmul.f32 %v126, %v126
  %v135 = vmul.f32 %v127, %v127
  %v136 = vmul.f32 %v128, %v128
  %137 = vadd.xlane.f32.xlu0 %v129
  %v138 = vpop.xlane.xlu0 %137
  %139 = vadd.xlane.f32.xlu0 %v130
  %v140 = vpop.xlane.xlu0 %139
  %141 = vadd.xlane.f32.xlu0 %v131
  %v142 = vpop.xlane.xlu0 %141
  %143 = vadd.xlane.f32.xlu0 %v132
  %v144 = vpop.xlane.xlu0 %143
  %145 = vadd.xlane.f32.xlu0 %v133
  %v146 = vpop.xlane.xlu0 %145
  %147 = vadd.xlane.f32.xlu0 %v134
  %v148 = vpop.xlane.xlu0 %147
  %149 = vadd.xlane.f32.xlu0 %v135
  %v150 = vpop.xlane.xlu0 %149
  %151 = vadd.xlane.f32.xlu0 %v136
  %v152 = vpop.xlane.xlu0 %151
  %v153 = vmul.f32 %v138, %v112
  %v154 = vmul.f32 %v140, %v112
  %v155 = vmul.f32 %v142, %v112
  %v156 = vmul.f32 %v144, %v112
  %v157 = vmul.f32 %v146, %v112
  %v158 = vmul.f32 %v148, %v112
  %v159 = vmul.f32 %v150, %v112
  %v160 = vmul.f32 %v152, %v112
  %v161 = vadd.f32 %v153, 1e-12
  %v162 = vadd.f32 %v154, 1e-12
  %v163 = vadd.f32 %v155, 1e-12
  %v164 = vadd.f32 %v156, 1e-12
  %v165 = vadd.f32 %v157, 1e-12
  %v166 = vadd.f32 %v158, 1e-12
  %v167 = vadd.f32 %v159, 1e-12
  %v168 = vadd.f32 %v160, 1e-12
  %v169 = vrsqrt.pop %v161
  %v170 = vrsqrt.pop %v162
  %v171 = vrsqrt.pop %v163
  %v172 = vrsqrt.pop %v164
  %v173 = vrsqrt.pop %v165
  %v174 = vrsqrt.pop %v166
  %v175 = vrsqrt.pop %v167
  %v176 = vrsqrt.pop %v168
  %v177 = vmul.f32 %v121, %v169
  %v178 = vmul.f32 %v122, %v170
  %v179 = vmul.f32 %v123, %v171
  %v180 = vmul.f32 %v124, %v172
  %v181 = vmul.f32 %v125, %v173
  %v182 = vmul.f32 %v126, %v174
  %v183 = vmul.f32 %v127, %v175
  %v184 = vmul.f32 %v128, %v176
  %v186 = vlaneseq
  %v187 = vshrl.u32 %v186, 7
  %v188 = vsub.s32 0, %v187
  %v189 = vrot.slane %v94, %v188
  %v191 = vmul.f32 %v177, %v189
  %v192 = vmul.f32 %v178, %v189
  %v193 = vmul.f32 %v179, %v189
  %v194 = vmul.f32 %v180, %v189
  %v195 = vmul.f32 %v181, %v189
  %v196 = vmul.f32 %v182, %v189
  %v197 = vmul.f32 %v183, %v189
  %v198 = vmul.f32 %v184, %v189
  %v200 = vlaneseq
  %v201 = vshrl.u32 %v200, 7
  %v202 = vsub.s32 0, %v201
  %v203 = vrot.slane %v95, %v202
  %v205 = vadd.f32 %v191, %v203
  %v206 = vadd.f32 %v192, %v203
  %v207 = vadd.f32 %v193, %v203
  %v208 = vadd.f32 %v194, %v203
  %v209 = vadd.f32 %v195, %v203
  %v210 = vadd.f32 %v196, %v203
  %v211 = vadd.f32 %v197, %v203
  %v212 = vadd.f32 %v198, %v203
  %v213 = vld [vmem:[%s2] sm:$0xff]
  %v215 = vcombine.high %v213, %v213
  %v217 = vunpack.c.l.s4 1966171168
  %v218 = vunpack.c.0.s8 %v217
  %v219 = vlaneseq
  %v220 = vshrl.u32 %v219, 7
  %v221 = vsub.s32 %v218, %v220
  %v222 = vrot.slane %v213, %v221
  %v224 = vunpack.c.l.s4 1966171168
  %v225 = vunpack.c.0.s8 %v224
  %v226 = vlaneseq
  %v227 = vshrl.u32 %v226, 7
  %v228 = vsub.s32 %v225, %v227
  %v229 = vrot.slane %v215, %v228
  %v230 = vcombine.high %v222, %v222
  %v231 = vcombine.high %v229, %v229
  %v233 = vunpack.c.l.s4 1966171168
  %v234 = vunpack.c.0.s8 %v233
  %v235 = vlaneseq
  %v236 = vshrl.u32 %v235, 7
  %v237 = vsub.s32 %v234, %v236
  %v238 = vrot.slane %v222, %v237
  %v240 = vunpack.c.l.s4 1966171168
  %v241 = vunpack.c.0.s8 %v240
  %v242 = vlaneseq
  %v243 = vshrl.u32 %v242, 7
  %v244 = vsub.s32 %v241, %v243
  %v245 = vrot.slane %v229, %v244
  %v247 = vunpack.c.l.s4 1966171168
  %v248 = vunpack.c.0.s8 %v247
  %v249 = vlaneseq
  %v250 = vshrl.u32 %v249, 7
  %v251 = vsub.s32 %v248, %v250
  %v252 = vrot.slane %v230, %v251
  %v254 = vunpack.c.l.s4 1966171168
  %v255 = vunpack.c.0.s8 %v254
  %v256 = vlaneseq
  %v257 = vshrl.u32 %v256, 7
  %v258 = vsub.s32 %v255, %v257
  %v259 = vrot.slane %v231, %v258
  %v260 = vcombine.high %v238, %v238
  %v261 = vcombine.high %v245, %v245
  %v262 = vcombine.high %v252, %v252
  %v263 = vcombine.high %v259, %v259
  %v264 = vld [vmem:[%s5] sm:$0xff]
  %v265 = vld [vmem:[%s5 + $0x8] sm:$0xf]
  %v266 = vld [vmem:[%s5 + $0xc] sm:$0xff]
  %v267 = vld [vmem:[%s5 + $0x14] sm:$0xf]
  %v268 = vld [vmem:[%s5 + $0x18] sm:$0xff]
  %v269 = vld [vmem:[%s5 + $0x20] sm:$0xf]
  %v270 = vld [vmem:[%s5 + $0x24] sm:$0xff]
  %v271 = vld [vmem:[%s5 + $0x2c] sm:$0xf]
  %v272 = vld [vmem:[%s5 + $0x30] sm:$0xff]
  %v273 = vld [vmem:[%s5 + $0x38] sm:$0xf]
  %v274 = vld [vmem:[%s5 + $0x3c] sm:$0xff]
  %v275 = vld [vmem:[%s5 + $0x44] sm:$0xf]
  %v276 = vld [vmem:[%s5 + $0x48] sm:$0xff]
  %v277 = vld [vmem:[%s5 + $0x50] sm:$0xf]
  %v278 = vld [vmem:[%s5 + $0x54] sm:$0xff]
  %v279 = vld [vmem:[%s5 + $0x5c] sm:$0xf]
  %v280 = vld [vmem:[%s5 + $0x60] sm:$0xff]
  %v281 = vld [vmem:[%s5 + $0x68] sm:$0xf]
  %v282 = vld [vmem:[%s5 + $0x6c] sm:$0xff]
  %v283 = vld [vmem:[%s5 + $0x74] sm:$0xf]
  %v284 = vld [vmem:[%s5 + $0x78] sm:$0xff]
  %v285 = vld [vmem:[%s5 + $0x80] sm:$0xf]
  %v286 = vld [vmem:[%s5 + $0x84] sm:$0xff]
  %v287 = vld [vmem:[%s5 + $0x8c] sm:$0xf]
  %v288 = vld [vmem:[%s5 + $0x90] sm:$0xff]
  %v289 = vld [vmem:[%s5 + $0x98] sm:$0xf]
  %v290 = vld [vmem:[%s5 + $0x9c] sm:$0xff]
  %v291 = vld [vmem:[%s5 + $0xa4] sm:$0xf]
  %v292 = vld [vmem:[%s5 + $0xa8] sm:$0xff]
  %v293 = vld [vmem:[%s5 + $0xb0] sm:$0xf]
  %v294 = vld [vmem:[%s5 + $0xb4] sm:$0xff]
  %v295 = vld [vmem:[%s5 + $0xbc] sm:$0xf]
  %v296 = vld [vmem:[%s7] sm:$0xf]
  %v297 = vld [vmem:[%s7 + $0x4] sm:$0xf]
  %v298 = vld [vmem:[%s7 + $0x8] sm:$0xf]
  %v299 = vld [vmem:[%s7 + $0xc] sm:$0xf]
  %v300 = vld [vmem:[%s7 + $0x10] sm:$0xf]
  %v301 = vld [vmem:[%s7 + $0x14] sm:$0xf]
  %v302 = vld [vmem:[%s7 + $0x18] sm:$0xf]
  %v303 = vld [vmem:[%s7 + $0x1c] sm:$0xf]
  %v304 = vld [vmem:[%s7 + $0x20] sm:$0xf]
  %v305 = vld [vmem:[%s7 + $0x24] sm:$0xf]
  %v306 = vld [vmem:[%s7 + $0x28] sm:$0xf]
  %v307 = vld [vmem:[%s7 + $0x2c] sm:$0xf]
  %v308 = vld [vmem:[%s7 + $0x30] sm:$0xf]
  %v309 = vld [vmem:[%s7 + $0x34] sm:$0xf]
  %v310 = vld [vmem:[%s7 + $0x38] sm:$0xf]
  %v311 = vld [vmem:[%s7 + $0x3c] sm:$0xf]
  %v312 = vpack.c.bf16 %v206, %v205
  %v313 = vpack.c.bf16 %v208, %v207
  %v314 = vpack.c.bf16 %v210, %v209
  %v315 = vpack.c.bf16 %v212, %v211
  %v316 = vld [vmem:[%s6] sm:$0x7]
  %v318 = vlaneseq
  %v319 = vshrl.u32 %v318, 7
  %v320 = vsub.s32 0, %v319
  %v321 = vrot.slane %v316, %v320
  %v322 = vlaneseq
  %v323 = vshrl.u32 %v322, 7
  %v324 = vsub.s32 1, %v323
  %v325 = vrot.slane %v316, %v324
  %v326 = vlaneseq
  %v327 = vshrl.u32 %v326, 7
  %v328 = vsub.s32 2, %v327
  %v329 = vrot.slane %v316, %v328
  %v365 = vunpack.c.l.b16 %v264
  %v366 = vunpack.c.h.b16 %v264
  %v367 = vunpack.c.l.b16 %v265
  %v368 = vunpack.c.l.b16 %v266
  %v369 = vunpack.c.h.b16 %v266
  %v370 = vunpack.c.l.b16 %v267
  %v371 = vunpack.c.l.b16 %v268
  %v372 = vunpack.c.h.b16 %v268
  %v373 = vunpack.c.l.b16 %v269
  %v374 = vunpack.c.l.b16 %v270
  %v375 = vunpack.c.h.b16 %v270
  %v376 = vunpack.c.l.b16 %v271
  %v377 = vunpack.c.l.b16 %v272
  %v378 = vunpack.c.h.b16 %v272
  %v379 = vunpack.c.l.b16 %v273
  %v380 = vunpack.c.l.b16 %v274
  %v381 = vunpack.c.h.b16 %v274
  %v382 = vunpack.c.l.b16 %v275
  %v383 = vunpack.c.l.b16 %v276
  %v384 = vunpack.c.h.b16 %v276
  %v385 = vunpack.c.l.b16 %v277
  %v386 = vunpack.c.l.b16 %v278
  %v387 = vunpack.c.h.b16 %v278
  %v388 = vunpack.c.l.b16 %v279
  %v389 = vunpack.c.l.b16 %v280
  %v390 = vunpack.c.h.b16 %v280
  %v391 = vunpack.c.l.b16 %v281
  %v392 = vunpack.c.l.b16 %v282
  %v393 = vunpack.c.h.b16 %v282
  %v394 = vunpack.c.l.b16 %v283
  %v395 = vunpack.c.l.b16 %v284
  %v396 = vunpack.c.h.b16 %v284
  %v397 = vunpack.c.l.b16 %v285
  %v398 = vunpack.c.l.b16 %v286
  %v399 = vunpack.c.h.b16 %v286
  %v400 = vunpack.c.l.b16 %v287
  %v401 = vunpack.c.l.b16 %v288
  %v402 = vunpack.c.h.b16 %v288
  %v403 = vunpack.c.l.b16 %v289
  %v404 = vunpack.c.l.b16 %v290
  %v405 = vunpack.c.h.b16 %v290
  %v406 = vunpack.c.l.b16 %v291
  %v407 = vunpack.c.l.b16 %v292
  %v408 = vunpack.c.h.b16 %v292
  %v409 = vunpack.c.l.b16 %v293
  %v410 = vunpack.c.l.b16 %v294
  %v411 = vunpack.c.h.b16 %v294
  %v412 = vunpack.c.l.b16 %v295
  %v413 = vpack.c.b16 %v368, %v365
  %v414 = vpack.c.b16 %v369, %v366
  %v415 = vpack.c.b16 %v370, %v367
  %v416 = vpack.c.b16 %v374, %v371
  %v417 = vpack.c.b16 %v375, %v372
  %v418 = vpack.c.b16 %v376, %v373
  %v419 = vpack.c.b16 %v380, %v377
  %v420 = vpack.c.b16 %v381, %v378
  %v421 = vpack.c.b16 %v382, %v379
  %v422 = vpack.c.b16 %v386, %v383
  %v423 = vpack.c.b16 %v387, %v384
  %v424 = vpack.c.b16 %v388, %v385
  %v425 = vpack.c.b16 %v392, %v389
  %v426 = vpack.c.b16 %v393, %v390
  %v427 = vpack.c.b16 %v394, %v391
  %v428 = vpack.c.b16 %v398, %v395
  %v429 = vpack.c.b16 %v399, %v396
  %v430 = vpack.c.b16 %v400, %v397
  %v431 = vpack.c.b16 %v404, %v401
  %v432 = vpack.c.b16 %v405, %v402
  %v433 = vpack.c.b16 %v406, %v403
  %v434 = vpack.c.b16 %v410, %v407
  %v435 = vpack.c.b16 %v411, %v408
  %v436 = vpack.c.b16 %v412, %v409
  %461 = vmatprep.subr.bf16.mxu0 %v414
  %462 = vmatpush1.bf16.msra.mxu0 %v413
  %463 = vmatprep.subr.bf16.mxu0 %v417
  %464 = vmatpush1.bf16.msra.mxu0 %v416
  %465 = vmatprep.subr.bf16.mxu0 %v420
  %466 = vmatpush1.bf16.msra.mxu0 %v419
  %467 = vmatprep.subr.bf16.mxu0 %v423
  %468 = vmatpush1.bf16.msra.mxu0 %v422
  %469 = vmatprep.subr.bf16.mxu0 %v426
  %470 = vmatpush1.bf16.msra.mxu0 %v425
  %471 = vmatprep.subr.bf16.mxu0 %v429
  %472 = vmatpush1.bf16.msra.mxu0 %v428
  %473 = vmatprep.subr.bf16.mxu0 %v432
  %474 = vmatpush1.bf16.msra.mxu0 %v431
  %475 = vmatprep.subr.bf16.mxu0 %v435
  %476 = vmatpush1.bf16.msra.mxu0 %v434
  %477 = vmatprep.subr.bf16.mxu0 0
  %478 = vmatpush1.bf16.msra.mxu0 0
  %479 = vmatprep.subr.bf16.mxu0 0
  %480 = vmatpush1.bf16.msra.mxu0 0
  %481 = vmatprep.subr.bf16.mxu0 0
  %482 = vmatpush1.bf16.msra.mxu0 0
  %483 = vmatprep.subr.bf16.mxu0 0
  %484 = vmatpush1.bf16.msra.mxu0 0
  %485 = vmatprep.subr.bf16.mxu0 0
  %486 = vmatpush1.bf16.msra.mxu0 0
  %487 = vmatprep.subr.bf16.mxu0 0
  %488 = vmatpush1.bf16.msra.mxu0 0
  %489 = vmatprep.subr.bf16.mxu0 0
  %490 = vmatpush1.bf16.msra.mxu0 0
  %491 = vmatprep.subr.bf16.mxu0 0
  %492 = vmatpush1.bf16.msra.mxu0 0
  %493 = vmatprep.mubr.bf16.mxu0 0
  %494 = vmatmul.mubr.bf16.gmra.mrb[0].mxu0 %v312
  %v495 = vpop.f32.mrb[0].mxu0
  %v496 = vadd.f32 %v321, %v495
  %v497 = vpop.f32.mrb[0].mxu0
  %v498 = vadd.f32 %v325, %v497
  %v499 = vpop.f32.mrb[0].mxu0
  %v500 = vadd.f32 %v321, %v499
  %v501 = vpop.f32.mrb[0].mxu0
  %v502 = vadd.f32 %v325, %v501
  %503 = vmatprep.mubr.bf16.mxu0 0
  %504 = vmatmul.mubr.bf16.gmra.mrb[0].mxu0 %v313
  %v505 = vpop.f32.mrb[0].mxu0
  %v506 = vadd.f32 %v321, %v505
  %v507 = vpop.f32.mrb[0].mxu0
  %v508 = vadd.f32 %v325, %v507
  %v509 = vpop.f32.mrb[0].mxu0
  %v510 = vadd.f32 %v321, %v509
  %v511 = vpop.f32.mrb[0].mxu0
  %v512 = vadd.f32 %v325, %v511
  %513 = vmatprep.mubr.bf16.mxu0 0
  %514 = vmatmul.mubr.bf16.gmra.mrb[0].mxu0 %v314
  %v515 = vpop.f32.mrb[0].mxu0
  %v516 = vadd.f32 %v321, %v515
  %v517 = vpop.f32.mrb[0].mxu0
  %v518 = vadd.f32 %v325, %v517
  %v519 = vpop.f32.mrb[0].mxu0
  %v520 = vadd.f32 %v321, %v519
  %v521 = vpop.f32.mrb[0].mxu0
  %v522 = vadd.f32 %v325, %v521
  %523 = vmatprep.mubr.bf16.mxu0 0
  %524 = vmatmul.mubr.bf16.gmra.mrb[0].mxu0 %v315
  %v525 = vpop.f32.mrb[0].mxu0
  %v526 = vadd.f32 %v321, %v525
  %v527 = vpop.f32.mrb[0].mxu0
  %v528 = vadd.f32 %v325, %v527
  %v529 = vpop.f32.mrb[0].mxu0
  %v530 = vadd.f32 %v321, %v529
  %v531 = vpop.f32.mrb[0].mxu0
  %v532 = vadd.f32 %v325, %v531
  %533 = vdwg.mxu0
  %534 = vmatprep.subr.bf16.mxu0 0
  %535 = vmatpush1.bf16.msra.mxu0 %v415
  %536 = vmatprep.subr.bf16.mxu0 0
  %537 = vmatpush1.bf16.msra.mxu0 %v418
  %538 = vmatprep.subr.bf16.mxu0 0
  %539 = vmatpush1.bf16.msra.mxu0 %v421
  %540 = vmatprep.subr.bf16.mxu0 0
  %541 = vmatpush1.bf16.msra.mxu0 %v424
  %542 = vmatprep.subr.bf16.mxu0 0
  %543 = vmatpush1.bf16.msra.mxu0 %v427
  %544 = vmatprep.subr.bf16.mxu0 0
  %545 = vmatpush1.bf16.msra.mxu0 %v430
  %546 = vmatprep.subr.bf16.mxu0 0
  %547 = vmatpush1.bf16.msra.mxu0 %v433
  %548 = vmatprep.subr.bf16.mxu0 0
  %549 = vmatpush1.bf16.msra.mxu0 %v436
  %550 = vmatprep.subr.bf16.mxu0 0
  %551 = vmatpush1.bf16.msra.mxu0 0
  %552 = vmatprep.subr.bf16.mxu0 0
  %553 = vmatpush1.bf16.msra.mxu0 0
  %554 = vmatprep.subr.bf16.mxu0 0
  %555 = vmatpush1.bf16.msra.mxu0 0
  %556 = vmatprep.subr.bf16.mxu0 0
  %557 = vmatpush1.bf16.msra.mxu0 0
  %558 = vmatprep.subr.bf16.mxu0 0
  %559 = vmatpush1.bf16.msra.mxu0 0
  %560 = vmatprep.subr.bf16.mxu0 0
  %561 = vmatpush1.bf16.msra.mxu0 0
  %562 = vmatprep.subr.bf16.mxu0 0
  %563 = vmatpush1.bf16.msra.mxu0 0
  %564 = vmatprep.subr.bf16.mxu0 0
  %565 = vmatpush1.bf16.msra.mxu0 0
  %566 = vmatprep.mubr.bf16.mxu0 0
  %567 = vmatmul.mubr.bf16.gmra.mrb[0].mxu0 %v312
  %v568 = vpop.f32.mrb[0].mxu0
  %v569 = vadd.f32 %v329, %v568
  %v570 = vpop.f32.mrb[0].mxu0
  %v571 = vpop.f32.mrb[0].mxu0
  %v572 = vadd.f32 %v329, %v571
  %v573 = vpop.f32.mrb[0].mxu0
  %574 = vmatprep.mubr.bf16.mxu0 0
  %575 = vmatmul.mubr.bf16.gmra.mrb[0].mxu0 %v313
  %v576 = vpop.f32.mrb[0].mxu0
  %v577 = vadd.f32 %v329, %v576
  %v578 = vpop.f32.mrb[0].mxu0
  %v579 = vpop.f32.mrb[0].mxu0
  %v580 = vadd.f32 %v329, %v579
  %v581 = vpop.f32.mrb[0].mxu0
  %582 = vmatprep.mubr.bf16.mxu0 0
  %583 = vmatmul.mubr.bf16.gmra.mrb[0].mxu0 %v314
  %v584 = vpop.f32.mrb[0].mxu0
  %v585 = vadd.f32 %v329, %v584
  %v586 = vpop.f32.mrb[0].mxu0
  %v587 = vpop.f32.mrb[0].mxu0
  %v588 = vadd.f32 %v329, %v587
  %v589 = vpop.f32.mrb[0].mxu0
  %590 = vmatprep.mubr.bf16.mxu0 0
  %591 = vmatmul.mubr.bf16.gmra.mrb[0].mxu0 %v315
  %v592 = vpop.f32.mrb[0].mxu0
  %v593 = vadd.f32 %v329, %v592
  %v594 = vpop.f32.mrb[0].mxu0
  %v595 = vpop.f32.mrb[0].mxu0
  %v596 = vadd.f32 %v329, %v595
  %v597 = vpop.f32.mrb[0].mxu0
  %598 = vdwg.mxu0
  %v599 = vpack.c.bf16 %v496, %v496
  %v600 = vpack.c.bf16 %v500, %v500
  %v601 = vpack.c.bf16 %v506, %v506
  %v602 = vpack.c.bf16 %v510, %v510
  %v603 = vpack.c.bf16 %v516, %v516
  %v604 = vpack.c.bf16 %v520, %v520
  %v605 = vpack.c.bf16 %v526, %v526
  %v606 = vpack.c.bf16 %v530, %v530
  %v607 = vpack.c.bf16 %v498, %v498
  %v608 = vpack.c.bf16 %v502, %v502
  %v609 = vpack.c.bf16 %v508, %v508
  %v610 = vpack.c.bf16 %v512, %v512
  %v611 = vpack.c.bf16 %v518, %v518
  %v612 = vpack.c.bf16 %v522, %v522
  %v613 = vpack.c.bf16 %v528, %v528
  %v614 = vpack.c.bf16 %v532, %v532
  %vm615 = vcmask 523264
  %v617 = vsel %vm615, %v599, 0
  %v620 = vsel %vm615, %v607, 0
  %622 = vmatprep.subr.bf16.mxu0 0
  %623 = vmatpush1.bf16.xpose.msra.mxu0 %v620
  %624 = vmatprep.subr.bf16.mxu0 0
  %625 = vmatpush1.bf16.xpose.msra.mxu0 0
  %626 = vmatprep.subr.bf16.mxu0 0
  %627 = vmatpush1.bf16.xpose.msra.mxu0 0
  %628 = vmatprep.subr.bf16.mxu0 0
  %629 = vmatpush1.bf16.xpose.msra.mxu0 0
  %630 = vmatprep.subr.bf16.mxu0 0
  %631 = vmatpush1.bf16.xpose.msra.mxu0 0
  %632 = vmatprep.subr.bf16.mxu0 0
  %633 = vmatpush1.bf16.xpose.msra.mxu0 0
  %634 = vmatprep.subr.bf16.mxu0 0
  %635 = vmatpush1.bf16.xpose.msra.mxu0 0
  %636 = vmatprep.subr.bf16.mxu0 0
  %637 = vmatpush1.bf16.xpose.msra.mxu0 0
  %638 = vmatprep.subr.bf16.mxu0 0
  %639 = vmatpush1.bf16.xpose.msra.mxu0 0
  %640 = vmatprep.subr.bf16.mxu0 0
  %641 = vmatpush1.bf16.xpose.msra.mxu0 0
  %642 = vmatprep.subr.bf16.mxu0 0
  %643 = vmatpush1.bf16.xpose.msra.mxu0 0
  %644 = vmatprep.subr.bf16.mxu0 0
  %645 = vmatpush1.bf16.xpose.msra.mxu0 0
  %646 = vmatprep.subr.bf16.mxu0 0
  %647 = vmatpush1.bf16.xpose.msra.mxu0 0
  %648 = vmatprep.subr.bf16.mxu0 0
  %649 = vmatpush1.bf16.xpose.msra.mxu0 0
  %650 = vmatprep.subr.bf16.mxu0 0
  %651 = vmatpush1.bf16.xpose.msra.mxu0 0
  %652 = vmatprep.subr.bf16.mxu0 0
  %653 = vmatpush1.bf16.xpose.msra.mxu0 0
  %654 = vmatprep.mubr.bf16.mxu0 0
  %655 = vmatmul.mubr.bf16.gmra.mrb[0].mxu0 %v617
  %v656 = vpop.f32.mrb[0].mxu0
  %v657 = vadd.f32 0.0, %v656
  %v658 = vpop.f32.mrb[0].mxu0
  %v659 = vpop.f32.mrb[0].mxu0
  %v660 = vpop.f32.mrb[0].mxu0
  %661 = vdwg.mxu0
  %v663 = vsel %vm615, %v600, 0
  %v666 = vsel %vm615, %v608, 0
  %668 = vmatprep.subr.bf16.mxu0 0
  %669 = vmatpush1.bf16.xpose.msra.mxu0 %v666
  %670 = vmatprep.subr.bf16.mxu0 0
  %671 = vmatpush1.bf16.xpose.msra.mxu0 0
  %672 = vmatprep.subr.bf16.mxu0 0
  %673 = vmatpush1.bf16.xpose.msra.mxu0 0
  %674 = vmatprep.subr.bf16.mxu0 0
  %675 = vmatpush1.bf16.xpose.msra.mxu0 0
  %676 = vmatprep.subr.bf16.mxu0 0
  %677 = vmatpush1.bf16.xpose.msra.mxu0 0
  %678 = vmatprep.subr.bf16.mxu0 0
  %679 = vmatpush1.bf16.xpose.msra.mxu0 0
  %680 = vmatprep.subr.bf16.mxu0 0
  %681 = vmatpush1.bf16.xpose.msra.mxu0 0
  %682 = vmatprep.subr.bf16.mxu0 0
  %683 = vmatpush1.bf16.xpose.msra.mxu0 0
  %684 = vmatprep.subr.bf16.mxu0 0
  %685 = vmatpush1.bf16.xpose.msra.mxu0 0
  %686 = vmatprep.subr.bf16.mxu0 0
  %687 = vmatpush1.bf16.xpose.msra.mxu0 0
  %688 = vmatprep.subr.bf16.mxu0 0
  %689 = vmatpush1.bf16.xpose.msra.mxu0 0
  %690 = vmatprep.subr.bf16.mxu0 0
  %691 = vmatpush1.bf16.xpose.msra.mxu0 0
  %692 = vmatprep.subr.bf16.mxu0 0
  %693 = vmatpush1.bf16.xpose.msra.mxu0 0
  %694 = vmatprep.subr.bf16.mxu0 0
  %695 = vmatpush1.bf16.xpose.msra.mxu0 0
  %696 = vmatprep.subr.bf16.mxu0 0
  %697 = vmatpush1.bf16.xpose.msra.mxu0 0
  %698 = vmatprep.subr.bf16.mxu0 0
  %699 = vmatpush1.bf16.xpose.msra.mxu0 0
  %700 = vmatprep.mubr.bf16.mxu0 0
  %701 = vmatmul.mubr.bf16.gmra.mrb[0].mxu0 %v663
  %v702 = vpop.f32.mrb[0].mxu0
  %v703 = vadd.f32 0.0, %v702
  %v704 = vpop.f32.mrb[0].mxu0
  %v705 = vpop.f32.mrb[0].mxu0
  %v706 = vpop.f32.mrb[0].mxu0
  %707 = vdwg.mxu0
  %v709 = vsel %vm615, %v601, 0
  %v712 = vsel %vm615, %v609, 0
  %714 = vmatprep.subr.bf16.mxu0 0
  %715 = vmatpush1.bf16.xpose.msra.mxu0 %v712
  %716 = vmatprep.subr.bf16.mxu0 0
  %717 = vmatpush1.bf16.xpose.msra.mxu0 0
  %718 = vmatprep.subr.bf16.mxu0 0
  %719 = vmatpush1.bf16.xpose.msra.mxu0 0
  %720 = vmatprep.subr.bf16.mxu0 0
  %721 = vmatpush1.bf16.xpose.msra.mxu0 0
  %722 = vmatprep.subr.bf16.mxu0 0
  %723 = vmatpush1.bf16.xpose.msra.mxu0 0
  %724 = vmatprep.subr.bf16.mxu0 0
  %725 = vmatpush1.bf16.xpose.msra.mxu0 0
  %726 = vmatprep.subr.bf16.mxu0 0
  %727 = vmatpush1.bf16.xpose.msra.mxu0 0
  %728 = vmatprep.subr.bf16.mxu0 0
  %729 = vmatpush1.bf16.xpose.msra.mxu0 0
  %730 = vmatprep.subr.bf16.mxu0 0
  %731 = vmatpush1.bf16.xpose.msra.mxu0 0
  %732 = vmatprep.subr.bf16.mxu0 0
  %733 = vmatpush1.bf16.xpose.msra.mxu0 0
  %734 = vmatprep.subr.bf16.mxu0 0
  %735 = vmatpush1.bf16.xpose.msra.mxu0 0
  %736 = vmatprep.subr.bf16.mxu0 0
  %737 = vmatpush1.bf16.xpose.msra.mxu0 0
  %738 = vmatprep.subr.bf16.mxu0 0
  %739 = vmatpush1.bf16.xpose.msra.mxu0 0
  %740 = vmatprep.subr.bf16.mxu0 0
  %741 = vmatpush1.bf16.xpose.msra.mxu0 0
  %742 = vmatprep.subr.bf16.mxu0 0
  %743 = vmatpush1.bf16.xpose.msra.mxu0 0
  %744 = vmatprep.subr.bf16.mxu0 0
  %745 = vmatpush1.bf16.xpose.msra.mxu0 0
  %746 = vmatprep.mubr.bf16.mxu0 0
  %747 = vmatmul.mubr.bf16.gmra.mrb[0].mxu0 %v709
  %v748 = vpop.f32.mrb[0].mxu0
  %v749 = vadd.f32 0.0, %v748
  %v750 = vpop.f32.mrb[0].mxu0
  %v751 = vpop.f32.mrb[0].mxu0
  %v752 = vpop.f32.mrb[0].mxu0
  %753 = vdwg.mxu0
  %v755 = vsel %vm615, %v602, 0
  %v758 = vsel %vm615, %v610, 0
  %760 = vmatprep.subr.bf16.mxu0 0
  %761 = vmatpush1.bf16.xpose.msra.mxu0 %v758
  %762 = vmatprep.subr.bf16.mxu0 0
  %763 = vmatpush1.bf16.xpose.msra.mxu0 0
  %764 = vmatprep.subr.bf16.mxu0 0
  %765 = vmatpush1.bf16.xpose.msra.mxu0 0
  %766 = vmatprep.subr.bf16.mxu0 0
  %767 = vmatpush1.bf16.xpose.msra.mxu0 0
  %768 = vmatprep.subr.bf16.mxu0 0
  %769 = vmatpush1.bf16.xpose.msra.mxu0 0
  %770 = vmatprep.subr.bf16.mxu0 0
  %771 = vmatpush1.bf16.xpose.msra.mxu0 0
  %772 = vmatprep.subr.bf16.mxu0 0
  %773 = vmatpush1.bf16.xpose.msra.mxu0 0
  %774 = vmatprep.subr.bf16.mxu0 0
  %775 = vmatpush1.bf16.xpose.msra.mxu0 0
  %776 = vmatprep.subr.bf16.mxu0 0
  %777 = vmatpush1.bf16.xpose.msra.mxu0 0
  %778 = vmatprep.subr.bf16.mxu0 0
  %779 = vmatpush1.bf16.xpose.msra.mxu0 0
  %780 = vmatprep.subr.bf16.mxu0 0
  %781 = vmatpush1.bf16.xpose.msra.mxu0 0
  %782 = vmatprep.subr.bf16.mxu0 0
  %783 = vmatpush1.bf16.xpose.msra.mxu0 0
  %784 = vmatprep.subr.bf16.mxu0 0
  %785 = vmatpush1.bf16.xpose.msra.mxu0 0
  %786 = vmatprep.subr.bf16.mxu0 0
  %787 = vmatpush1.bf16.xpose.msra.mxu0 0
  %788 = vmatprep.subr.bf16.mxu0 0
  %789 = vmatpush1.bf16.xpose.msra.mxu0 0
  %790 = vmatprep.subr.bf16.mxu0 0
  %791 = vmatpush1.bf16.xpose.msra.mxu0 0
  %792 = vmatprep.mubr.bf16.mxu0 0
  %793 = vmatmul.mubr.bf16.gmra.mrb[0].mxu0 %v755
  %v794 = vpop.f32.mrb[0].mxu0
  %v795 = vadd.f32 0.0, %v794
  %v796 = vpop.f32.mrb[0].mxu0
  %v797 = vpop.f32.mrb[0].mxu0
  %v798 = vpop.f32.mrb[0].mxu0
  %799 = vdwg.mxu0
  %v801 = vsel %vm615, %v603, 0
  %v804 = vsel %vm615, %v611, 0
  %806 = vmatprep.subr.bf16.mxu0 0
  %807 = vmatpush1.bf16.xpose.msra.mxu0 %v804
  %808 = vmatprep.subr.bf16.mxu0 0
  %809 = vmatpush1.bf16.xpose.msra.mxu0 0
  %810 = vmatprep.subr.bf16.mxu0 0
  %811 = vmatpush1.bf16.xpose.msra.mxu0 0
  %812 = vmatprep.subr.bf16.mxu0 0
  %813 = vmatpush1.bf16.xpose.msra.mxu0 0
  %814 = vmatprep.subr.bf16.mxu0 0
  %815 = vmatpush1.bf16.xpose.msra.mxu0 0
  %816 = vmatprep.subr.bf16.mxu0 0
  %817 = vmatpush1.bf16.xpose.msra.mxu0 0
  %818 = vmatprep.subr.bf16.mxu0 0
  %819 = vmatpush1.bf16.xpose.msra.mxu0 0
  %820 = vmatprep.subr.bf16.mxu0 0
  %821 = vmatpush1.bf16.xpose.msra.mxu0 0
  %822 = vmatprep.subr.bf16.mxu0 0
  %823 = vmatpush1.bf16.xpose.msra.mxu0 0
  %824 = vmatprep.subr.bf16.mxu0 0
  %825 = vmatpush1.bf16.xpose.msra.mxu0 0
  %826 = vmatprep.subr.bf16.mxu0 0
  %827 = vmatpush1.bf16.xpose.msra.mxu0 0
  %828 = vmatprep.subr.bf16.mxu0 0
  %829 = vmatpush1.bf16.xpose.msra.mxu0 0
  %830 = vmatprep.subr.bf16.mxu0 0
  %831 = vmatpush1.bf16.xpose.msra.mxu0 0
  %832 = vmatprep.subr.bf16.mxu0 0
  %833 = vmatpush1.bf16.xpose.msra.mxu0 0
  %834 = vmatprep.subr.bf16.mxu0 0
  %835 = vmatpush1.bf16.xpose.msra.mxu0 0
  %836 = vmatprep.subr.bf16.mxu0 0
  %837 = vmatpush1.bf16.xpose.msra.mxu0 0
  %838 = vmatprep.mubr.bf16.mxu0 0
  %839 = vmatmul.mubr.bf16.gmra.mrb[0].mxu0 %v801
  %v840 = vpop.f32.mrb[0].mxu0
  %v841 = vadd.f32 0.0, %v840
  %v842 = vpop.f32.mrb[0].mxu0
  %v843 = vpop.f32.mrb[0].mxu0
  %v844 = vpop.f32.mrb[0].mxu0
  %845 = vdwg.mxu0
  %v847 = vsel %vm615, %v604, 0
  %v850 = vsel %vm615, %v612, 0
  %852 = vmatprep.subr.bf16.mxu0 0
  %853 = vmatpush1.bf16.xpose.msra.mxu0 %v850
  %854 = vmatprep.subr.bf16.mxu0 0
  %855 = vmatpush1.bf16.xpose.msra.mxu0 0
  %856 = vmatprep.subr.bf16.mxu0 0
  %857 = vmatpush1.bf16.xpose.msra.mxu0 0
  %858 = vmatprep.subr.bf16.mxu0 0
  %859 = vmatpush1.bf16.xpose.msra.mxu0 0
  %860 = vmatprep.subr.bf16.mxu0 0
  %861 = vmatpush1.bf16.xpose.msra.mxu0 0
  %862 = vmatprep.subr.bf16.mxu0 0
  %863 = vmatpush1.bf16.xpose.msra.mxu0 0
  %864 = vmatprep.subr.bf16.mxu0 0
  %865 = vmatpush1.bf16.xpose.msra.mxu0 0
  %866 = vmatprep.subr.bf16.mxu0 0
  %867 = vmatpush1.bf16.xpose.msra.mxu0 0
  %868 = vmatprep.subr.bf16.mxu0 0
  %869 = vmatpush1.bf16.xpose.msra.mxu0 0
  %870 = vmatprep.subr.bf16.mxu0 0
  %871 = vmatpush1.bf16.xpose.msra.mxu0 0
  %872 = vmatprep.subr.bf16.mxu0 0
  %873 = vmatpush1.bf16.xpose.msra.mxu0 0
  %874 = vmatprep.subr.bf16.mxu0 0
  %875 = vmatpush1.bf16.xpose.msra.mxu0 0
  %876 = vmatprep.subr.bf16.mxu0 0
  %877 = vmatpush1.bf16.xpose.msra.mxu0 0
  %878 = vmatprep.subr.bf16.mxu0 0
  %879 = vmatpush1.bf16.xpose.msra.mxu0 0
  %880 = vmatprep.subr.bf16.mxu0 0
  %881 = vmatpush1.bf16.xpose.msra.mxu0 0
  %882 = vmatprep.subr.bf16.mxu0 0
  %883 = vmatpush1.bf16.xpose.msra.mxu0 0
  %884 = vmatprep.mubr.bf16.mxu0 0
  %885 = vmatmul.mubr.bf16.gmra.mrb[0].mxu0 %v847
  %v886 = vpop.f32.mrb[0].mxu0
  %v887 = vadd.f32 0.0, %v886
  %v888 = vpop.f32.mrb[0].mxu0
  %v889 = vpop.f32.mrb[0].mxu0
  %v890 = vpop.f32.mrb[0].mxu0
  %891 = vdwg.mxu0
  %v893 = vsel %vm615, %v605, 0
  %v896 = vsel %vm615, %v613, 0
  %898 = vmatprep.subr.bf16.mxu0 0
  %899 = vmatpush1.bf16.xpose.msra.mxu0 %v896
  %900 = vmatprep.subr.bf16.mxu0 0
  %901 = vmatpush1.bf16.xpose.msra.mxu0 0
  %902 = vmatprep.subr.bf16.mxu0 0
  %903 = vmatpush1.bf16.xpose.msra.mxu0 0
  %904 = vmatprep.subr.bf16.mxu0 0
  %905 = vmatpush1.bf16.xpose.msra.mxu0 0
  %906 = vmatprep.subr.bf16.mxu0 0
  %907 = vmatpush1.bf16.xpose.msra.mxu0 0
  %908 = vmatprep.subr.bf16.mxu0 0
  %909 = vmatpush1.bf16.xpose.msra.mxu0 0
  %910 = vmatprep.subr.bf16.mxu0 0
  %911 = vmatpush1.bf16.xpose.msra.mxu0 0
  %912 = vmatprep.subr.bf16.mxu0 0
  %913 = vmatpush1.bf16.xpose.msra.mxu0 0
  %914 = vmatprep.subr.bf16.mxu0 0
  %915 = vmatpush1.bf16.xpose.msra.mxu0 0
  %916 = vmatprep.subr.bf16.mxu0 0
  %917 = vmatpush1.bf16.xpose.msra.mxu0 0
  %918 = vmatprep.subr.bf16.mxu0 0
  %919 = vmatpush1.bf16.xpose.msra.mxu0 0
  %920 = vmatprep.subr.bf16.mxu0 0
  %921 = vmatpush1.bf16.xpose.msra.mxu0 0
  %922 = vmatprep.subr.bf16.mxu0 0
  %923 = vmatpush1.bf16.xpose.msra.mxu0 0
  %924 = vmatprep.subr.bf16.mxu0 0
  %925 = vmatpush1.bf16.xpose.msra.mxu0 0
  %926 = vmatprep.subr.bf16.mxu0 0
  %927 = vmatpush1.bf16.xpose.msra.mxu0 0
  %928 = vmatprep.subr.bf16.mxu0 0
  %929 = vmatpush1.bf16.xpose.msra.mxu0 0
  %930 = vmatprep.mubr.bf16.mxu0 0
  %931 = vmatmul.mubr.bf16.gmra.mrb[0].mxu0 %v893
  %v932 = vpop.f32.mrb[0].mxu0
  %v933 = vadd.f32 0.0, %v932
  %v934 = vpop.f32.mrb[0].mxu0
  %v935 = vpop.f32.mrb[0].mxu0
  %v936 = vpop.f32.mrb[0].mxu0
  %937 = vdwg.mxu0
  %v939 = vsel %vm615, %v606, 0
  %v942 = vsel %vm615, %v614, 0
  %944 = vmatprep.subr.bf16.mxu0 0
  %945 = vmatpush1.bf16.xpose.msra.mxu0 %v942
  %946 = vmatprep.subr.bf16.mxu0 0
  %947 = vmatpush1.bf16.xpose.msra.mxu0 0
  %948 = vmatprep.subr.bf16.mxu0 0
  %949 = vmatpush1.bf16.xpose.msra.mxu0 0
  %950 = vmatprep.subr.bf16.mxu0 0
  %951 = vmatpush1.bf16.xpose.msra.mxu0 0
  %952 = vmatprep.subr.bf16.mxu0 0
  %953 = vmatpush1.bf16.xpose.msra.mxu0 0
  %954 = vmatprep.subr.bf16.mxu0 0
  %955 = vmatpush1.bf16.xpose.msra.mxu0 0
  %956 = vmatprep.subr.bf16.mxu0 0
  %957 = vmatpush1.bf16.xpose.msra.mxu0 0
  %958 = vmatprep.subr.bf16.mxu0 0
  %959 = vmatpush1.bf16.xpose.msra.mxu0 0
  %960 = vmatprep.subr.bf16.mxu0 0
  %961 = vmatpush1.bf16.xpose.msra.mxu0 0
  %962 = vmatprep.subr.bf16.mxu0 0
  %963 = vmatpush1.bf16.xpose.msra.mxu0 0
  %964 = vmatprep.subr.bf16.mxu0 0
  %965 = vmatpush1.bf16.xpose.msra.mxu0 0
  %966 = vmatprep.subr.bf16.mxu0 0
  %967 = vmatpush1.bf16.xpose.msra.mxu0 0
  %968 = vmatprep.subr.bf16.mxu0 0
  %969 = vmatpush1.bf16.xpose.msra.mxu0 0
  %970 = vmatprep.subr.bf16.mxu0 0
  %971 = vmatpush1.bf16.xpose.msra.mxu0 0
  %972 = vmatprep.subr.bf16.mxu0 0
  %973 = vmatpush1.bf16.xpose.msra.mxu0 0
  %974 = vmatprep.subr.bf16.mxu0 0
  %975 = vmatpush1.bf16.xpose.msra.mxu0 0
  %976 = vmatprep.mubr.bf16.mxu0 0
  %977 = vmatmul.mubr.bf16.gmra.mrb[0].mxu0 %v939
  %v978 = vpop.f32.mrb[0].mxu0
  %v979 = vadd.f32 0.0, %v978
  %v980 = vpop.f32.mrb[0].mxu0
  %v981 = vpop.f32.mrb[0].mxu0
  %v982 = vpop.f32.mrb[0].mxu0
  %983 = vdwg.mxu0
  %v984 = vmul.f32 %v657, 0.125
  %v985 = vmul.f32 %v703, 0.125
  %v986 = vmul.f32 %v749, 0.125
  %v987 = vmul.f32 %v795, 0.125
  %v988 = vmul.f32 %v841, 0.125
  %v989 = vmul.f32 %v887, 0.125
  %v990 = vmul.f32 %v933, 0.125
  %v991 = vmul.f32 %v979, 0.125
  %v992 = vlaneseq
  %v993 = vshrl.u32 %v992, 7
  %v994 = vsub.s32 0, %v993
  %v995 = vrot.slane %v238, %v994
  %v996 = vlaneseq
  %v997 = vshrl.u32 %v996, 7
  %v998 = vsub.s32 0, %v997
  %v999 = vrot.slane %v252, %v998
  %v1000 = vlaneseq
  %v1001 = vshrl.u32 %v1000, 7
  %v1002 = vsub.s32 0, %v1001
  %v1003 = vrot.slane %v260, %v1002
  %v1004 = vlaneseq
  %v1005 = vshrl.u32 %v1004, 7
  %v1006 = vsub.s32 0, %v1005
  %v1007 = vrot.slane %v262, %v1006
  %v1008 = vlaneseq
  %v1009 = vshrl.u32 %v1008, 7
  %v1010 = vsub.s32 0, %v1009
  %v1011 = vrot.slane %v245, %v1010
  %v1012 = vlaneseq
  %v1013 = vshrl.u32 %v1012, 7
  %v1014 = vsub.s32 0, %v1013
  %v1015 = vrot.slane %v259, %v1014
  %v1016 = vlaneseq
  %v1017 = vshrl.u32 %v1016, 7
  %v1018 = vsub.s32 0, %v1017
  %v1019 = vrot.slane %v261, %v1018
  %v1020 = vlaneseq
  %v1021 = vshrl.u32 %v1020, 7
  %v1022 = vsub.s32 0, %v1021
  %v1023 = vrot.slane %v263, %v1022
  %v1032 = vadd.f32 %v984, %v995
  %v1033 = vadd.f32 %v985, %v999
  %v1034 = vadd.f32 %v986, %v1003
  %v1035 = vadd.f32 %v987, %v1007
  %v1036 = vadd.f32 %v988, %v1011
  %v1037 = vadd.f32 %v989, %v1015
  %v1038 = vadd.f32 %v990, %v1019
  %v1039 = vadd.f32 %v991, %v1023
  %vm1040 = vcmask 64512
  %v1041 = vsel %vm1040, %v1032, -inf
  %1042 = vmax.xlane.f32.xlu0 %v1041
  %v1043 = vpop.xlane.xlu0 %1042
  %v1044 = vsel %vm1040, %v1033, -inf
  %1045 = vmax.xlane.f32.xlu0 %v1044
  %v1046 = vpop.xlane.xlu0 %1045
  %v1047 = vsel %vm1040, %v1034, -inf
  %1048 = vmax.xlane.f32.xlu0 %v1047
  %v1049 = vpop.xlane.xlu0 %1048
  %v1050 = vsel %vm1040, %v1035, -inf
  %1051 = vmax.xlane.f32.xlu0 %v1050
  %v1052 = vpop.xlane.xlu0 %1051
  %v1053 = vsel %vm1040, %v1036, -inf
  %1054 = vmax.xlane.f32.xlu0 %v1053
  %v1055 = vpop.xlane.xlu0 %1054
  %v1056 = vsel %vm1040, %v1037, -inf
  %1057 = vmax.xlane.f32.xlu0 %v1056
  %v1058 = vpop.xlane.xlu0 %1057
  %v1059 = vsel %vm1040, %v1038, -inf
  %1060 = vmax.xlane.f32.xlu0 %v1059
  %v1061 = vpop.xlane.xlu0 %1060
  %v1062 = vsel %vm1040, %v1039, -inf
  %1063 = vmax.xlane.f32.xlu0 %v1062
  %v1064 = vpop.xlane.xlu0 %1063
  %v1065 = vsub.f32 %v1032, %v1043
  %v1066 = vsub.f32 %v1033, %v1046
  %v1067 = vsub.f32 %v1034, %v1049
  %v1068 = vsub.f32 %v1035, %v1052
  %v1069 = vsub.f32 %v1036, %v1055
  %v1070 = vsub.f32 %v1037, %v1058
  %v1071 = vsub.f32 %v1038, %v1061
  %v1072 = vsub.f32 %v1039, %v1064
  %v1073 = vmul.f32 %v1065, 1.442695
  %v1074 = vpow.pop %v1073
  %v1075 = vmul.f32 %v1066, 1.442695
  %v1076 = vpow.pop %v1075
  %v1077 = vmul.f32 %v1067, 1.442695
  %v1078 = vpow.pop %v1077
  %v1079 = vmul.f32 %v1068, 1.442695
  %v1080 = vpow.pop %v1079
  %v1081 = vmul.f32 %v1069, 1.442695
  %v1082 = vpow.pop %v1081
  %v1083 = vmul.f32 %v1070, 1.442695
  %v1084 = vpow.pop %v1083
  %v1085 = vmul.f32 %v1071, 1.442695
  %v1086 = vpow.pop %v1085
  %v1087 = vmul.f32 %v1072, 1.442695
  %v1088 = vpow.pop %v1087
  %v1089 = vsel %vm1040, %v1074, 0.0
  %1090 = vadd.xlane.f32.xlu0 %v1089
  %v1091 = vpop.xlane.xlu0 %1090
  %v1092 = vsel %vm1040, %v1076, 0.0
  %1093 = vadd.xlane.f32.xlu0 %v1092
  %v1094 = vpop.xlane.xlu0 %1093
  %v1095 = vsel %vm1040, %v1078, 0.0
  %1096 = vadd.xlane.f32.xlu0 %v1095
  %v1097 = vpop.xlane.xlu0 %1096
  %v1098 = vsel %vm1040, %v1080, 0.0
  %1099 = vadd.xlane.f32.xlu0 %v1098
  %v1100 = vpop.xlane.xlu0 %1099
  %v1101 = vsel %vm1040, %v1082, 0.0
  %1102 = vadd.xlane.f32.xlu0 %v1101
  %v1103 = vpop.xlane.xlu0 %1102
  %v1104 = vsel %vm1040, %v1084, 0.0
  %1105 = vadd.xlane.f32.xlu0 %v1104
  %v1106 = vpop.xlane.xlu0 %1105
  %v1107 = vsel %vm1040, %v1086, 0.0
  %1108 = vadd.xlane.f32.xlu0 %v1107
  %v1109 = vpop.xlane.xlu0 %1108
  %v1110 = vsel %vm1040, %v1088, 0.0
  %1111 = vadd.xlane.f32.xlu0 %v1110
  %v1112 = vpop.xlane.xlu0 %1111
  %v1113 = vrcp.pop %v1091
  %v1114 = vmul.f32 %v1074, %v1113
  %v1115 = vrcp.pop %v1094
  %v1116 = vmul.f32 %v1076, %v1115
  %v1117 = vrcp.pop %v1097
  %v1118 = vmul.f32 %v1078, %v1117
  %v1119 = vrcp.pop %v1100
  %v1120 = vmul.f32 %v1080, %v1119
  %v1121 = vrcp.pop %v1103
  %v1122 = vmul.f32 %v1082, %v1121
  %v1123 = vrcp.pop %v1106
  %v1124 = vmul.f32 %v1084, %v1123
  %v1125 = vrcp.pop %v1109
  %v1126 = vmul.f32 %v1086, %v1125
  %v1127 = vrcp.pop %v1112
  %v1128 = vmul.f32 %v1088, %v1127
  %v1129 = vpack.c.bf16 %v1114, %v1114
  %v1130 = vpack.c.bf16 %v1116, %v1116
  %v1131 = vpack.c.bf16 %v1118, %v1118
  %v1132 = vpack.c.bf16 %v1120, %v1120
  %v1133 = vpack.c.bf16 %v1122, %v1122
  %v1134 = vpack.c.bf16 %v1124, %v1124
  %v1135 = vpack.c.bf16 %v1126, %v1126
  %v1136 = vpack.c.bf16 %v1128, %v1128
  %v1137 = vpack.c.bf16 %v569, %v569
  %v1138 = vpack.c.bf16 %v572, %v572
  %v1139 = vpack.c.bf16 %v577, %v577
  %v1140 = vpack.c.bf16 %v580, %v580
  %v1141 = vpack.c.bf16 %v585, %v585
  %v1142 = vpack.c.bf16 %v588, %v588
  %v1143 = vpack.c.bf16 %v593, %v593
  %v1144 = vpack.c.bf16 %v596, %v596
  %v1146 = vsel %vm1040, %v1129, 0
  %vm1148 = vcmask 1043456
  %v1150 = vsel %vm1148, %v1137, 0
  %1152 = vmatprep.subr.bf16.mxu0 0
  %1153 = vmatpush1.bf16.msra.mxu0 %v1150
  %1154 = vmatprep.subr.bf16.mxu0 0
  %1155 = vmatpush1.bf16.msra.mxu0 0
  %1156 = vmatprep.subr.bf16.mxu0 0
  %1157 = vmatpush1.bf16.msra.mxu0 0
  %1158 = vmatprep.subr.bf16.mxu0 0
  %1159 = vmatpush1.bf16.msra.mxu0 0
  %1160 = vmatprep.subr.bf16.mxu0 0
  %1161 = vmatpush1.bf16.msra.mxu0 0
  %1162 = vmatprep.subr.bf16.mxu0 0
  %1163 = vmatpush1.bf16.msra.mxu0 0
  %1164 = vmatprep.subr.bf16.mxu0 0
  %1165 = vmatpush1.bf16.msra.mxu0 0
  %1166 = vmatprep.subr.bf16.mxu0 0
  %1167 = vmatpush1.bf16.msra.mxu0 0
  %1168 = vmatprep.subr.bf16.mxu0 0
  %1169 = vmatpush1.bf16.msra.mxu0 0
  %1170 = vmatprep.subr.bf16.mxu0 0
  %1171 = vmatpush1.bf16.msra.mxu0 0
  %1172 = vmatprep.subr.bf16.mxu0 0
  %1173 = vmatpush1.bf16.msra.mxu0 0
  %1174 = vmatprep.subr.bf16.mxu0 0
  %1175 = vmatpush1.bf16.msra.mxu0 0
  %1176 = vmatprep.subr.bf16.mxu0 0
  %1177 = vmatpush1.bf16.msra.mxu0 0
  %1178 = vmatprep.subr.bf16.mxu0 0
  %1179 = vmatpush1.bf16.msra.mxu0 0
  %1180 = vmatprep.subr.bf16.mxu0 0
  %1181 = vmatpush1.bf16.msra.mxu0 0
  %1182 = vmatprep.subr.bf16.mxu0 0
  %1183 = vmatpush1.bf16.msra.mxu0 0
  %1184 = vmatprep.mubr.bf16.mxu0 0
  %1185 = vmatmul.mubr.bf16.gmra.mrb[0].mxu0 %v1146
  %v1186 = vpop.f32.mrb[0].mxu0
  %v1187 = vadd.f32 0.0, %v1186
  %v1188 = vpop.f32.mrb[0].mxu0
  %v1189 = vpop.f32.mrb[0].mxu0
  %v1190 = vpop.f32.mrb[0].mxu0
  %1191 = vdwg.mxu0
  %v1193 = vsel %vm1040, %v1130, 0
  %v1196 = vsel %vm1148, %v1138, 0
  %1198 = vmatprep.subr.bf16.mxu0 0
  %1199 = vmatpush1.bf16.msra.mxu0 %v1196
  %1200 = vmatprep.subr.bf16.mxu0 0
  %1201 = vmatpush1.bf16.msra.mxu0 0
  %1202 = vmatprep.subr.bf16.mxu0 0
  %1203 = vmatpush1.bf16.msra.mxu0 0
  %1204 = vmatprep.subr.bf16.mxu0 0
  %1205 = vmatpush1.bf16.msra.mxu0 0
  %1206 = vmatprep.subr.bf16.mxu0 0
  %1207 = vmatpush1.bf16.msra.mxu0 0
  %1208 = vmatprep.subr.bf16.mxu0 0
  %1209 = vmatpush1.bf16.msra.mxu0 0
  %1210 = vmatprep.subr.bf16.mxu0 0
  %1211 = vmatpush1.bf16.msra.mxu0 0
  %1212 = vmatprep.subr.bf16.mxu0 0
  %1213 = vmatpush1.bf16.msra.mxu0 0
  %1214 = vmatprep.subr.bf16.mxu0 0
  %1215 = vmatpush1.bf16.msra.mxu0 0
  %1216 = vmatprep.subr.bf16.mxu0 0
  %1217 = vmatpush1.bf16.msra.mxu0 0
  %1218 = vmatprep.subr.bf16.mxu0 0
  %1219 = vmatpush1.bf16.msra.mxu0 0
  %1220 = vmatprep.subr.bf16.mxu0 0
  %1221 = vmatpush1.bf16.msra.mxu0 0
  %1222 = vmatprep.subr.bf16.mxu0 0
  %1223 = vmatpush1.bf16.msra.mxu0 0
  %1224 = vmatprep.subr.bf16.mxu0 0
  %1225 = vmatpush1.bf16.msra.mxu0 0
  %1226 = vmatprep.subr.bf16.mxu0 0
  %1227 = vmatpush1.bf16.msra.mxu0 0
  %1228 = vmatprep.subr.bf16.mxu0 0
  %1229 = vmatpush1.bf16.msra.mxu0 0
  %1230 = vmatprep.mubr.bf16.mxu0 0
  %1231 = vmatmul.mubr.bf16.gmra.mrb[0].mxu0 %v1193
  %v1232 = vpop.f32.mrb[0].mxu0
  %v1233 = vadd.f32 0.0, %v1232
  %v1234 = vpop.f32.mrb[0].mxu0
  %v1235 = vpop.f32.mrb[0].mxu0
  %v1236 = vpop.f32.mrb[0].mxu0
  %1237 = vdwg.mxu0
  %v1239 = vsel %vm1040, %v1131, 0
  %v1242 = vsel %vm1148, %v1139, 0
  %1244 = vmatprep.subr.bf16.mxu0 0
  %1245 = vmatpush1.bf16.msra.mxu0 %v1242
  %1246 = vmatprep.subr.bf16.mxu0 0
  %1247 = vmatpush1.bf16.msra.mxu0 0
  %1248 = vmatprep.subr.bf16.mxu0 0
  %1249 = vmatpush1.bf16.msra.mxu0 0
  %1250 = vmatprep.subr.bf16.mxu0 0
  %1251 = vmatpush1.bf16.msra.mxu0 0
  %1252 = vmatprep.subr.bf16.mxu0 0
  %1253 = vmatpush1.bf16.msra.mxu0 0
  %1254 = vmatprep.subr.bf16.mxu0 0
  %1255 = vmatpush1.bf16.msra.mxu0 0
  %1256 = vmatprep.subr.bf16.mxu0 0
  %1257 = vmatpush1.bf16.msra.mxu0 0
  %1258 = vmatprep.subr.bf16.mxu0 0
  %1259 = vmatpush1.bf16.msra.mxu0 0
  %1260 = vmatprep.subr.bf16.mxu0 0
  %1261 = vmatpush1.bf16.msra.mxu0 0
  %1262 = vmatprep.subr.bf16.mxu0 0
  %1263 = vmatpush1.bf16.msra.mxu0 0
  %1264 = vmatprep.subr.bf16.mxu0 0
  %1265 = vmatpush1.bf16.msra.mxu0 0
  %1266 = vmatprep.subr.bf16.mxu0 0
  %1267 = vmatpush1.bf16.msra.mxu0 0
  %1268 = vmatprep.subr.bf16.mxu0 0
  %1269 = vmatpush1.bf16.msra.mxu0 0
  %1270 = vmatprep.subr.bf16.mxu0 0
  %1271 = vmatpush1.bf16.msra.mxu0 0
  %1272 = vmatprep.subr.bf16.mxu0 0
  %1273 = vmatpush1.bf16.msra.mxu0 0
  %1274 = vmatprep.subr.bf16.mxu0 0
  %1275 = vmatpush1.bf16.msra.mxu0 0
  %1276 = vmatprep.mubr.bf16.mxu0 0
  %1277 = vmatmul.mubr.bf16.gmra.mrb[0].mxu0 %v1239
  %v1278 = vpop.f32.mrb[0].mxu0
  %v1279 = vadd.f32 0.0, %v1278
  %v1280 = vpop.f32.mrb[0].mxu0
  %v1281 = vpop.f32.mrb[0].mxu0
  %v1282 = vpop.f32.mrb[0].mxu0
  %1283 = vdwg.mxu0
  %v1285 = vsel %vm1040, %v1132, 0
  %v1288 = vsel %vm1148, %v1140, 0
  %1290 = vmatprep.subr.bf16.mxu0 0
  %1291 = vmatpush1.bf16.msra.mxu0 %v1288
  %1292 = vmatprep.subr.bf16.mxu0 0
  %1293 = vmatpush1.bf16.msra.mxu0 0
  %1294 = vmatprep.subr.bf16.mxu0 0
  %1295 = vmatpush1.bf16.msra.mxu0 0
  %1296 = vmatprep.subr.bf16.mxu0 0
  %1297 = vmatpush1.bf16.msra.mxu0 0
  %1298 = vmatprep.subr.bf16.mxu0 0
  %1299 = vmatpush1.bf16.msra.mxu0 0
  %1300 = vmatprep.subr.bf16.mxu0 0
  %1301 = vmatpush1.bf16.msra.mxu0 0
  %1302 = vmatprep.subr.bf16.mxu0 0
  %1303 = vmatpush1.bf16.msra.mxu0 0
  %1304 = vmatprep.subr.bf16.mxu0 0
  %1305 = vmatpush1.bf16.msra.mxu0 0
  %1306 = vmatprep.subr.bf16.mxu0 0
  %1307 = vmatpush1.bf16.msra.mxu0 0
  %1308 = vmatprep.subr.bf16.mxu0 0
  %1309 = vmatpush1.bf16.msra.mxu0 0
  %1310 = vmatprep.subr.bf16.mxu0 0
  %1311 = vmatpush1.bf16.msra.mxu0 0
  %1312 = vmatprep.subr.bf16.mxu0 0
  %1313 = vmatpush1.bf16.msra.mxu0 0
  %1314 = vmatprep.subr.bf16.mxu0 0
  %1315 = vmatpush1.bf16.msra.mxu0 0
  %1316 = vmatprep.subr.bf16.mxu0 0
  %1317 = vmatpush1.bf16.msra.mxu0 0
  %1318 = vmatprep.subr.bf16.mxu0 0
  %1319 = vmatpush1.bf16.msra.mxu0 0
  %1320 = vmatprep.subr.bf16.mxu0 0
  %1321 = vmatpush1.bf16.msra.mxu0 0
  %1322 = vmatprep.mubr.bf16.mxu0 0
  %1323 = vmatmul.mubr.bf16.gmra.mrb[0].mxu0 %v1285
  %v1324 = vpop.f32.mrb[0].mxu0
  %v1325 = vadd.f32 0.0, %v1324
  %v1326 = vpop.f32.mrb[0].mxu0
  %v1327 = vpop.f32.mrb[0].mxu0
  %v1328 = vpop.f32.mrb[0].mxu0
  %1329 = vdwg.mxu0
  %v1331 = vsel %vm1040, %v1133, 0
  %v1334 = vsel %vm1148, %v1141, 0
  %1336 = vmatprep.subr.bf16.mxu0 0
  %1337 = vmatpush1.bf16.msra.mxu0 %v1334
  %1338 = vmatprep.subr.bf16.mxu0 0
  %1339 = vmatpush1.bf16.msra.mxu0 0
  %1340 = vmatprep.subr.bf16.mxu0 0
  %1341 = vmatpush1.bf16.msra.mxu0 0
  %1342 = vmatprep.subr.bf16.mxu0 0
  %1343 = vmatpush1.bf16.msra.mxu0 0
  %1344 = vmatprep.subr.bf16.mxu0 0
  %1345 = vmatpush1.bf16.msra.mxu0 0
  %1346 = vmatprep.subr.bf16.mxu0 0
  %1347 = vmatpush1.bf16.msra.mxu0 0
  %1348 = vmatprep.subr.bf16.mxu0 0
  %1349 = vmatpush1.bf16.msra.mxu0 0
  %1350 = vmatprep.subr.bf16.mxu0 0
  %1351 = vmatpush1.bf16.msra.mxu0 0
  %1352 = vmatprep.subr.bf16.mxu0 0
  %1353 = vmatpush1.bf16.msra.mxu0 0
  %1354 = vmatprep.subr.bf16.mxu0 0
  %1355 = vmatpush1.bf16.msra.mxu0 0
  %1356 = vmatprep.subr.bf16.mxu0 0
  %1357 = vmatpush1.bf16.msra.mxu0 0
  %1358 = vmatprep.subr.bf16.mxu0 0
  %1359 = vmatpush1.bf16.msra.mxu0 0
  %1360 = vmatprep.subr.bf16.mxu0 0
  %1361 = vmatpush1.bf16.msra.mxu0 0
  %1362 = vmatprep.subr.bf16.mxu0 0
  %1363 = vmatpush1.bf16.msra.mxu0 0
  %1364 = vmatprep.subr.bf16.mxu0 0
  %1365 = vmatpush1.bf16.msra.mxu0 0
  %1366 = vmatprep.subr.bf16.mxu0 0
  %1367 = vmatpush1.bf16.msra.mxu0 0
  %1368 = vmatprep.mubr.bf16.mxu0 0
  %1369 = vmatmul.mubr.bf16.gmra.mrb[0].mxu0 %v1331
  %v1370 = vpop.f32.mrb[0].mxu0
  %v1371 = vadd.f32 0.0, %v1370
  %v1372 = vpop.f32.mrb[0].mxu0
  %v1373 = vpop.f32.mrb[0].mxu0
  %v1374 = vpop.f32.mrb[0].mxu0
  %1375 = vdwg.mxu0
  %v1377 = vsel %vm1040, %v1134, 0
  %v1380 = vsel %vm1148, %v1142, 0
  %1382 = vmatprep.subr.bf16.mxu0 0
  %1383 = vmatpush1.bf16.msra.mxu0 %v1380
  %1384 = vmatprep.subr.bf16.mxu0 0
  %1385 = vmatpush1.bf16.msra.mxu0 0
  %1386 = vmatprep.subr.bf16.mxu0 0
  %1387 = vmatpush1.bf16.msra.mxu0 0
  %1388 = vmatprep.subr.bf16.mxu0 0
  %1389 = vmatpush1.bf16.msra.mxu0 0
  %1390 = vmatprep.subr.bf16.mxu0 0
  %1391 = vmatpush1.bf16.msra.mxu0 0
  %1392 = vmatprep.subr.bf16.mxu0 0
  %1393 = vmatpush1.bf16.msra.mxu0 0
  %1394 = vmatprep.subr.bf16.mxu0 0
  %1395 = vmatpush1.bf16.msra.mxu0 0
  %1396 = vmatprep.subr.bf16.mxu0 0
  %1397 = vmatpush1.bf16.msra.mxu0 0
  %1398 = vmatprep.subr.bf16.mxu0 0
  %1399 = vmatpush1.bf16.msra.mxu0 0
  %1400 = vmatprep.subr.bf16.mxu0 0
  %1401 = vmatpush1.bf16.msra.mxu0 0
  %1402 = vmatprep.subr.bf16.mxu0 0
  %1403 = vmatpush1.bf16.msra.mxu0 0
  %1404 = vmatprep.subr.bf16.mxu0 0
  %1405 = vmatpush1.bf16.msra.mxu0 0
  %1406 = vmatprep.subr.bf16.mxu0 0
  %1407 = vmatpush1.bf16.msra.mxu0 0
  %1408 = vmatprep.subr.bf16.mxu0 0
  %1409 = vmatpush1.bf16.msra.mxu0 0
  %1410 = vmatprep.subr.bf16.mxu0 0
  %1411 = vmatpush1.bf16.msra.mxu0 0
  %1412 = vmatprep.subr.bf16.mxu0 0
  %1413 = vmatpush1.bf16.msra.mxu0 0
  %1414 = vmatprep.mubr.bf16.mxu0 0
  %1415 = vmatmul.mubr.bf16.gmra.mrb[0].mxu0 %v1377
  %v1416 = vpop.f32.mrb[0].mxu0
  %v1417 = vadd.f32 0.0, %v1416
  %v1418 = vpop.f32.mrb[0].mxu0
  %v1419 = vpop.f32.mrb[0].mxu0
  %v1420 = vpop.f32.mrb[0].mxu0
  %1421 = vdwg.mxu0
  %v1423 = vsel %vm1040, %v1135, 0
  %v1426 = vsel %vm1148, %v1143, 0
  %1428 = vmatprep.subr.bf16.mxu0 0
  %1429 = vmatpush1.bf16.msra.mxu0 %v1426
  %1430 = vmatprep.subr.bf16.mxu0 0
  %1431 = vmatpush1.bf16.msra.mxu0 0
  %1432 = vmatprep.subr.bf16.mxu0 0
  %1433 = vmatpush1.bf16.msra.mxu0 0
  %1434 = vmatprep.subr.bf16.mxu0 0
  %1435 = vmatpush1.bf16.msra.mxu0 0
  %1436 = vmatprep.subr.bf16.mxu0 0
  %1437 = vmatpush1.bf16.msra.mxu0 0
  %1438 = vmatprep.subr.bf16.mxu0 0
  %1439 = vmatpush1.bf16.msra.mxu0 0
  %1440 = vmatprep.subr.bf16.mxu0 0
  %1441 = vmatpush1.bf16.msra.mxu0 0
  %1442 = vmatprep.subr.bf16.mxu0 0
  %1443 = vmatpush1.bf16.msra.mxu0 0
  %1444 = vmatprep.subr.bf16.mxu0 0
  %1445 = vmatpush1.bf16.msra.mxu0 0
  %1446 = vmatprep.subr.bf16.mxu0 0
  %1447 = vmatpush1.bf16.msra.mxu0 0
  %1448 = vmatprep.subr.bf16.mxu0 0
  %1449 = vmatpush1.bf16.msra.mxu0 0
  %1450 = vmatprep.subr.bf16.mxu0 0
  %1451 = vmatpush1.bf16.msra.mxu0 0
  %1452 = vmatprep.subr.bf16.mxu0 0
  %1453 = vmatpush1.bf16.msra.mxu0 0
  %1454 = vmatprep.subr.bf16.mxu0 0
  %1455 = vmatpush1.bf16.msra.mxu0 0
  %1456 = vmatprep.subr.bf16.mxu0 0
  %1457 = vmatpush1.bf16.msra.mxu0 0
  %1458 = vmatprep.subr.bf16.mxu0 0
  %1459 = vmatpush1.bf16.msra.mxu0 0
  %1460 = vmatprep.mubr.bf16.mxu0 0
  %1461 = vmatmul.mubr.bf16.gmra.mrb[0].mxu0 %v1423
  %v1462 = vpop.f32.mrb[0].mxu0
  %v1463 = vadd.f32 0.0, %v1462
  %v1464 = vpop.f32.mrb[0].mxu0
  %v1465 = vpop.f32.mrb[0].mxu0
  %v1466 = vpop.f32.mrb[0].mxu0
  %1467 = vdwg.mxu0
  %v1469 = vsel %vm1040, %v1136, 0
  %v1472 = vsel %vm1148, %v1144, 0
  %1474 = vmatprep.subr.bf16.mxu0 0
  %1475 = vmatpush1.bf16.msra.mxu0 %v1472
  %1476 = vmatprep.subr.bf16.mxu0 0
  %1477 = vmatpush1.bf16.msra.mxu0 0
  %1478 = vmatprep.subr.bf16.mxu0 0
  %1479 = vmatpush1.bf16.msra.mxu0 0
  %1480 = vmatprep.subr.bf16.mxu0 0
  %1481 = vmatpush1.bf16.msra.mxu0 0
  %1482 = vmatprep.subr.bf16.mxu0 0
  %1483 = vmatpush1.bf16.msra.mxu0 0
  %1484 = vmatprep.subr.bf16.mxu0 0
  %1485 = vmatpush1.bf16.msra.mxu0 0
  %1486 = vmatprep.subr.bf16.mxu0 0
  %1487 = vmatpush1.bf16.msra.mxu0 0
  %1488 = vmatprep.subr.bf16.mxu0 0
  %1489 = vmatpush1.bf16.msra.mxu0 0
  %1490 = vmatprep.subr.bf16.mxu0 0
  %1491 = vmatpush1.bf16.msra.mxu0 0
  %1492 = vmatprep.subr.bf16.mxu0 0
  %1493 = vmatpush1.bf16.msra.mxu0 0
  %1494 = vmatprep.subr.bf16.mxu0 0
  %1495 = vmatpush1.bf16.msra.mxu0 0
  %1496 = vmatprep.subr.bf16.mxu0 0
  %1497 = vmatpush1.bf16.msra.mxu0 0
  %1498 = vmatprep.subr.bf16.mxu0 0
  %1499 = vmatpush1.bf16.msra.mxu0 0
  %1500 = vmatprep.subr.bf16.mxu0 0
  %1501 = vmatpush1.bf16.msra.mxu0 0
  %1502 = vmatprep.subr.bf16.mxu0 0
  %1503 = vmatpush1.bf16.msra.mxu0 0
  %1504 = vmatprep.subr.bf16.mxu0 0
  %1505 = vmatpush1.bf16.msra.mxu0 0
  %1506 = vmatprep.mubr.bf16.mxu0 0
  %1507 = vmatmul.mubr.bf16.gmra.mrb[0].mxu0 %v1469
  %v1508 = vpop.f32.mrb[0].mxu0
  %v1509 = vadd.f32 0.0, %v1508
  %v1510 = vpop.f32.mrb[0].mxu0
  %v1511 = vpop.f32.mrb[0].mxu0
  %v1512 = vpop.f32.mrb[0].mxu0
  %1513 = vdwg.mxu0
  %v1514 = vpack.c.bf16 %v1233, %v1187
  %v1515 = vpack.c.bf16 %v1325, %v1279
  %v1516 = vpack.c.bf16 %v1417, %v1371
  %v1517 = vpack.c.bf16 %v1509, %v1463
  %1519 = vrot.lane.b32.xlu0 %v599, 64
  %v1520 = vpop.permute.xlu0 %1519
  %1522 = vrot.lane.b32.xlu0 %v607, 64
  %v1523 = vpop.permute.xlu0 %1522
  %v1525 = vsel %vm615, %v1520, 0
  %v1528 = vsel %vm615, %v1523, 0
  %1530 = vmatprep.subr.bf16.mxu0 0
  %1531 = vmatpush1.bf16.xpose.msra.mxu0 %v1528
  %1532 = vmatprep.subr.bf16.mxu0 0
  %1533 = vmatpush1.bf16.xpose.msra.mxu0 0
  %1534 = vmatprep.subr.bf16.mxu0 0
  %1535 = vmatpush1.bf16.xpose.msra.mxu0 0
  %1536 = vmatprep.subr.bf16.mxu0 0
  %1537 = vmatpush1.bf16.xpose.msra.mxu0 0
  %1538 = vmatprep.subr.bf16.mxu0 0
  %1539 = vmatpush1.bf16.xpose.msra.mxu0 0
  %1540 = vmatprep.subr.bf16.mxu0 0
  %1541 = vmatpush1.bf16.xpose.msra.mxu0 0
  %1542 = vmatprep.subr.bf16.mxu0 0
  %1543 = vmatpush1.bf16.xpose.msra.mxu0 0
  %1544 = vmatprep.subr.bf16.mxu0 0
  %1545 = vmatpush1.bf16.xpose.msra.mxu0 0
  %1546 = vmatprep.subr.bf16.mxu0 0
  %1547 = vmatpush1.bf16.xpose.msra.mxu0 0
  %1548 = vmatprep.subr.bf16.mxu0 0
  %1549 = vmatpush1.bf16.xpose.msra.mxu0 0
  %1550 = vmatprep.subr.bf16.mxu0 0
  %1551 = vmatpush1.bf16.xpose.msra.mxu0 0
  %1552 = vmatprep.subr.bf16.mxu0 0
  %1553 = vmatpush1.bf16.xpose.msra.mxu0 0
  %1554 = vmatprep.subr.bf16.mxu0 0
  %1555 = vmatpush1.bf16.xpose.msra.mxu0 0
  %1556 = vmatprep.subr.bf16.mxu0 0
  %1557 = vmatpush1.bf16.xpose.msra.mxu0 0
  %1558 = vmatprep.subr.bf16.mxu0 0
  %1559 = vmatpush1.bf16.xpose.msra.mxu0 0
  %1560 = vmatprep.subr.bf16.mxu0 0
  %1561 = vmatpush1.bf16.xpose.msra.mxu0 0
  %1562 = vmatprep.mubr.bf16.mxu0 0
  %1563 = vmatmul.mubr.bf16.gmra.mrb[0].mxu0 %v1525
  %v1564 = vpop.f32.mrb[0].mxu0
  %v1565 = vadd.f32 0.0, %v1564
  %v1566 = vpop.f32.mrb[0].mxu0
  %v1567 = vpop.f32.mrb[0].mxu0
  %v1568 = vpop.f32.mrb[0].mxu0
  %1569 = vdwg.mxu0
  %1571 = vrot.lane.b32.xlu0 %v600, 64
  %v1572 = vpop.permute.xlu0 %1571
  %1574 = vrot.lane.b32.xlu0 %v608, 64
  %v1575 = vpop.permute.xlu0 %1574
  %v1577 = vsel %vm615, %v1572, 0
  %v1580 = vsel %vm615, %v1575, 0
  %1582 = vmatprep.subr.bf16.mxu0 0
  %1583 = vmatpush1.bf16.xpose.msra.mxu0 %v1580
  %1584 = vmatprep.subr.bf16.mxu0 0
  %1585 = vmatpush1.bf16.xpose.msra.mxu0 0
  %1586 = vmatprep.subr.bf16.mxu0 0
  %1587 = vmatpush1.bf16.xpose.msra.mxu0 0
  %1588 = vmatprep.subr.bf16.mxu0 0
  %1589 = vmatpush1.bf16.xpose.msra.mxu0 0
  %1590 = vmatprep.subr.bf16.mxu0 0
  %1591 = vmatpush1.bf16.xpose.msra.mxu0 0
  %1592 = vmatprep.subr.bf16.mxu0 0
  %1593 = vmatpush1.bf16.xpose.msra.mxu0 0
  %1594 = vmatprep.subr.bf16.mxu0 0
  %1595 = vmatpush1.bf16.xpose.msra.mxu0 0
  %1596 = vmatprep.subr.bf16.mxu0 0
  %1597 = vmatpush1.bf16.xpose.msra.mxu0 0
  %1598 = vmatprep.subr.bf16.mxu0 0
  %1599 = vmatpush1.bf16.xpose.msra.mxu0 0
  %1600 = vmatprep.subr.bf16.mxu0 0
  %1601 = vmatpush1.bf16.xpose.msra.mxu0 0
  %1602 = vmatprep.subr.bf16.mxu0 0
  %1603 = vmatpush1.bf16.xpose.msra.mxu0 0
  %1604 = vmatprep.subr.bf16.mxu0 0
  %1605 = vmatpush1.bf16.xpose.msra.mxu0 0
  %1606 = vmatprep.subr.bf16.mxu0 0
  %1607 = vmatpush1.bf16.xpose.msra.mxu0 0
  %1608 = vmatprep.subr.bf16.mxu0 0
  %1609 = vmatpush1.bf16.xpose.msra.mxu0 0
  %1610 = vmatprep.subr.bf16.mxu0 0
  %1611 = vmatpush1.bf16.xpose.msra.mxu0 0
  %1612 = vmatprep.subr.bf16.mxu0 0
  %1613 = vmatpush1.bf16.xpose.msra.mxu0 0
  %1614 = vmatprep.mubr.bf16.mxu0 0
  %1615 = vmatmul.mubr.bf16.gmra.mrb[0].mxu0 %v1577
  %v1616 = vpop.f32.mrb[0].mxu0
  %v1617 = vadd.f32 0.0, %v1616
  %v1618 = vpop.f32.mrb[0].mxu0
  %v1619 = vpop.f32.mrb[0].mxu0
  %v1620 = vpop.f32.mrb[0].mxu0
  %1621 = vdwg.mxu0
  %1623 = vrot.lane.b32.xlu0 %v601, 64
  %v1624 = vpop.permute.xlu0 %1623
  %1626 = vrot.lane.b32.xlu0 %v609, 64
  %v1627 = vpop.permute.xlu0 %1626
  %v1629 = vsel %vm615, %v1624, 0
  %v1632 = vsel %vm615, %v1627, 0
  %1634 = vmatprep.subr.bf16.mxu0 0
  %1635 = vmatpush1.bf16.xpose.msra.mxu0 %v1632
  %1636 = vmatprep.subr.bf16.mxu0 0
  %1637 = vmatpush1.bf16.xpose.msra.mxu0 0
  %1638 = vmatprep.subr.bf16.mxu0 0
  %1639 = vmatpush1.bf16.xpose.msra.mxu0 0
  %1640 = vmatprep.subr.bf16.mxu0 0
  %1641 = vmatpush1.bf16.xpose.msra.mxu0 0
  %1642 = vmatprep.subr.bf16.mxu0 0
  %1643 = vmatpush1.bf16.xpose.msra.mxu0 0
  %1644 = vmatprep.subr.bf16.mxu0 0
  %1645 = vmatpush1.bf16.xpose.msra.mxu0 0
  %1646 = vmatprep.subr.bf16.mxu0 0
  %1647 = vmatpush1.bf16.xpose.msra.mxu0 0
  %1648 = vmatprep.subr.bf16.mxu0 0
  %1649 = vmatpush1.bf16.xpose.msra.mxu0 0
  %1650 = vmatprep.subr.bf16.mxu0 0
  %1651 = vmatpush1.bf16.xpose.msra.mxu0 0
  %1652 = vmatprep.subr.bf16.mxu0 0
  %1653 = vmatpush1.bf16.xpose.msra.mxu0 0
  %1654 = vmatprep.subr.bf16.mxu0 0
  %1655 = vmatpush1.bf16.xpose.msra.mxu0 0
  %1656 = vmatprep.subr.bf16.mxu0 0
  %1657 = vmatpush1.bf16.xpose.msra.mxu0 0
  %1658 = vmatprep.subr.bf16.mxu0 0
  %1659 = vmatpush1.bf16.xpose.msra.mxu0 0
  %1660 = vmatprep.subr.bf16.mxu0 0
  %1661 = vmatpush1.bf16.xpose.msra.mxu0 0
  %1662 = vmatprep.subr.bf16.mxu0 0
  %1663 = vmatpush1.bf16.xpose.msra.mxu0 0
  %1664 = vmatprep.subr.bf16.mxu0 0
  %1665 = vmatpush1.bf16.xpose.msra.mxu0 0
  %1666 = vmatprep.mubr.bf16.mxu0 0
  %1667 = vmatmul.mubr.bf16.gmra.mrb[0].mxu0 %v1629
  %v1668 = vpop.f32.mrb[0].mxu0
  %v1669 = vadd.f32 0.0, %v1668
  %v1670 = vpop.f32.mrb[0].mxu0
  %v1671 = vpop.f32.mrb[0].mxu0
  %v1672 = vpop.f32.mrb[0].mxu0
  %1673 = vdwg.mxu0
  %1675 = vrot.lane.b32.xlu0 %v602, 64
  %v1676 = vpop.permute.xlu0 %1675
  %1678 = vrot.lane.b32.xlu0 %v610, 64
  %v1679 = vpop.permute.xlu0 %1678
  %v1681 = vsel %vm615, %v1676, 0
  %v1684 = vsel %vm615, %v1679, 0
  %1686 = vmatprep.subr.bf16.mxu0 0
  %1687 = vmatpush1.bf16.xpose.msra.mxu0 %v1684
  %1688 = vmatprep.subr.bf16.mxu0 0
  %1689 = vmatpush1.bf16.xpose.msra.mxu0 0
  %1690 = vmatprep.subr.bf16.mxu0 0
  %1691 = vmatpush1.bf16.xpose.msra.mxu0 0
  %1692 = vmatprep.subr.bf16.mxu0 0
  %1693 = vmatpush1.bf16.xpose.msra.mxu0 0
  %1694 = vmatprep.subr.bf16.mxu0 0
  %1695 = vmatpush1.bf16.xpose.msra.mxu0 0
  %1696 = vmatprep.subr.bf16.mxu0 0
  %1697 = vmatpush1.bf16.xpose.msra.mxu0 0
  %1698 = vmatprep.subr.bf16.mxu0 0
  %1699 = vmatpush1.bf16.xpose.msra.mxu0 0
  %1700 = vmatprep.subr.bf16.mxu0 0
  %1701 = vmatpush1.bf16.xpose.msra.mxu0 0
  %1702 = vmatprep.subr.bf16.mxu0 0
  %1703 = vmatpush1.bf16.xpose.msra.mxu0 0
  %1704 = vmatprep.subr.bf16.mxu0 0
  %1705 = vmatpush1.bf16.xpose.msra.mxu0 0
  %1706 = vmatprep.subr.bf16.mxu0 0
  %1707 = vmatpush1.bf16.xpose.msra.mxu0 0
  %1708 = vmatprep.subr.bf16.mxu0 0
  %1709 = vmatpush1.bf16.xpose.msra.mxu0 0
  %1710 = vmatprep.subr.bf16.mxu0 0
  %1711 = vmatpush1.bf16.xpose.msra.mxu0 0
  %1712 = vmatprep.subr.bf16.mxu0 0
  %1713 = vmatpush1.bf16.xpose.msra.mxu0 0
  %1714 = vmatprep.subr.bf16.mxu0 0
  %1715 = vmatpush1.bf16.xpose.msra.mxu0 0
  %1716 = vmatprep.subr.bf16.mxu0 0
  %1717 = vmatpush1.bf16.xpose.msra.mxu0 0
  %1718 = vmatprep.mubr.bf16.mxu0 0
  %1719 = vmatmul.mubr.bf16.gmra.mrb[0].mxu0 %v1681
  %v1720 = vpop.f32.mrb[0].mxu0
  %v1721 = vadd.f32 0.0, %v1720
  %v1722 = vpop.f32.mrb[0].mxu0
  %v1723 = vpop.f32.mrb[0].mxu0
  %v1724 = vpop.f32.mrb[0].mxu0
  %1725 = vdwg.mxu0
  %1727 = vrot.lane.b32.xlu0 %v603, 64
  %v1728 = vpop.permute.xlu0 %1727
  %1730 = vrot.lane.b32.xlu0 %v611, 64
  %v1731 = vpop.permute.xlu0 %1730
  %v1733 = vsel %vm615, %v1728, 0
  %v1736 = vsel %vm615, %v1731, 0
  %1738 = vmatprep.subr.bf16.mxu0 0
  %1739 = vmatpush1.bf16.xpose.msra.mxu0 %v1736
  %1740 = vmatprep.subr.bf16.mxu0 0
  %1741 = vmatpush1.bf16.xpose.msra.mxu0 0
  %1742 = vmatprep.subr.bf16.mxu0 0
  %1743 = vmatpush1.bf16.xpose.msra.mxu0 0
  %1744 = vmatprep.subr.bf16.mxu0 0
  %1745 = vmatpush1.bf16.xpose.msra.mxu0 0
  %1746 = vmatprep.subr.bf16.mxu0 0
  %1747 = vmatpush1.bf16.xpose.msra.mxu0 0
  %1748 = vmatprep.subr.bf16.mxu0 0
  %1749 = vmatpush1.bf16.xpose.msra.mxu0 0
  %1750 = vmatprep.subr.bf16.mxu0 0
  %1751 = vmatpush1.bf16.xpose.msra.mxu0 0
  %1752 = vmatprep.subr.bf16.mxu0 0
  %1753 = vmatpush1.bf16.xpose.msra.mxu0 0
  %1754 = vmatprep.subr.bf16.mxu0 0
  %1755 = vmatpush1.bf16.xpose.msra.mxu0 0
  %1756 = vmatprep.subr.bf16.mxu0 0
  %1757 = vmatpush1.bf16.xpose.msra.mxu0 0
  %1758 = vmatprep.subr.bf16.mxu0 0
  %1759 = vmatpush1.bf16.xpose.msra.mxu0 0
  %1760 = vmatprep.subr.bf16.mxu0 0
  %1761 = vmatpush1.bf16.xpose.msra.mxu0 0
  %1762 = vmatprep.subr.bf16.mxu0 0
  %1763 = vmatpush1.bf16.xpose.msra.mxu0 0
  %1764 = vmatprep.subr.bf16.mxu0 0
  %1765 = vmatpush1.bf16.xpose.msra.mxu0 0
  %1766 = vmatprep.subr.bf16.mxu0 0
  %1767 = vmatpush1.bf16.xpose.msra.mxu0 0
  %1768 = vmatprep.subr.bf16.mxu0 0
  %1769 = vmatpush1.bf16.xpose.msra.mxu0 0
  %1770 = vmatprep.mubr.bf16.mxu0 0
  %1771 = vmatmul.mubr.bf16.gmra.mrb[0].mxu0 %v1733
  %v1772 = vpop.f32.mrb[0].mxu0
  %v1773 = vadd.f32 0.0, %v1772
  %v1774 = vpop.f32.mrb[0].mxu0
  %v1775 = vpop.f32.mrb[0].mxu0
  %v1776 = vpop.f32.mrb[0].mxu0
  %1777 = vdwg.mxu0
  %1779 = vrot.lane.b32.xlu0 %v604, 64
  %v1780 = vpop.permute.xlu0 %1779
  %1782 = vrot.lane.b32.xlu0 %v612, 64
  %v1783 = vpop.permute.xlu0 %1782
  %v1785 = vsel %vm615, %v1780, 0
  %v1788 = vsel %vm615, %v1783, 0
  %1790 = vmatprep.subr.bf16.mxu0 0
  %1791 = vmatpush1.bf16.xpose.msra.mxu0 %v1788
  %1792 = vmatprep.subr.bf16.mxu0 0
  %1793 = vmatpush1.bf16.xpose.msra.mxu0 0
  %1794 = vmatprep.subr.bf16.mxu0 0
  %1795 = vmatpush1.bf16.xpose.msra.mxu0 0
  %1796 = vmatprep.subr.bf16.mxu0 0
  %1797 = vmatpush1.bf16.xpose.msra.mxu0 0
  %1798 = vmatprep.subr.bf16.mxu0 0
  %1799 = vmatpush1.bf16.xpose.msra.mxu0 0
  %1800 = vmatprep.subr.bf16.mxu0 0
  %1801 = vmatpush1.bf16.xpose.msra.mxu0 0
  %1802 = vmatprep.subr.bf16.mxu0 0
  %1803 = vmatpush1.bf16.xpose.msra.mxu0 0
  %1804 = vmatprep.subr.bf16.mxu0 0
  %1805 = vmatpush1.bf16.xpose.msra.mxu0 0
  %1806 = vmatprep.subr.bf16.mxu0 0
  %1807 = vmatpush1.bf16.xpose.msra.mxu0 0
  %1808 = vmatprep.subr.bf16.mxu0 0
  %1809 = vmatpush1.bf16.xpose.msra.mxu0 0
  %1810 = vmatprep.subr.bf16.mxu0 0
  %1811 = vmatpush1.bf16.xpose.msra.mxu0 0
  %1812 = vmatprep.subr.bf16.mxu0 0
  %1813 = vmatpush1.bf16.xpose.msra.mxu0 0
  %1814 = vmatprep.subr.bf16.mxu0 0
  %1815 = vmatpush1.bf16.xpose.msra.mxu0 0
  %1816 = vmatprep.subr.bf16.mxu0 0
  %1817 = vmatpush1.bf16.xpose.msra.mxu0 0
  %1818 = vmatprep.subr.bf16.mxu0 0
  %1819 = vmatpush1.bf16.xpose.msra.mxu0 0
  %1820 = vmatprep.subr.bf16.mxu0 0
  %1821 = vmatpush1.bf16.xpose.msra.mxu0 0
  %1822 = vmatprep.mubr.bf16.mxu0 0
  %1823 = vmatmul.mubr.bf16.gmra.mrb[0].mxu0 %v1785
  %v1824 = vpop.f32.mrb[0].mxu0
  %v1825 = vadd.f32 0.0, %v1824
  %v1826 = vpop.f32.mrb[0].mxu0
  %v1827 = vpop.f32.mrb[0].mxu0
  %v1828 = vpop.f32.mrb[0].mxu0
  %1829 = vdwg.mxu0
  %1831 = vrot.lane.b32.xlu0 %v605, 64
  %v1832 = vpop.permute.xlu0 %1831
  %1834 = vrot.lane.b32.xlu0 %v613, 64
  %v1835 = vpop.permute.xlu0 %1834
  %v1837 = vsel %vm615, %v1832, 0
  %v1840 = vsel %vm615, %v1835, 0
  %1842 = vmatprep.subr.bf16.mxu0 0
  %1843 = vmatpush1.bf16.xpose.msra.mxu0 %v1840
  %1844 = vmatprep.subr.bf16.mxu0 0
  %1845 = vmatpush1.bf16.xpose.msra.mxu0 0
  %1846 = vmatprep.subr.bf16.mxu0 0
  %1847 = vmatpush1.bf16.xpose.msra.mxu0 0
  %1848 = vmatprep.subr.bf16.mxu0 0
  %1849 = vmatpush1.bf16.xpose.msra.mxu0 0
  %1850 = vmatprep.subr.bf16.mxu0 0
  %1851 = vmatpush1.bf16.xpose.msra.mxu0 0
  %1852 = vmatprep.subr.bf16.mxu0 0
  %1853 = vmatpush1.bf16.xpose.msra.mxu0 0
  %1854 = vmatprep.subr.bf16.mxu0 0
  %1855 = vmatpush1.bf16.xpose.msra.mxu0 0
  %1856 = vmatprep.subr.bf16.mxu0 0
  %1857 = vmatpush1.bf16.xpose.msra.mxu0 0
  %1858 = vmatprep.subr.bf16.mxu0 0
  %1859 = vmatpush1.bf16.xpose.msra.mxu0 0
  %1860 = vmatprep.subr.bf16.mxu0 0
  %1861 = vmatpush1.bf16.xpose.msra.mxu0 0
  %1862 = vmatprep.subr.bf16.mxu0 0
  %1863 = vmatpush1.bf16.xpose.msra.mxu0 0
  %1864 = vmatprep.subr.bf16.mxu0 0
  %1865 = vmatpush1.bf16.xpose.msra.mxu0 0
  %1866 = vmatprep.subr.bf16.mxu0 0
  %1867 = vmatpush1.bf16.xpose.msra.mxu0 0
  %1868 = vmatprep.subr.bf16.mxu0 0
  %1869 = vmatpush1.bf16.xpose.msra.mxu0 0
  %1870 = vmatprep.subr.bf16.mxu0 0
  %1871 = vmatpush1.bf16.xpose.msra.mxu0 0
  %1872 = vmatprep.subr.bf16.mxu0 0
  %1873 = vmatpush1.bf16.xpose.msra.mxu0 0
  %1874 = vmatprep.mubr.bf16.mxu0 0
  %1875 = vmatmul.mubr.bf16.gmra.mrb[0].mxu0 %v1837
  %v1876 = vpop.f32.mrb[0].mxu0
  %v1877 = vadd.f32 0.0, %v1876
  %v1878 = vpop.f32.mrb[0].mxu0
  %v1879 = vpop.f32.mrb[0].mxu0
  %v1880 = vpop.f32.mrb[0].mxu0
  %1881 = vdwg.mxu0
  %1883 = vrot.lane.b32.xlu0 %v606, 64
  %v1884 = vpop.permute.xlu0 %1883
  %1886 = vrot.lane.b32.xlu0 %v614, 64
  %v1887 = vpop.permute.xlu0 %1886
  %v1889 = vsel %vm615, %v1884, 0
  %v1892 = vsel %vm615, %v1887, 0
  %1894 = vmatprep.subr.bf16.mxu0 0
  %1895 = vmatpush1.bf16.xpose.msra.mxu0 %v1892
  %1896 = vmatprep.subr.bf16.mxu0 0
  %1897 = vmatpush1.bf16.xpose.msra.mxu0 0
  %1898 = vmatprep.subr.bf16.mxu0 0
  %1899 = vmatpush1.bf16.xpose.msra.mxu0 0
  %1900 = vmatprep.subr.bf16.mxu0 0
  %1901 = vmatpush1.bf16.xpose.msra.mxu0 0
  %1902 = vmatprep.subr.bf16.mxu0 0
  %1903 = vmatpush1.bf16.xpose.msra.mxu0 0
  %1904 = vmatprep.subr.bf16.mxu0 0
  %1905 = vmatpush1.bf16.xpose.msra.mxu0 0
  %1906 = vmatprep.subr.bf16.mxu0 0
  %1907 = vmatpush1.bf16.xpose.msra.mxu0 0
  %1908 = vmatprep.subr.bf16.mxu0 0
  %1909 = vmatpush1.bf16.xpose.msra.mxu0 0
  %1910 = vmatprep.subr.bf16.mxu0 0
  %1911 = vmatpush1.bf16.xpose.msra.mxu0 0
  %1912 = vmatprep.subr.bf16.mxu0 0
  %1913 = vmatpush1.bf16.xpose.msra.mxu0 0
  %1914 = vmatprep.subr.bf16.mxu0 0
  %1915 = vmatpush1.bf16.xpose.msra.mxu0 0
  %1916 = vmatprep.subr.bf16.mxu0 0
  %1917 = vmatpush1.bf16.xpose.msra.mxu0 0
  %1918 = vmatprep.subr.bf16.mxu0 0
  %1919 = vmatpush1.bf16.xpose.msra.mxu0 0
  %1920 = vmatprep.subr.bf16.mxu0 0
  %1921 = vmatpush1.bf16.xpose.msra.mxu0 0
  %1922 = vmatprep.subr.bf16.mxu0 0
  %1923 = vmatpush1.bf16.xpose.msra.mxu0 0
  %1924 = vmatprep.subr.bf16.mxu0 0
  %1925 = vmatpush1.bf16.xpose.msra.mxu0 0
  %1926 = vmatprep.mubr.bf16.mxu0 0
  %1927 = vmatmul.mubr.bf16.gmra.mrb[0].mxu0 %v1889
  %v1928 = vpop.f32.mrb[0].mxu0
  %v1929 = vadd.f32 0.0, %v1928
  %v1930 = vpop.f32.mrb[0].mxu0
  %v1931 = vpop.f32.mrb[0].mxu0
  %v1932 = vpop.f32.mrb[0].mxu0
  %1933 = vdwg.mxu0
  %v1934 = vmul.f32 %v1565, 0.125
  %v1935 = vmul.f32 %v1617, 0.125
  %v1936 = vmul.f32 %v1669, 0.125
  %v1937 = vmul.f32 %v1721, 0.125
  %v1938 = vmul.f32 %v1773, 0.125
  %v1939 = vmul.f32 %v1825, 0.125
  %v1940 = vmul.f32 %v1877, 0.125
  %v1941 = vmul.f32 %v1929, 0.125
  %v1942 = vadd.f32 %v1934, %v995
  %v1943 = vadd.f32 %v1935, %v999
  %v1944 = vadd.f32 %v1936, %v1003
  %v1945 = vadd.f32 %v1937, %v1007
  %v1946 = vadd.f32 %v1938, %v1011
  %v1947 = vadd.f32 %v1939, %v1015
  %v1948 = vadd.f32 %v1940, %v1019
  %v1949 = vadd.f32 %v1941, %v1023
  %v1950 = vsel %vm1040, %v1942, -inf
  %1951 = vmax.xlane.f32.xlu0 %v1950
  %v1952 = vpop.xlane.xlu0 %1951
  %v1953 = vsel %vm1040, %v1943, -inf
  %1954 = vmax.xlane.f32.xlu0 %v1953
  %v1955 = vpop.xlane.xlu0 %1954
  %v1956 = vsel %vm1040, %v1944, -inf
  %1957 = vmax.xlane.f32.xlu0 %v1956
  %v1958 = vpop.xlane.xlu0 %1957
  %v1959 = vsel %vm1040, %v1945, -inf
  %1960 = vmax.xlane.f32.xlu0 %v1959
  %v1961 = vpop.xlane.xlu0 %1960
  %v1962 = vsel %vm1040, %v1946, -inf
  %1963 = vmax.xlane.f32.xlu0 %v1962
  %v1964 = vpop.xlane.xlu0 %1963
  %v1965 = vsel %vm1040, %v1947, -inf
  %1966 = vmax.xlane.f32.xlu0 %v1965
  %v1967 = vpop.xlane.xlu0 %1966
  %v1968 = vsel %vm1040, %v1948, -inf
  %1969 = vmax.xlane.f32.xlu0 %v1968
  %v1970 = vpop.xlane.xlu0 %1969
  %v1971 = vsel %vm1040, %v1949, -inf
  %1972 = vmax.xlane.f32.xlu0 %v1971
  %v1973 = vpop.xlane.xlu0 %1972
  %v1974 = vsub.f32 %v1942, %v1952
  %v1975 = vsub.f32 %v1943, %v1955
  %v1976 = vsub.f32 %v1944, %v1958
  %v1977 = vsub.f32 %v1945, %v1961
  %v1978 = vsub.f32 %v1946, %v1964
  %v1979 = vsub.f32 %v1947, %v1967
  %v1980 = vsub.f32 %v1948, %v1970
  %v1981 = vsub.f32 %v1949, %v1973
  %v1982 = vmul.f32 %v1974, 1.442695
  %v1983 = vpow.pop %v1982
  %v1984 = vmul.f32 %v1975, 1.442695
  %v1985 = vpow.pop %v1984
  %v1986 = vmul.f32 %v1976, 1.442695
  %v1987 = vpow.pop %v1986
  %v1988 = vmul.f32 %v1977, 1.442695
  %v1989 = vpow.pop %v1988
  %v1990 = vmul.f32 %v1978, 1.442695
  %v1991 = vpow.pop %v1990
  %v1992 = vmul.f32 %v1979, 1.442695
  %v1993 = vpow.pop %v1992
  %v1994 = vmul.f32 %v1980, 1.442695
  %v1995 = vpow.pop %v1994
  %v1996 = vmul.f32 %v1981, 1.442695
  %v1997 = vpow.pop %v1996
  %v1998 = vsel %vm1040, %v1983, 0.0
  %1999 = vadd.xlane.f32.xlu0 %v1998
  %v2000 = vpop.xlane.xlu0 %1999
  %v2001 = vsel %vm1040, %v1985, 0.0
  %2002 = vadd.xlane.f32.xlu0 %v2001
  %v2003 = vpop.xlane.xlu0 %2002
  %v2004 = vsel %vm1040, %v1987, 0.0
  %2005 = vadd.xlane.f32.xlu0 %v2004
  %v2006 = vpop.xlane.xlu0 %2005
  %v2007 = vsel %vm1040, %v1989, 0.0
  %2008 = vadd.xlane.f32.xlu0 %v2007
  %v2009 = vpop.xlane.xlu0 %2008
  %v2010 = vsel %vm1040, %v1991, 0.0
  %2011 = vadd.xlane.f32.xlu0 %v2010
  %v2012 = vpop.xlane.xlu0 %2011
  %v2013 = vsel %vm1040, %v1993, 0.0
  %2014 = vadd.xlane.f32.xlu0 %v2013
  %v2015 = vpop.xlane.xlu0 %2014
  %v2016 = vsel %vm1040, %v1995, 0.0
  %2017 = vadd.xlane.f32.xlu0 %v2016
  %v2018 = vpop.xlane.xlu0 %2017
  %v2019 = vsel %vm1040, %v1997, 0.0
  %2020 = vadd.xlane.f32.xlu0 %v2019
  %v2021 = vpop.xlane.xlu0 %2020
  %v2022 = vrcp.pop %v2000
  %v2023 = vmul.f32 %v1983, %v2022
  %v2024 = vrcp.pop %v2003
  %v2025 = vmul.f32 %v1985, %v2024
  %v2026 = vrcp.pop %v2006
  %v2027 = vmul.f32 %v1987, %v2026
  %v2028 = vrcp.pop %v2009
  %v2029 = vmul.f32 %v1989, %v2028
  %v2030 = vrcp.pop %v2012
  %v2031 = vmul.f32 %v1991, %v2030
  %v2032 = vrcp.pop %v2015
  %v2033 = vmul.f32 %v1993, %v2032
  %v2034 = vrcp.pop %v2018
  %v2035 = vmul.f32 %v1995, %v2034
  %v2036 = vrcp.pop %v2021
  %v2037 = vmul.f32 %v1997, %v2036
  %v2038 = vpack.c.bf16 %v2023, %v2023
  %v2039 = vpack.c.bf16 %v2025, %v2025
  %v2040 = vpack.c.bf16 %v2027, %v2027
  %v2041 = vpack.c.bf16 %v2029, %v2029
  %v2042 = vpack.c.bf16 %v2031, %v2031
  %v2043 = vpack.c.bf16 %v2033, %v2033
  %v2044 = vpack.c.bf16 %v2035, %v2035
  %v2045 = vpack.c.bf16 %v2037, %v2037
  %2047 = vrot.lane.b32.xlu0 %v1137, 64
  %v2048 = vpop.permute.xlu0 %2047
  %v2050 = vsel %vm1040, %v2038, 0
  %v2053 = vsel %vm1148, %v2048, 0
  %2055 = vmatprep.subr.bf16.mxu0 0
  %2056 = vmatpush1.bf16.msra.mxu0 %v2053
  %2057 = vmatprep.subr.bf16.mxu0 0
  %2058 = vmatpush1.bf16.msra.mxu0 0
  %2059 = vmatprep.subr.bf16.mxu0 0
  %2060 = vmatpush1.bf16.msra.mxu0 0
  %2061 = vmatprep.subr.bf16.mxu0 0
  %2062 = vmatpush1.bf16.msra.mxu0 0
  %2063 = vmatprep.subr.bf16.mxu0 0
  %2064 = vmatpush1.bf16.msra.mxu0 0
  %2065 = vmatprep.subr.bf16.mxu0 0
  %2066 = vmatpush1.bf16.msra.mxu0 0
  %2067 = vmatprep.subr.bf16.mxu0 0
  %2068 = vmatpush1.bf16.msra.mxu0 0
  %2069 = vmatprep.subr.bf16.mxu0 0
  %2070 = vmatpush1.bf16.msra.mxu0 0
  %2071 = vmatprep.subr.bf16.mxu0 0
  %2072 = vmatpush1.bf16.msra.mxu0 0
  %2073 = vmatprep.subr.bf16.mxu0 0
  %2074 = vmatpush1.bf16.msra.mxu0 0
  %2075 = vmatprep.subr.bf16.mxu0 0
  %2076 = vmatpush1.bf16.msra.mxu0 0
  %2077 = vmatprep.subr.bf16.mxu0 0
  %2078 = vmatpush1.bf16.msra.mxu0 0
  %2079 = vmatprep.subr.bf16.mxu0 0
  %2080 = vmatpush1.bf16.msra.mxu0 0
  %2081 = vmatprep.subr.bf16.mxu0 0
  %2082 = vmatpush1.bf16.msra.mxu0 0
  %2083 = vmatprep.subr.bf16.mxu0 0
  %2084 = vmatpush1.bf16.msra.mxu0 0
  %2085 = vmatprep.subr.bf16.mxu0 0
  %2086 = vmatpush1.bf16.msra.mxu0 0
  %2087 = vmatprep.mubr.bf16.mxu0 0
  %2088 = vmatmul.mubr.bf16.gmra.mrb[0].mxu0 %v2050
  %v2089 = vpop.f32.mrb[0].mxu0
  %v2090 = vadd.f32 0.0, %v2089
  %v2091 = vpop.f32.mrb[0].mxu0
  %v2092 = vpop.f32.mrb[0].mxu0
  %v2093 = vpop.f32.mrb[0].mxu0
  %2094 = vdwg.mxu0
  %2096 = vrot.lane.b32.xlu0 %v1138, 64
  %v2097 = vpop.permute.xlu0 %2096
  %v2099 = vsel %vm1040, %v2039, 0
  %v2102 = vsel %vm1148, %v2097, 0
  %2104 = vmatprep.subr.bf16.mxu0 0
  %2105 = vmatpush1.bf16.msra.mxu0 %v2102
  %2106 = vmatprep.subr.bf16.mxu0 0
  %2107 = vmatpush1.bf16.msra.mxu0 0
  %2108 = vmatprep.subr.bf16.mxu0 0
  %2109 = vmatpush1.bf16.msra.mxu0 0
  %2110 = vmatprep.subr.bf16.mxu0 0
  %2111 = vmatpush1.bf16.msra.mxu0 0
  %2112 = vmatprep.subr.bf16.mxu0 0
  %2113 = vmatpush1.bf16.msra.mxu0 0
  %2114 = vmatprep.subr.bf16.mxu0 0
  %2115 = vmatpush1.bf16.msra.mxu0 0
  %2116 = vmatprep.subr.bf16.mxu0 0
  %2117 = vmatpush1.bf16.msra.mxu0 0
  %2118 = vmatprep.subr.bf16.mxu0 0
  %2119 = vmatpush1.bf16.msra.mxu0 0
  %2120 = vmatprep.subr.bf16.mxu0 0
  %2121 = vmatpush1.bf16.msra.mxu0 0
  %2122 = vmatprep.subr.bf16.mxu0 0
  %2123 = vmatpush1.bf16.msra.mxu0 0
  %2124 = vmatprep.subr.bf16.mxu0 0
  %2125 = vmatpush1.bf16.msra.mxu0 0
  %2126 = vmatprep.subr.bf16.mxu0 0
  %2127 = vmatpush1.bf16.msra.mxu0 0
  %2128 = vmatprep.subr.bf16.mxu0 0
  %2129 = vmatpush1.bf16.msra.mxu0 0
  %2130 = vmatprep.subr.bf16.mxu0 0
  %2131 = vmatpush1.bf16.msra.mxu0 0
  %2132 = vmatprep.subr.bf16.mxu0 0
  %2133 = vmatpush1.bf16.msra.mxu0 0
  %2134 = vmatprep.subr.bf16.mxu0 0
  %2135 = vmatpush1.bf16.msra.mxu0 0
  %2136 = vmatprep.mubr.bf16.mxu0 0
  %2137 = vmatmul.mubr.bf16.gmra.mrb[0].mxu0 %v2099
  %v2138 = vpop.f32.mrb[0].mxu0
  %v2139 = vadd.f32 0.0, %v2138
  %v2140 = vpop.f32.mrb[0].mxu0
  %v2141 = vpop.f32.mrb[0].mxu0
  %v2142 = vpop.f32.mrb[0].mxu0
  %2143 = vdwg.mxu0
  %2145 = vrot.lane.b32.xlu0 %v1139, 64
  %v2146 = vpop.permute.xlu0 %2145
  %v2148 = vsel %vm1040, %v2040, 0
  %v2151 = vsel %vm1148, %v2146, 0
  %2153 = vmatprep.subr.bf16.mxu0 0
  %2154 = vmatpush1.bf16.msra.mxu0 %v2151
  %2155 = vmatprep.subr.bf16.mxu0 0
  %2156 = vmatpush1.bf16.msra.mxu0 0
  %2157 = vmatprep.subr.bf16.mxu0 0
  %2158 = vmatpush1.bf16.msra.mxu0 0
  %2159 = vmatprep.subr.bf16.mxu0 0
  %2160 = vmatpush1.bf16.msra.mxu0 0
  %2161 = vmatprep.subr.bf16.mxu0 0
  %2162 = vmatpush1.bf16.msra.mxu0 0
  %2163 = vmatprep.subr.bf16.mxu0 0
  %2164 = vmatpush1.bf16.msra.mxu0 0
  %2165 = vmatprep.subr.bf16.mxu0 0
  %2166 = vmatpush1.bf16.msra.mxu0 0
  %2167 = vmatprep.subr.bf16.mxu0 0
  %2168 = vmatpush1.bf16.msra.mxu0 0
  %2169 = vmatprep.subr.bf16.mxu0 0
  %2170 = vmatpush1.bf16.msra.mxu0 0
  %2171 = vmatprep.subr.bf16.mxu0 0
  %2172 = vmatpush1.bf16.msra.mxu0 0
  %2173 = vmatprep.subr.bf16.mxu0 0
  %2174 = vmatpush1.bf16.msra.mxu0 0
  %2175 = vmatprep.subr.bf16.mxu0 0
  %2176 = vmatpush1.bf16.msra.mxu0 0
  %2177 = vmatprep.subr.bf16.mxu0 0
  %2178 = vmatpush1.bf16.msra.mxu0 0
  %2179 = vmatprep.subr.bf16.mxu0 0
  %2180 = vmatpush1.bf16.msra.mxu0 0
  %2181 = vmatprep.subr.bf16.mxu0 0
  %2182 = vmatpush1.bf16.msra.mxu0 0
  %2183 = vmatprep.subr.bf16.mxu0 0
  %2184 = vmatpush1.bf16.msra.mxu0 0
  %2185 = vmatprep.mubr.bf16.mxu0 0
  %2186 = vmatmul.mubr.bf16.gmra.mrb[0].mxu0 %v2148
  %v2187 = vpop.f32.mrb[0].mxu0
  %v2188 = vadd.f32 0.0, %v2187
  %v2189 = vpop.f32.mrb[0].mxu0
  %v2190 = vpop.f32.mrb[0].mxu0
  %v2191 = vpop.f32.mrb[0].mxu0
  %2192 = vdwg.mxu0
  %2194 = vrot.lane.b32.xlu0 %v1140, 64
  %v2195 = vpop.permute.xlu0 %2194
  %v2197 = vsel %vm1040, %v2041, 0
  %v2200 = vsel %vm1148, %v2195, 0
  %2202 = vmatprep.subr.bf16.mxu0 0
  %2203 = vmatpush1.bf16.msra.mxu0 %v2200
  %2204 = vmatprep.subr.bf16.mxu0 0
  %2205 = vmatpush1.bf16.msra.mxu0 0
  %2206 = vmatprep.subr.bf16.mxu0 0
  %2207 = vmatpush1.bf16.msra.mxu0 0
  %2208 = vmatprep.subr.bf16.mxu0 0
  %2209 = vmatpush1.bf16.msra.mxu0 0
  %2210 = vmatprep.subr.bf16.mxu0 0
  %2211 = vmatpush1.bf16.msra.mxu0 0
  %2212 = vmatprep.subr.bf16.mxu0 0
  %2213 = vmatpush1.bf16.msra.mxu0 0
  %2214 = vmatprep.subr.bf16.mxu0 0
  %2215 = vmatpush1.bf16.msra.mxu0 0
  %2216 = vmatprep.subr.bf16.mxu0 0
  %2217 = vmatpush1.bf16.msra.mxu0 0
  %2218 = vmatprep.subr.bf16.mxu0 0
  %2219 = vmatpush1.bf16.msra.mxu0 0
  %2220 = vmatprep.subr.bf16.mxu0 0
  %2221 = vmatpush1.bf16.msra.mxu0 0
  %2222 = vmatprep.subr.bf16.mxu0 0
  %2223 = vmatpush1.bf16.msra.mxu0 0
  %2224 = vmatprep.subr.bf16.mxu0 0
  %2225 = vmatpush1.bf16.msra.mxu0 0
  %2226 = vmatprep.subr.bf16.mxu0 0
  %2227 = vmatpush1.bf16.msra.mxu0 0
  %2228 = vmatprep.subr.bf16.mxu0 0
  %2229 = vmatpush1.bf16.msra.mxu0 0
  %2230 = vmatprep.subr.bf16.mxu0 0
  %2231 = vmatpush1.bf16.msra.mxu0 0
  %2232 = vmatprep.subr.bf16.mxu0 0
  %2233 = vmatpush1.bf16.msra.mxu0 0
  %2234 = vmatprep.mubr.bf16.mxu0 0
  %2235 = vmatmul.mubr.bf16.gmra.mrb[0].mxu0 %v2197
  %v2236 = vpop.f32.mrb[0].mxu0
  %v2237 = vadd.f32 0.0, %v2236
  %v2238 = vpop.f32.mrb[0].mxu0
  %v2239 = vpop.f32.mrb[0].mxu0
  %v2240 = vpop.f32.mrb[0].mxu0
  %2241 = vdwg.mxu0
  %2243 = vrot.lane.b32.xlu0 %v1141, 64
  %v2244 = vpop.permute.xlu0 %2243
  %v2246 = vsel %vm1040, %v2042, 0
  %v2249 = vsel %vm1148, %v2244, 0
  %2251 = vmatprep.subr.bf16.mxu0 0
  %2252 = vmatpush1.bf16.msra.mxu0 %v2249
  %2253 = vmatprep.subr.bf16.mxu0 0
  %2254 = vmatpush1.bf16.msra.mxu0 0
  %2255 = vmatprep.subr.bf16.mxu0 0
  %2256 = vmatpush1.bf16.msra.mxu0 0
  %2257 = vmatprep.subr.bf16.mxu0 0
  %2258 = vmatpush1.bf16.msra.mxu0 0
  %2259 = vmatprep.subr.bf16.mxu0 0
  %2260 = vmatpush1.bf16.msra.mxu0 0
  %2261 = vmatprep.subr.bf16.mxu0 0
  %2262 = vmatpush1.bf16.msra.mxu0 0
  %2263 = vmatprep.subr.bf16.mxu0 0
  %2264 = vmatpush1.bf16.msra.mxu0 0
  %2265 = vmatprep.subr.bf16.mxu0 0
  %2266 = vmatpush1.bf16.msra.mxu0 0
  %2267 = vmatprep.subr.bf16.mxu0 0
  %2268 = vmatpush1.bf16.msra.mxu0 0
  %2269 = vmatprep.subr.bf16.mxu0 0
  %2270 = vmatpush1.bf16.msra.mxu0 0
  %2271 = vmatprep.subr.bf16.mxu0 0
  %2272 = vmatpush1.bf16.msra.mxu0 0
  %2273 = vmatprep.subr.bf16.mxu0 0
  %2274 = vmatpush1.bf16.msra.mxu0 0
  %2275 = vmatprep.subr.bf16.mxu0 0
  %2276 = vmatpush1.bf16.msra.mxu0 0
  %2277 = vmatprep.subr.bf16.mxu0 0
  %2278 = vmatpush1.bf16.msra.mxu0 0
  %2279 = vmatprep.subr.bf16.mxu0 0
  %2280 = vmatpush1.bf16.msra.mxu0 0
  %2281 = vmatprep.subr.bf16.mxu0 0
  %2282 = vmatpush1.bf16.msra.mxu0 0
  %2283 = vmatprep.mubr.bf16.mxu0 0
  %2284 = vmatmul.mubr.bf16.gmra.mrb[0].mxu0 %v2246
  %v2285 = vpop.f32.mrb[0].mxu0
  %v2286 = vadd.f32 0.0, %v2285
  %v2287 = vpop.f32.mrb[0].mxu0
  %v2288 = vpop.f32.mrb[0].mxu0
  %v2289 = vpop.f32.mrb[0].mxu0
  %2290 = vdwg.mxu0
  %2292 = vrot.lane.b32.xlu0 %v1142, 64
  %v2293 = vpop.permute.xlu0 %2292
  %v2295 = vsel %vm1040, %v2043, 0
  %v2298 = vsel %vm1148, %v2293, 0
  %2300 = vmatprep.subr.bf16.mxu0 0
  %2301 = vmatpush1.bf16.msra.mxu0 %v2298
  %2302 = vmatprep.subr.bf16.mxu0 0
  %2303 = vmatpush1.bf16.msra.mxu0 0
  %2304 = vmatprep.subr.bf16.mxu0 0
  %2305 = vmatpush1.bf16.msra.mxu0 0
  %2306 = vmatprep.subr.bf16.mxu0 0
  %2307 = vmatpush1.bf16.msra.mxu0 0
  %2308 = vmatprep.subr.bf16.mxu0 0
  %2309 = vmatpush1.bf16.msra.mxu0 0
  %2310 = vmatprep.subr.bf16.mxu0 0
  %2311 = vmatpush1.bf16.msra.mxu0 0
  %2312 = vmatprep.subr.bf16.mxu0 0
  %2313 = vmatpush1.bf16.msra.mxu0 0
  %2314 = vmatprep.subr.bf16.mxu0 0
  %2315 = vmatpush1.bf16.msra.mxu0 0
  %2316 = vmatprep.subr.bf16.mxu0 0
  %2317 = vmatpush1.bf16.msra.mxu0 0
  %2318 = vmatprep.subr.bf16.mxu0 0
  %2319 = vmatpush1.bf16.msra.mxu0 0
  %2320 = vmatprep.subr.bf16.mxu0 0
  %2321 = vmatpush1.bf16.msra.mxu0 0
  %2322 = vmatprep.subr.bf16.mxu0 0
  %2323 = vmatpush1.bf16.msra.mxu0 0
  %2324 = vmatprep.subr.bf16.mxu0 0
  %2325 = vmatpush1.bf16.msra.mxu0 0
  %2326 = vmatprep.subr.bf16.mxu0 0
  %2327 = vmatpush1.bf16.msra.mxu0 0
  %2328 = vmatprep.subr.bf16.mxu0 0
  %2329 = vmatpush1.bf16.msra.mxu0 0
  %2330 = vmatprep.subr.bf16.mxu0 0
  %2331 = vmatpush1.bf16.msra.mxu0 0
  %2332 = vmatprep.mubr.bf16.mxu0 0
  %2333 = vmatmul.mubr.bf16.gmra.mrb[0].mxu0 %v2295
  %v2334 = vpop.f32.mrb[0].mxu0
  %v2335 = vadd.f32 0.0, %v2334
  %v2336 = vpop.f32.mrb[0].mxu0
  %v2337 = vpop.f32.mrb[0].mxu0
  %v2338 = vpop.f32.mrb[0].mxu0
  %2339 = vdwg.mxu0
  %2341 = vrot.lane.b32.xlu0 %v1143, 64
  %v2342 = vpop.permute.xlu0 %2341
  %v2344 = vsel %vm1040, %v2044, 0
  %v2347 = vsel %vm1148, %v2342, 0
  %2349 = vmatprep.subr.bf16.mxu0 0
  %2350 = vmatpush1.bf16.msra.mxu0 %v2347
  %2351 = vmatprep.subr.bf16.mxu0 0
  %2352 = vmatpush1.bf16.msra.mxu0 0
  %2353 = vmatprep.subr.bf16.mxu0 0
  %2354 = vmatpush1.bf16.msra.mxu0 0
  %2355 = vmatprep.subr.bf16.mxu0 0
  %2356 = vmatpush1.bf16.msra.mxu0 0
  %2357 = vmatprep.subr.bf16.mxu0 0
  %2358 = vmatpush1.bf16.msra.mxu0 0
  %2359 = vmatprep.subr.bf16.mxu0 0
  %2360 = vmatpush1.bf16.msra.mxu0 0
  %2361 = vmatprep.subr.bf16.mxu0 0
  %2362 = vmatpush1.bf16.msra.mxu0 0
  %2363 = vmatprep.subr.bf16.mxu0 0
  %2364 = vmatpush1.bf16.msra.mxu0 0
  %2365 = vmatprep.subr.bf16.mxu0 0
  %2366 = vmatpush1.bf16.msra.mxu0 0
  %2367 = vmatprep.subr.bf16.mxu0 0
  %2368 = vmatpush1.bf16.msra.mxu0 0
  %2369 = vmatprep.subr.bf16.mxu0 0
  %2370 = vmatpush1.bf16.msra.mxu0 0
  %2371 = vmatprep.subr.bf16.mxu0 0
  %2372 = vmatpush1.bf16.msra.mxu0 0
  %2373 = vmatprep.subr.bf16.mxu0 0
  %2374 = vmatpush1.bf16.msra.mxu0 0
  %2375 = vmatprep.subr.bf16.mxu0 0
  %2376 = vmatpush1.bf16.msra.mxu0 0
  %2377 = vmatprep.subr.bf16.mxu0 0
  %2378 = vmatpush1.bf16.msra.mxu0 0
  %2379 = vmatprep.subr.bf16.mxu0 0
  %2380 = vmatpush1.bf16.msra.mxu0 0
  %2381 = vmatprep.mubr.bf16.mxu0 0
  %2382 = vmatmul.mubr.bf16.gmra.mrb[0].mxu0 %v2344
  %v2383 = vpop.f32.mrb[0].mxu0
  %v2384 = vadd.f32 0.0, %v2383
  %v2385 = vpop.f32.mrb[0].mxu0
  %v2386 = vpop.f32.mrb[0].mxu0
  %v2387 = vpop.f32.mrb[0].mxu0
  %2388 = vdwg.mxu0
  %2390 = vrot.lane.b32.xlu0 %v1144, 64
  %v2391 = vpop.permute.xlu0 %2390
  %v2393 = vsel %vm1040, %v2045, 0
  %v2396 = vsel %vm1148, %v2391, 0
  %2398 = vmatprep.subr.bf16.mxu0 0
  %2399 = vmatpush1.bf16.msra.mxu0 %v2396
  %2400 = vmatprep.subr.bf16.mxu0 0
  %2401 = vmatpush1.bf16.msra.mxu0 0
  %2402 = vmatprep.subr.bf16.mxu0 0
  %2403 = vmatpush1.bf16.msra.mxu0 0
  %2404 = vmatprep.subr.bf16.mxu0 0
  %2405 = vmatpush1.bf16.msra.mxu0 0
  %2406 = vmatprep.subr.bf16.mxu0 0
  %2407 = vmatpush1.bf16.msra.mxu0 0
  %2408 = vmatprep.subr.bf16.mxu0 0
  %2409 = vmatpush1.bf16.msra.mxu0 0
  %2410 = vmatprep.subr.bf16.mxu0 0
  %2411 = vmatpush1.bf16.msra.mxu0 0
  %2412 = vmatprep.subr.bf16.mxu0 0
  %2413 = vmatpush1.bf16.msra.mxu0 0
  %2414 = vmatprep.subr.bf16.mxu0 0
  %2415 = vmatpush1.bf16.msra.mxu0 0
  %2416 = vmatprep.subr.bf16.mxu0 0
  %2417 = vmatpush1.bf16.msra.mxu0 0
  %2418 = vmatprep.subr.bf16.mxu0 0
  %2419 = vmatpush1.bf16.msra.mxu0 0
  %2420 = vmatprep.subr.bf16.mxu0 0
  %2421 = vmatpush1.bf16.msra.mxu0 0
  %2422 = vmatprep.subr.bf16.mxu0 0
  %2423 = vmatpush1.bf16.msra.mxu0 0
  %2424 = vmatprep.subr.bf16.mxu0 0
  %2425 = vmatpush1.bf16.msra.mxu0 0
  %2426 = vmatprep.subr.bf16.mxu0 0
  %2427 = vmatpush1.bf16.msra.mxu0 0
  %2428 = vmatprep.subr.bf16.mxu0 0
  %2429 = vmatpush1.bf16.msra.mxu0 0
  %2430 = vmatprep.mubr.bf16.mxu0 0
  %2431 = vmatmul.mubr.bf16.gmra.mrb[0].mxu0 %v2393
  %v2432 = vpop.f32.mrb[0].mxu0
  %v2433 = vadd.f32 0.0, %v2432
  %v2434 = vpop.f32.mrb[0].mxu0
  %v2435 = vpop.f32.mrb[0].mxu0
  %v2436 = vpop.f32.mrb[0].mxu0
  %2437 = vdwg.mxu0
  %v2438 = vpack.c.bf16 %v2139, %v2090
  %v2439 = vpack.c.bf16 %v2237, %v2188
  %v2440 = vpack.c.bf16 %v2335, %v2286
  %v2441 = vpack.c.bf16 %v2433, %v2384
  %v2450 = vunpack.c.l.b16 %v304
  %v2451 = vunpack.c.l.b16 %v305
  %v2452 = vunpack.c.l.b16 %v306
  %v2453 = vunpack.c.l.b16 %v307
  %v2454 = vunpack.c.l.b16 %v308
  %v2455 = vunpack.c.l.b16 %v309
  %v2456 = vunpack.c.l.b16 %v310
  %v2457 = vunpack.c.l.b16 %v311
  %v2458 = vpack.c.b16 %v2451, %v2450
  %v2459 = vpack.c.b16 %v2453, %v2452
  %v2460 = vpack.c.b16 %v2455, %v2454
  %v2461 = vpack.c.b16 %v2457, %v2456
  %v2467 = vsel %vm615, %v2438, 0
  %v2470 = vsel %vm615, %v2439, 0
  %v2473 = vsel %vm615, %v2440, 0
  %v2476 = vsel %vm615, %v2441, 0
  %2478 = vmatprep.subr.bf16.mxu0 0
  %2479 = vmatpush1.bf16.msra.mxu0 %v2458
  %2480 = vmatprep.subr.bf16.mxu0 0
  %2481 = vmatpush1.bf16.msra.mxu0 %v2459
  %2482 = vmatprep.subr.bf16.mxu0 0
  %2483 = vmatpush1.bf16.msra.mxu0 %v2460
  %2484 = vmatprep.subr.bf16.mxu0 0
  %2485 = vmatpush1.bf16.msra.mxu0 %v2461
  %2486 = vmatprep.subr.bf16.mxu0 0
  %2487 = vmatpush1.bf16.msra.mxu0 0
  %2488 = vmatprep.subr.bf16.mxu0 0
  %2489 = vmatpush1.bf16.msra.mxu0 0
  %2490 = vmatprep.subr.bf16.mxu0 0
  %2491 = vmatpush1.bf16.msra.mxu0 0
  %2492 = vmatprep.subr.bf16.mxu0 0
  %2493 = vmatpush1.bf16.msra.mxu0 0
  %2494 = vmatprep.subr.bf16.mxu0 0
  %2495 = vmatpush1.bf16.msra.mxu0 0
  %2496 = vmatprep.subr.bf16.mxu0 0
  %2497 = vmatpush1.bf16.msra.mxu0 0
  %2498 = vmatprep.subr.bf16.mxu0 0
  %2499 = vmatpush1.bf16.msra.mxu0 0
  %2500 = vmatprep.subr.bf16.mxu0 0
  %2501 = vmatpush1.bf16.msra.mxu0 0
  %2502 = vmatprep.subr.bf16.mxu0 0
  %2503 = vmatpush1.bf16.msra.mxu0 0
  %2504 = vmatprep.subr.bf16.mxu0 0
  %2505 = vmatpush1.bf16.msra.mxu0 0
  %2506 = vmatprep.subr.bf16.mxu0 0
  %2507 = vmatpush1.bf16.msra.mxu0 0
  %2508 = vmatprep.subr.bf16.mxu0 0
  %2509 = vmatpush1.bf16.msra.mxu0 0
  %2510 = vmatprep.mubr.bf16.mxu0 0
  %2511 = vmatmul.mubr.bf16.gmra.mrb[0].mxu0 %v2467
  %v2512 = vpop.f32.mrb[0].mxu0
  %v2513 = vadd.f32 0.0, %v2512
  %v2514 = vpop.f32.mrb[0].mxu0
  %v2515 = vpop.f32.mrb[0].mxu0
  %v2516 = vadd.f32 0.0, %v2515
  %v2517 = vpop.f32.mrb[0].mxu0
  %2518 = vmatprep.mubr.bf16.mxu0 0
  %2519 = vmatmul.mubr.bf16.gmra.mrb[0].mxu0 %v2470
  %v2520 = vpop.f32.mrb[0].mxu0
  %v2521 = vadd.f32 0.0, %v2520
  %v2522 = vpop.f32.mrb[0].mxu0
  %v2523 = vpop.f32.mrb[0].mxu0
  %v2524 = vadd.f32 0.0, %v2523
  %v2525 = vpop.f32.mrb[0].mxu0
  %2526 = vmatprep.mubr.bf16.mxu0 0
  %2527 = vmatmul.mubr.bf16.gmra.mrb[0].mxu0 %v2473
  %v2528 = vpop.f32.mrb[0].mxu0
  %v2529 = vadd.f32 0.0, %v2528
  %v2530 = vpop.f32.mrb[0].mxu0
  %v2531 = vpop.f32.mrb[0].mxu0
  %v2532 = vadd.f32 0.0, %v2531
  %v2533 = vpop.f32.mrb[0].mxu0
  %2534 = vmatprep.mubr.bf16.mxu0 0
  %2535 = vmatmul.mubr.bf16.gmra.mrb[0].mxu0 %v2476
  %v2536 = vpop.f32.mrb[0].mxu0
  %v2537 = vadd.f32 0.0, %v2536
  %v2538 = vpop.f32.mrb[0].mxu0
  %v2539 = vpop.f32.mrb[0].mxu0
  %v2540 = vadd.f32 0.0, %v2539
  %v2541 = vpop.f32.mrb[0].mxu0
  %2542 = vdwg.mxu0
  %v2551 = vunpack.c.l.b16 %v296
  %v2552 = vunpack.c.l.b16 %v297
  %v2553 = vunpack.c.l.b16 %v298
  %v2554 = vunpack.c.l.b16 %v299
  %v2555 = vunpack.c.l.b16 %v300
  %v2556 = vunpack.c.l.b16 %v301
  %v2557 = vunpack.c.l.b16 %v302
  %v2558 = vunpack.c.l.b16 %v303
  %v2559 = vpack.c.b16 %v2552, %v2551
  %v2560 = vpack.c.b16 %v2554, %v2553
  %v2561 = vpack.c.b16 %v2556, %v2555
  %v2562 = vpack.c.b16 %v2558, %v2557
  %v2568 = vsel %vm615, %v1514, 0
  %v2571 = vsel %vm615, %v1515, 0
  %v2574 = vsel %vm615, %v1516, 0
  %v2577 = vsel %vm615, %v1517, 0
  %2579 = vmatprep.subr.bf16.mxu0 0
  %2580 = vmatpush1.bf16.msra.mxu0 %v2559
  %2581 = vmatprep.subr.bf16.mxu0 0
  %2582 = vmatpush1.bf16.msra.mxu0 %v2560
  %2583 = vmatprep.subr.bf16.mxu0 0
  %2584 = vmatpush1.bf16.msra.mxu0 %v2561
  %2585 = vmatprep.subr.bf16.mxu0 0
  %2586 = vmatpush1.bf16.msra.mxu0 %v2562
  %2587 = vmatprep.subr.bf16.mxu0 0
  %2588 = vmatpush1.bf16.msra.mxu0 0
  %2589 = vmatprep.subr.bf16.mxu0 0
  %2590 = vmatpush1.bf16.msra.mxu0 0
  %2591 = vmatprep.subr.bf16.mxu0 0
  %2592 = vmatpush1.bf16.msra.mxu0 0
  %2593 = vmatprep.subr.bf16.mxu0 0
  %2594 = vmatpush1.bf16.msra.mxu0 0
  %2595 = vmatprep.subr.bf16.mxu0 0
  %2596 = vmatpush1.bf16.msra.mxu0 0
  %2597 = vmatprep.subr.bf16.mxu0 0
  %2598 = vmatpush1.bf16.msra.mxu0 0
  %2599 = vmatprep.subr.bf16.mxu0 0
  %2600 = vmatpush1.bf16.msra.mxu0 0
  %2601 = vmatprep.subr.bf16.mxu0 0
  %2602 = vmatpush1.bf16.msra.mxu0 0
  %2603 = vmatprep.subr.bf16.mxu0 0
  %2604 = vmatpush1.bf16.msra.mxu0 0
  %2605 = vmatprep.subr.bf16.mxu0 0
  %2606 = vmatpush1.bf16.msra.mxu0 0
  %2607 = vmatprep.subr.bf16.mxu0 0
  %2608 = vmatpush1.bf16.msra.mxu0 0
  %2609 = vmatprep.subr.bf16.mxu0 0
  %2610 = vmatpush1.bf16.msra.mxu0 0
  %2611 = vmatprep.mubr.bf16.mxu0 0
  %2612 = vmatmul.mubr.bf16.gmra.mrb[0].mxu0 %v2568
  %v2613 = vpop.f32.mrb[0].mxu0
  %v2614 = vadd.f32 %v2513, %v2613
  %v2615 = vpop.f32.mrb[0].mxu0
  %v2616 = vpop.f32.mrb[0].mxu0
  %v2617 = vadd.f32 %v2516, %v2616
  %v2618 = vpop.f32.mrb[0].mxu0
  %2619 = vmatprep.mubr.bf16.mxu0 0
  %2620 = vmatmul.mubr.bf16.gmra.mrb[0].mxu0 %v2571
  %v2621 = vpop.f32.mrb[0].mxu0
  %v2622 = vadd.f32 %v2521, %v2621
  %v2623 = vpop.f32.mrb[0].mxu0
  %v2624 = vpop.f32.mrb[0].mxu0
  %v2625 = vadd.f32 %v2524, %v2624
  %v2626 = vpop.f32.mrb[0].mxu0
  %2627 = vmatprep.mubr.bf16.mxu0 0
  %2628 = vmatmul.mubr.bf16.gmra.mrb[0].mxu0 %v2574
  %v2629 = vpop.f32.mrb[0].mxu0
  %v2630 = vadd.f32 %v2529, %v2629
  %v2631 = vpop.f32.mrb[0].mxu0
  %v2632 = vpop.f32.mrb[0].mxu0
  %v2633 = vadd.f32 %v2532, %v2632
  %v2634 = vpop.f32.mrb[0].mxu0
  %2635 = vmatprep.mubr.bf16.mxu0 0
  %2636 = vmatmul.mubr.bf16.gmra.mrb[0].mxu0 %v2577
  %v2637 = vpop.f32.mrb[0].mxu0
  %v2638 = vadd.f32 %v2537, %v2637
  %v2639 = vpop.f32.mrb[0].mxu0
  %v2640 = vpop.f32.mrb[0].mxu0
  %v2641 = vadd.f32 %v2540, %v2640
  %v2642 = vpop.f32.mrb[0].mxu0
  %2643 = vdwg.mxu0
  %v2644 = vld [vmem:[%s8] sm:$0x1]
  %v2646 = vlaneseq
  %v2647 = vshrl.u32 %v2646, 7
  %v2648 = vsub.s32 0, %v2647
  %v2649 = vrot.slane %v2644, %v2648
  %v2651 = vadd.f32 %v2614, %v2649
  %v2652 = vadd.f32 %v2617, %v2649
  %v2653 = vadd.f32 %v2622, %v2649
  %v2654 = vadd.f32 %v2625, %v2649
  %v2655 = vadd.f32 %v2630, %v2649
  %v2656 = vadd.f32 %v2633, %v2649
  %v2657 = vadd.f32 %v2638, %v2649
  %v2658 = vadd.f32 %v2641, %v2649
  %v2659 = vadd.f32 %v2651, %v205
  %v2660 = vadd.f32 %v2652, %v206
  %v2661 = vadd.f32 %v2653, %v207
  %v2662 = vadd.f32 %v2654, %v208
  %v2663 = vadd.f32 %v2655, %v209
  %v2664 = vadd.f32 %v2656, %v210
  %v2665 = vadd.f32 %v2657, %v211
  %v2666 = vadd.f32 %v2658, %v212
  %v2667 = vld [vmem:[%s9] sm:$0x1]
  %v2668 = vld [vmem:[%s10] sm:$0x1]
  %2669 = vadd.xlane.f32.xlu0 %v2659
  %v2670 = vpop.xlane.xlu0 %2669
  %2671 = vadd.xlane.f32.xlu0 %v2660
  %v2672 = vpop.xlane.xlu0 %2671
  %2673 = vadd.xlane.f32.xlu0 %v2661
  %v2674 = vpop.xlane.xlu0 %2673
  %2675 = vadd.xlane.f32.xlu0 %v2662
  %v2676 = vpop.xlane.xlu0 %2675
  %2677 = vadd.xlane.f32.xlu0 %v2663
  %v2678 = vpop.xlane.xlu0 %2677
  %2679 = vadd.xlane.f32.xlu0 %v2664
  %v2680 = vpop.xlane.xlu0 %2679
  %2681 = vadd.xlane.f32.xlu0 %v2665
  %v2682 = vpop.xlane.xlu0 %2681
  %2683 = vadd.xlane.f32.xlu0 %v2666
  %v2684 = vpop.xlane.xlu0 %2683
  %v2685 = vmul.f32 %v2670, %v112
  %v2686 = vmul.f32 %v2672, %v112
  %v2687 = vmul.f32 %v2674, %v112
  %v2688 = vmul.f32 %v2676, %v112
  %v2689 = vmul.f32 %v2678, %v112
  %v2690 = vmul.f32 %v2680, %v112
  %v2691 = vmul.f32 %v2682, %v112
  %v2692 = vmul.f32 %v2684, %v112
  %v2693 = vsub.f32 %v2659, %v2685
  %v2694 = vsub.f32 %v2660, %v2686
  %v2695 = vsub.f32 %v2661, %v2687
  %v2696 = vsub.f32 %v2662, %v2688
  %v2697 = vsub.f32 %v2663, %v2689
  %v2698 = vsub.f32 %v2664, %v2690
  %v2699 = vsub.f32 %v2665, %v2691
  %v2700 = vsub.f32 %v2666, %v2692
  %v2701 = vmul.f32 %v2693, %v2693
  %v2702 = vmul.f32 %v2694, %v2694
  %v2703 = vmul.f32 %v2695, %v2695
  %v2704 = vmul.f32 %v2696, %v2696
  %v2705 = vmul.f32 %v2697, %v2697
  %v2706 = vmul.f32 %v2698, %v2698
  %v2707 = vmul.f32 %v2699, %v2699
  %v2708 = vmul.f32 %v2700, %v2700
  %2709 = vadd.xlane.f32.xlu0 %v2701
  %v2710 = vpop.xlane.xlu0 %2709
  %2711 = vadd.xlane.f32.xlu0 %v2702
  %v2712 = vpop.xlane.xlu0 %2711
  %2713 = vadd.xlane.f32.xlu0 %v2703
  %v2714 = vpop.xlane.xlu0 %2713
  %2715 = vadd.xlane.f32.xlu0 %v2704
  %v2716 = vpop.xlane.xlu0 %2715
  %2717 = vadd.xlane.f32.xlu0 %v2705
  %v2718 = vpop.xlane.xlu0 %2717
  %2719 = vadd.xlane.f32.xlu0 %v2706
  %v2720 = vpop.xlane.xlu0 %2719
  %2721 = vadd.xlane.f32.xlu0 %v2707
  %v2722 = vpop.xlane.xlu0 %2721
  %2723 = vadd.xlane.f32.xlu0 %v2708
  %v2724 = vpop.xlane.xlu0 %2723
  %v2725 = vmul.f32 %v2710, %v112
  %v2726 = vmul.f32 %v2712, %v112
  %v2727 = vmul.f32 %v2714, %v112
  %v2728 = vmul.f32 %v2716, %v112
  %v2729 = vmul.f32 %v2718, %v112
  %v2730 = vmul.f32 %v2720, %v112
  %v2731 = vmul.f32 %v2722, %v112
  %v2732 = vmul.f32 %v2724, %v112
  %v2733 = vadd.f32 %v2725, 1e-12
  %v2734 = vadd.f32 %v2726, 1e-12
  %v2735 = vadd.f32 %v2727, 1e-12
  %v2736 = vadd.f32 %v2728, 1e-12
  %v2737 = vadd.f32 %v2729, 1e-12
  %v2738 = vadd.f32 %v2730, 1e-12
  %v2739 = vadd.f32 %v2731, 1e-12
  %v2740 = vadd.f32 %v2732, 1e-12
  %v2741 = vrsqrt.pop %v2733
  %v2742 = vrsqrt.pop %v2734
  %v2743 = vrsqrt.pop %v2735
  %v2744 = vrsqrt.pop %v2736
  %v2745 = vrsqrt.pop %v2737
  %v2746 = vrsqrt.pop %v2738
  %v2747 = vrsqrt.pop %v2739
  %v2748 = vrsqrt.pop %v2740
  %v2749 = vmul.f32 %v2693, %v2741
  %v2750 = vmul.f32 %v2694, %v2742
  %v2751 = vmul.f32 %v2695, %v2743
  %v2752 = vmul.f32 %v2696, %v2744
  %v2753 = vmul.f32 %v2697, %v2745
  %v2754 = vmul.f32 %v2698, %v2746
  %v2755 = vmul.f32 %v2699, %v2747
  %v2756 = vmul.f32 %v2700, %v2748
  %v2758 = vlaneseq
  %v2759 = vshrl.u32 %v2758, 7
  %v2760 = vsub.s32 0, %v2759
  %v2761 = vrot.slane %v2667, %v2760
  %v2763 = vmul.f32 %v2749, %v2761
  %v2764 = vmul.f32 %v2750, %v2761
  %v2765 = vmul.f32 %v2751, %v2761
  %v2766 = vmul.f32 %v2752, %v2761
  %v2767 = vmul.f32 %v2753, %v2761
  %v2768 = vmul.f32 %v2754, %v2761
  %v2769 = vmul.f32 %v2755, %v2761
  %v2770 = vmul.f32 %v2756, %v2761
  %v2772 = vlaneseq
  %v2773 = vshrl.u32 %v2772, 7
  %v2774 = vsub.s32 0, %v2773
  %v2775 = vrot.slane %v2668, %v2774
  %v2777 = vadd.f32 %v2763, %v2775
  %v2778 = vadd.f32 %v2764, %v2775
  %v2779 = vadd.f32 %v2765, %v2775
  %v2780 = vadd.f32 %v2766, %v2775
  %v2781 = vadd.f32 %v2767, %v2775
  %v2782 = vadd.f32 %v2768, %v2775
  %v2783 = vadd.f32 %v2769, %v2775
  %v2784 = vadd.f32 %v2770, %v2775
  %v2785 = vpack.c.bf16 %v2778, %v2777
  %v2786 = vpack.c.bf16 %v2780, %v2779
  %v2787 = vpack.c.bf16 %v2782, %v2781
  %v2788 = vpack.c.bf16 %v2784, %v2783
  %v2789 = vld [vmem:[%s11] sm:$0xff]
  %v2790 = vld [vmem:[%s11 + $0x8] sm:$0xff]
  %v2791 = vld [vmem:[%s11 + $0x10] sm:$0xff]
  %v2792 = vld [vmem:[%s11 + $0x18] sm:$0xff]
  %v2793 = vld [vmem:[%s11 + $0x20] sm:$0xff]
  %v2794 = vld [vmem:[%s11 + $0x28] sm:$0xff]
  %v2795 = vld [vmem:[%s11 + $0x30] sm:$0xff]
  %v2796 = vld [vmem:[%s11 + $0x38] sm:$0xff]
  %v2797 = vld [vmem:[%s11 + $0x40] sm:$0xff]
  %v2798 = vld [vmem:[%s11 + $0x48] sm:$0xff]
  %v2799 = vld [vmem:[%s11 + $0x50] sm:$0xff]
  %v2800 = vld [vmem:[%s11 + $0x58] sm:$0xff]
  %v2801 = vld [vmem:[%s11 + $0x60] sm:$0xff]
  %v2802 = vld [vmem:[%s11 + $0x68] sm:$0xff]
  %v2803 = vld [vmem:[%s11 + $0x70] sm:$0xff]
  %v2804 = vld [vmem:[%s11 + $0x78] sm:$0xff]
  %v2805 = vld [vmem:[%s12] sm:$0x3]
  %v2807 = vlaneseq
  %v2808 = vshrl.u32 %v2807, 7
  %v2809 = vsub.s32 0, %v2808
  %v2810 = vrot.slane %v2805, %v2809
  %v2811 = vlaneseq
  %v2812 = vshrl.u32 %v2811, 7
  %v2813 = vsub.s32 1, %v2812
  %v2814 = vrot.slane %v2805, %v2813
  %v2833 = vunpack.c.l.b16 %v2789
  %v2834 = vunpack.c.h.b16 %v2789
  %v2835 = vunpack.c.l.b16 %v2790
  %v2836 = vunpack.c.h.b16 %v2790
  %v2837 = vunpack.c.l.b16 %v2791
  %v2838 = vunpack.c.h.b16 %v2791
  %v2839 = vunpack.c.l.b16 %v2792
  %v2840 = vunpack.c.h.b16 %v2792
  %v2841 = vunpack.c.l.b16 %v2793
  %v2842 = vunpack.c.h.b16 %v2793
  %v2843 = vunpack.c.l.b16 %v2794
  %v2844 = vunpack.c.h.b16 %v2794
  %v2845 = vunpack.c.l.b16 %v2795
  %v2846 = vunpack.c.h.b16 %v2795
  %v2847 = vunpack.c.l.b16 %v2796
  %v2848 = vunpack.c.h.b16 %v2796
  %v2849 = vunpack.c.l.b16 %v2797
  %v2850 = vunpack.c.h.b16 %v2797
  %v2851 = vunpack.c.l.b16 %v2798
  %v2852 = vunpack.c.h.b16 %v2798
  %v2853 = vunpack.c.l.b16 %v2799
  %v2854 = vunpack.c.h.b16 %v2799
  %v2855 = vunpack.c.l.b16 %v2800
  %v2856 = vunpack.c.h.b16 %v2800
  %v2857 = vunpack.c.l.b16 %v2801
  %v2858 = vunpack.c.h.b16 %v2801
  %v2859 = vunpack.c.l.b16 %v2802
  %v2860 = vunpack.c.h.b16 %v2802
  %v2861 = vunpack.c.l.b16 %v2803
  %v2862 = vunpack.c.h.b16 %v2803
  %v2863 = vunpack.c.l.b16 %v2804
  %v2864 = vunpack.c.h.b16 %v2804
  %v2865 = vpack.c.b16 %v2835, %v2833
  %v2866 = vpack.c.b16 %v2836, %v2834
  %v2867 = vpack.c.b16 %v2839, %v2837
  %v2868 = vpack.c.b16 %v2840, %v2838
  %v2869 = vpack.c.b16 %v2843, %v2841
  %v2870 = vpack.c.b16 %v2844, %v2842
  %v2871 = vpack.c.b16 %v2847, %v2845
  %v2872 = vpack.c.b16 %v2848, %v2846
  %v2873 = vpack.c.b16 %v2851, %v2849
  %v2874 = vpack.c.b16 %v2852, %v2850
  %v2875 = vpack.c.b16 %v2855, %v2853
  %v2876 = vpack.c.b16 %v2856, %v2854
  %v2877 = vpack.c.b16 %v2859, %v2857
  %v2878 = vpack.c.b16 %v2860, %v2858
  %v2879 = vpack.c.b16 %v2863, %v2861
  %v2880 = vpack.c.b16 %v2864, %v2862
  %2897 = vmatprep.subr.bf16.mxu0 %v2866
  %2898 = vmatpush1.bf16.msra.mxu0 %v2865
  %2899 = vmatprep.subr.bf16.mxu0 %v2868
  %2900 = vmatpush1.bf16.msra.mxu0 %v2867
  %2901 = vmatprep.subr.bf16.mxu0 %v2870
  %2902 = vmatpush1.bf16.msra.mxu0 %v2869
  %2903 = vmatprep.subr.bf16.mxu0 %v2872
  %2904 = vmatpush1.bf16.msra.mxu0 %v2871
  %2905 = vmatprep.subr.bf16.mxu0 %v2874
  %2906 = vmatpush1.bf16.msra.mxu0 %v2873
  %2907 = vmatprep.subr.bf16.mxu0 %v2876
  %2908 = vmatpush1.bf16.msra.mxu0 %v2875
  %2909 = vmatprep.subr.bf16.mxu0 %v2878
  %2910 = vmatpush1.bf16.msra.mxu0 %v2877
  %2911 = vmatprep.subr.bf16.mxu0 %v2880
  %2912 = vmatpush1.bf16.msra.mxu0 %v2879
  %2913 = vmatprep.subr.bf16.mxu0 0
  %2914 = vmatpush1.bf16.msra.mxu0 0
  %2915 = vmatprep.subr.bf16.mxu0 0
  %2916 = vmatpush1.bf16.msra.mxu0 0
  %2917 = vmatprep.subr.bf16.mxu0 0
  %2918 = vmatpush1.bf16.msra.mxu0 0
  %2919 = vmatprep.subr.bf16.mxu0 0
  %2920 = vmatpush1.bf16.msra.mxu0 0
  %2921 = vmatprep.subr.bf16.mxu0 0
  %2922 = vmatpush1.bf16.msra.mxu0 0
  %2923 = vmatprep.subr.bf16.mxu0 0
  %2924 = vmatpush1.bf16.msra.mxu0 0
  %2925 = vmatprep.subr.bf16.mxu0 0
  %2926 = vmatpush1.bf16.msra.mxu0 0
  %2927 = vmatprep.subr.bf16.mxu0 0
  %2928 = vmatpush1.bf16.msra.mxu0 0
  %2929 = vmatprep.mubr.bf16.mxu0 0
  %2930 = vmatmul.mubr.bf16.gmra.mrb[0].mxu0 %v2785
  %v2931 = vpop.f32.mrb[0].mxu0
  %v2932 = vadd.f32 %v2810, %v2931
  %v2933 = vpop.f32.mrb[0].mxu0
  %v2934 = vadd.f32 %v2814, %v2933
  %v2935 = vpop.f32.mrb[0].mxu0
  %v2936 = vadd.f32 %v2810, %v2935
  %v2937 = vpop.f32.mrb[0].mxu0
  %v2938 = vadd.f32 %v2814, %v2937
  %2939 = vmatprep.mubr.bf16.mxu0 0
  %2940 = vmatmul.mubr.bf16.gmra.mrb[0].mxu0 %v2786
  %v2941 = vpop.f32.mrb[0].mxu0
  %v2942 = vadd.f32 %v2810, %v2941
  %v2943 = vpop.f32.mrb[0].mxu0
  %v2944 = vadd.f32 %v2814, %v2943
  %v2945 = vpop.f32.mrb[0].mxu0
  %v2946 = vadd.f32 %v2810, %v2945
  %v2947 = vpop.f32.mrb[0].mxu0
  %v2948 = vadd.f32 %v2814, %v2947
  %2949 = vmatprep.mubr.bf16.mxu0 0
  %2950 = vmatmul.mubr.bf16.gmra.mrb[0].mxu0 %v2787
  %v2951 = vpop.f32.mrb[0].mxu0
  %v2952 = vadd.f32 %v2810, %v2951
  %v2953 = vpop.f32.mrb[0].mxu0
  %v2954 = vadd.f32 %v2814, %v2953
  %v2955 = vpop.f32.mrb[0].mxu0
  %v2956 = vadd.f32 %v2810, %v2955
  %v2957 = vpop.f32.mrb[0].mxu0
  %v2958 = vadd.f32 %v2814, %v2957
  %2959 = vmatprep.mubr.bf16.mxu0 0
  %2960 = vmatmul.mubr.bf16.gmra.mrb[0].mxu0 %v2788
  %v2961 = vpop.f32.mrb[0].mxu0
  %v2962 = vadd.f32 %v2810, %v2961
  %v2963 = vpop.f32.mrb[0].mxu0
  %v2964 = vadd.f32 %v2814, %v2963
  %v2965 = vpop.f32.mrb[0].mxu0
  %v2966 = vadd.f32 %v2810, %v2965
  %v2967 = vpop.f32.mrb[0].mxu0
  %v2968 = vadd.f32 %v2814, %v2967
  %2969 = vdwg.mxu0
  %v2970 = vmul.f32 %v2932, 0.5
  %v2971 = vmul.f32 %v2934, 0.5
  %v2972 = vmul.f32 %v2936, 0.5
  %v2973 = vmul.f32 %v2938, 0.5
  %v2974 = vmul.f32 %v2942, 0.5
  %v2975 = vmul.f32 %v2944, 0.5
  %v2976 = vmul.f32 %v2946, 0.5
  %v2977 = vmul.f32 %v2948, 0.5
  %v2978 = vmul.f32 %v2952, 0.5
  %v2979 = vmul.f32 %v2954, 0.5
  %v2980 = vmul.f32 %v2956, 0.5
  %v2981 = vmul.f32 %v2958, 0.5
  %v2982 = vmul.f32 %v2962, 0.5
  %v2983 = vmul.f32 %v2964, 0.5
  %v2984 = vmul.f32 %v2966, 0.5
  %v2985 = vmul.f32 %v2968, 0.5
  %v2986 = vmul.f32 %v2932, 0.044715
  %v2987 = vmul.f32 %v2934, 0.044715
  %v2988 = vmul.f32 %v2936, 0.044715
  %v2989 = vmul.f32 %v2938, 0.044715
  %v2990 = vmul.f32 %v2942, 0.044715
  %v2991 = vmul.f32 %v2944, 0.044715
  %v2992 = vmul.f32 %v2946, 0.044715
  %v2993 = vmul.f32 %v2948, 0.044715
  %v2994 = vmul.f32 %v2952, 0.044715
  %v2995 = vmul.f32 %v2954, 0.044715
  %v2996 = vmul.f32 %v2956, 0.044715
  %v2997 = vmul.f32 %v2958, 0.044715
  %v2998 = vmul.f32 %v2962, 0.044715
  %v2999 = vmul.f32 %v2964, 0.044715
  %v3000 = vmul.f32 %v2966, 0.044715
  %v3001 = vmul.f32 %v2968, 0.044715
  %v3002 = vmul.f32 %v2986, %v2932
  %v3003 = vmul.f32 %v2987, %v2934
  %v3004 = vmul.f32 %v2988, %v2936
  %v3005 = vmul.f32 %v2989, %v2938
  %v3006 = vmul.f32 %v2990, %v2942
  %v3007 = vmul.f32 %v2991, %v2944
  %v3008 = vmul.f32 %v2992, %v2946
  %v3009 = vmul.f32 %v2993, %v2948
  %v3010 = vmul.f32 %v2994, %v2952
  %v3011 = vmul.f32 %v2995, %v2954
  %v3012 = vmul.f32 %v2996, %v2956
  %v3013 = vmul.f32 %v2997, %v2958
  %v3014 = vmul.f32 %v2998, %v2962
  %v3015 = vmul.f32 %v2999, %v2964
  %v3016 = vmul.f32 %v3000, %v2966
  %v3017 = vmul.f32 %v3001, %v2968
  %v3018 = vmul.f32 %v3002, %v2932
  %v3019 = vmul.f32 %v3003, %v2934
  %v3020 = vmul.f32 %v3004, %v2936
  %v3021 = vmul.f32 %v3005, %v2938
  %v3022 = vmul.f32 %v3006, %v2942
  %v3023 = vmul.f32 %v3007, %v2944
  %v3024 = vmul.f32 %v3008, %v2946
  %v3025 = vmul.f32 %v3009, %v2948
  %v3026 = vmul.f32 %v3010, %v2952
  %v3027 = vmul.f32 %v3011, %v2954
  %v3028 = vmul.f32 %v3012, %v2956
  %v3029 = vmul.f32 %v3013, %v2958
  %v3030 = vmul.f32 %v3014, %v2962
  %v3031 = vmul.f32 %v3015, %v2964
  %v3032 = vmul.f32 %v3016, %v2966
  %v3033 = vmul.f32 %v3017, %v2968
  %v3034 = vadd.f32 %v2932, %v3018
  %v3035 = vadd.f32 %v2934, %v3019
  %v3036 = vadd.f32 %v2936, %v3020
  %v3037 = vadd.f32 %v2938, %v3021
  %v3038 = vadd.f32 %v2942, %v3022
  %v3039 = vadd.f32 %v2944, %v3023
  %v3040 = vadd.f32 %v2946, %v3024
  %v3041 = vadd.f32 %v2948, %v3025
  %v3042 = vadd.f32 %v2952, %v3026
  %v3043 = vadd.f32 %v2954, %v3027
  %v3044 = vadd.f32 %v2956, %v3028
  %v3045 = vadd.f32 %v2958, %v3029
  %v3046 = vadd.f32 %v2962, %v3030
  %v3047 = vadd.f32 %v2964, %v3031
  %v3048 = vadd.f32 %v2966, %v3032
  %v3049 = vadd.f32 %v2968, %v3033
  %v3050 = vmul.f32 %v3034, 0.7978846
  %v3051 = vmul.f32 %v3035, 0.7978846
  %v3052 = vmul.f32 %v3036, 0.7978846
  %v3053 = vmul.f32 %v3037, 0.7978846
  %v3054 = vmul.f32 %v3038, 0.7978846
  %v3055 = vmul.f32 %v3039, 0.7978846
  %v3056 = vmul.f32 %v3040, 0.7978846
  %v3057 = vmul.f32 %v3041, 0.7978846
  %v3058 = vmul.f32 %v3042, 0.7978846
  %v3059 = vmul.f32 %v3043, 0.7978846
  %v3060 = vmul.f32 %v3044, 0.7978846
  %v3061 = vmul.f32 %v3045, 0.7978846
  %v3062 = vmul.f32 %v3046, 0.7978846
  %v3063 = vmul.f32 %v3047, 0.7978846
  %v3064 = vmul.f32 %v3048, 0.7978846
  %v3065 = vmul.f32 %v3049, 0.7978846
  %v3066 = vtanh.pop %v3050
  %v3067 = vtanh.pop %v3051
  %v3068 = vtanh.pop %v3052
  %v3069 = vtanh.pop %v3053
  %v3070 = vtanh.pop %v3054
  %v3071 = vtanh.pop %v3055
  %v3072 = vtanh.pop %v3056
  %v3073 = vtanh.pop %v3057
  %v3074 = vtanh.pop %v3058
  %v3075 = vtanh.pop %v3059
  %v3076 = vtanh.pop %v3060
  %v3077 = vtanh.pop %v3061
  %v3078 = vtanh.pop %v3062
  %v3079 = vtanh.pop %v3063
  %v3080 = vtanh.pop %v3064
  %v3081 = vtanh.pop %v3065
  %v3082 = vadd.f32 %v3066, 1.0
  %v3083 = vadd.f32 %v3067, 1.0
  %v3084 = vadd.f32 %v3068, 1.0
  %v3085 = vadd.f32 %v3069, 1.0
  %v3086 = vadd.f32 %v3070, 1.0
  %v3087 = vadd.f32 %v3071, 1.0
  %v3088 = vadd.f32 %v3072, 1.0
  %v3089 = vadd.f32 %v3073, 1.0
  %v3090 = vadd.f32 %v3074, 1.0
  %v3091 = vadd.f32 %v3075, 1.0
  %v3092 = vadd.f32 %v3076, 1.0
  %v3093 = vadd.f32 %v3077, 1.0
  %v3094 = vadd.f32 %v3078, 1.0
  %v3095 = vadd.f32 %v3079, 1.0
  %v3096 = vadd.f32 %v3080, 1.0
  %v3097 = vadd.f32 %v3081, 1.0
  %v3098 = vmul.f32 %v2970, %v3082
  %v3099 = vmul.f32 %v2971, %v3083
  %v3100 = vmul.f32 %v2972, %v3084
  %v3101 = vmul.f32 %v2973, %v3085
  %v3102 = vmul.f32 %v2974, %v3086
  %v3103 = vmul.f32 %v2975, %v3087
  %v3104 = vmul.f32 %v2976, %v3088
  %v3105 = vmul.f32 %v2977, %v3089
  %v3106 = vmul.f32 %v2978, %v3090
  %v3107 = vmul.f32 %v2979, %v3091
  %v3108 = vmul.f32 %v2980, %v3092
  %v3109 = vmul.f32 %v2981, %v3093
  %v3110 = vmul.f32 %v2982, %v3094
  %v3111 = vmul.f32 %v2983, %v3095
  %v3112 = vmul.f32 %v2984, %v3096
  %v3113 = vmul.f32 %v2985, %v3097
  %v3114 = vpack.c.bf16 %v3100, %v3098
  %v3115 = vpack.c.bf16 %v3101, %v3099
  %v3116 = vpack.c.bf16 %v3104, %v3102
  %v3117 = vpack.c.bf16 %v3105, %v3103
  %v3118 = vpack.c.bf16 %v3108, %v3106
  %v3119 = vpack.c.bf16 %v3109, %v3107
  %v3120 = vpack.c.bf16 %v3112, %v3110
  %v3121 = vpack.c.bf16 %v3113, %v3111
  %v3122 = vld [vmem:[%s13] sm:$0xf]
  %v3123 = vld [vmem:[%s13 + $0x4] sm:$0xf]
  %v3124 = vld [vmem:[%s13 + $0x8] sm:$0xf]
  %v3125 = vld [vmem:[%s13 + $0xc] sm:$0xf]
  %v3126 = vld [vmem:[%s13 + $0x10] sm:$0xf]
  %v3127 = vld [vmem:[%s13 + $0x14] sm:$0xf]
  %v3128 = vld [vmem:[%s13 + $0x18] sm:$0xf]
  %v3129 = vld [vmem:[%s13 + $0x1c] sm:$0xf]
  %v3130 = vld [vmem:[%s13 + $0x20] sm:$0xf]
  %v3131 = vld [vmem:[%s13 + $0x24] sm:$0xf]
  %v3132 = vld [vmem:[%s13 + $0x28] sm:$0xf]
  %v3133 = vld [vmem:[%s13 + $0x2c] sm:$0xf]
  %v3134 = vld [vmem:[%s13 + $0x30] sm:$0xf]
  %v3135 = vld [vmem:[%s13 + $0x34] sm:$0xf]
  %v3136 = vld [vmem:[%s13 + $0x38] sm:$0xf]
  %v3137 = vld [vmem:[%s13 + $0x3c] sm:$0xf]
  %v3138 = vld [vmem:[%s13 + $0x40] sm:$0xf]
  %v3139 = vld [vmem:[%s13 + $0x44] sm:$0xf]
  %v3140 = vld [vmem:[%s13 + $0x48] sm:$0xf]
  %v3141 = vld [vmem:[%s13 + $0x4c] sm:$0xf]
  %v3142 = vld [vmem:[%s13 + $0x50] sm:$0xf]
  %v3143 = vld [vmem:[%s13 + $0x54] sm:$0xf]
  %v3144 = vld [vmem:[%s13 + $0x58] sm:$0xf]
  %v3145 = vld [vmem:[%s13 + $0x5c] sm:$0xf]
  %v3146 = vld [vmem:[%s13 + $0x60] sm:$0xf]
  %v3147 = vld [vmem:[%s13 + $0x64] sm:$0xf]
  %v3148 = vld [vmem:[%s13 + $0x68] sm:$0xf]
  %v3149 = vld [vmem:[%s13 + $0x6c] sm:$0xf]
  %v3150 = vld [vmem:[%s13 + $0x70] sm:$0xf]
  %v3151 = vld [vmem:[%s13 + $0x74] sm:$0xf]
  %v3152 = vld [vmem:[%s13 + $0x78] sm:$0xf]
  %v3153 = vld [vmem:[%s13 + $0x7c] sm:$0xf]
  %v3154 = vld [vmem:[%s14] sm:$0x1]
  %v3156 = vlaneseq
  %v3157 = vshrl.u32 %v3156, 7
  %v3158 = vsub.s32 0, %v3157
  %v3159 = vrot.slane %v3154, %v3158
  %v3193 = vunpack.c.l.b16 %v3122
  %v3194 = vunpack.c.l.b16 %v3123
  %v3195 = vunpack.c.l.b16 %v3124
  %v3196 = vunpack.c.l.b16 %v3125
  %v3197 = vunpack.c.l.b16 %v3126
  %v3198 = vunpack.c.l.b16 %v3127
  %v3199 = vunpack.c.l.b16 %v3128
  %v3200 = vunpack.c.l.b16 %v3129
  %v3201 = vunpack.c.l.b16 %v3130
  %v3202 = vunpack.c.l.b16 %v3131
  %v3203 = vunpack.c.l.b16 %v3132
  %v3204 = vunpack.c.l.b16 %v3133
  %v3205 = vunpack.c.l.b16 %v3134
  %v3206 = vunpack.c.l.b16 %v3135
  %v3207 = vunpack.c.l.b16 %v3136
  %v3208 = vunpack.c.l.b16 %v3137
  %v3209 = vunpack.c.l.b16 %v3138
  %v3210 = vunpack.c.l.b16 %v3139
  %v3211 = vunpack.c.l.b16 %v3140
  %v3212 = vunpack.c.l.b16 %v3141
  %v3213 = vunpack.c.l.b16 %v3142
  %v3214 = vunpack.c.l.b16 %v3143
  %v3215 = vunpack.c.l.b16 %v3144
  %v3216 = vunpack.c.l.b16 %v3145
  %v3217 = vunpack.c.l.b16 %v3146
  %v3218 = vunpack.c.l.b16 %v3147
  %v3219 = vunpack.c.l.b16 %v3148
  %v3220 = vunpack.c.l.b16 %v3149
  %v3221 = vunpack.c.l.b16 %v3150
  %v3222 = vunpack.c.l.b16 %v3151
  %v3223 = vunpack.c.l.b16 %v3152
  %v3224 = vunpack.c.l.b16 %v3153
  %v3225 = vpack.c.b16 %v3194, %v3193
  %v3226 = vpack.c.b16 %v3196, %v3195
  %v3227 = vpack.c.b16 %v3198, %v3197
  %v3228 = vpack.c.b16 %v3200, %v3199
  %v3229 = vpack.c.b16 %v3202, %v3201
  %v3230 = vpack.c.b16 %v3204, %v3203
  %v3231 = vpack.c.b16 %v3206, %v3205
  %v3232 = vpack.c.b16 %v3208, %v3207
  %v3233 = vpack.c.b16 %v3210, %v3209
  %v3234 = vpack.c.b16 %v3212, %v3211
  %v3235 = vpack.c.b16 %v3214, %v3213
  %v3236 = vpack.c.b16 %v3216, %v3215
  %v3237 = vpack.c.b16 %v3218, %v3217
  %v3238 = vpack.c.b16 %v3220, %v3219
  %v3239 = vpack.c.b16 %v3222, %v3221
  %v3240 = vpack.c.b16 %v3224, %v3223
  %3257 = vmatprep.subr.bf16.mxu0 0
  %3258 = vmatpush1.bf16.msra.mxu0 %v3225
  %3259 = vmatprep.subr.bf16.mxu0 0
  %3260 = vmatpush1.bf16.msra.mxu0 %v3226
  %3261 = vmatprep.subr.bf16.mxu0 0
  %3262 = vmatpush1.bf16.msra.mxu0 %v3227
  %3263 = vmatprep.subr.bf16.mxu0 0
  %3264 = vmatpush1.bf16.msra.mxu0 %v3228
  %3265 = vmatprep.subr.bf16.mxu0 0
  %3266 = vmatpush1.bf16.msra.mxu0 %v3229
  %3267 = vmatprep.subr.bf16.mxu0 0
  %3268 = vmatpush1.bf16.msra.mxu0 %v3230
  %3269 = vmatprep.subr.bf16.mxu0 0
  %3270 = vmatpush1.bf16.msra.mxu0 %v3231
  %3271 = vmatprep.subr.bf16.mxu0 0
  %3272 = vmatpush1.bf16.msra.mxu0 %v3232
  %3273 = vmatprep.subr.bf16.mxu0 0
  %3274 = vmatpush1.bf16.msra.mxu0 %v3233
  %3275 = vmatprep.subr.bf16.mxu0 0
  %3276 = vmatpush1.bf16.msra.mxu0 %v3234
  %3277 = vmatprep.subr.bf16.mxu0 0
  %3278 = vmatpush1.bf16.msra.mxu0 %v3235
  %3279 = vmatprep.subr.bf16.mxu0 0
  %3280 = vmatpush1.bf16.msra.mxu0 %v3236
  %3281 = vmatprep.subr.bf16.mxu0 0
  %3282 = vmatpush1.bf16.msra.mxu0 %v3237
  %3283 = vmatprep.subr.bf16.mxu0 0
  %3284 = vmatpush1.bf16.msra.mxu0 %v3238
  %3285 = vmatprep.subr.bf16.mxu0 0
  %3286 = vmatpush1.bf16.msra.mxu0 %v3239
  %3287 = vmatprep.subr.bf16.mxu0 0
  %3288 = vmatpush1.bf16.msra.mxu0 %v3240
  %3289 = vmatprep.mubr.bf16.mxu0 %v3115
  %3290 = vmatmul.mubr.bf16.gmra.mrb[0].mxu0 %v3114
  %v3291 = vpop.f32.mrb[0].mxu0
  %v3292 = vadd.f32 %v3159, %v3291
  %v3293 = vpop.f32.mrb[0].mxu0
  %v3294 = vpop.f32.mrb[0].mxu0
  %v3295 = vadd.f32 %v3159, %v3294
  %v3296 = vpop.f32.mrb[0].mxu0
  %3297 = vmatprep.mubr.bf16.mxu0 %v3117
  %3298 = vmatmul.mubr.bf16.gmra.mrb[0].mxu0 %v3116
  %v3299 = vpop.f32.mrb[0].mxu0
  %v3300 = vadd.f32 %v3159, %v3299
  %v3301 = vpop.f32.mrb[0].mxu0
  %v3302 = vpop.f32.mrb[0].mxu0
  %v3303 = vadd.f32 %v3159, %v3302
  %v3304 = vpop.f32.mrb[0].mxu0
  %3305 = vmatprep.mubr.bf16.mxu0 %v3119
  %3306 = vmatmul.mubr.bf16.gmra.mrb[0].mxu0 %v3118
  %v3307 = vpop.f32.mrb[0].mxu0
  %v3308 = vadd.f32 %v3159, %v3307
  %v3309 = vpop.f32.mrb[0].mxu0
  %v3310 = vpop.f32.mrb[0].mxu0
  %v3311 = vadd.f32 %v3159, %v3310
  %v3312 = vpop.f32.mrb[0].mxu0
  %3313 = vmatprep.mubr.bf16.mxu0 %v3121
  %3314 = vmatmul.mubr.bf16.gmra.mrb[0].mxu0 %v3120
  %v3315 = vpop.f32.mrb[0].mxu0
  %v3316 = vadd.f32 %v3159, %v3315
  %v3317 = vpop.f32.mrb[0].mxu0
  %v3318 = vpop.f32.mrb[0].mxu0
  %v3319 = vadd.f32 %v3159, %v3318
  %v3320 = vpop.f32.mrb[0].mxu0
  %3321 = vdwg.mxu0
  %v3322 = vadd.f32 %v3292, %v2777
  %v3323 = vadd.f32 %v3295, %v2778
  %v3324 = vadd.f32 %v3300, %v2779
  %v3325 = vadd.f32 %v3303, %v2780
  %v3326 = vadd.f32 %v3308, %v2781
  %v3327 = vadd.f32 %v3311, %v2782
  %v3328 = vadd.f32 %v3316, %v2783
  %v3329 = vadd.f32 %v3319, %v2784
  %v3330 = vld [vmem:[%s15] sm:$0x1]
  %v3331 = vld [vmem:[%s16] sm:$0x1]
  %3332 = vadd.xlane.f32.xlu0 %v3322
  %v3333 = vpop.xlane.xlu0 %3332
  %3334 = vadd.xlane.f32.xlu0 %v3323
  %v3335 = vpop.xlane.xlu0 %3334
  %3336 = vadd.xlane.f32.xlu0 %v3324
  %v3337 = vpop.xlane.xlu0 %3336
  %3338 = vadd.xlane.f32.xlu0 %v3325
  %v3339 = vpop.xlane.xlu0 %3338
  %3340 = vadd.xlane.f32.xlu0 %v3326
  %v3341 = vpop.xlane.xlu0 %3340
  %3342 = vadd.xlane.f32.xlu0 %v3327
  %v3343 = vpop.xlane.xlu0 %3342
  %3344 = vadd.xlane.f32.xlu0 %v3328
  %v3345 = vpop.xlane.xlu0 %3344
  %3346 = vadd.xlane.f32.xlu0 %v3329
  %v3347 = vpop.xlane.xlu0 %3346
  %v3348 = vmul.f32 %v3333, %v112
  %v3349 = vmul.f32 %v3335, %v112
  %v3350 = vmul.f32 %v3337, %v112
  %v3351 = vmul.f32 %v3339, %v112
  %v3352 = vmul.f32 %v3341, %v112
  %v3353 = vmul.f32 %v3343, %v112
  %v3354 = vmul.f32 %v3345, %v112
  %v3355 = vmul.f32 %v3347, %v112
  %v3356 = vsub.f32 %v3322, %v3348
  %v3357 = vsub.f32 %v3323, %v3349
  %v3358 = vsub.f32 %v3324, %v3350
  %v3359 = vsub.f32 %v3325, %v3351
  %v3360 = vsub.f32 %v3326, %v3352
  %v3361 = vsub.f32 %v3327, %v3353
  %v3362 = vsub.f32 %v3328, %v3354
  %v3363 = vsub.f32 %v3329, %v3355
  %v3364 = vmul.f32 %v3356, %v3356
  %v3365 = vmul.f32 %v3357, %v3357
  %v3366 = vmul.f32 %v3358, %v3358
  %v3367 = vmul.f32 %v3359, %v3359
  %v3368 = vmul.f32 %v3360, %v3360
  %v3369 = vmul.f32 %v3361, %v3361
  %v3370 = vmul.f32 %v3362, %v3362
  %v3371 = vmul.f32 %v3363, %v3363
  %3372 = vadd.xlane.f32.xlu0 %v3364
  %v3373 = vpop.xlane.xlu0 %3372
  %3374 = vadd.xlane.f32.xlu0 %v3365
  %v3375 = vpop.xlane.xlu0 %3374
  %3376 = vadd.xlane.f32.xlu0 %v3366
  %v3377 = vpop.xlane.xlu0 %3376
  %3378 = vadd.xlane.f32.xlu0 %v3367
  %v3379 = vpop.xlane.xlu0 %3378
  %3380 = vadd.xlane.f32.xlu0 %v3368
  %v3381 = vpop.xlane.xlu0 %3380
  %3382 = vadd.xlane.f32.xlu0 %v3369
  %v3383 = vpop.xlane.xlu0 %3382
  %3384 = vadd.xlane.f32.xlu0 %v3370
  %v3385 = vpop.xlane.xlu0 %3384
  %3386 = vadd.xlane.f32.xlu0 %v3371
  %v3387 = vpop.xlane.xlu0 %3386
  %v3388 = vmul.f32 %v3373, %v112
  %v3389 = vmul.f32 %v3375, %v112
  %v3390 = vmul.f32 %v3377, %v112
  %v3391 = vmul.f32 %v3379, %v112
  %v3392 = vmul.f32 %v3381, %v112
  %v3393 = vmul.f32 %v3383, %v112
  %v3394 = vmul.f32 %v3385, %v112
  %v3395 = vmul.f32 %v3387, %v112
  %v3396 = vadd.f32 %v3388, 1e-12
  %v3397 = vadd.f32 %v3389, 1e-12
  %v3398 = vadd.f32 %v3390, 1e-12
  %v3399 = vadd.f32 %v3391, 1e-12
  %v3400 = vadd.f32 %v3392, 1e-12
  %v3401 = vadd.f32 %v3393, 1e-12
  %v3402 = vadd.f32 %v3394, 1e-12
  %v3403 = vadd.f32 %v3395, 1e-12
  %v3404 = vrsqrt.pop %v3396
  %v3405 = vrsqrt.pop %v3397
  %v3406 = vrsqrt.pop %v3398
  %v3407 = vrsqrt.pop %v3399
  %v3408 = vrsqrt.pop %v3400
  %v3409 = vrsqrt.pop %v3401
  %v3410 = vrsqrt.pop %v3402
  %v3411 = vrsqrt.pop %v3403
  %v3412 = vmul.f32 %v3356, %v3404
  %v3413 = vmul.f32 %v3357, %v3405
  %v3414 = vmul.f32 %v3358, %v3406
  %v3415 = vmul.f32 %v3359, %v3407
  %v3416 = vmul.f32 %v3360, %v3408
  %v3417 = vmul.f32 %v3361, %v3409
  %v3418 = vmul.f32 %v3362, %v3410
  %v3419 = vmul.f32 %v3363, %v3411
  %v3421 = vlaneseq
  %v3422 = vshrl.u32 %v3421, 7
  %v3423 = vsub.s32 0, %v3422
  %v3424 = vrot.slane %v3330, %v3423
  %v3426 = vmul.f32 %v3412, %v3424
  %v3427 = vmul.f32 %v3413, %v3424
  %v3428 = vmul.f32 %v3414, %v3424
  %v3429 = vmul.f32 %v3415, %v3424
  %v3430 = vmul.f32 %v3416, %v3424
  %v3431 = vmul.f32 %v3417, %v3424
  %v3432 = vmul.f32 %v3418, %v3424
  %v3433 = vmul.f32 %v3419, %v3424
  %v3435 = vlaneseq
  %v3436 = vshrl.u32 %v3435, 7
  %v3437 = vsub.s32 0, %v3436
  %v3438 = vrot.slane %v3331, %v3437
  %v3440 = vadd.f32 %v3426, %v3438
  %v3441 = vadd.f32 %v3427, %v3438
  %v3442 = vadd.f32 %v3428, %v3438
  %v3443 = vadd.f32 %v3429, %v3438
  %v3444 = vadd.f32 %v3430, %v3438
  %v3445 = vadd.f32 %v3431, %v3438
  %v3446 = vadd.f32 %v3432, %v3438
  %v3447 = vadd.f32 %v3433, %v3438
  %s3448 = scalar_lea.vmem %s5, 192
  %v3449 = vld [vmem:[%s3448] sm:$0xff]
  %v3450 = vld [vmem:[%s3448 + $0x8] sm:$0xf]
  %v3451 = vld [vmem:[%s3448 + $0xc] sm:$0xff]
  %v3452 = vld [vmem:[%s3448 + $0x14] sm:$0xf]
  %v3453 = vld [vmem:[%s3448 + $0x18] sm:$0xff]
  %v3454 = vld [vmem:[%s3448 + $0x20] sm:$0xf]
  %v3455 = vld [vmem:[%s3448 + $0x24] sm:$0xff]
  %v3456 = vld [vmem:[%s3448 + $0x2c] sm:$0xf]
  %v3457 = vld [vmem:[%s3448 + $0x30] sm:$0xff]
  %v3458 = vld [vmem:[%s3448 + $0x38] sm:$0xf]
  %v3459 = vld [vmem:[%s3448 + $0x3c] sm:$0xff]
  %v3460 = vld [vmem:[%s3448 + $0x44] sm:$0xf]
  %v3461 = vld [vmem:[%s3448 + $0x48] sm:$0xff]
  %v3462 = vld [vmem:[%s3448 + $0x50] sm:$0xf]
  %v3463 = vld [vmem:[%s3448 + $0x54] sm:$0xff]
  %v3464 = vld [vmem:[%s3448 + $0x5c] sm:$0xf]
  %v3465 = vld [vmem:[%s3448 + $0x60] sm:$0xff]
  %v3466 = vld [vmem:[%s3448 + $0x68] sm:$0xf]
  %v3467 = vld [vmem:[%s3448 + $0x6c] sm:$0xff]
  %v3468 = vld [vmem:[%s3448 + $0x74] sm:$0xf]
  %v3469 = vld [vmem:[%s3448 + $0x78] sm:$0xff]
  %v3470 = vld [vmem:[%s3448 + $0x80] sm:$0xf]
  %v3471 = vld [vmem:[%s3448 + $0x84] sm:$0xff]
  %v3472 = vld [vmem:[%s3448 + $0x8c] sm:$0xf]
  %v3473 = vld [vmem:[%s3448 + $0x90] sm:$0xff]
  %v3474 = vld [vmem:[%s3448 + $0x98] sm:$0xf]
  %v3475 = vld [vmem:[%s3448 + $0x9c] sm:$0xff]
  %v3476 = vld [vmem:[%s3448 + $0xa4] sm:$0xf]
  %v3477 = vld [vmem:[%s3448 + $0xa8] sm:$0xff]
  %v3478 = vld [vmem:[%s3448 + $0xb0] sm:$0xf]
  %v3479 = vld [vmem:[%s3448 + $0xb4] sm:$0xff]
  %v3480 = vld [vmem:[%s3448 + $0xbc] sm:$0xf]
  %s3481 = scalar_lea.vmem %s7, 64
  %v3482 = vld [vmem:[%s3481] sm:$0xf]
  %v3483 = vld [vmem:[%s3481 + $0x4] sm:$0xf]
  %v3484 = vld [vmem:[%s3481 + $0x8] sm:$0xf]
  %v3485 = vld [vmem:[%s3481 + $0xc] sm:$0xf]
  %v3486 = vld [vmem:[%s3481 + $0x10] sm:$0xf]
  %v3487 = vld [vmem:[%s3481 + $0x14] sm:$0xf]
  %v3488 = vld [vmem:[%s3481 + $0x18] sm:$0xf]
  %v3489 = vld [vmem:[%s3481 + $0x1c] sm:$0xf]
  %v3490 = vld [vmem:[%s3481 + $0x20] sm:$0xf]
  %v3491 = vld [vmem:[%s3481 + $0x24] sm:$0xf]
  %v3492 = vld [vmem:[%s3481 + $0x28] sm:$0xf]
  %v3493 = vld [vmem:[%s3481 + $0x2c] sm:$0xf]
  %v3494 = vld [vmem:[%s3481 + $0x30] sm:$0xf]
  %v3495 = vld [vmem:[%s3481 + $0x34] sm:$0xf]
  %v3496 = vld [vmem:[%s3481 + $0x38] sm:$0xf]
  %v3497 = vld [vmem:[%s3481 + $0x3c] sm:$0xf]
  %v3498 = vpack.c.bf16 %v3441, %v3440
  %v3499 = vpack.c.bf16 %v3443, %v3442
  %v3500 = vpack.c.bf16 %v3445, %v3444
  %v3501 = vpack.c.bf16 %v3447, %v3446
  %s3502 = scalar_lea.vmem %s6, 3
  %v3503 = vld [vmem:[%s3502] sm:$0x7]
  %v3505 = vlaneseq
  %v3506 = vshrl.u32 %v3505, 7
  %v3507 = vsub.s32 0, %v3506
  %v3508 = vrot.slane %v3503, %v3507
  %v3509 = vlaneseq
  %v3510 = vshrl.u32 %v3509, 7
  %v3511 = vsub.s32 1, %v3510
  %v3512 = vrot.slane %v3503, %v3511
  %v3513 = vlaneseq
  %v3514 = vshrl.u32 %v3513, 7
  %v3515 = vsub.s32 2, %v3514
  %v3516 = vrot.slane %v3503, %v3515
  %v3552 = vunpack.c.l.b16 %v3449
  %v3553 = vunpack.c.h.b16 %v3449
  %v3554 = vunpack.c.l.b16 %v3450
  %v3555 = vunpack.c.l.b16 %v3451
  %v3556 = vunpack.c.h.b16 %v3451
  %v3557 = vunpack.c.l.b16 %v3452
  %v3558 = vunpack.c.l.b16 %v3453
  %v3559 = vunpack.c.h.b16 %v3453
  %v3560 = vunpack.c.l.b16 %v3454
  %v3561 = vunpack.c.l.b16 %v3455
  %v3562 = vunpack.c.h.b16 %v3455
  %v3563 = vunpack.c.l.b16 %v3456
  %v3564 = vunpack.c.l.b16 %v3457
  %v3565 = vunpack.c.h.b16 %v3457
  %v3566 = vunpack.c.l.b16 %v3458
  %v3567 = vunpack.c.l.b16 %v3459
  %v3568 = vunpack.c.h.b16 %v3459
  %v3569 = vunpack.c.l.b16 %v3460
  %v3570 = vunpack.c.l.b16 %v3461
  %v3571 = vunpack.c.h.b16 %v3461
  %v3572 = vunpack.c.l.b16 %v3462
  %v3573 = vunpack.c.l.b16 %v3463
  %v3574 = vunpack.c.h.b16 %v3463
  %v3575 = vunpack.c.l.b16 %v3464
  %v3576 = vunpack.c.l.b16 %v3465
  %v3577 = vunpack.c.h.b16 %v3465
  %v3578 = vunpack.c.l.b16 %v3466
  %v3579 = vunpack.c.l.b16 %v3467
  %v3580 = vunpack.c.h.b16 %v3467
  %v3581 = vunpack.c.l.b16 %v3468
  %v3582 = vunpack.c.l.b16 %v3469
  %v3583 = vunpack.c.h.b16 %v3469
  %v3584 = vunpack.c.l.b16 %v3470
  %v3585 = vunpack.c.l.b16 %v3471
  %v3586 = vunpack.c.h.b16 %v3471
  %v3587 = vunpack.c.l.b16 %v3472
  %v3588 = vunpack.c.l.b16 %v3473
  %v3589 = vunpack.c.h.b16 %v3473
  %v3590 = vunpack.c.l.b16 %v3474
  %v3591 = vunpack.c.l.b16 %v3475
  %v3592 = vunpack.c.h.b16 %v3475
  %v3593 = vunpack.c.l.b16 %v3476
  %v3594 = vunpack.c.l.b16 %v3477
  %v3595 = vunpack.c.h.b16 %v3477
  %v3596 = vunpack.c.l.b16 %v3478
  %v3597 = vunpack.c.l.b16 %v3479
  %v3598 = vunpack.c.h.b16 %v3479
  %v3599 = vunpack.c.l.b16 %v3480
  %v3600 = vpack.c.b16 %v3555, %v3552
  %v3601 = vpack.c.b16 %v3556, %v3553
  %v3602 = vpack.c.b16 %v3557, %v3554
  %v3603 = vpack.c.b16 %v3561, %v3558
  %v3604 = vpack.c.b16 %v3562, %v3559
  %v3605 = vpack.c.b16 %v3563, %v3560
  %v3606 = vpack.c.b16 %v3567, %v3564
  %v3607 = vpack.c.b16 %v3568, %v3565
  %v3608 = vpack.c.b16 %v3569, %v3566
  %v3609 = vpack.c.b16 %v3573, %v3570
  %v3610 = vpack.c.b16 %v3574, %v3571
  %v3611 = vpack.c.b16 %v3575, %v3572
  %v3612 = vpack.c.b16 %v3579, %v3576
  %v3613 = vpack.c.b16 %v3580, %v3577
  %v3614 = vpack.c.b16 %v3581, %v3578
  %v3615 = vpack.c.b16 %v3585, %v3582
  %v3616 = vpack.c.b16 %v3586, %v3583
  %v3617 = vpack.c.b16 %v3587, %v3584
  %v3618 = vpack.c.b16 %v3591, %v3588
  %v3619 = vpack.c.b16 %v3592, %v3589
  %v3620 = vpack.c.b16 %v3593, %v3590
  %v3621 = vpack.c.b16 %v3597, %v3594
  %v3622 = vpack.c.b16 %v3598, %v3595
  %v3623 = vpack.c.b16 %v3599, %v3596
  %3648 = vmatprep.subr.bf16.mxu0 %v3601
  %3649 = vmatpush1.bf16.msra.mxu0 %v3600
  %3650 = vmatprep.subr.bf16.mxu0 %v3604
  %3651 = vmatpush1.bf16.msra.mxu0 %v3603
  %3652 = vmatprep.subr.bf16.mxu0 %v3607
  %3653 = vmatpush1.bf16.msra.mxu0 %v3606
  %3654 = vmatprep.subr.bf16.mxu0 %v3610
  %3655 = vmatpush1.bf16.msra.mxu0 %v3609
  %3656 = vmatprep.subr.bf16.mxu0 %v3613
  %3657 = vmatpush1.bf16.msra.mxu0 %v3612
  %3658 = vmatprep.subr.bf16.mxu0 %v3616
  %3659 = vmatpush1.bf16.msra.mxu0 %v3615
  %3660 = vmatprep.subr.bf16.mxu0 %v3619
  %3661 = vmatpush1.bf16.msra.mxu0 %v3618
  %3662 = vmatprep.subr.bf16.mxu0 %v3622
  %3663 = vmatpush1.bf16.msra.mxu0 %v3621
  %3664 = vmatprep.subr.bf16.mxu0 0
  %3665 = vmatpush1.bf16.msra.mxu0 0
  %3666 = vmatprep.subr.bf16.mxu0 0
  %3667 = vmatpush1.bf16.msra.mxu0 0
  %3668 = vmatprep.subr.bf16.mxu0 0
  %3669 = vmatpush1.bf16.msra.mxu0 0
  %3670 = vmatprep.subr.bf16.mxu0 0
  %3671 = vmatpush1.bf16.msra.mxu0 0
  %3672 = vmatprep.subr.bf16.mxu0 0
  %3673 = vmatpush1.bf16.msra.mxu0 0
  %3674 = vmatprep.subr.bf16.mxu0 0
  %3675 = vmatpush1.bf16.msra.mxu0 0
  %3676 = vmatprep.subr.bf16.mxu0 0
  %3677 = vmatpush1.bf16.msra.mxu0 0
  %3678 = vmatprep.subr.bf16.mxu0 0
  %3679 = vmatpush1.bf16.msra.mxu0 0
  %3680 = vmatprep.mubr.bf16.mxu0 0
  %3681 = vmatmul.mubr.bf16.gmra.mrb[0].mxu0 %v3498
  %v3682 = vpop.f32.mrb[0].mxu0
  %v3683 = vadd.f32 %v3508, %v3682
  %v3684 = vpop.f32.mrb[0].mxu0
  %v3685 = vadd.f32 %v3512, %v3684
  %v3686 = vpop.f32.mrb[0].mxu0
  %v3687 = vadd.f32 %v3508, %v3686
  %v3688 = vpop.f32.mrb[0].mxu0
  %v3689 = vadd.f32 %v3512, %v3688
  %3690 = vmatprep.mubr.bf16.mxu0 0
  %3691 = vmatmul.mubr.bf16.gmra.mrb[0].mxu0 %v3499
  %v3692 = vpop.f32.mrb[0].mxu0
  %v3693 = vadd.f32 %v3508, %v3692
  %v3694 = vpop.f32.mrb[0].mxu0
  %v3695 = vadd.f32 %v3512, %v3694
  %v3696 = vpop.f32.mrb[0].mxu0
  %v3697 = vadd.f32 %v3508, %v3696
  %v3698 = vpop.f32.mrb[0].mxu0
  %v3699 = vadd.f32 %v3512, %v3698
  %3700 = vmatprep.mubr.bf16.mxu0 0
  %3701 = vmatmul.mubr.bf16.gmra.mrb[0].mxu0 %v3500
  %v3702 = vpop.f32.mrb[0].mxu0
  %v3703 = vadd.f32 %v3508, %v3702
  %v3704 = vpop.f32.mrb[0].mxu0
  %v3705 = vadd.f32 %v3512, %v3704
  %v3706 = vpop.f32.mrb[0].mxu0
  %v3707 = vadd.f32 %v3508, %v3706
  %v3708 = vpop.f32.mrb[0].mxu0
  %v3709 = vadd.f32 %v3512, %v3708
  %3710 = vmatprep.mubr.bf16.mxu0 0
  %3711 = vmatmul.mubr.bf16.gmra.mrb[0].mxu0 %v3501
  %v3712 = vpop.f32.mrb[0].mxu0
  %v3713 = vadd.f32 %v3508, %v3712
  %v3714 = vpop.f32.mrb[0].mxu0
  %v3715 = vadd.f32 %v3512, %v3714
  %v3716 = vpop.f32.mrb[0].mxu0
  %v3717 = vadd.f32 %v3508, %v3716
  %v3718 = vpop.f32.mrb[0].mxu0
  %v3719 = vadd.f32 %v3512, %v3718
  %3720 = vdwg.mxu0
  %3721 = vmatprep.subr.bf16.mxu0 0
  %3722 = vmatpush1.bf16.msra.mxu0 %v3602
  %3723 = vmatprep.subr.bf16.mxu0 0
  %3724 = vmatpush1.bf16.msra.mxu0 %v3605
  %3725 = vmatprep.subr.bf16.mxu0 0
  %3726 = vmatpush1.bf16.msra.mxu0 %v3608
  %3727 = vmatprep.subr.bf16.mxu0 0
  %3728 = vmatpush1.bf16.msra.mxu0 %v3611
  %3729 = vmatprep.subr.bf16.mxu0 0
  %3730 = vmatpush1.bf16.msra.mxu0 %v3614
  %3731 = vmatprep.subr.bf16.mxu0 0
  %3732 = vmatpush1.bf16.msra.mxu0 %v3617
  %3733 = vmatprep.subr.bf16.mxu0 0
  %3734 = vmatpush1.bf16.msra.mxu0 %v3620
  %3735 = vmatprep.subr.bf16.mxu0 0
  %3736 = vmatpush1.bf16.msra.mxu0 %v3623
  %3737 = vmatprep.subr.bf16.mxu0 0
  %3738 = vmatpush1.bf16.msra.mxu0 0
  %3739 = vmatprep.subr.bf16.mxu0 0
  %3740 = vmatpush1.bf16.msra.mxu0 0
  %3741 = vmatprep.subr.bf16.mxu0 0
  %3742 = vmatpush1.bf16.msra.mxu0 0
  %3743 = vmatprep.subr.bf16.mxu0 0
  %3744 = vmatpush1.bf16.msra.mxu0 0
  %3745 = vmatprep.subr.bf16.mxu0 0
  %3746 = vmatpush1.bf16.msra.mxu0 0
  %3747 = vmatprep.subr.bf16.mxu0 0
  %3748 = vmatpush1.bf16.msra.mxu0 0
  %3749 = vmatprep.subr.bf16.mxu0 0
  %3750 = vmatpush1.bf16.msra.mxu0 0
  %3751 = vmatprep.subr.bf16.mxu0 0
  %3752 = vmatpush1.bf16.msra.mxu0 0
  %3753 = vmatprep.mubr.bf16.mxu0 0
  %3754 = vmatmul.mubr.bf16.gmra.mrb[0].mxu0 %v3498
  %v3755 = vpop.f32.mrb[0].mxu0
  %v3756 = vadd.f32 %v3516, %v3755
  %v3757 = vpop.f32.mrb[0].mxu0
  %v3758 = vpop.f32.mrb[0].mxu0
  %v3759 = vadd.f32 %v3516, %v3758
  %v3760 = vpop.f32.mrb[0].mxu0
  %3761 = vmatprep.mubr.bf16.mxu0 0
  %3762 = vmatmul.mubr.bf16.gmra.mrb[0].mxu0 %v3499
  %v3763 = vpop.f32.mrb[0].mxu0
  %v3764 = vadd.f32 %v3516, %v3763
  %v3765 = vpop.f32.mrb[0].mxu0
  %v3766 = vpop.f32.mrb[0].mxu0
  %v3767 = vadd.f32 %v3516, %v3766
  %v3768 = vpop.f32.mrb[0].mxu0
  %3769 = vmatprep.mubr.bf16.mxu0 0
  %3770 = vmatmul.mubr.bf16.gmra.mrb[0].mxu0 %v3500
  %v3771 = vpop.f32.mrb[0].mxu0
  %v3772 = vadd.f32 %v3516, %v3771
  %v3773 = vpop.f32.mrb[0].mxu0
  %v3774 = vpop.f32.mrb[0].mxu0
  %v3775 = vadd.f32 %v3516, %v3774
  %v3776 = vpop.f32.mrb[0].mxu0
  %3777 = vmatprep.mubr.bf16.mxu0 0
  %3778 = vmatmul.mubr.bf16.gmra.mrb[0].mxu0 %v3501
  %v3779 = vpop.f32.mrb[0].mxu0
  %v3780 = vadd.f32 %v3516, %v3779
  %v3781 = vpop.f32.mrb[0].mxu0
  %v3782 = vpop.f32.mrb[0].mxu0
  %v3783 = vadd.f32 %v3516, %v3782
  %v3784 = vpop.f32.mrb[0].mxu0
  %3785 = vdwg.mxu0
  %v3786 = vpack.c.bf16 %v3683, %v3683
  %v3787 = vpack.c.bf16 %v3687, %v3687
  %v3788 = vpack.c.bf16 %v3693, %v3693
  %v3789 = vpack.c.bf16 %v3697, %v3697
  %v3790 = vpack.c.bf16 %v3703, %v3703
  %v3791 = vpack.c.bf16 %v3707, %v3707
  %v3792 = vpack.c.bf16 %v3713, %v3713
  %v3793 = vpack.c.bf16 %v3717, %v3717
  %v3794 = vpack.c.bf16 %v3685, %v3685
  %v3795 = vpack.c.bf16 %v3689, %v3689
  %v3796 = vpack.c.bf16 %v3695, %v3695
  %v3797 = vpack.c.bf16 %v3699, %v3699
  %v3798 = vpack.c.bf16 %v3705, %v3705
  %v3799 = vpack.c.bf16 %v3709, %v3709
  %v3800 = vpack.c.bf16 %v3715, %v3715
  %v3801 = vpack.c.bf16 %v3719, %v3719
  %v3803 = vsel %vm615, %v3786, 0
  %v3806 = vsel %vm615, %v3794, 0
  %3808 = vmatprep.subr.bf16.mxu0 0
  %3809 = vmatpush1.bf16.xpose.msra.mxu0 %v3806
  %3810 = vmatprep.subr.bf16.mxu0 0
  %3811 = vmatpush1.bf16.xpose.msra.mxu0 0
  %3812 = vmatprep.subr.bf16.mxu0 0
  %3813 = vmatpush1.bf16.xpose.msra.mxu0 0
  %3814 = vmatprep.subr.bf16.mxu0 0
  %3815 = vmatpush1.bf16.xpose.msra.mxu0 0
  %3816 = vmatprep.subr.bf16.mxu0 0
  %3817 = vmatpush1.bf16.xpose.msra.mxu0 0
  %3818 = vmatprep.subr.bf16.mxu0 0
  %3819 = vmatpush1.bf16.xpose.msra.mxu0 0
  %3820 = vmatprep.subr.bf16.mxu0 0
  %3821 = vmatpush1.bf16.xpose.msra.mxu0 0
  %3822 = vmatprep.subr.bf16.mxu0 0
  %3823 = vmatpush1.bf16.xpose.msra.mxu0 0
  %3824 = vmatprep.subr.bf16.mxu0 0
  %3825 = vmatpush1.bf16.xpose.msra.mxu0 0
  %3826 = vmatprep.subr.bf16.mxu0 0
  %3827 = vmatpush1.bf16.xpose.msra.mxu0 0
  %3828 = vmatprep.subr.bf16.mxu0 0
  %3829 = vmatpush1.bf16.xpose.msra.mxu0 0
  %3830 = vmatprep.subr.bf16.mxu0 0
  %3831 = vmatpush1.bf16.xpose.msra.mxu0 0
  %3832 = vmatprep.subr.bf16.mxu0 0
  %3833 = vmatpush1.bf16.xpose.msra.mxu0 0
  %3834 = vmatprep.subr.bf16.mxu0 0
  %3835 = vmatpush1.bf16.xpose.msra.mxu0 0
  %3836 = vmatprep.subr.bf16.mxu0 0
  %3837 = vmatpush1.bf16.xpose.msra.mxu0 0
  %3838 = vmatprep.subr.bf16.mxu0 0
  %3839 = vmatpush1.bf16.xpose.msra.mxu0 0
  %3840 = vmatprep.mubr.bf16.mxu0 0
  %3841 = vmatmul.mubr.bf16.gmra.mrb[0].mxu0 %v3803
  %v3842 = vpop.f32.mrb[0].mxu0
  %v3843 = vadd.f32 0.0, %v3842
  %v3844 = vpop.f32.mrb[0].mxu0
  %v3845 = vpop.f32.mrb[0].mxu0
  %v3846 = vpop.f32.mrb[0].mxu0
  %3847 = vdwg.mxu0
  %v3849 = vsel %vm615, %v3787, 0
  %v3852 = vsel %vm615, %v3795, 0
  %3854 = vmatprep.subr.bf16.mxu0 0
  %3855 = vmatpush1.bf16.xpose.msra.mxu0 %v3852
  %3856 = vmatprep.subr.bf16.mxu0 0
  %3857 = vmatpush1.bf16.xpose.msra.mxu0 0
  %3858 = vmatprep.subr.bf16.mxu0 0
  %3859 = vmatpush1.bf16.xpose.msra.mxu0 0
  %3860 = vmatprep.subr.bf16.mxu0 0
  %3861 = vmatpush1.bf16.xpose.msra.mxu0 0
  %3862 = vmatprep.subr.bf16.mxu0 0
  %3863 = vmatpush1.bf16.xpose.msra.mxu0 0
  %3864 = vmatprep.subr.bf16.mxu0 0
  %3865 = vmatpush1.bf16.xpose.msra.mxu0 0
  %3866 = vmatprep.subr.bf16.mxu0 0
  %3867 = vmatpush1.bf16.xpose.msra.mxu0 0
  %3868 = vmatprep.subr.bf16.mxu0 0
  %3869 = vmatpush1.bf16.xpose.msra.mxu0 0
  %3870 = vmatprep.subr.bf16.mxu0 0
  %3871 = vmatpush1.bf16.xpose.msra.mxu0 0
  %3872 = vmatprep.subr.bf16.mxu0 0
  %3873 = vmatpush1.bf16.xpose.msra.mxu0 0
  %3874 = vmatprep.subr.bf16.mxu0 0
  %3875 = vmatpush1.bf16.xpose.msra.mxu0 0
  %3876 = vmatprep.subr.bf16.mxu0 0
  %3877 = vmatpush1.bf16.xpose.msra.mxu0 0
  %3878 = vmatprep.subr.bf16.mxu0 0
  %3879 = vmatpush1.bf16.xpose.msra.mxu0 0
  %3880 = vmatprep.subr.bf16.mxu0 0
  %3881 = vmatpush1.bf16.xpose.msra.mxu0 0
  %3882 = vmatprep.subr.bf16.mxu0 0
  %3883 = vmatpush1.bf16.xpose.msra.mxu0 0
  %3884 = vmatprep.subr.bf16.mxu0 0
  %3885 = vmatpush1.bf16.xpose.msra.mxu0 0
  %3886 = vmatprep.mubr.bf16.mxu0 0
  %3887 = vmatmul.mubr.bf16.gmra.mrb[0].mxu0 %v3849
  %v3888 = vpop.f32.mrb[0].mxu0
  %v3889 = vadd.f32 0.0, %v3888
  %v3890 = vpop.f32.mrb[0].mxu0
  %v3891 = vpop.f32.mrb[0].mxu0
  %v3892 = vpop.f32.mrb[0].mxu0
  %3893 = vdwg.mxu0
  %v3895 = vsel %vm615, %v3788, 0
  %v3898 = vsel %vm615, %v3796, 0
  %3900 = vmatprep.subr.bf16.mxu0 0
  %3901 = vmatpush1.bf16.xpose.msra.mxu0 %v3898
  %3902 = vmatprep.subr.bf16.mxu0 0
  %3903 = vmatpush1.bf16.xpose.msra.mxu0 0
  %3904 = vmatprep.subr.bf16.mxu0 0
  %3905 = vmatpush1.bf16.xpose.msra.mxu0 0
  %3906 = vmatprep.subr.bf16.mxu0 0
  %3907 = vmatpush1.bf16.xpose.msra.mxu0 0
  %3908 = vmatprep.subr.bf16.mxu0 0
  %3909 = vmatpush1.bf16.xpose.msra.mxu0 0
  %3910 = vmatprep.subr.bf16.mxu0 0
  %3911 = vmatpush1.bf16.xpose.msra.mxu0 0
  %3912 = vmatprep.subr.bf16.mxu0 0
  %3913 = vmatpush1.bf16.xpose.msra.mxu0 0
  %3914 = vmatprep.subr.bf16.mxu0 0
  %3915 = vmatpush1.bf16.xpose.msra.mxu0 0
  %3916 = vmatprep.subr.bf16.mxu0 0
  %3917 = vmatpush1.bf16.xpose.msra.mxu0 0
  %3918 = vmatprep.subr.bf16.mxu0 0
  %3919 = vmatpush1.bf16.xpose.msra.mxu0 0
  %3920 = vmatprep.subr.bf16.mxu0 0
  %3921 = vmatpush1.bf16.xpose.msra.mxu0 0
  %3922 = vmatprep.subr.bf16.mxu0 0
  %3923 = vmatpush1.bf16.xpose.msra.mxu0 0
  %3924 = vmatprep.subr.bf16.mxu0 0
  %3925 = vmatpush1.bf16.xpose.msra.mxu0 0
  %3926 = vmatprep.subr.bf16.mxu0 0
  %3927 = vmatpush1.bf16.xpose.msra.mxu0 0
  %3928 = vmatprep.subr.bf16.mxu0 0
  %3929 = vmatpush1.bf16.xpose.msra.mxu0 0
  %3930 = vmatprep.subr.bf16.mxu0 0
  %3931 = vmatpush1.bf16.xpose.msra.mxu0 0
  %3932 = vmatprep.mubr.bf16.mxu0 0
  %3933 = vmatmul.mubr.bf16.gmra.mrb[0].mxu0 %v3895
  %v3934 = vpop.f32.mrb[0].mxu0
  %v3935 = vadd.f32 0.0, %v3934
  %v3936 = vpop.f32.mrb[0].mxu0
  %v3937 = vpop.f32.mrb[0].mxu0
  %v3938 = vpop.f32.mrb[0].mxu0
  %3939 = vdwg.mxu0
  %v3941 = vsel %vm615, %v3789, 0
  %v3944 = vsel %vm615, %v3797, 0
  %3946 = vmatprep.subr.bf16.mxu0 0
  %3947 = vmatpush1.bf16.xpose.msra.mxu0 %v3944
  %3948 = vmatprep.subr.bf16.mxu0 0
  %3949 = vmatpush1.bf16.xpose.msra.mxu0 0
  %3950 = vmatprep.subr.bf16.mxu0 0
  %3951 = vmatpush1.bf16.xpose.msra.mxu0 0
  %3952 = vmatprep.subr.bf16.mxu0 0
  %3953 = vmatpush1.bf16.xpose.msra.mxu0 0
  %3954 = vmatprep.subr.bf16.mxu0 0
  %3955 = vmatpush1.bf16.xpose.msra.mxu0 0
  %3956 = vmatprep.subr.bf16.mxu0 0
  %3957 = vmatpush1.bf16.xpose.msra.mxu0 0
  %3958 = vmatprep.subr.bf16.mxu0 0
  %3959 = vmatpush1.bf16.xpose.msra.mxu0 0
  %3960 = vmatprep.subr.bf16.mxu0 0
  %3961 = vmatpush1.bf16.xpose.msra.mxu0 0
  %3962 = vmatprep.subr.bf16.mxu0 0
  %3963 = vmatpush1.bf16.xpose.msra.mxu0 0
  %3964 = vmatprep.subr.bf16.mxu0 0
  %3965 = vmatpush1.bf16.xpose.msra.mxu0 0
  %3966 = vmatprep.subr.bf16.mxu0 0
  %3967 = vmatpush1.bf16.xpose.msra.mxu0 0
  %3968 = vmatprep.subr.bf16.mxu0 0
  %3969 = vmatpush1.bf16.xpose.msra.mxu0 0
  %3970 = vmatprep.subr.bf16.mxu0 0
  %3971 = vmatpush1.bf16.xpose.msra.mxu0 0
  %3972 = vmatprep.subr.bf16.mxu0 0
  %3973 = vmatpush1.bf16.xpose.msra.mxu0 0
  %3974 = vmatprep.subr.bf16.mxu0 0
  %3975 = vmatpush1.bf16.xpose.msra.mxu0 0
  %3976 = vmatprep.subr.bf16.mxu0 0
  %3977 = vmatpush1.bf16.xpose.msra.mxu0 0
  %3978 = vmatprep.mubr.bf16.mxu0 0
  %3979 = vmatmul.mubr.bf16.gmra.mrb[0].mxu0 %v3941
  %v3980 = vpop.f32.mrb[0].mxu0
  %v3981 = vadd.f32 0.0, %v3980
  %v3982 = vpop.f32.mrb[0].mxu0
  %v3983 = vpop.f32.mrb[0].mxu0
  %v3984 = vpop.f32.mrb[0].mxu0
  %3985 = vdwg.mxu0
  %v3987 = vsel %vm615, %v3790, 0
  %v3990 = vsel %vm615, %v3798, 0
  %3992 = vmatprep.subr.bf16.mxu0 0
  %3993 = vmatpush1.bf16.xpose.msra.mxu0 %v3990
  %3994 = vmatprep.subr.bf16.mxu0 0
  %3995 = vmatpush1.bf16.xpose.msra.mxu0 0
  %3996 = vmatprep.subr.bf16.mxu0 0
  %3997 = vmatpush1.bf16.xpose.msra.mxu0 0
  %3998 = vmatprep.subr.bf16.mxu0 0
  %3999 = vmatpush1.bf16.xpose.msra.mxu0 0
  %4000 = vmatprep.subr.bf16.mxu0 0
  %4001 = vmatpush1.bf16.xpose.msra.mxu0 0
  %4002 = vmatprep.subr.bf16.mxu0 0
  %4003 = vmatpush1.bf16.xpose.msra.mxu0 0
  %4004 = vmatprep.subr.bf16.mxu0 0
  %4005 = vmatpush1.bf16.xpose.msra.mxu0 0
  %4006 = vmatprep.subr.bf16.mxu0 0
  %4007 = vmatpush1.bf16.xpose.msra.mxu0 0
  %4008 = vmatprep.subr.bf16.mxu0 0
  %4009 = vmatpush1.bf16.xpose.msra.mxu0 0
  %4010 = vmatprep.subr.bf16.mxu0 0
  %4011 = vmatpush1.bf16.xpose.msra.mxu0 0
  %4012 = vmatprep.subr.bf16.mxu0 0
  %4013 = vmatpush1.bf16.xpose.msra.mxu0 0
  %4014 = vmatprep.subr.bf16.mxu0 0
  %4015 = vmatpush1.bf16.xpose.msra.mxu0 0
  %4016 = vmatprep.subr.bf16.mxu0 0
  %4017 = vmatpush1.bf16.xpose.msra.mxu0 0
  %4018 = vmatprep.subr.bf16.mxu0 0
  %4019 = vmatpush1.bf16.xpose.msra.mxu0 0
  %4020 = vmatprep.subr.bf16.mxu0 0
  %4021 = vmatpush1.bf16.xpose.msra.mxu0 0
  %4022 = vmatprep.subr.bf16.mxu0 0
  %4023 = vmatpush1.bf16.xpose.msra.mxu0 0
  %4024 = vmatprep.mubr.bf16.mxu0 0
  %4025 = vmatmul.mubr.bf16.gmra.mrb[0].mxu0 %v3987
  %v4026 = vpop.f32.mrb[0].mxu0
  %v4027 = vadd.f32 0.0, %v4026
  %v4028 = vpop.f32.mrb[0].mxu0
  %v4029 = vpop.f32.mrb[0].mxu0
  %v4030 = vpop.f32.mrb[0].mxu0
  %4031 = vdwg.mxu0
  %v4033 = vsel %vm615, %v3791, 0
  %v4036 = vsel %vm615, %v3799, 0
  %4038 = vmatprep.subr.bf16.mxu0 0
  %4039 = vmatpush1.bf16.xpose.msra.mxu0 %v4036
  %4040 = vmatprep.subr.bf16.mxu0 0
  %4041 = vmatpush1.bf16.xpose.msra.mxu0 0
  %4042 = vmatprep.subr.bf16.mxu0 0
  %4043 = vmatpush1.bf16.xpose.msra.mxu0 0
  %4044 = vmatprep.subr.bf16.mxu0 0
  %4045 = vmatpush1.bf16.xpose.msra.mxu0 0
  %4046 = vmatprep.subr.bf16.mxu0 0
  %4047 = vmatpush1.bf16.xpose.msra.mxu0 0
  %4048 = vmatprep.subr.bf16.mxu0 0
  %4049 = vmatpush1.bf16.xpose.msra.mxu0 0
  %4050 = vmatprep.subr.bf16.mxu0 0
  %4051 = vmatpush1.bf16.xpose.msra.mxu0 0
  %4052 = vmatprep.subr.bf16.mxu0 0
  %4053 = vmatpush1.bf16.xpose.msra.mxu0 0
  %4054 = vmatprep.subr.bf16.mxu0 0
  %4055 = vmatpush1.bf16.xpose.msra.mxu0 0
  %4056 = vmatprep.subr.bf16.mxu0 0
  %4057 = vmatpush1.bf16.xpose.msra.mxu0 0
  %4058 = vmatprep.subr.bf16.mxu0 0
  %4059 = vmatpush1.bf16.xpose.msra.mxu0 0
  %4060 = vmatprep.subr.bf16.mxu0 0
  %4061 = vmatpush1.bf16.xpose.msra.mxu0 0
  %4062 = vmatprep.subr.bf16.mxu0 0
  %4063 = vmatpush1.bf16.xpose.msra.mxu0 0
  %4064 = vmatprep.subr.bf16.mxu0 0
  %4065 = vmatpush1.bf16.xpose.msra.mxu0 0
  %4066 = vmatprep.subr.bf16.mxu0 0
  %4067 = vmatpush1.bf16.xpose.msra.mxu0 0
  %4068 = vmatprep.subr.bf16.mxu0 0
  %4069 = vmatpush1.bf16.xpose.msra.mxu0 0
  %4070 = vmatprep.mubr.bf16.mxu0 0
  %4071 = vmatmul.mubr.bf16.gmra.mrb[0].mxu0 %v4033
  %v4072 = vpop.f32.mrb[0].mxu0
  %v4073 = vadd.f32 0.0, %v4072
  %v4074 = vpop.f32.mrb[0].mxu0
  %v4075 = vpop.f32.mrb[0].mxu0
  %v4076 = vpop.f32.mrb[0].mxu0
  %4077 = vdwg.mxu0
  %v4079 = vsel %vm615, %v3792, 0
  %v4082 = vsel %vm615, %v3800, 0
  %4084 = vmatprep.subr.bf16.mxu0 0
  %4085 = vmatpush1.bf16.xpose.msra.mxu0 %v4082
  %4086 = vmatprep.subr.bf16.mxu0 0
  %4087 = vmatpush1.bf16.xpose.msra.mxu0 0
  %4088 = vmatprep.subr.bf16.mxu0 0
  %4089 = vmatpush1.bf16.xpose.msra.mxu0 0
  %4090 = vmatprep.subr.bf16.mxu0 0
  %4091 = vmatpush1.bf16.xpose.msra.mxu0 0
  %4092 = vmatprep.subr.bf16.mxu0 0
  %4093 = vmatpush1.bf16.xpose.msra.mxu0 0
  %4094 = vmatprep.subr.bf16.mxu0 0
  %4095 = vmatpush1.bf16.xpose.msra.mxu0 0
  %4096 = vmatprep.subr.bf16.mxu0 0
  %4097 = vmatpush1.bf16.xpose.msra.mxu0 0
  %4098 = vmatprep.subr.bf16.mxu0 0
  %4099 = vmatpush1.bf16.xpose.msra.mxu0 0
  %4100 = vmatprep.subr.bf16.mxu0 0
  %4101 = vmatpush1.bf16.xpose.msra.mxu0 0
  %4102 = vmatprep.subr.bf16.mxu0 0
  %4103 = vmatpush1.bf16.xpose.msra.mxu0 0
  %4104 = vmatprep.subr.bf16.mxu0 0
  %4105 = vmatpush1.bf16.xpose.msra.mxu0 0
  %4106 = vmatprep.subr.bf16.mxu0 0
  %4107 = vmatpush1.bf16.xpose.msra.mxu0 0
  %4108 = vmatprep.subr.bf16.mxu0 0
  %4109 = vmatpush1.bf16.xpose.msra.mxu0 0
  %4110 = vmatprep.subr.bf16.mxu0 0
  %4111 = vmatpush1.bf16.xpose.msra.mxu0 0
  %4112 = vmatprep.subr.bf16.mxu0 0
  %4113 = vmatpush1.bf16.xpose.msra.mxu0 0
  %4114 = vmatprep.subr.bf16.mxu0 0
  %4115 = vmatpush1.bf16.xpose.msra.mxu0 0
  %4116 = vmatprep.mubr.bf16.mxu0 0
  %4117 = vmatmul.mubr.bf16.gmra.mrb[0].mxu0 %v4079
  %v4118 = vpop.f32.mrb[0].mxu0
  %v4119 = vadd.f32 0.0, %v4118
  %v4120 = vpop.f32.mrb[0].mxu0
  %v4121 = vpop.f32.mrb[0].mxu0
  %v4122 = vpop.f32.mrb[0].mxu0
  %4123 = vdwg.mxu0
  %v4125 = vsel %vm615, %v3793, 0
  %v4128 = vsel %vm615, %v3801, 0
  %4130 = vmatprep.subr.bf16.mxu0 0
  %4131 = vmatpush1.bf16.xpose.msra.mxu0 %v4128
  %4132 = vmatprep.subr.bf16.mxu0 0
  %4133 = vmatpush1.bf16.xpose.msra.mxu0 0
  %4134 = vmatprep.subr.bf16.mxu0 0
  %4135 = vmatpush1.bf16.xpose.msra.mxu0 0
  %4136 = vmatprep.subr.bf16.mxu0 0
  %4137 = vmatpush1.bf16.xpose.msra.mxu0 0
  %4138 = vmatprep.subr.bf16.mxu0 0
  %4139 = vmatpush1.bf16.xpose.msra.mxu0 0
  %4140 = vmatprep.subr.bf16.mxu0 0
  %4141 = vmatpush1.bf16.xpose.msra.mxu0 0
  %4142 = vmatprep.subr.bf16.mxu0 0
  %4143 = vmatpush1.bf16.xpose.msra.mxu0 0
  %4144 = vmatprep.subr.bf16.mxu0 0
  %4145 = vmatpush1.bf16.xpose.msra.mxu0 0
  %4146 = vmatprep.subr.bf16.mxu0 0
  %4147 = vmatpush1.bf16.xpose.msra.mxu0 0
  %4148 = vmatprep.subr.bf16.mxu0 0
  %4149 = vmatpush1.bf16.xpose.msra.mxu0 0
  %4150 = vmatprep.subr.bf16.mxu0 0
  %4151 = vmatpush1.bf16.xpose.msra.mxu0 0
  %4152 = vmatprep.subr.bf16.mxu0 0
  %4153 = vmatpush1.bf16.xpose.msra.mxu0 0
  %4154 = vmatprep.subr.bf16.mxu0 0
  %4155 = vmatpush1.bf16.xpose.msra.mxu0 0
  %4156 = vmatprep.subr.bf16.mxu0 0
  %4157 = vmatpush1.bf16.xpose.msra.mxu0 0
  %4158 = vmatprep.subr.bf16.mxu0 0
  %4159 = vmatpush1.bf16.xpose.msra.mxu0 0
  %4160 = vmatprep.subr.bf16.mxu0 0
  %4161 = vmatpush1.bf16.xpose.msra.mxu0 0
  %4162 = vmatprep.mubr.bf16.mxu0 0
  %4163 = vmatmul.mubr.bf16.gmra.mrb[0].mxu0 %v4125
  %v4164 = vpop.f32.mrb[0].mxu0
  %v4165 = vadd.f32 0.0, %v4164
  %v4166 = vpop.f32.mrb[0].mxu0
  %v4167 = vpop.f32.mrb[0].mxu0
  %v4168 = vpop.f32.mrb[0].mxu0
  %4169 = vdwg.mxu0
  %v4170 = vmul.f32 %v3843, 0.125
  %v4171 = vmul.f32 %v3889, 0.125
  %v4172 = vmul.f32 %v3935, 0.125
  %v4173 = vmul.f32 %v3981, 0.125
  %v4174 = vmul.f32 %v4027, 0.125
  %v4175 = vmul.f32 %v4073, 0.125
  %v4176 = vmul.f32 %v4119, 0.125
  %v4177 = vmul.f32 %v4165, 0.125
  %v4178 = vadd.f32 %v4170, %v995
  %v4179 = vadd.f32 %v4171, %v999
  %v4180 = vadd.f32 %v4172, %v1003
  %v4181 = vadd.f32 %v4173, %v1007
  %v4182 = vadd.f32 %v4174, %v1011
  %v4183 = vadd.f32 %v4175, %v1015
  %v4184 = vadd.f32 %v4176, %v1019
  %v4185 = vadd.f32 %v4177, %v1023
  %v4186 = vsel %vm1040, %v4178, -inf
  %4187 = vmax.xlane.f32.xlu0 %v4186
  %v4188 = vpop.xlane.xlu0 %4187
  %v4189 = vsel %vm1040, %v4179, -inf
  %4190 = vmax.xlane.f32.xlu0 %v4189
  %v4191 = vpop.xlane.xlu0 %4190
  %v4192 = vsel %vm1040, %v4180, -inf
  %4193 = vmax.xlane.f32.xlu0 %v4192
  %v4194 = vpop.xlane.xlu0 %4193
  %v4195 = vsel %vm1040, %v4181, -inf
  %4196 = vmax.xlane.f32.xlu0 %v4195
  %v4197 = vpop.xlane.xlu0 %4196
  %v4198 = vsel %vm1040, %v4182, -inf
  %4199 = vmax.xlane.f32.xlu0 %v4198
  %v4200 = vpop.xlane.xlu0 %4199
  %v4201 = vsel %vm1040, %v4183, -inf
  %4202 = vmax.xlane.f32.xlu0 %v4201
  %v4203 = vpop.xlane.xlu0 %4202
  %v4204 = vsel %vm1040, %v4184, -inf
  %4205 = vmax.xlane.f32.xlu0 %v4204
  %v4206 = vpop.xlane.xlu0 %4205
  %v4207 = vsel %vm1040, %v4185, -inf
  %4208 = vmax.xlane.f32.xlu0 %v4207
  %v4209 = vpop.xlane.xlu0 %4208
  %v4210 = vsub.f32 %v4178, %v4188
  %v4211 = vsub.f32 %v4179, %v4191
  %v4212 = vsub.f32 %v4180, %v4194
  %v4213 = vsub.f32 %v4181, %v4197
  %v4214 = vsub.f32 %v4182, %v4200
  %v4215 = vsub.f32 %v4183, %v4203
  %v4216 = vsub.f32 %v4184, %v4206
  %v4217 = vsub.f32 %v4185, %v4209
  %v4218 = vmul.f32 %v4210, 1.442695
  %v4219 = vpow.pop %v4218
  %v4220 = vmul.f32 %v4211, 1.442695
  %v4221 = vpow.pop %v4220
  %v4222 = vmul.f32 %v4212, 1.442695
  %v4223 = vpow.pop %v4222
  %v4224 = vmul.f32 %v4213, 1.442695
  %v4225 = vpow.pop %v4224
  %v4226 = vmul.f32 %v4214, 1.442695
  %v4227 = vpow.pop %v4226
  %v4228 = vmul.f32 %v4215, 1.442695
  %v4229 = vpow.pop %v4228
  %v4230 = vmul.f32 %v4216, 1.442695
  %v4231 = vpow.pop %v4230
  %v4232 = vmul.f32 %v4217, 1.442695
  %v4233 = vpow.pop %v4232
  %v4234 = vsel %vm1040, %v4219, 0.0
  %4235 = vadd.xlane.f32.xlu0 %v4234
  %v4236 = vpop.xlane.xlu0 %4235
  %v4237 = vsel %vm1040, %v4221, 0.0
  %4238 = vadd.xlane.f32.xlu0 %v4237
  %v4239 = vpop.xlane.xlu0 %4238
  %v4240 = vsel %vm1040, %v4223, 0.0
  %4241 = vadd.xlane.f32.xlu0 %v4240
  %v4242 = vpop.xlane.xlu0 %4241
  %v4243 = vsel %vm1040, %v4225, 0.0
  %4244 = vadd.xlane.f32.xlu0 %v4243
  %v4245 = vpop.xlane.xlu0 %4244
  %v4246 = vsel %vm1040, %v4227, 0.0
  %4247 = vadd.xlane.f32.xlu0 %v4246
  %v4248 = vpop.xlane.xlu0 %4247
  %v4249 = vsel %vm1040, %v4229, 0.0
  %4250 = vadd.xlane.f32.xlu0 %v4249
  %v4251 = vpop.xlane.xlu0 %4250
  %v4252 = vsel %vm1040, %v4231, 0.0
  %4253 = vadd.xlane.f32.xlu0 %v4252
  %v4254 = vpop.xlane.xlu0 %4253
  %v4255 = vsel %vm1040, %v4233, 0.0
  %4256 = vadd.xlane.f32.xlu0 %v4255
  %v4257 = vpop.xlane.xlu0 %4256
  %v4258 = vrcp.pop %v4236
  %v4259 = vmul.f32 %v4219, %v4258
  %v4260 = vrcp.pop %v4239
  %v4261 = vmul.f32 %v4221, %v4260
  %v4262 = vrcp.pop %v4242
  %v4263 = vmul.f32 %v4223, %v4262
  %v4264 = vrcp.pop %v4245
  %v4265 = vmul.f32 %v4225, %v4264
  %v4266 = vrcp.pop %v4248
  %v4267 = vmul.f32 %v4227, %v4266
  %v4268 = vrcp.pop %v4251
  %v4269 = vmul.f32 %v4229, %v4268
  %v4270 = vrcp.pop %v4254
  %v4271 = vmul.f32 %v4231, %v4270
  %v4272 = vrcp.pop %v4257
  %v4273 = vmul.f32 %v4233, %v4272
  %v4274 = vpack.c.bf16 %v4259, %v4259
  %v4275 = vpack.c.bf16 %v4261, %v4261
  %v4276 = vpack.c.bf16 %v4263, %v4263
  %v4277 = vpack.c.bf16 %v4265, %v4265
  %v4278 = vpack.c.bf16 %v4267, %v4267
  %v4279 = vpack.c.bf16 %v4269, %v4269
  %v4280 = vpack.c.bf16 %v4271, %v4271
  %v4281 = vpack.c.bf16 %v4273, %v4273
  %v4282 = vpack.c.bf16 %v3756, %v3756
  %v4283 = vpack.c.bf16 %v3759, %v3759
  %v4284 = vpack.c.bf16 %v3764, %v3764
  %v4285 = vpack.c.bf16 %v3767, %v3767
  %v4286 = vpack.c.bf16 %v3772, %v3772
  %v4287 = vpack.c.bf16 %v3775, %v3775
  %v4288 = vpack.c.bf16 %v3780, %v3780
  %v4289 = vpack.c.bf16 %v3783, %v3783
  %v4291 = vsel %vm1040, %v4274, 0
  %v4294 = vsel %vm1148, %v4282, 0
  %4296 = vmatprep.subr.bf16.mxu0 0
  %4297 = vmatpush1.bf16.msra.mxu0 %v4294
  %4298 = vmatprep.subr.bf16.mxu0 0
  %4299 = vmatpush1.bf16.msra.mxu0 0
  %4300 = vmatprep.subr.bf16.mxu0 0
  %4301 = vmatpush1.bf16.msra.mxu0 0
  %4302 = vmatprep.subr.bf16.mxu0 0
  %4303 = vmatpush1.bf16.msra.mxu0 0
  %4304 = vmatprep.subr.bf16.mxu0 0
  %4305 = vmatpush1.bf16.msra.mxu0 0
  %4306 = vmatprep.subr.bf16.mxu0 0
  %4307 = vmatpush1.bf16.msra.mxu0 0
  %4308 = vmatprep.subr.bf16.mxu0 0
  %4309 = vmatpush1.bf16.msra.mxu0 0
  %4310 = vmatprep.subr.bf16.mxu0 0
  %4311 = vmatpush1.bf16.msra.mxu0 0
  %4312 = vmatprep.subr.bf16.mxu0 0
  %4313 = vmatpush1.bf16.msra.mxu0 0
  %4314 = vmatprep.subr.bf16.mxu0 0
  %4315 = vmatpush1.bf16.msra.mxu0 0
  %4316 = vmatprep.subr.bf16.mxu0 0
  %4317 = vmatpush1.bf16.msra.mxu0 0
  %4318 = vmatprep.subr.bf16.mxu0 0
  %4319 = vmatpush1.bf16.msra.mxu0 0
  %4320 = vmatprep.subr.bf16.mxu0 0
  %4321 = vmatpush1.bf16.msra.mxu0 0
  %4322 = vmatprep.subr.bf16.mxu0 0
  %4323 = vmatpush1.bf16.msra.mxu0 0
  %4324 = vmatprep.subr.bf16.mxu0 0
  %4325 = vmatpush1.bf16.msra.mxu0 0
  %4326 = vmatprep.subr.bf16.mxu0 0
  %4327 = vmatpush1.bf16.msra.mxu0 0
  %4328 = vmatprep.mubr.bf16.mxu0 0
  %4329 = vmatmul.mubr.bf16.gmra.mrb[0].mxu0 %v4291
  %v4330 = vpop.f32.mrb[0].mxu0
  %v4331 = vadd.f32 0.0, %v4330
  %v4332 = vpop.f32.mrb[0].mxu0
  %v4333 = vpop.f32.mrb[0].mxu0
  %v4334 = vpop.f32.mrb[0].mxu0
  %4335 = vdwg.mxu0
  %v4337 = vsel %vm1040, %v4275, 0
  %v4340 = vsel %vm1148, %v4283, 0
  %4342 = vmatprep.subr.bf16.mxu0 0
  %4343 = vmatpush1.bf16.msra.mxu0 %v4340
  %4344 = vmatprep.subr.bf16.mxu0 0
  %4345 = vmatpush1.bf16.msra.mxu0 0
  %4346 = vmatprep.subr.bf16.mxu0 0
  %4347 = vmatpush1.bf16.msra.mxu0 0
  %4348 = vmatprep.subr.bf16.mxu0 0
  %4349 = vmatpush1.bf16.msra.mxu0 0
  %4350 = vmatprep.subr.bf16.mxu0 0
  %4351 = vmatpush1.bf16.msra.mxu0 0
  %4352 = vmatprep.subr.bf16.mxu0 0
  %4353 = vmatpush1.bf16.msra.mxu0 0
  %4354 = vmatprep.subr.bf16.mxu0 0
  %4355 = vmatpush1.bf16.msra.mxu0 0
  %4356 = vmatprep.subr.bf16.mxu0 0
  %4357 = vmatpush1.bf16.msra.mxu0 0
  %4358 = vmatprep.subr.bf16.mxu0 0
  %4359 = vmatpush1.bf16.msra.mxu0 0
  %4360 = vmatprep.subr.bf16.mxu0 0
  %4361 = vmatpush1.bf16.msra.mxu0 0
  %4362 = vmatprep.subr.bf16.mxu0 0
  %4363 = vmatpush1.bf16.msra.mxu0 0
  %4364 = vmatprep.subr.bf16.mxu0 0
  %4365 = vmatpush1.bf16.msra.mxu0 0
  %4366 = vmatprep.subr.bf16.mxu0 0
  %4367 = vmatpush1.bf16.msra.mxu0 0
  %4368 = vmatprep.subr.bf16.mxu0 0
  %4369 = vmatpush1.bf16.msra.mxu0 0
  %4370 = vmatprep.subr.bf16.mxu0 0
  %4371 = vmatpush1.bf16.msra.mxu0 0
  %4372 = vmatprep.subr.bf16.mxu0 0
  %4373 = vmatpush1.bf16.msra.mxu0 0
  %4374 = vmatprep.mubr.bf16.mxu0 0
  %4375 = vmatmul.mubr.bf16.gmra.mrb[0].mxu0 %v4337
  %v4376 = vpop.f32.mrb[0].mxu0
  %v4377 = vadd.f32 0.0, %v4376
  %v4378 = vpop.f32.mrb[0].mxu0
  %v4379 = vpop.f32.mrb[0].mxu0
  %v4380 = vpop.f32.mrb[0].mxu0
  %4381 = vdwg.mxu0
  %v4383 = vsel %vm1040, %v4276, 0
  %v4386 = vsel %vm1148, %v4284, 0
  %4388 = vmatprep.subr.bf16.mxu0 0
  %4389 = vmatpush1.bf16.msra.mxu0 %v4386
  %4390 = vmatprep.subr.bf16.mxu0 0
  %4391 = vmatpush1.bf16.msra.mxu0 0
  %4392 = vmatprep.subr.bf16.mxu0 0
  %4393 = vmatpush1.bf16.msra.mxu0 0
  %4394 = vmatprep.subr.bf16.mxu0 0
  %4395 = vmatpush1.bf16.msra.mxu0 0
  %4396 = vmatprep.subr.bf16.mxu0 0
  %4397 = vmatpush1.bf16.msra.mxu0 0
  %4398 = vmatprep.subr.bf16.mxu0 0
  %4399 = vmatpush1.bf16.msra.mxu0 0
  %4400 = vmatprep.subr.bf16.mxu0 0
  %4401 = vmatpush1.bf16.msra.mxu0 0
  %4402 = vmatprep.subr.bf16.mxu0 0
  %4403 = vmatpush1.bf16.msra.mxu0 0
  %4404 = vmatprep.subr.bf16.mxu0 0
  %4405 = vmatpush1.bf16.msra.mxu0 0
  %4406 = vmatprep.subr.bf16.mxu0 0
  %4407 = vmatpush1.bf16.msra.mxu0 0
  %4408 = vmatprep.subr.bf16.mxu0 0
  %4409 = vmatpush1.bf16.msra.mxu0 0
  %4410 = vmatprep.subr.bf16.mxu0 0
  %4411 = vmatpush1.bf16.msra.mxu0 0
  %4412 = vmatprep.subr.bf16.mxu0 0
  %4413 = vmatpush1.bf16.msra.mxu0 0
  %4414 = vmatprep.subr.bf16.mxu0 0
  %4415 = vmatpush1.bf16.msra.mxu0 0
  %4416 = vmatprep.subr.bf16.mxu0 0
  %4417 = vmatpush1.bf16.msra.mxu0 0
  %4418 = vmatprep.subr.bf16.mxu0 0
  %4419 = vmatpush1.bf16.msra.mxu0 0
  %4420 = vmatprep.mubr.bf16.mxu0 0
  %4421 = vmatmul.mubr.bf16.gmra.mrb[0].mxu0 %v4383
  %v4422 = vpop.f32.mrb[0].mxu0
  %v4423 = vadd.f32 0.0, %v4422
  %v4424 = vpop.f32.mrb[0].mxu0
  %v4425 = vpop.f32.mrb[0].mxu0
  %v4426 = vpop.f32.mrb[0].mxu0
  %4427 = vdwg.mxu0
  %v4429 = vsel %vm1040, %v4277, 0
  %v4432 = vsel %vm1148, %v4285, 0
  %4434 = vmatprep.subr.bf16.mxu0 0
  %4435 = vmatpush1.bf16.msra.mxu0 %v4432
  %4436 = vmatprep.subr.bf16.mxu0 0
  %4437 = vmatpush1.bf16.msra.mxu0 0
  %4438 = vmatprep.subr.bf16.mxu0 0
  %4439 = vmatpush1.bf16.msra.mxu0 0
  %4440 = vmatprep.subr.bf16.mxu0 0
  %4441 = vmatpush1.bf16.msra.mxu0 0
  %4442 = vmatprep.subr.bf16.mxu0 0
  %4443 = vmatpush1.bf16.msra.mxu0 0
  %4444 = vmatprep.subr.bf16.mxu0 0
  %4445 = vmatpush1.bf16.msra.mxu0 0
  %4446 = vmatprep.subr.bf16.mxu0 0
  %4447 = vmatpush1.bf16.msra.mxu0 0
  %4448 = vmatprep.subr.bf16.mxu0 0
  %4449 = vmatpush1.bf16.msra.mxu0 0
  %4450 = vmatprep.subr.bf16.mxu0 0
  %4451 = vmatpush1.bf16.msra.mxu0 0
  %4452 = vmatprep.subr.bf16.mxu0 0
  %4453 = vmatpush1.bf16.msra.mxu0 0
  %4454 = vmatprep.subr.bf16.mxu0 0
  %4455 = vmatpush1.bf16.msra.mxu0 0
  %4456 = vmatprep.subr.bf16.mxu0 0
  %4457 = vmatpush1.bf16.msra.mxu0 0
  %4458 = vmatprep.subr.bf16.mxu0 0
  %4459 = vmatpush1.bf16.msra.mxu0 0
  %4460 = vmatprep.subr.bf16.mxu0 0
  %4461 = vmatpush1.bf16.msra.mxu0 0
  %4462 = vmatprep.subr.bf16.mxu0 0
  %4463 = vmatpush1.bf16.msra.mxu0 0
  %4464 = vmatprep.subr.bf16.mxu0 0
  %4465 = vmatpush1.bf16.msra.mxu0 0
  %4466 = vmatprep.mubr.bf16.mxu0 0
  %4467 = vmatmul.mubr.bf16.gmra.mrb[0].mxu0 %v4429
  %v4468 = vpop.f32.mrb[0].mxu0
  %v4469 = vadd.f32 0.0, %v4468
  %v4470 = vpop.f32.mrb[0].mxu0
  %v4471 = vpop.f32.mrb[0].mxu0
  %v4472 = vpop.f32.mrb[0].mxu0
  %4473 = vdwg.mxu0
  %v4475 = vsel %vm1040, %v4278, 0
  %v4478 = vsel %vm1148, %v4286, 0
  %4480 = vmatprep.subr.bf16.mxu0 0
  %4481 = vmatpush1.bf16.msra.mxu0 %v4478
  %4482 = vmatprep.subr.bf16.mxu0 0
  %4483 = vmatpush1.bf16.msra.mxu0 0
  %4484 = vmatprep.subr.bf16.mxu0 0
  %4485 = vmatpush1.bf16.msra.mxu0 0
  %4486 = vmatprep.subr.bf16.mxu0 0
  %4487 = vmatpush1.bf16.msra.mxu0 0
  %4488 = vmatprep.subr.bf16.mxu0 0
  %4489 = vmatpush1.bf16.msra.mxu0 0
  %4490 = vmatprep.subr.bf16.mxu0 0
  %4491 = vmatpush1.bf16.msra.mxu0 0
  %4492 = vmatprep.subr.bf16.mxu0 0
  %4493 = vmatpush1.bf16.msra.mxu0 0
  %4494 = vmatprep.subr.bf16.mxu0 0
  %4495 = vmatpush1.bf16.msra.mxu0 0
  %4496 = vmatprep.subr.bf16.mxu0 0
  %4497 = vmatpush1.bf16.msra.mxu0 0
  %4498 = vmatprep.subr.bf16.mxu0 0
  %4499 = vmatpush1.bf16.msra.mxu0 0
  %4500 = vmatprep.subr.bf16.mxu0 0
  %4501 = vmatpush1.bf16.msra.mxu0 0
  %4502 = vmatprep.subr.bf16.mxu0 0
  %4503 = vmatpush1.bf16.msra.mxu0 0
  %4504 = vmatprep.subr.bf16.mxu0 0
  %4505 = vmatpush1.bf16.msra.mxu0 0
  %4506 = vmatprep.subr.bf16.mxu0 0
  %4507 = vmatpush1.bf16.msra.mxu0 0
  %4508 = vmatprep.subr.bf16.mxu0 0
  %4509 = vmatpush1.bf16.msra.mxu0 0
  %4510 = vmatprep.subr.bf16.mxu0 0
  %4511 = vmatpush1.bf16.msra.mxu0 0
  %4512 = vmatprep.mubr.bf16.mxu0 0
  %4513 = vmatmul.mubr.bf16.gmra.mrb[0].mxu0 %v4475
  %v4514 = vpop.f32.mrb[0].mxu0
  %v4515 = vadd.f32 0.0, %v4514
  %v4516 = vpop.f32.mrb[0].mxu0
  %v4517 = vpop.f32.mrb[0].mxu0
  %v4518 = vpop.f32.mrb[0].mxu0
  %4519 = vdwg.mxu0
  %v4521 = vsel %vm1040, %v4279, 0
  %v4524 = vsel %vm1148, %v4287, 0
  %4526 = vmatprep.subr.bf16.mxu0 0
  %4527 = vmatpush1.bf16.msra.mxu0 %v4524
  %4528 = vmatprep.subr.bf16.mxu0 0
  %4529 = vmatpush1.bf16.msra.mxu0 0
  %4530 = vmatprep.subr.bf16.mxu0 0
  %4531 = vmatpush1.bf16.msra.mxu0 0
  %4532 = vmatprep.subr.bf16.mxu0 0
  %4533 = vmatpush1.bf16.msra.mxu0 0
  %4534 = vmatprep.subr.bf16.mxu0 0
  %4535 = vmatpush1.bf16.msra.mxu0 0
  %4536 = vmatprep.subr.bf16.mxu0 0
  %4537 = vmatpush1.bf16.msra.mxu0 0
  %4538 = vmatprep.subr.bf16.mxu0 0
  %4539 = vmatpush1.bf16.msra.mxu0 0
  %4540 = vmatprep.subr.bf16.mxu0 0
  %4541 = vmatpush1.bf16.msra.mxu0 0
  %4542 = vmatprep.subr.bf16.mxu0 0
  %4543 = vmatpush1.bf16.msra.mxu0 0
  %4544 = vmatprep.subr.bf16.mxu0 0
  %4545 = vmatpush1.bf16.msra.mxu0 0
  %4546 = vmatprep.subr.bf16.mxu0 0
  %4547 = vmatpush1.bf16.msra.mxu0 0
  %4548 = vmatprep.subr.bf16.mxu0 0
  %4549 = vmatpush1.bf16.msra.mxu0 0
  %4550 = vmatprep.subr.bf16.mxu0 0
  %4551 = vmatpush1.bf16.msra.mxu0 0
  %4552 = vmatprep.subr.bf16.mxu0 0
  %4553 = vmatpush1.bf16.msra.mxu0 0
  %4554 = vmatprep.subr.bf16.mxu0 0
  %4555 = vmatpush1.bf16.msra.mxu0 0
  %4556 = vmatprep.subr.bf16.mxu0 0
  %4557 = vmatpush1.bf16.msra.mxu0 0
  %4558 = vmatprep.mubr.bf16.mxu0 0
  %4559 = vmatmul.mubr.bf16.gmra.mrb[0].mxu0 %v4521
  %v4560 = vpop.f32.mrb[0].mxu0
  %v4561 = vadd.f32 0.0, %v4560
  %v4562 = vpop.f32.mrb[0].mxu0
  %v4563 = vpop.f32.mrb[0].mxu0
  %v4564 = vpop.f32.mrb[0].mxu0
  %4565 = vdwg.mxu0
  %v4567 = vsel %vm1040, %v4280, 0
  %v4570 = vsel %vm1148, %v4288, 0
  %4572 = vmatprep.subr.bf16.mxu0 0
  %4573 = vmatpush1.bf16.msra.mxu0 %v4570
  %4574 = vmatprep.subr.bf16.mxu0 0
  %4575 = vmatpush1.bf16.msra.mxu0 0
  %4576 = vmatprep.subr.bf16.mxu0 0
  %4577 = vmatpush1.bf16.msra.mxu0 0
  %4578 = vmatprep.subr.bf16.mxu0 0
  %4579 = vmatpush1.bf16.msra.mxu0 0
  %4580 = vmatprep.subr.bf16.mxu0 0
  %4581 = vmatpush1.bf16.msra.mxu0 0
  %4582 = vmatprep.subr.bf16.mxu0 0
  %4583 = vmatpush1.bf16.msra.mxu0 0
  %4584 = vmatprep.subr.bf16.mxu0 0
  %4585 = vmatpush1.bf16.msra.mxu0 0
  %4586 = vmatprep.subr.bf16.mxu0 0
  %4587 = vmatpush1.bf16.msra.mxu0 0
  %4588 = vmatprep.subr.bf16.mxu0 0
  %4589 = vmatpush1.bf16.msra.mxu0 0
  %4590 = vmatprep.subr.bf16.mxu0 0
  %4591 = vmatpush1.bf16.msra.mxu0 0
  %4592 = vmatprep.subr.bf16.mxu0 0
  %4593 = vmatpush1.bf16.msra.mxu0 0
  %4594 = vmatprep.subr.bf16.mxu0 0
  %4595 = vmatpush1.bf16.msra.mxu0 0
  %4596 = vmatprep.subr.bf16.mxu0 0
  %4597 = vmatpush1.bf16.msra.mxu0 0
  %4598 = vmatprep.subr.bf16.mxu0 0
  %4599 = vmatpush1.bf16.msra.mxu0 0
  %4600 = vmatprep.subr.bf16.mxu0 0
  %4601 = vmatpush1.bf16.msra.mxu0 0
  %4602 = vmatprep.subr.bf16.mxu0 0
  %4603 = vmatpush1.bf16.msra.mxu0 0
  %4604 = vmatprep.mubr.bf16.mxu0 0
  %4605 = vmatmul.mubr.bf16.gmra.mrb[0].mxu0 %v4567
  %v4606 = vpop.f32.mrb[0].mxu0
  %v4607 = vadd.f32 0.0, %v4606
  %v4608 = vpop.f32.mrb[0].mxu0
  %v4609 = vpop.f32.mrb[0].mxu0
  %v4610 = vpop.f32.mrb[0].mxu0
  %4611 = vdwg.mxu0
  %v4613 = vsel %vm1040, %v4281, 0
  %v4616 = vsel %vm1148, %v4289, 0
  %4618 = vmatprep.subr.bf16.mxu0 0
  %4619 = vmatpush1.bf16.msra.mxu0 %v4616
  %4620 = vmatprep.subr.bf16.mxu0 0
  %4621 = vmatpush1.bf16.msra.mxu0 0
  %4622 = vmatprep.subr.bf16.mxu0 0
  %4623 = vmatpush1.bf16.msra.mxu0 0
  %4624 = vmatprep.subr.bf16.mxu0 0
  %4625 = vmatpush1.bf16.msra.mxu0 0
  %4626 = vmatprep.subr.bf16.mxu0 0
  %4627 = vmatpush1.bf16.msra.mxu0 0
  %4628 = vmatprep.subr.bf16.mxu0 0
  %4629 = vmatpush1.bf16.msra.mxu0 0
  %4630 = vmatprep.subr.bf16.mxu0 0
  %4631 = vmatpush1.bf16.msra.mxu0 0
  %4632 = vmatprep.subr.bf16.mxu0 0
  %4633 = vmatpush1.bf16.msra.mxu0 0
  %4634 = vmatprep.subr.bf16.mxu0 0
  %4635 = vmatpush1.bf16.msra.mxu0 0
  %4636 = vmatprep.subr.bf16.mxu0 0
  %4637 = vmatpush1.bf16.msra.mxu0 0
  %4638 = vmatprep.subr.bf16.mxu0 0
  %4639 = vmatpush1.bf16.msra.mxu0 0
  %4640 = vmatprep.subr.bf16.mxu0 0
  %4641 = vmatpush1.bf16.msra.mxu0 0
  %4642 = vmatprep.subr.bf16.mxu0 0
  %4643 = vmatpush1.bf16.msra.mxu0 0
  %4644 = vmatprep.subr.bf16.mxu0 0
  %4645 = vmatpush1.bf16.msra.mxu0 0
  %4646 = vmatprep.subr.bf16.mxu0 0
  %4647 = vmatpush1.bf16.msra.mxu0 0
  %4648 = vmatprep.subr.bf16.mxu0 0
  %4649 = vmatpush1.bf16.msra.mxu0 0
  %4650 = vmatprep.mubr.bf16.mxu0 0
  %4651 = vmatmul.mubr.bf16.gmra.mrb[0].mxu0 %v4613
  %v4652 = vpop.f32.mrb[0].mxu0
  %v4653 = vadd.f32 0.0, %v4652
  %v4654 = vpop.f32.mrb[0].mxu0
  %v4655 = vpop.f32.mrb[0].mxu0
  %v4656 = vpop.f32.mrb[0].mxu0
  %4657 = vdwg.mxu0
  %v4658 = vpack.c.bf16 %v4377, %v4331
  %v4659 = vpack.c.bf16 %v4469, %v4423
  %v4660 = vpack.c.bf16 %v4561, %v4515
  %v4661 = vpack.c.bf16 %v4653, %v4607
  %4663 = vrot.lane.b32.xlu0 %v3786, 64
  %v4664 = vpop.permute.xlu0 %4663
  %4666 = vrot.lane.b32.xlu0 %v3794, 64
  %v4667 = vpop.permute.xlu0 %4666
  %v4669 = vsel %vm615, %v4664, 0
  %v4672 = vsel %vm615, %v4667, 0
  %4674 = vmatprep.subr.bf16.mxu0 0
  %4675 = vmatpush1.bf16.xpose.msra.mxu0 %v4672
  %4676 = vmatprep.subr.bf16.mxu0 0
  %4677 = vmatpush1.bf16.xpose.msra.mxu0 0
  %4678 = vmatprep.subr.bf16.mxu0 0
  %4679 = vmatpush1.bf16.xpose.msra.mxu0 0
  %4680 = vmatprep.subr.bf16.mxu0 0
  %4681 = vmatpush1.bf16.xpose.msra.mxu0 0
  %4682 = vmatprep.subr.bf16.mxu0 0
  %4683 = vmatpush1.bf16.xpose.msra.mxu0 0
  %4684 = vmatprep.subr.bf16.mxu0 0
  %4685 = vmatpush1.bf16.xpose.msra.mxu0 0
  %4686 = vmatprep.subr.bf16.mxu0 0
  %4687 = vmatpush1.bf16.xpose.msra.mxu0 0
  %4688 = vmatprep.subr.bf16.mxu0 0
  %4689 = vmatpush1.bf16.xpose.msra.mxu0 0
  %4690 = vmatprep.subr.bf16.mxu0 0
  %4691 = vmatpush1.bf16.xpose.msra.mxu0 0
  %4692 = vmatprep.subr.bf16.mxu0 0
  %4693 = vmatpush1.bf16.xpose.msra.mxu0 0
  %4694 = vmatprep.subr.bf16.mxu0 0
  %4695 = vmatpush1.bf16.xpose.msra.mxu0 0
  %4696 = vmatprep.subr.bf16.mxu0 0
  %4697 = vmatpush1.bf16.xpose.msra.mxu0 0
  %4698 = vmatprep.subr.bf16.mxu0 0
  %4699 = vmatpush1.bf16.xpose.msra.mxu0 0
  %4700 = vmatprep.subr.bf16.mxu0 0
  %4701 = vmatpush1.bf16.xpose.msra.mxu0 0
  %4702 = vmatprep.subr.bf16.mxu0 0
  %4703 = vmatpush1.bf16.xpose.msra.mxu0 0
  %4704 = vmatprep.subr.bf16.mxu0 0
  %4705 = vmatpush1.bf16.xpose.msra.mxu0 0
  %4706 = vmatprep.mubr.bf16.mxu0 0
  %4707 = vmatmul.mubr.bf16.gmra.mrb[0].mxu0 %v4669
  %v4708 = vpop.f32.mrb[0].mxu0
  %v4709 = vadd.f32 0.0, %v4708
  %v4710 = vpop.f32.mrb[0].mxu0
  %v4711 = vpop.f32.mrb[0].mxu0
  %v4712 = vpop.f32.mrb[0].mxu0
  %4713 = vdwg.mxu0
  %4715 = vrot.lane.b32.xlu0 %v3787, 64
  %v4716 = vpop.permute.xlu0 %4715
  %4718 = vrot.lane.b32.xlu0 %v3795, 64
  %v4719 = vpop.permute.xlu0 %4718
  %v4721 = vsel %vm615, %v4716, 0
  %v4724 = vsel %vm615, %v4719, 0
  %4726 = vmatprep.subr.bf16.mxu0 0
  %4727 = vmatpush1.bf16.xpose.msra.mxu0 %v4724
  %4728 = vmatprep.subr.bf16.mxu0 0
  %4729 = vmatpush1.bf16.xpose.msra.mxu0 0
  %4730 = vmatprep.subr.bf16.mxu0 0
  %4731 = vmatpush1.bf16.xpose.msra.mxu0 0
  %4732 = vmatprep.subr.bf16.mxu0 0
  %4733 = vmatpush1.bf16.xpose.msra.mxu0 0
  %4734 = vmatprep.subr.bf16.mxu0 0
  %4735 = vmatpush1.bf16.xpose.msra.mxu0 0
  %4736 = vmatprep.subr.bf16.mxu0 0
  %4737 = vmatpush1.bf16.xpose.msra.mxu0 0
  %4738 = vmatprep.subr.bf16.mxu0 0
  %4739 = vmatpush1.bf16.xpose.msra.mxu0 0
  %4740 = vmatprep.subr.bf16.mxu0 0
  %4741 = vmatpush1.bf16.xpose.msra.mxu0 0
  %4742 = vmatprep.subr.bf16.mxu0 0
  %4743 = vmatpush1.bf16.xpose.msra.mxu0 0
  %4744 = vmatprep.subr.bf16.mxu0 0
  %4745 = vmatpush1.bf16.xpose.msra.mxu0 0
  %4746 = vmatprep.subr.bf16.mxu0 0
  %4747 = vmatpush1.bf16.xpose.msra.mxu0 0
  %4748 = vmatprep.subr.bf16.mxu0 0
  %4749 = vmatpush1.bf16.xpose.msra.mxu0 0
  %4750 = vmatprep.subr.bf16.mxu0 0
  %4751 = vmatpush1.bf16.xpose.msra.mxu0 0
  %4752 = vmatprep.subr.bf16.mxu0 0
  %4753 = vmatpush1.bf16.xpose.msra.mxu0 0
  %4754 = vmatprep.subr.bf16.mxu0 0
  %4755 = vmatpush1.bf16.xpose.msra.mxu0 0
  %4756 = vmatprep.subr.bf16.mxu0 0
  %4757 = vmatpush1.bf16.xpose.msra.mxu0 0
  %4758 = vmatprep.mubr.bf16.mxu0 0
  %4759 = vmatmul.mubr.bf16.gmra.mrb[0].mxu0 %v4721
  %v4760 = vpop.f32.mrb[0].mxu0
  %v4761 = vadd.f32 0.0, %v4760
  %v4762 = vpop.f32.mrb[0].mxu0
  %v4763 = vpop.f32.mrb[0].mxu0
  %v4764 = vpop.f32.mrb[0].mxu0
  %4765 = vdwg.mxu0
  %4767 = vrot.lane.b32.xlu0 %v3788, 64
  %v4768 = vpop.permute.xlu0 %4767
  %4770 = vrot.lane.b32.xlu0 %v3796, 64
  %v4771 = vpop.permute.xlu0 %4770
  %v4773 = vsel %vm615, %v4768, 0
  %v4776 = vsel %vm615, %v4771, 0
  %4778 = vmatprep.subr.bf16.mxu0 0
  %4779 = vmatpush1.bf16.xpose.msra.mxu0 %v4776
  %4780 = vmatprep.subr.bf16.mxu0 0
  %4781 = vmatpush1.bf16.xpose.msra.mxu0 0
  %4782 = vmatprep.subr.bf16.mxu0 0
  %4783 = vmatpush1.bf16.xpose.msra.mxu0 0
  %4784 = vmatprep.subr.bf16.mxu0 0
  %4785 = vmatpush1.bf16.xpose.msra.mxu0 0
  %4786 = vmatprep.subr.bf16.mxu0 0
  %4787 = vmatpush1.bf16.xpose.msra.mxu0 0
  %4788 = vmatprep.subr.bf16.mxu0 0
  %4789 = vmatpush1.bf16.xpose.msra.mxu0 0
  %4790 = vmatprep.subr.bf16.mxu0 0
  %4791 = vmatpush1.bf16.xpose.msra.mxu0 0
  %4792 = vmatprep.subr.bf16.mxu0 0
  %4793 = vmatpush1.bf16.xpose.msra.mxu0 0
  %4794 = vmatprep.subr.bf16.mxu0 0
  %4795 = vmatpush1.bf16.xpose.msra.mxu0 0
  %4796 = vmatprep.subr.bf16.mxu0 0
  %4797 = vmatpush1.bf16.xpose.msra.mxu0 0
  %4798 = vmatprep.subr.bf16.mxu0 0
  %4799 = vmatpush1.bf16.xpose.msra.mxu0 0
  %4800 = vmatprep.subr.bf16.mxu0 0
  %4801 = vmatpush1.bf16.xpose.msra.mxu0 0
  %4802 = vmatprep.subr.bf16.mxu0 0
  %4803 = vmatpush1.bf16.xpose.msra.mxu0 0
  %4804 = vmatprep.subr.bf16.mxu0 0
  %4805 = vmatpush1.bf16.xpose.msra.mxu0 0
  %4806 = vmatprep.subr.bf16.mxu0 0
  %4807 = vmatpush1.bf16.xpose.msra.mxu0 0
  %4808 = vmatprep.subr.bf16.mxu0 0
  %4809 = vmatpush1.bf16.xpose.msra.mxu0 0
  %4810 = vmatprep.mubr.bf16.mxu0 0
  %4811 = vmatmul.mubr.bf16.gmra.mrb[0].mxu0 %v4773
  %v4812 = vpop.f32.mrb[0].mxu0
  %v4813 = vadd.f32 0.0, %v4812
  %v4814 = vpop.f32.mrb[0].mxu0
  %v4815 = vpop.f32.mrb[0].mxu0
  %v4816 = vpop.f32.mrb[0].mxu0
  %4817 = vdwg.mxu0
  %4819 = vrot.lane.b32.xlu0 %v3789, 64
  %v4820 = vpop.permute.xlu0 %4819
  %4822 = vrot.lane.b32.xlu0 %v3797, 64
  %v4823 = vpop.permute.xlu0 %4822
  %v4825 = vsel %vm615, %v4820, 0
  %v4828 = vsel %vm615, %v4823, 0
  %4830 = vmatprep.subr.bf16.mxu0 0
  %4831 = vmatpush1.bf16.xpose.msra.mxu0 %v4828
  %4832 = vmatprep.subr.bf16.mxu0 0
  %4833 = vmatpush1.bf16.xpose.msra.mxu0 0
  %4834 = vmatprep.subr.bf16.mxu0 0
  %4835 = vmatpush1.bf16.xpose.msra.mxu0 0
  %4836 = vmatprep.subr.bf16.mxu0 0
  %4837 = vmatpush1.bf16.xpose.msra.mxu0 0
  %4838 = vmatprep.subr.bf16.mxu0 0
  %4839 = vmatpush1.bf16.xpose.msra.mxu0 0
  %4840 = vmatprep.subr.bf16.mxu0 0
  %4841 = vmatpush1.bf16.xpose.msra.mxu0 0
  %4842 = vmatprep.subr.bf16.mxu0 0
  %4843 = vmatpush1.bf16.xpose.msra.mxu0 0
  %4844 = vmatprep.subr.bf16.mxu0 0
  %4845 = vmatpush1.bf16.xpose.msra.mxu0 0
  %4846 = vmatprep.subr.bf16.mxu0 0
  %4847 = vmatpush1.bf16.xpose.msra.mxu0 0
  %4848 = vmatprep.subr.bf16.mxu0 0
  %4849 = vmatpush1.bf16.xpose.msra.mxu0 0
  %4850 = vmatprep.subr.bf16.mxu0 0
  %4851 = vmatpush1.bf16.xpose.msra.mxu0 0
  %4852 = vmatprep.subr.bf16.mxu0 0
  %4853 = vmatpush1.bf16.xpose.msra.mxu0 0
  %4854 = vmatprep.subr.bf16.mxu0 0
  %4855 = vmatpush1.bf16.xpose.msra.mxu0 0
  %4856 = vmatprep.subr.bf16.mxu0 0
  %4857 = vmatpush1.bf16.xpose.msra.mxu0 0
  %4858 = vmatprep.subr.bf16.mxu0 0
  %4859 = vmatpush1.bf16.xpose.msra.mxu0 0
  %4860 = vmatprep.subr.bf16.mxu0 0
  %4861 = vmatpush1.bf16.xpose.msra.mxu0 0
  %4862 = vmatprep.mubr.bf16.mxu0 0
  %4863 = vmatmul.mubr.bf16.gmra.mrb[0].mxu0 %v4825
  %v4864 = vpop.f32.mrb[0].mxu0
  %v4865 = vadd.f32 0.0, %v4864
  %v4866 = vpop.f32.mrb[0].mxu0
  %v4867 = vpop.f32.mrb[0].mxu0
  %v4868 = vpop.f32.mrb[0].mxu0
  %4869 = vdwg.mxu0
  %4871 = vrot.lane.b32.xlu0 %v3790, 64
  %v4872 = vpop.permute.xlu0 %4871
  %4874 = vrot.lane.b32.xlu0 %v3798, 64
  %v4875 = vpop.permute.xlu0 %4874
  %v4877 = vsel %vm615, %v4872, 0
  %v4880 = vsel %vm615, %v4875, 0
  %4882 = vmatprep.subr.bf16.mxu0 0
  %4883 = vmatpush1.bf16.xpose.msra.mxu0 %v4880
  %4884 = vmatprep.subr.bf16.mxu0 0
  %4885 = vmatpush1.bf16.xpose.msra.mxu0 0
  %4886 = vmatprep.subr.bf16.mxu0 0
  %4887 = vmatpush1.bf16.xpose.msra.mxu0 0
  %4888 = vmatprep.subr.bf16.mxu0 0
  %4889 = vmatpush1.bf16.xpose.msra.mxu0 0
  %4890 = vmatprep.subr.bf16.mxu0 0
  %4891 = vmatpush1.bf16.xpose.msra.mxu0 0
  %4892 = vmatprep.subr.bf16.mxu0 0
  %4893 = vmatpush1.bf16.xpose.msra.mxu0 0
  %4894 = vmatprep.subr.bf16.mxu0 0
  %4895 = vmatpush1.bf16.xpose.msra.mxu0 0
  %4896 = vmatprep.subr.bf16.mxu0 0
  %4897 = vmatpush1.bf16.xpose.msra.mxu0 0
  %4898 = vmatprep.subr.bf16.mxu0 0
  %4899 = vmatpush1.bf16.xpose.msra.mxu0 0
  %4900 = vmatprep.subr.bf16.mxu0 0
  %4901 = vmatpush1.bf16.xpose.msra.mxu0 0
  %4902 = vmatprep.subr.bf16.mxu0 0
  %4903 = vmatpush1.bf16.xpose.msra.mxu0 0
  %4904 = vmatprep.subr.bf16.mxu0 0
  %4905 = vmatpush1.bf16.xpose.msra.mxu0 0
  %4906 = vmatprep.subr.bf16.mxu0 0
  %4907 = vmatpush1.bf16.xpose.msra.mxu0 0
  %4908 = vmatprep.subr.bf16.mxu0 0
  %4909 = vmatpush1.bf16.xpose.msra.mxu0 0
  %4910 = vmatprep.subr.bf16.mxu0 0
  %4911 = vmatpush1.bf16.xpose.msra.mxu0 0
  %4912 = vmatprep.subr.bf16.mxu0 0
  %4913 = vmatpush1.bf16.xpose.msra.mxu0 0
  %4914 = vmatprep.mubr.bf16.mxu0 0
  %4915 = vmatmul.mubr.bf16.gmra.mrb[0].mxu0 %v4877
  %v4916 = vpop.f32.mrb[0].mxu0
  %v4917 = vadd.f32 0.0, %v4916
  %v4918 = vpop.f32.mrb[0].mxu0
  %v4919 = vpop.f32.mrb[0].mxu0
  %v4920 = vpop.f32.mrb[0].mxu0
  %4921 = vdwg.mxu0
  %4923 = vrot.lane.b32.xlu0 %v3791, 64
  %v4924 = vpop.permute.xlu0 %4923
  %4926 = vrot.lane.b32.xlu0 %v3799, 64
  %v4927 = vpop.permute.xlu0 %4926
  %v4929 = vsel %vm615, %v4924, 0
  %v4932 = vsel %vm615, %v4927, 0
  %4934 = vmatprep.subr.bf16.mxu0 0
  %4935 = vmatpush1.bf16.xpose.msra.mxu0 %v4932
  %4936 = vmatprep.subr.bf16.mxu0 0
  %4937 = vmatpush1.bf16.xpose.msra.mxu0 0
  %4938 = vmatprep.subr.bf16.mxu0 0
  %4939 = vmatpush1.bf16.xpose.msra.mxu0 0
  %4940 = vmatprep.subr.bf16.mxu0 0
  %4941 = vmatpush1.bf16.xpose.msra.mxu0 0
  %4942 = vmatprep.subr.bf16.mxu0 0
  %4943 = vmatpush1.bf16.xpose.msra.mxu0 0
  %4944 = vmatprep.subr.bf16.mxu0 0
  %4945 = vmatpush1.bf16.xpose.msra.mxu0 0
  %4946 = vmatprep.subr.bf16.mxu0 0
  %4947 = vmatpush1.bf16.xpose.msra.mxu0 0
  %4948 = vmatprep.subr.bf16.mxu0 0
  %4949 = vmatpush1.bf16.xpose.msra.mxu0 0
  %4950 = vmatprep.subr.bf16.mxu0 0
  %4951 = vmatpush1.bf16.xpose.msra.mxu0 0
  %4952 = vmatprep.subr.bf16.mxu0 0
  %4953 = vmatpush1.bf16.xpose.msra.mxu0 0
  %4954 = vmatprep.subr.bf16.mxu0 0
  %4955 = vmatpush1.bf16.xpose.msra.mxu0 0
  %4956 = vmatprep.subr.bf16.mxu0 0
  %4957 = vmatpush1.bf16.xpose.msra.mxu0 0
  %4958 = vmatprep.subr.bf16.mxu0 0
  %4959 = vmatpush1.bf16.xpose.msra.mxu0 0
  %4960 = vmatprep.subr.bf16.mxu0 0
  %4961 = vmatpush1.bf16.xpose.msra.mxu0 0
  %4962 = vmatprep.subr.bf16.mxu0 0
  %4963 = vmatpush1.bf16.xpose.msra.mxu0 0
  %4964 = vmatprep.subr.bf16.mxu0 0
  %4965 = vmatpush1.bf16.xpose.msra.mxu0 0
  %4966 = vmatprep.mubr.bf16.mxu0 0
  %4967 = vmatmul.mubr.bf16.gmra.mrb[0].mxu0 %v4929
  %v4968 = vpop.f32.mrb[0].mxu0
  %v4969 = vadd.f32 0.0, %v4968
  %v4970 = vpop.f32.mrb[0].mxu0
  %v4971 = vpop.f32.mrb[0].mxu0
  %v4972 = vpop.f32.mrb[0].mxu0
  %4973 = vdwg.mxu0
  %4975 = vrot.lane.b32.xlu0 %v3792, 64
  %v4976 = vpop.permute.xlu0 %4975
  %4978 = vrot.lane.b32.xlu0 %v3800, 64
  %v4979 = vpop.permute.xlu0 %4978
  %v4981 = vsel %vm615, %v4976, 0
  %v4984 = vsel %vm615, %v4979, 0
  %4986 = vmatprep.subr.bf16.mxu0 0
  %4987 = vmatpush1.bf16.xpose.msra.mxu0 %v4984
  %4988 = vmatprep.subr.bf16.mxu0 0
  %4989 = vmatpush1.bf16.xpose.msra.mxu0 0
  %4990 = vmatprep.subr.bf16.mxu0 0
  %4991 = vmatpush1.bf16.xpose.msra.mxu0 0
  %4992 = vmatprep.subr.bf16.mxu0 0
  %4993 = vmatpush1.bf16.xpose.msra.mxu0 0
  %4994 = vmatprep.subr.bf16.mxu0 0
  %4995 = vmatpush1.bf16.xpose.msra.mxu0 0
  %4996 = vmatprep.subr.bf16.mxu0 0
  %4997 = vmatpush1.bf16.xpose.msra.mxu0 0
  %4998 = vmatprep.subr.bf16.mxu0 0
  %4999 = vmatpush1.bf16.xpose.msra.mxu0 0
  %5000 = vmatprep.subr.bf16.mxu0 0
  %5001 = vmatpush1.bf16.xpose.msra.mxu0 0
  %5002 = vmatprep.subr.bf16.mxu0 0
  %5003 = vmatpush1.bf16.xpose.msra.mxu0 0
  %5004 = vmatprep.subr.bf16.mxu0 0
  %5005 = vmatpush1.bf16.xpose.msra.mxu0 0
  %5006 = vmatprep.subr.bf16.mxu0 0
  %5007 = vmatpush1.bf16.xpose.msra.mxu0 0
  %5008 = vmatprep.subr.bf16.mxu0 0
  %5009 = vmatpush1.bf16.xpose.msra.mxu0 0
  %5010 = vmatprep.subr.bf16.mxu0 0
  %5011 = vmatpush1.bf16.xpose.msra.mxu0 0
  %5012 = vmatprep.subr.bf16.mxu0 0
  %5013 = vmatpush1.bf16.xpose.msra.mxu0 0
  %5014 = vmatprep.subr.bf16.mxu0 0
  %5015 = vmatpush1.bf16.xpose.msra.mxu0 0
  %5016 = vmatprep.subr.bf16.mxu0 0
  %5017 = vmatpush1.bf16.xpose.msra.mxu0 0
  %5018 = vmatprep.mubr.bf16.mxu0 0
  %5019 = vmatmul.mubr.bf16.gmra.mrb[0].mxu0 %v4981
  %v5020 = vpop.f32.mrb[0].mxu0
  %v5021 = vadd.f32 0.0, %v5020
  %v5022 = vpop.f32.mrb[0].mxu0
  %v5023 = vpop.f32.mrb[0].mxu0
  %v5024 = vpop.f32.mrb[0].mxu0
  %5025 = vdwg.mxu0
  %5027 = vrot.lane.b32.xlu0 %v3793, 64
  %v5028 = vpop.permute.xlu0 %5027
  %5030 = vrot.lane.b32.xlu0 %v3801, 64
  %v5031 = vpop.permute.xlu0 %5030
  %v5033 = vsel %vm615, %v5028, 0
  %v5036 = vsel %vm615, %v5031, 0
  %5038 = vmatprep.subr.bf16.mxu0 0
  %5039 = vmatpush1.bf16.xpose.msra.mxu0 %v5036
  %5040 = vmatprep.subr.bf16.mxu0 0
  %5041 = vmatpush1.bf16.xpose.msra.mxu0 0
  %5042 = vmatprep.subr.bf16.mxu0 0
  %5043 = vmatpush1.bf16.xpose.msra.mxu0 0
  %5044 = vmatprep.subr.bf16.mxu0 0
  %5045 = vmatpush1.bf16.xpose.msra.mxu0 0
  %5046 = vmatprep.subr.bf16.mxu0 0
  %5047 = vmatpush1.bf16.xpose.msra.mxu0 0
  %5048 = vmatprep.subr.bf16.mxu0 0
  %5049 = vmatpush1.bf16.xpose.msra.mxu0 0
  %5050 = vmatprep.subr.bf16.mxu0 0
  %5051 = vmatpush1.bf16.xpose.msra.mxu0 0
  %5052 = vmatprep.subr.bf16.mxu0 0
  %5053 = vmatpush1.bf16.xpose.msra.mxu0 0
  %5054 = vmatprep.subr.bf16.mxu0 0
  %5055 = vmatpush1.bf16.xpose.msra.mxu0 0
  %5056 = vmatprep.subr.bf16.mxu0 0
  %5057 = vmatpush1.bf16.xpose.msra.mxu0 0
  %5058 = vmatprep.subr.bf16.mxu0 0
  %5059 = vmatpush1.bf16.xpose.msra.mxu0 0
  %5060 = vmatprep.subr.bf16.mxu0 0
  %5061 = vmatpush1.bf16.xpose.msra.mxu0 0
  %5062 = vmatprep.subr.bf16.mxu0 0
  %5063 = vmatpush1.bf16.xpose.msra.mxu0 0
  %5064 = vmatprep.subr.bf16.mxu0 0
  %5065 = vmatpush1.bf16.xpose.msra.mxu0 0
  %5066 = vmatprep.subr.bf16.mxu0 0
  %5067 = vmatpush1.bf16.xpose.msra.mxu0 0
  %5068 = vmatprep.subr.bf16.mxu0 0
  %5069 = vmatpush1.bf16.xpose.msra.mxu0 0
  %5070 = vmatprep.mubr.bf16.mxu0 0
  %5071 = vmatmul.mubr.bf16.gmra.mrb[0].mxu0 %v5033
  %v5072 = vpop.f32.mrb[0].mxu0
  %v5073 = vadd.f32 0.0, %v5072
  %v5074 = vpop.f32.mrb[0].mxu0
  %v5075 = vpop.f32.mrb[0].mxu0
  %v5076 = vpop.f32.mrb[0].mxu0
  %5077 = vdwg.mxu0
  %v5078 = vmul.f32 %v4709, 0.125
  %v5079 = vmul.f32 %v4761, 0.125
  %v5080 = vmul.f32 %v4813, 0.125
  %v5081 = vmul.f32 %v4865, 0.125
  %v5082 = vmul.f32 %v4917, 0.125
  %v5083 = vmul.f32 %v4969, 0.125
  %v5084 = vmul.f32 %v5021, 0.125
  %v5085 = vmul.f32 %v5073, 0.125
  %v5086 = vadd.f32 %v5078, %v995
  %v5087 = vadd.f32 %v5079, %v999
  %v5088 = vadd.f32 %v5080, %v1003
  %v5089 = vadd.f32 %v5081, %v1007
  %v5090 = vadd.f32 %v5082, %v1011
  %v5091 = vadd.f32 %v5083, %v1015
  %v5092 = vadd.f32 %v5084, %v1019
  %v5093 = vadd.f32 %v5085, %v1023
  %v5094 = vsel %vm1040, %v5086, -inf
  %5095 = vmax.xlane.f32.xlu0 %v5094
  %v5096 = vpop.xlane.xlu0 %5095
  %v5097 = vsel %vm1040, %v5087, -inf
  %5098 = vmax.xlane.f32.xlu0 %v5097
  %v5099 = vpop.xlane.xlu0 %5098
  %v5100 = vsel %vm1040, %v5088, -inf
  %5101 = vmax.xlane.f32.xlu0 %v5100
  %v5102 = vpop.xlane.xlu0 %5101
  %v5103 = vsel %vm1040, %v5089, -inf
  %5104 = vmax.xlane.f32.xlu0 %v5103
  %v5105 = vpop.xlane.xlu0 %5104
  %v5106 = vsel %vm1040, %v5090, -inf
  %5107 = vmax.xlane.f32.xlu0 %v5106
  %v5108 = vpop.xlane.xlu0 %5107
  %v5109 = vsel %vm1040, %v5091, -inf
  %5110 = vmax.xlane.f32.xlu0 %v5109
  %v5111 = vpop.xlane.xlu0 %5110
  %v5112 = vsel %vm1040, %v5092, -inf
  %5113 = vmax.xlane.f32.xlu0 %v5112
  %v5114 = vpop.xlane.xlu0 %5113
  %v5115 = vsel %vm1040, %v5093, -inf
  %5116 = vmax.xlane.f32.xlu0 %v5115
  %v5117 = vpop.xlane.xlu0 %5116
  %v5118 = vsub.f32 %v5086, %v5096
  %v5119 = vsub.f32 %v5087, %v5099
  %v5120 = vsub.f32 %v5088, %v5102
  %v5121 = vsub.f32 %v5089, %v5105
  %v5122 = vsub.f32 %v5090, %v5108
  %v5123 = vsub.f32 %v5091, %v5111
  %v5124 = vsub.f32 %v5092, %v5114
  %v5125 = vsub.f32 %v5093, %v5117
  %v5126 = vmul.f32 %v5118, 1.442695
  %v5127 = vpow.pop %v5126
  %v5128 = vmul.f32 %v5119, 1.442695
  %v5129 = vpow.pop %v5128
  %v5130 = vmul.f32 %v5120, 1.442695
  %v5131 = vpow.pop %v5130
  %v5132 = vmul.f32 %v5121, 1.442695
  %v5133 = vpow.pop %v5132
  %v5134 = vmul.f32 %v5122, 1.442695
  %v5135 = vpow.pop %v5134
  %v5136 = vmul.f32 %v5123, 1.442695
  %v5137 = vpow.pop %v5136
  %v5138 = vmul.f32 %v5124, 1.442695
  %v5139 = vpow.pop %v5138
  %v5140 = vmul.f32 %v5125, 1.442695
  %v5141 = vpow.pop %v5140
  %v5142 = vsel %vm1040, %v5127, 0.0
  %5143 = vadd.xlane.f32.xlu0 %v5142
  %v5144 = vpop.xlane.xlu0 %5143
  %v5145 = vsel %vm1040, %v5129, 0.0
  %5146 = vadd.xlane.f32.xlu0 %v5145
  %v5147 = vpop.xlane.xlu0 %5146
  %v5148 = vsel %vm1040, %v5131, 0.0
  %5149 = vadd.xlane.f32.xlu0 %v5148
  %v5150 = vpop.xlane.xlu0 %5149
  %v5151 = vsel %vm1040, %v5133, 0.0
  %5152 = vadd.xlane.f32.xlu0 %v5151
  %v5153 = vpop.xlane.xlu0 %5152
  %v5154 = vsel %vm1040, %v5135, 0.0
  %5155 = vadd.xlane.f32.xlu0 %v5154
  %v5156 = vpop.xlane.xlu0 %5155
  %v5157 = vsel %vm1040, %v5137, 0.0
  %5158 = vadd.xlane.f32.xlu0 %v5157
  %v5159 = vpop.xlane.xlu0 %5158
  %v5160 = vsel %vm1040, %v5139, 0.0
  %5161 = vadd.xlane.f32.xlu0 %v5160
  %v5162 = vpop.xlane.xlu0 %5161
  %v5163 = vsel %vm1040, %v5141, 0.0
  %5164 = vadd.xlane.f32.xlu0 %v5163
  %v5165 = vpop.xlane.xlu0 %5164
  %v5166 = vrcp.pop %v5144
  %v5167 = vmul.f32 %v5127, %v5166
  %v5168 = vrcp.pop %v5147
  %v5169 = vmul.f32 %v5129, %v5168
  %v5170 = vrcp.pop %v5150
  %v5171 = vmul.f32 %v5131, %v5170
  %v5172 = vrcp.pop %v5153
  %v5173 = vmul.f32 %v5133, %v5172
  %v5174 = vrcp.pop %v5156
  %v5175 = vmul.f32 %v5135, %v5174
  %v5176 = vrcp.pop %v5159
  %v5177 = vmul.f32 %v5137, %v5176
  %v5178 = vrcp.pop %v5162
  %v5179 = vmul.f32 %v5139, %v5178
  %v5180 = vrcp.pop %v5165
  %v5181 = vmul.f32 %v5141, %v5180
  %v5182 = vpack.c.bf16 %v5167, %v5167
  %v5183 = vpack.c.bf16 %v5169, %v5169
  %v5184 = vpack.c.bf16 %v5171, %v5171
  %v5185 = vpack.c.bf16 %v5173, %v5173
  %v5186 = vpack.c.bf16 %v5175, %v5175
  %v5187 = vpack.c.bf16 %v5177, %v5177
  %v5188 = vpack.c.bf16 %v5179, %v5179
  %v5189 = vpack.c.bf16 %v5181, %v5181
  %5191 = vrot.lane.b32.xlu0 %v4282, 64
  %v5192 = vpop.permute.xlu0 %5191
  %v5194 = vsel %vm1040, %v5182, 0
  %v5197 = vsel %vm1148, %v5192, 0
  %5199 = vmatprep.subr.bf16.mxu0 0
  %5200 = vmatpush1.bf16.msra.mxu0 %v5197
  %5201 = vmatprep.subr.bf16.mxu0 0
  %5202 = vmatpush1.bf16.msra.mxu0 0
  %5203 = vmatprep.subr.bf16.mxu0 0
  %5204 = vmatpush1.bf16.msra.mxu0 0
  %5205 = vmatprep.subr.bf16.mxu0 0
  %5206 = vmatpush1.bf16.msra.mxu0 0
  %5207 = vmatprep.subr.bf16.mxu0 0
  %5208 = vmatpush1.bf16.msra.mxu0 0
  %5209 = vmatprep.subr.bf16.mxu0 0
  %5210 = vmatpush1.bf16.msra.mxu0 0
  %5211 = vmatprep.subr.bf16.mxu0 0
  %5212 = vmatpush1.bf16.msra.mxu0 0
  %5213 = vmatprep.subr.bf16.mxu0 0
  %5214 = vmatpush1.bf16.msra.mxu0 0
  %5215 = vmatprep.subr.bf16.mxu0 0
  %5216 = vmatpush1.bf16.msra.mxu0 0
  %5217 = vmatprep.subr.bf16.mxu0 0
  %5218 = vmatpush1.bf16.msra.mxu0 0
  %5219 = vmatprep.subr.bf16.mxu0 0
  %5220 = vmatpush1.bf16.msra.mxu0 0
  %5221 = vmatprep.subr.bf16.mxu0 0
  %5222 = vmatpush1.bf16.msra.mxu0 0
  %5223 = vmatprep.subr.bf16.mxu0 0
  %5224 = vmatpush1.bf16.msra.mxu0 0
  %5225 = vmatprep.subr.bf16.mxu0 0
  %5226 = vmatpush1.bf16.msra.mxu0 0
  %5227 = vmatprep.subr.bf16.mxu0 0
  %5228 = vmatpush1.bf16.msra.mxu0 0
  %5229 = vmatprep.subr.bf16.mxu0 0
  %5230 = vmatpush1.bf16.msra.mxu0 0
  %5231 = vmatprep.mubr.bf16.mxu0 0
  %5232 = vmatmul.mubr.bf16.gmra.mrb[0].mxu0 %v5194
  %v5233 = vpop.f32.mrb[0].mxu0
  %v5234 = vadd.f32 0.0, %v5233
  %v5235 = vpop.f32.mrb[0].mxu0
  %v5236 = vpop.f32.mrb[0].mxu0
  %v5237 = vpop.f32.mrb[0].mxu0
  %5238 = vdwg.mxu0
  %5240 = vrot.lane.b32.xlu0 %v4283, 64
  %v5241 = vpop.permute.xlu0 %5240
  %v5243 = vsel %vm1040, %v5183, 0
  %v5246 = vsel %vm1148, %v5241, 0
  %5248 = vmatprep.subr.bf16.mxu0 0
  %5249 = vmatpush1.bf16.msra.mxu0 %v5246
  %5250 = vmatprep.subr.bf16.mxu0 0
  %5251 = vmatpush1.bf16.msra.mxu0 0
  %5252 = vmatprep.subr.bf16.mxu0 0
  %5253 = vmatpush1.bf16.msra.mxu0 0
  %5254 = vmatprep.subr.bf16.mxu0 0
  %5255 = vmatpush1.bf16.msra.mxu0 0
  %5256 = vmatprep.subr.bf16.mxu0 0
  %5257 = vmatpush1.bf16.msra.mxu0 0
  %5258 = vmatprep.subr.bf16.mxu0 0
  %5259 = vmatpush1.bf16.msra.mxu0 0
  %5260 = vmatprep.subr.bf16.mxu0 0
  %5261 = vmatpush1.bf16.msra.mxu0 0
  %5262 = vmatprep.subr.bf16.mxu0 0
  %5263 = vmatpush1.bf16.msra.mxu0 0
  %5264 = vmatprep.subr.bf16.mxu0 0
  %5265 = vmatpush1.bf16.msra.mxu0 0
  %5266 = vmatprep.subr.bf16.mxu0 0
  %5267 = vmatpush1.bf16.msra.mxu0 0
  %5268 = vmatprep.subr.bf16.mxu0 0
  %5269 = vmatpush1.bf16.msra.mxu0 0
  %5270 = vmatprep.subr.bf16.mxu0 0
  %5271 = vmatpush1.bf16.msra.mxu0 0
  %5272 = vmatprep.subr.bf16.mxu0 0
  %5273 = vmatpush1.bf16.msra.mxu0 0
  %5274 = vmatprep.subr.bf16.mxu0 0
  %5275 = vmatpush1.bf16.msra.mxu0 0
  %5276 = vmatprep.subr.bf16.mxu0 0
  %5277 = vmatpush1.bf16.msra.mxu0 0
  %5278 = vmatprep.subr.bf16.mxu0 0
  %5279 = vmatpush1.bf16.msra.mxu0 0
  %5280 = vmatprep.mubr.bf16.mxu0 0
  %5281 = vmatmul.mubr.bf16.gmra.mrb[0].mxu0 %v5243
  %v5282 = vpop.f32.mrb[0].mxu0
  %v5283 = vadd.f32 0.0, %v5282
  %v5284 = vpop.f32.mrb[0].mxu0
  %v5285 = vpop.f32.mrb[0].mxu0
  %v5286 = vpop.f32.mrb[0].mxu0
  %5287 = vdwg.mxu0
  %5289 = vrot.lane.b32.xlu0 %v4284, 64
  %v5290 = vpop.permute.xlu0 %5289
  %v5292 = vsel %vm1040, %v5184, 0
  %v5295 = vsel %vm1148, %v5290, 0
  %5297 = vmatprep.subr.bf16.mxu0 0
  %5298 = vmatpush1.bf16.msra.mxu0 %v5295
  %5299 = vmatprep.subr.bf16.mxu0 0
  %5300 = vmatpush1.bf16.msra.mxu0 0
  %5301 = vmatprep.subr.bf16.mxu0 0
  %5302 = vmatpush1.bf16.msra.mxu0 0
  %5303 = vmatprep.subr.bf16.mxu0 0
  %5304 = vmatpush1.bf16.msra.mxu0 0
  %5305 = vmatprep.subr.bf16.mxu0 0
  %5306 = vmatpush1.bf16.msra.mxu0 0
  %5307 = vmatprep.subr.bf16.mxu0 0
  %5308 = vmatpush1.bf16.msra.mxu0 0
  %5309 = vmatprep.subr.bf16.mxu0 0
  %5310 = vmatpush1.bf16.msra.mxu0 0
  %5311 = vmatprep.subr.bf16.mxu0 0
  %5312 = vmatpush1.bf16.msra.mxu0 0
  %5313 = vmatprep.subr.bf16.mxu0 0
  %5314 = vmatpush1.bf16.msra.mxu0 0
  %5315 = vmatprep.subr.bf16.mxu0 0
  %5316 = vmatpush1.bf16.msra.mxu0 0
  %5317 = vmatprep.subr.bf16.mxu0 0
  %5318 = vmatpush1.bf16.msra.mxu0 0
  %5319 = vmatprep.subr.bf16.mxu0 0
  %5320 = vmatpush1.bf16.msra.mxu0 0
  %5321 = vmatprep.subr.bf16.mxu0 0
  %5322 = vmatpush1.bf16.msra.mxu0 0
  %5323 = vmatprep.subr.bf16.mxu0 0
  %5324 = vmatpush1.bf16.msra.mxu0 0
  %5325 = vmatprep.subr.bf16.mxu0 0
  %5326 = vmatpush1.bf16.msra.mxu0 0
  %5327 = vmatprep.subr.bf16.mxu0 0
  %5328 = vmatpush1.bf16.msra.mxu0 0
  %5329 = vmatprep.mubr.bf16.mxu0 0
  %5330 = vmatmul.mubr.bf16.gmra.mrb[0].mxu0 %v5292
  %v5331 = vpop.f32.mrb[0].mxu0
  %v5332 = vadd.f32 0.0, %v5331
  %v5333 = vpop.f32.mrb[0].mxu0
  %v5334 = vpop.f32.mrb[0].mxu0
  %v5335 = vpop.f32.mrb[0].mxu0
  %5336 = vdwg.mxu0
  %5338 = vrot.lane.b32.xlu0 %v4285, 64
  %v5339 = vpop.permute.xlu0 %5338
  %v5341 = vsel %vm1040, %v5185, 0
  %v5344 = vsel %vm1148, %v5339, 0
  %5346 = vmatprep.subr.bf16.mxu0 0
  %5347 = vmatpush1.bf16.msra.mxu0 %v5344
  %5348 = vmatprep.subr.bf16.mxu0 0
  %5349 = vmatpush1.bf16.msra.mxu0 0
  %5350 = vmatprep.subr.bf16.mxu0 0
  %5351 = vmatpush1.bf16.msra.mxu0 0
  %5352 = vmatprep.subr.bf16.mxu0 0
  %5353 = vmatpush1.bf16.msra.mxu0 0
  %5354 = vmatprep.subr.bf16.mxu0 0
  %5355 = vmatpush1.bf16.msra.mxu0 0
  %5356 = vmatprep.subr.bf16.mxu0 0
  %5357 = vmatpush1.bf16.msra.mxu0 0
  %5358 = vmatprep.subr.bf16.mxu0 0
  %5359 = vmatpush1.bf16.msra.mxu0 0
  %5360 = vmatprep.subr.bf16.mxu0 0
  %5361 = vmatpush1.bf16.msra.mxu0 0
  %5362 = vmatprep.subr.bf16.mxu0 0
  %5363 = vmatpush1.bf16.msra.mxu0 0
  %5364 = vmatprep.subr.bf16.mxu0 0
  %5365 = vmatpush1.bf16.msra.mxu0 0
  %5366 = vmatprep.subr.bf16.mxu0 0
  %5367 = vmatpush1.bf16.msra.mxu0 0
  %5368 = vmatprep.subr.bf16.mxu0 0
  %5369 = vmatpush1.bf16.msra.mxu0 0
  %5370 = vmatprep.subr.bf16.mxu0 0
  %5371 = vmatpush1.bf16.msra.mxu0 0
  %5372 = vmatprep.subr.bf16.mxu0 0
  %5373 = vmatpush1.bf16.msra.mxu0 0
  %5374 = vmatprep.subr.bf16.mxu0 0
  %5375 = vmatpush1.bf16.msra.mxu0 0
  %5376 = vmatprep.subr.bf16.mxu0 0
  %5377 = vmatpush1.bf16.msra.mxu0 0
  %5378 = vmatprep.mubr.bf16.mxu0 0
  %5379 = vmatmul.mubr.bf16.gmra.mrb[0].mxu0 %v5341
  %v5380 = vpop.f32.mrb[0].mxu0
  %v5381 = vadd.f32 0.0, %v5380
  %v5382 = vpop.f32.mrb[0].mxu0
  %v5383 = vpop.f32.mrb[0].mxu0
  %v5384 = vpop.f32.mrb[0].mxu0
  %5385 = vdwg.mxu0
  %5387 = vrot.lane.b32.xlu0 %v4286, 64
  %v5388 = vpop.permute.xlu0 %5387
  %v5390 = vsel %vm1040, %v5186, 0
  %v5393 = vsel %vm1148, %v5388, 0
  %5395 = vmatprep.subr.bf16.mxu0 0
  %5396 = vmatpush1.bf16.msra.mxu0 %v5393
  %5397 = vmatprep.subr.bf16.mxu0 0
  %5398 = vmatpush1.bf16.msra.mxu0 0
  %5399 = vmatprep.subr.bf16.mxu0 0
  %5400 = vmatpush1.bf16.msra.mxu0 0
  %5401 = vmatprep.subr.bf16.mxu0 0
  %5402 = vmatpush1.bf16.msra.mxu0 0
  %5403 = vmatprep.subr.bf16.mxu0 0
  %5404 = vmatpush1.bf16.msra.mxu0 0
  %5405 = vmatprep.subr.bf16.mxu0 0
  %5406 = vmatpush1.bf16.msra.mxu0 0
  %5407 = vmatprep.subr.bf16.mxu0 0
  %5408 = vmatpush1.bf16.msra.mxu0 0
  %5409 = vmatprep.subr.bf16.mxu0 0
  %5410 = vmatpush1.bf16.msra.mxu0 0
  %5411 = vmatprep.subr.bf16.mxu0 0
  %5412 = vmatpush1.bf16.msra.mxu0 0
  %5413 = vmatprep.subr.bf16.mxu0 0
  %5414 = vmatpush1.bf16.msra.mxu0 0
  %5415 = vmatprep.subr.bf16.mxu0 0
  %5416 = vmatpush1.bf16.msra.mxu0 0
  %5417 = vmatprep.subr.bf16.mxu0 0
  %5418 = vmatpush1.bf16.msra.mxu0 0
  %5419 = vmatprep.subr.bf16.mxu0 0
  %5420 = vmatpush1.bf16.msra.mxu0 0
  %5421 = vmatprep.subr.bf16.mxu0 0
  %5422 = vmatpush1.bf16.msra.mxu0 0
  %5423 = vmatprep.subr.bf16.mxu0 0
  %5424 = vmatpush1.bf16.msra.mxu0 0
  %5425 = vmatprep.subr.bf16.mxu0 0
  %5426 = vmatpush1.bf16.msra.mxu0 0
  %5427 = vmatprep.mubr.bf16.mxu0 0
  %5428 = vmatmul.mubr.bf16.gmra.mrb[0].mxu0 %v5390
  %v5429 = vpop.f32.mrb[0].mxu0
  %v5430 = vadd.f32 0.0, %v5429
  %v5431 = vpop.f32.mrb[0].mxu0
  %v5432 = vpop.f32.mrb[0].mxu0
  %v5433 = vpop.f32.mrb[0].mxu0
  %5434 = vdwg.mxu0
  %5436 = vrot.lane.b32.xlu0 %v4287, 64
  %v5437 = vpop.permute.xlu0 %5436
  %v5439 = vsel %vm1040, %v5187, 0
  %v5442 = vsel %vm1148, %v5437, 0
  %5444 = vmatprep.subr.bf16.mxu0 0
  %5445 = vmatpush1.bf16.msra.mxu0 %v5442
  %5446 = vmatprep.subr.bf16.mxu0 0
  %5447 = vmatpush1.bf16.msra.mxu0 0
  %5448 = vmatprep.subr.bf16.mxu0 0
  %5449 = vmatpush1.bf16.msra.mxu0 0
  %5450 = vmatprep.subr.bf16.mxu0 0
  %5451 = vmatpush1.bf16.msra.mxu0 0
  %5452 = vmatprep.subr.bf16.mxu0 0
  %5453 = vmatpush1.bf16.msra.mxu0 0
  %5454 = vmatprep.subr.bf16.mxu0 0
  %5455 = vmatpush1.bf16.msra.mxu0 0
  %5456 = vmatprep.subr.bf16.mxu0 0
  %5457 = vmatpush1.bf16.msra.mxu0 0
  %5458 = vmatprep.subr.bf16.mxu0 0
  %5459 = vmatpush1.bf16.msra.mxu0 0
  %5460 = vmatprep.subr.bf16.mxu0 0
  %5461 = vmatpush1.bf16.msra.mxu0 0
  %5462 = vmatprep.subr.bf16.mxu0 0
  %5463 = vmatpush1.bf16.msra.mxu0 0
  %5464 = vmatprep.subr.bf16.mxu0 0
  %5465 = vmatpush1.bf16.msra.mxu0 0
  %5466 = vmatprep.subr.bf16.mxu0 0
  %5467 = vmatpush1.bf16.msra.mxu0 0
  %5468 = vmatprep.subr.bf16.mxu0 0
  %5469 = vmatpush1.bf16.msra.mxu0 0
  %5470 = vmatprep.subr.bf16.mxu0 0
  %5471 = vmatpush1.bf16.msra.mxu0 0
  %5472 = vmatprep.subr.bf16.mxu0 0
  %5473 = vmatpush1.bf16.msra.mxu0 0
  %5474 = vmatprep.subr.bf16.mxu0 0
  %5475 = vmatpush1.bf16.msra.mxu0 0
  %5476 = vmatprep.mubr.bf16.mxu0 0
  %5477 = vmatmul.mubr.bf16.gmra.mrb[0].mxu0 %v5439
  %v5478 = vpop.f32.mrb[0].mxu0
  %v5479 = vadd.f32 0.0, %v5478
  %v5480 = vpop.f32.mrb[0].mxu0
  %v5481 = vpop.f32.mrb[0].mxu0
  %v5482 = vpop.f32.mrb[0].mxu0
  %5483 = vdwg.mxu0
  %5485 = vrot.lane.b32.xlu0 %v4288, 64
  %v5486 = vpop.permute.xlu0 %5485
  %v5488 = vsel %vm1040, %v5188, 0
  %v5491 = vsel %vm1148, %v5486, 0
  %5493 = vmatprep.subr.bf16.mxu0 0
  %5494 = vmatpush1.bf16.msra.mxu0 %v5491
  %5495 = vmatprep.subr.bf16.mxu0 0
  %5496 = vmatpush1.bf16.msra.mxu0 0
  %5497 = vmatprep.subr.bf16.mxu0 0
  %5498 = vmatpush1.bf16.msra.mxu0 0
  %5499 = vmatprep.subr.bf16.mxu0 0
  %5500 = vmatpush1.bf16.msra.mxu0 0
  %5501 = vmatprep.subr.bf16.mxu0 0
  %5502 = vmatpush1.bf16.msra.mxu0 0
  %5503 = vmatprep.subr.bf16.mxu0 0
  %5504 = vmatpush1.bf16.msra.mxu0 0
  %5505 = vmatprep.subr.bf16.mxu0 0
  %5506 = vmatpush1.bf16.msra.mxu0 0
  %5507 = vmatprep.subr.bf16.mxu0 0
  %5508 = vmatpush1.bf16.msra.mxu0 0
  %5509 = vmatprep.subr.bf16.mxu0 0
  %5510 = vmatpush1.bf16.msra.mxu0 0
  %5511 = vmatprep.subr.bf16.mxu0 0
  %5512 = vmatpush1.bf16.msra.mxu0 0
  %5513 = vmatprep.subr.bf16.mxu0 0
  %5514 = vmatpush1.bf16.msra.mxu0 0
  %5515 = vmatprep.subr.bf16.mxu0 0
  %5516 = vmatpush1.bf16.msra.mxu0 0
  %5517 = vmatprep.subr.bf16.mxu0 0
  %5518 = vmatpush1.bf16.msra.mxu0 0
  %5519 = vmatprep.subr.bf16.mxu0 0
  %5520 = vmatpush1.bf16.msra.mxu0 0
  %5521 = vmatprep.subr.bf16.mxu0 0
  %5522 = vmatpush1.bf16.msra.mxu0 0
  %5523 = vmatprep.subr.bf16.mxu0 0
  %5524 = vmatpush1.bf16.msra.mxu0 0
  %5525 = vmatprep.mubr.bf16.mxu0 0
  %5526 = vmatmul.mubr.bf16.gmra.mrb[0].mxu0 %v5488
  %v5527 = vpop.f32.mrb[0].mxu0
  %v5528 = vadd.f32 0.0, %v5527
  %v5529 = vpop.f32.mrb[0].mxu0
  %v5530 = vpop.f32.mrb[0].mxu0
  %v5531 = vpop.f32.mrb[0].mxu0
  %5532 = vdwg.mxu0
  %5534 = vrot.lane.b32.xlu0 %v4289, 64
  %v5535 = vpop.permute.xlu0 %5534
  %v5537 = vsel %vm1040, %v5189, 0
  %v5540 = vsel %vm1148, %v5535, 0
  %5542 = vmatprep.subr.bf16.mxu0 0
  %5543 = vmatpush1.bf16.msra.mxu0 %v5540
  %5544 = vmatprep.subr.bf16.mxu0 0
  %5545 = vmatpush1.bf16.msra.mxu0 0
  %5546 = vmatprep.subr.bf16.mxu0 0
  %5547 = vmatpush1.bf16.msra.mxu0 0
  %5548 = vmatprep.subr.bf16.mxu0 0
  %5549 = vmatpush1.bf16.msra.mxu0 0
  %5550 = vmatprep.subr.bf16.mxu0 0
  %5551 = vmatpush1.bf16.msra.mxu0 0
  %5552 = vmatprep.subr.bf16.mxu0 0
  %5553 = vmatpush1.bf16.msra.mxu0 0
  %5554 = vmatprep.subr.bf16.mxu0 0
  %5555 = vmatpush1.bf16.msra.mxu0 0
  %5556 = vmatprep.subr.bf16.mxu0 0
  %5557 = vmatpush1.bf16.msra.mxu0 0
  %5558 = vmatprep.subr.bf16.mxu0 0
  %5559 = vmatpush1.bf16.msra.mxu0 0
  %5560 = vmatprep.subr.bf16.mxu0 0
  %5561 = vmatpush1.bf16.msra.mxu0 0
  %5562 = vmatprep.subr.bf16.mxu0 0
  %5563 = vmatpush1.bf16.msra.mxu0 0
  %5564 = vmatprep.subr.bf16.mxu0 0
  %5565 = vmatpush1.bf16.msra.mxu0 0
  %5566 = vmatprep.subr.bf16.mxu0 0
  %5567 = vmatpush1.bf16.msra.mxu0 0
  %5568 = vmatprep.subr.bf16.mxu0 0
  %5569 = vmatpush1.bf16.msra.mxu0 0
  %5570 = vmatprep.subr.bf16.mxu0 0
  %5571 = vmatpush1.bf16.msra.mxu0 0
  %5572 = vmatprep.subr.bf16.mxu0 0
  %5573 = vmatpush1.bf16.msra.mxu0 0
  %5574 = vmatprep.mubr.bf16.mxu0 0
  %5575 = vmatmul.mubr.bf16.gmra.mrb[0].mxu0 %v5537
  %v5576 = vpop.f32.mrb[0].mxu0
  %v5577 = vadd.f32 0.0, %v5576
  %v5578 = vpop.f32.mrb[0].mxu0
  %v5579 = vpop.f32.mrb[0].mxu0
  %v5580 = vpop.f32.mrb[0].mxu0
  %5581 = vdwg.mxu0
  %v5582 = vpack.c.bf16 %v5283, %v5234
  %v5583 = vpack.c.bf16 %v5381, %v5332
  %v5584 = vpack.c.bf16 %v5479, %v5430
  %v5585 = vpack.c.bf16 %v5577, %v5528
  %v5594 = vunpack.c.l.b16 %v3490
  %v5595 = vunpack.c.l.b16 %v3491
  %v5596 = vunpack.c.l.b16 %v3492
  %v5597 = vunpack.c.l.b16 %v3493
  %v5598 = vunpack.c.l.b16 %v3494
  %v5599 = vunpack.c.l.b16 %v3495
  %v5600 = vunpack.c.l.b16 %v3496
  %v5601 = vunpack.c.l.b16 %v3497
  %v5602 = vpack.c.b16 %v5595, %v5594
  %v5603 = vpack.c.b16 %v5597, %v5596
  %v5604 = vpack.c.b16 %v5599, %v5598
  %v5605 = vpack.c.b16 %v5601, %v5600
  %v5611 = vsel %vm615, %v5582, 0
  %v5614 = vsel %vm615, %v5583, 0
  %v5617 = vsel %vm615, %v5584, 0
  %v5620 = vsel %vm615, %v5585, 0
  %5622 = vmatprep.subr.bf16.mxu0 0
  %5623 = vmatpush1.bf16.msra.mxu0 %v5602
  %5624 = vmatprep.subr.bf16.mxu0 0
  %5625 = vmatpush1.bf16.msra.mxu0 %v5603
  %5626 = vmatprep.subr.bf16.mxu0 0
  %5627 = vmatpush1.bf16.msra.mxu0 %v5604
  %5628 = vmatprep.subr.bf16.mxu0 0
  %5629 = vmatpush1.bf16.msra.mxu0 %v5605
  %5630 = vmatprep.subr.bf16.mxu0 0
  %5631 = vmatpush1.bf16.msra.mxu0 0
  %5632 = vmatprep.subr.bf16.mxu0 0
  %5633 = vmatpush1.bf16.msra.mxu0 0
  %5634 = vmatprep.subr.bf16.mxu0 0
  %5635 = vmatpush1.bf16.msra.mxu0 0
  %5636 = vmatprep.subr.bf16.mxu0 0
  %5637 = vmatpush1.bf16.msra.mxu0 0
  %5638 = vmatprep.subr.bf16.mxu0 0
  %5639 = vmatpush1.bf16.msra.mxu0 0
  %5640 = vmatprep.subr.bf16.mxu0 0
  %5641 = vmatpush1.bf16.msra.mxu0 0
  %5642 = vmatprep.subr.bf16.mxu0 0
  %5643 = vmatpush1.bf16.msra.mxu0 0
  %5644 = vmatprep.subr.bf16.mxu0 0
  %5645 = vmatpush1.bf16.msra.mxu0 0
  %5646 = vmatprep.subr.bf16.mxu0 0
  %5647 = vmatpush1.bf16.msra.mxu0 0
  %5648 = vmatprep.subr.bf16.mxu0 0
  %5649 = vmatpush1.bf16.msra.mxu0 0
  %5650 = vmatprep.subr.bf16.mxu0 0
  %5651 = vmatpush1.bf16.msra.mxu0 0
  %5652 = vmatprep.subr.bf16.mxu0 0
  %5653 = vmatpush1.bf16.msra.mxu0 0
  %5654 = vmatprep.mubr.bf16.mxu0 0
  %5655 = vmatmul.mubr.bf16.gmra.mrb[0].mxu0 %v5611
  %v5656 = vpop.f32.mrb[0].mxu0
  %v5657 = vadd.f32 0.0, %v5656
  %v5658 = vpop.f32.mrb[0].mxu0
  %v5659 = vpop.f32.mrb[0].mxu0
  %v5660 = vadd.f32 0.0, %v5659
  %v5661 = vpop.f32.mrb[0].mxu0
  %5662 = vmatprep.mubr.bf16.mxu0 0
  %5663 = vmatmul.mubr.bf16.gmra.mrb[0].mxu0 %v5614
  %v5664 = vpop.f32.mrb[0].mxu0
  %v5665 = vadd.f32 0.0, %v5664
  %v5666 = vpop.f32.mrb[0].mxu0
  %v5667 = vpop.f32.mrb[0].mxu0
  %v5668 = vadd.f32 0.0, %v5667
  %v5669 = vpop.f32.mrb[0].mxu0
  %5670 = vmatprep.mubr.bf16.mxu0 0
  %5671 = vmatmul.mubr.bf16.gmra.mrb[0].mxu0 %v5617
  %v5672 = vpop.f32.mrb[0].mxu0
  %v5673 = vadd.f32 0.0, %v5672
  %v5674 = vpop.f32.mrb[0].mxu0
  %v5675 = vpop.f32.mrb[0].mxu0
  %v5676 = vadd.f32 0.0, %v5675
  %v5677 = vpop.f32.mrb[0].mxu0
  %5678 = vmatprep.mubr.bf16.mxu0 0
  %5679 = vmatmul.mubr.bf16.gmra.mrb[0].mxu0 %v5620
  %v5680 = vpop.f32.mrb[0].mxu0
  %v5681 = vadd.f32 0.0, %v5680
  %v5682 = vpop.f32.mrb[0].mxu0
  %v5683 = vpop.f32.mrb[0].mxu0
  %v5684 = vadd.f32 0.0, %v5683
  %v5685 = vpop.f32.mrb[0].mxu0
  %5686 = vdwg.mxu0
  %v5695 = vunpack.c.l.b16 %v3482
  %v5696 = vunpack.c.l.b16 %v3483
  %v5697 = vunpack.c.l.b16 %v3484
  %v5698 = vunpack.c.l.b16 %v3485
  %v5699 = vunpack.c.l.b16 %v3486
  %v5700 = vunpack.c.l.b16 %v3487
  %v5701 = vunpack.c.l.b16 %v3488
  %v5702 = vunpack.c.l.b16 %v3489
  %v5703 = vpack.c.b16 %v5696, %v5695
  %v5704 = vpack.c.b16 %v5698, %v5697
  %v5705 = vpack.c.b16 %v5700, %v5699
  %v5706 = vpack.c.b16 %v5702, %v5701
  %v5712 = vsel %vm615, %v4658, 0
  %v5715 = vsel %vm615, %v4659, 0
  %v5718 = vsel %vm615, %v4660, 0
  %v5721 = vsel %vm615, %v4661, 0
  %5723 = vmatprep.subr.bf16.mxu0 0
  %5724 = vmatpush1.bf16.msra.mxu0 %v5703
  %5725 = vmatprep.subr.bf16.mxu0 0
  %5726 = vmatpush1.bf16.msra.mxu0 %v5704
  %5727 = vmatprep.subr.bf16.mxu0 0
  %5728 = vmatpush1.bf16.msra.mxu0 %v5705
  %5729 = vmatprep.subr.bf16.mxu0 0
  %5730 = vmatpush1.bf16.msra.mxu0 %v5706
  %5731 = vmatprep.subr.bf16.mxu0 0
  %5732 = vmatpush1.bf16.msra.mxu0 0
  %5733 = vmatprep.subr.bf16.mxu0 0
  %5734 = vmatpush1.bf16.msra.mxu0 0
  %5735 = vmatprep.subr.bf16.mxu0 0
  %5736 = vmatpush1.bf16.msra.mxu0 0
  %5737 = vmatprep.subr.bf16.mxu0 0
  %5738 = vmatpush1.bf16.msra.mxu0 0
  %5739 = vmatprep.subr.bf16.mxu0 0
  %5740 = vmatpush1.bf16.msra.mxu0 0
  %5741 = vmatprep.subr.bf16.mxu0 0
  %5742 = vmatpush1.bf16.msra.mxu0 0
  %5743 = vmatprep.subr.bf16.mxu0 0
  %5744 = vmatpush1.bf16.msra.mxu0 0
  %5745 = vmatprep.subr.bf16.mxu0 0
  %5746 = vmatpush1.bf16.msra.mxu0 0
  %5747 = vmatprep.subr.bf16.mxu0 0
  %5748 = vmatpush1.bf16.msra.mxu0 0
  %5749 = vmatprep.subr.bf16.mxu0 0
  %5750 = vmatpush1.bf16.msra.mxu0 0
  %5751 = vmatprep.subr.bf16.mxu0 0
  %5752 = vmatpush1.bf16.msra.mxu0 0
  %5753 = vmatprep.subr.bf16.mxu0 0
  %5754 = vmatpush1.bf16.msra.mxu0 0
  %5755 = vmatprep.mubr.bf16.mxu0 0
  %5756 = vmatmul.mubr.bf16.gmra.mrb[0].mxu0 %v5712
  %v5757 = vpop.f32.mrb[0].mxu0
  %v5758 = vadd.f32 %v5657, %v5757
  %v5759 = vpop.f32.mrb[0].mxu0
  %v5760 = vpop.f32.mrb[0].mxu0
  %v5761 = vadd.f32 %v5660, %v5760
  %v5762 = vpop.f32.mrb[0].mxu0
  %5763 = vmatprep.mubr.bf16.mxu0 0
  %5764 = vmatmul.mubr.bf16.gmra.mrb[0].mxu0 %v5715
  %v5765 = vpop.f32.mrb[0].mxu0
  %v5766 = vadd.f32 %v5665, %v5765
  %v5767 = vpop.f32.mrb[0].mxu0
  %v5768 = vpop.f32.mrb[0].mxu0
  %v5769 = vadd.f32 %v5668, %v5768
  %v5770 = vpop.f32.mrb[0].mxu0
  %5771 = vmatprep.mubr.bf16.mxu0 0
  %5772 = vmatmul.mubr.bf16.gmra.mrb[0].mxu0 %v5718
  %v5773 = vpop.f32.mrb[0].mxu0
  %v5774 = vadd.f32 %v5673, %v5773
  %v5775 = vpop.f32.mrb[0].mxu0
  %v5776 = vpop.f32.mrb[0].mxu0
  %v5777 = vadd.f32 %v5676, %v5776
  %v5778 = vpop.f32.mrb[0].mxu0
  %5779 = vmatprep.mubr.bf16.mxu0 0
  %5780 = vmatmul.mubr.bf16.gmra.mrb[0].mxu0 %v5721
  %v5781 = vpop.f32.mrb[0].mxu0
  %v5782 = vadd.f32 %v5681, %v5781
  %v5783 = vpop.f32.mrb[0].mxu0
  %v5784 = vpop.f32.mrb[0].mxu0
  %v5785 = vadd.f32 %v5684, %v5784
  %v5786 = vpop.f32.mrb[0].mxu0
  %5787 = vdwg.mxu0
  %s5788 = scalar_lea.vmem %s8, 1
  %v5789 = vld [vmem:[%s5788] sm:$0x1]
  %v5791 = vlaneseq
  %v5792 = vshrl.u32 %v5791, 7
  %v5793 = vsub.s32 0, %v5792
  %v5794 = vrot.slane %v5789, %v5793
  %v5796 = vadd.f32 %v5758, %v5794
  %v5797 = vadd.f32 %v5761, %v5794
  %v5798 = vadd.f32 %v5766, %v5794
  %v5799 = vadd.f32 %v5769, %v5794
  %v5800 = vadd.f32 %v5774, %v5794
  %v5801 = vadd.f32 %v5777, %v5794
  %v5802 = vadd.f32 %v5782, %v5794
  %v5803 = vadd.f32 %v5785, %v5794
  %v5804 = vadd.f32 %v5796, %v3440
  %v5805 = vadd.f32 %v5797, %v3441
  %v5806 = vadd.f32 %v5798, %v3442
  %v5807 = vadd.f32 %v5799, %v3443
  %v5808 = vadd.f32 %v5800, %v3444
  %v5809 = vadd.f32 %v5801, %v3445
  %v5810 = vadd.f32 %v5802, %v3446
  %v5811 = vadd.f32 %v5803, %v3447
  %s5812 = scalar_lea.vmem %s9, 1
  %v5813 = vld [vmem:[%s5812] sm:$0x1]
  %s5814 = scalar_lea.vmem %s10, 1
  %v5815 = vld [vmem:[%s5814] sm:$0x1]
  %5816 = vadd.xlane.f32.xlu0 %v5804
  %v5817 = vpop.xlane.xlu0 %5816
  %5818 = vadd.xlane.f32.xlu0 %v5805
  %v5819 = vpop.xlane.xlu0 %5818
  %5820 = vadd.xlane.f32.xlu0 %v5806
  %v5821 = vpop.xlane.xlu0 %5820
  %5822 = vadd.xlane.f32.xlu0 %v5807
  %v5823 = vpop.xlane.xlu0 %5822
  %5824 = vadd.xlane.f32.xlu0 %v5808
  %v5825 = vpop.xlane.xlu0 %5824
  %5826 = vadd.xlane.f32.xlu0 %v5809
  %v5827 = vpop.xlane.xlu0 %5826
  %5828 = vadd.xlane.f32.xlu0 %v5810
  %v5829 = vpop.xlane.xlu0 %5828
  %5830 = vadd.xlane.f32.xlu0 %v5811
  %v5831 = vpop.xlane.xlu0 %5830
  %v5832 = vmul.f32 %v5817, %v112
  %v5833 = vmul.f32 %v5819, %v112
  %v5834 = vmul.f32 %v5821, %v112
  %v5835 = vmul.f32 %v5823, %v112
  %v5836 = vmul.f32 %v5825, %v112
  %v5837 = vmul.f32 %v5827, %v112
  %v5838 = vmul.f32 %v5829, %v112
  %v5839 = vmul.f32 %v5831, %v112
  %v5840 = vsub.f32 %v5804, %v5832
  %v5841 = vsub.f32 %v5805, %v5833
  %v5842 = vsub.f32 %v5806, %v5834
  %v5843 = vsub.f32 %v5807, %v5835
  %v5844 = vsub.f32 %v5808, %v5836
  %v5845 = vsub.f32 %v5809, %v5837
  %v5846 = vsub.f32 %v5810, %v5838
  %v5847 = vsub.f32 %v5811, %v5839
  %v5848 = vmul.f32 %v5840, %v5840
  %v5849 = vmul.f32 %v5841, %v5841
  %v5850 = vmul.f32 %v5842, %v5842
  %v5851 = vmul.f32 %v5843, %v5843
  %v5852 = vmul.f32 %v5844, %v5844
  %v5853 = vmul.f32 %v5845, %v5845
  %v5854 = vmul.f32 %v5846, %v5846
  %v5855 = vmul.f32 %v5847, %v5847
  %5856 = vadd.xlane.f32.xlu0 %v5848
  %v5857 = vpop.xlane.xlu0 %5856
  %5858 = vadd.xlane.f32.xlu0 %v5849
  %v5859 = vpop.xlane.xlu0 %5858
  %5860 = vadd.xlane.f32.xlu0 %v5850
  %v5861 = vpop.xlane.xlu0 %5860
  %5862 = vadd.xlane.f32.xlu0 %v5851
  %v5863 = vpop.xlane.xlu0 %5862
  %5864 = vadd.xlane.f32.xlu0 %v5852
  %v5865 = vpop.xlane.xlu0 %5864
  %5866 = vadd.xlane.f32.xlu0 %v5853
  %v5867 = vpop.xlane.xlu0 %5866
  %5868 = vadd.xlane.f32.xlu0 %v5854
  %v5869 = vpop.xlane.xlu0 %5868
  %5870 = vadd.xlane.f32.xlu0 %v5855
  %v5871 = vpop.xlane.xlu0 %5870
  %v5872 = vmul.f32 %v5857, %v112
  %v5873 = vmul.f32 %v5859, %v112
  %v5874 = vmul.f32 %v5861, %v112
  %v5875 = vmul.f32 %v5863, %v112
  %v5876 = vmul.f32 %v5865, %v112
  %v5877 = vmul.f32 %v5867, %v112
  %v5878 = vmul.f32 %v5869, %v112
  %v5879 = vmul.f32 %v5871, %v112
  %v5880 = vadd.f32 %v5872, 1e-12
  %v5881 = vadd.f32 %v5873, 1e-12
  %v5882 = vadd.f32 %v5874, 1e-12
  %v5883 = vadd.f32 %v5875, 1e-12
  %v5884 = vadd.f32 %v5876, 1e-12
  %v5885 = vadd.f32 %v5877, 1e-12
  %v5886 = vadd.f32 %v5878, 1e-12
  %v5887 = vadd.f32 %v5879, 1e-12
  %v5888 = vrsqrt.pop %v5880
  %v5889 = vrsqrt.pop %v5881
  %v5890 = vrsqrt.pop %v5882
  %v5891 = vrsqrt.pop %v5883
  %v5892 = vrsqrt.pop %v5884
  %v5893 = vrsqrt.pop %v5885
  %v5894 = vrsqrt.pop %v5886
  %v5895 = vrsqrt.pop %v5887
  %v5896 = vmul.f32 %v5840, %v5888
  %v5897 = vmul.f32 %v5841, %v5889
  %v5898 = vmul.f32 %v5842, %v5890
  %v5899 = vmul.f32 %v5843, %v5891
  %v5900 = vmul.f32 %v5844, %v5892
  %v5901 = vmul.f32 %v5845, %v5893
  %v5902 = vmul.f32 %v5846, %v5894
  %v5903 = vmul.f32 %v5847, %v5895
  %v5905 = vlaneseq
  %v5906 = vshrl.u32 %v5905, 7
  %v5907 = vsub.s32 0, %v5906
  %v5908 = vrot.slane %v5813, %v5907
  %v5910 = vmul.f32 %v5896, %v5908
  %v5911 = vmul.f32 %v5897, %v5908
  %v5912 = vmul.f32 %v5898, %v5908
  %v5913 = vmul.f32 %v5899, %v5908
  %v5914 = vmul.f32 %v5900, %v5908
  %v5915 = vmul.f32 %v5901, %v5908
  %v5916 = vmul.f32 %v5902, %v5908
  %v5917 = vmul.f32 %v5903, %v5908
  %v5919 = vlaneseq
  %v5920 = vshrl.u32 %v5919, 7
  %v5921 = vsub.s32 0, %v5920
  %v5922 = vrot.slane %v5815, %v5921
  %v5924 = vadd.f32 %v5910, %v5922
  %v5925 = vadd.f32 %v5911, %v5922
  %v5926 = vadd.f32 %v5912, %v5922
  %v5927 = vadd.f32 %v5913, %v5922
  %v5928 = vadd.f32 %v5914, %v5922
  %v5929 = vadd.f32 %v5915, %v5922
  %v5930 = vadd.f32 %v5916, %v5922
  %v5931 = vadd.f32 %v5917, %v5922
  %v5932 = vpack.c.bf16 %v5925, %v5924
  %v5933 = vpack.c.bf16 %v5927, %v5926
  %v5934 = vpack.c.bf16 %v5929, %v5928
  %v5935 = vpack.c.bf16 %v5931, %v5930
  %s5936 = scalar_lea.vmem %s11, 128
  %v5937 = vld [vmem:[%s5936] sm:$0xff]
  %v5938 = vld [vmem:[%s5936 + $0x8] sm:$0xff]
  %v5939 = vld [vmem:[%s5936 + $0x10] sm:$0xff]
  %v5940 = vld [vmem:[%s5936 + $0x18] sm:$0xff]
  %v5941 = vld [vmem:[%s5936 + $0x20] sm:$0xff]
  %v5942 = vld [vmem:[%s5936 + $0x28] sm:$0xff]
  %v5943 = vld [vmem:[%s5936 + $0x30] sm:$0xff]
  %v5944 = vld [vmem:[%s5936 + $0x38] sm:$0xff]
  %v5945 = vld [vmem:[%s5936 + $0x40] sm:$0xff]
  %v5946 = vld [vmem:[%s5936 + $0x48] sm:$0xff]
  %v5947 = vld [vmem:[%s5936 + $0x50] sm:$0xff]
  %v5948 = vld [vmem:[%s5936 + $0x58] sm:$0xff]
  %v5949 = vld [vmem:[%s5936 + $0x60] sm:$0xff]
  %v5950 = vld [vmem:[%s5936 + $0x68] sm:$0xff]
  %v5951 = vld [vmem:[%s5936 + $0x70] sm:$0xff]
  %v5952 = vld [vmem:[%s5936 + $0x78] sm:$0xff]
  %s5953 = scalar_lea.vmem %s12, 2
  %v5954 = vld [vmem:[%s5953] sm:$0x3]
  %v5956 = vlaneseq
  %v5957 = vshrl.u32 %v5956, 7
  %v5958 = vsub.s32 0, %v5957
  %v5959 = vrot.slane %v5954, %v5958
  %v5960 = vlaneseq
  %v5961 = vshrl.u32 %v5960, 7
  %v5962 = vsub.s32 1, %v5961
  %v5963 = vrot.slane %v5954, %v5962
  %v5982 = vunpack.c.l.b16 %v5937
  %v5983 = vunpack.c.h.b16 %v5937
  %v5984 = vunpack.c.l.b16 %v5938
  %v5985 = vunpack.c.h.b16 %v5938
  %v5986 = vunpack.c.l.b16 %v5939
  %v5987 = vunpack.c.h.b16 %v5939
  %v5988 = vunpack.c.l.b16 %v5940
  %v5989 = vunpack.c.h.b16 %v5940
  %v5990 = vunpack.c.l.b16 %v5941
  %v5991 = vunpack.c.h.b16 %v5941
  %v5992 = vunpack.c.l.b16 %v5942
  %v5993 = vunpack.c.h.b16 %v5942
  %v5994 = vunpack.c.l.b16 %v5943
  %v5995 = vunpack.c.h.b16 %v5943
  %v5996 = vunpack.c.l.b16 %v5944
  %v5997 = vunpack.c.h.b16 %v5944
  %v5998 = vunpack.c.l.b16 %v5945
  %v5999 = vunpack.c.h.b16 %v5945
  %v6000 = vunpack.c.l.b16 %v5946
  %v6001 = vunpack.c.h.b16 %v5946
  %v6002 = vunpack.c.l.b16 %v5947
  %v6003 = vunpack.c.h.b16 %v5947
  %v6004 = vunpack.c.l.b16 %v5948
  %v6005 = vunpack.c.h.b16 %v5948
  %v6006 = vunpack.c.l.b16 %v5949
  %v6007 = vunpack.c.h.b16 %v5949
  %v6008 = vunpack.c.l.b16 %v5950
  %v6009 = vunpack.c.h.b16 %v5950
  %v6010 = vunpack.c.l.b16 %v5951
  %v6011 = vunpack.c.h.b16 %v5951
  %v6012 = vunpack.c.l.b16 %v5952
  %v6013 = vunpack.c.h.b16 %v5952
  %v6014 = vpack.c.b16 %v5984, %v5982
  %v6015 = vpack.c.b16 %v5985, %v5983
  %v6016 = vpack.c.b16 %v5988, %v5986
  %v6017 = vpack.c.b16 %v5989, %v5987
  %v6018 = vpack.c.b16 %v5992, %v5990
  %v6019 = vpack.c.b16 %v5993, %v5991
  %v6020 = vpack.c.b16 %v5996, %v5994
  %v6021 = vpack.c.b16 %v5997, %v5995
  %v6022 = vpack.c.b16 %v6000, %v5998
  %v6023 = vpack.c.b16 %v6001, %v5999
  %v6024 = vpack.c.b16 %v6004, %v6002
  %v6025 = vpack.c.b16 %v6005, %v6003
  %v6026 = vpack.c.b16 %v6008, %v6006
  %v6027 = vpack.c.b16 %v6009, %v6007
  %v6028 = vpack.c.b16 %v6012, %v6010
  %v6029 = vpack.c.b16 %v6013, %v6011
  %6046 = vmatprep.subr.bf16.mxu0 %v6015
  %6047 = vmatpush1.bf16.msra.mxu0 %v6014
  %6048 = vmatprep.subr.bf16.mxu0 %v6017
  %6049 = vmatpush1.bf16.msra.mxu0 %v6016
  %6050 = vmatprep.subr.bf16.mxu0 %v6019
  %6051 = vmatpush1.bf16.msra.mxu0 %v6018
  %6052 = vmatprep.subr.bf16.mxu0 %v6021
  %6053 = vmatpush1.bf16.msra.mxu0 %v6020
  %6054 = vmatprep.subr.bf16.mxu0 %v6023
  %6055 = vmatpush1.bf16.msra.mxu0 %v6022
  %6056 = vmatprep.subr.bf16.mxu0 %v6025
  %6057 = vmatpush1.bf16.msra.mxu0 %v6024
  %6058 = vmatprep.subr.bf16.mxu0 %v6027
  %6059 = vmatpush1.bf16.msra.mxu0 %v6026
  %6060 = vmatprep.subr.bf16.mxu0 %v6029
  %6061 = vmatpush1.bf16.msra.mxu0 %v6028
  %6062 = vmatprep.subr.bf16.mxu0 0
  %6063 = vmatpush1.bf16.msra.mxu0 0
  %6064 = vmatprep.subr.bf16.mxu0 0
  %6065 = vmatpush1.bf16.msra.mxu0 0
  %6066 = vmatprep.subr.bf16.mxu0 0
  %6067 = vmatpush1.bf16.msra.mxu0 0
  %6068 = vmatprep.subr.bf16.mxu0 0
  %6069 = vmatpush1.bf16.msra.mxu0 0
  %6070 = vmatprep.subr.bf16.mxu0 0
  %6071 = vmatpush1.bf16.msra.mxu0 0
  %6072 = vmatprep.subr.bf16.mxu0 0
  %6073 = vmatpush1.bf16.msra.mxu0 0
  %6074 = vmatprep.subr.bf16.mxu0 0
  %6075 = vmatpush1.bf16.msra.mxu0 0
  %6076 = vmatprep.subr.bf16.mxu0 0
  %6077 = vmatpush1.bf16.msra.mxu0 0
  %6078 = vmatprep.mubr.bf16.mxu0 0
  %6079 = vmatmul.mubr.bf16.gmra.mrb[0].mxu0 %v5932
  %v6080 = vpop.f32.mrb[0].mxu0
  %v6081 = vadd.f32 %v5959, %v6080
  %v6082 = vpop.f32.mrb[0].mxu0
  %v6083 = vadd.f32 %v5963, %v6082
  %v6084 = vpop.f32.mrb[0].mxu0
  %v6085 = vadd.f32 %v5959, %v6084
  %v6086 = vpop.f32.mrb[0].mxu0
  %v6087 = vadd.f32 %v5963, %v6086
  %6088 = vmatprep.mubr.bf16.mxu0 0
  %6089 = vmatmul.mubr.bf16.gmra.mrb[0].mxu0 %v5933
  %v6090 = vpop.f32.mrb[0].mxu0
  %v6091 = vadd.f32 %v5959, %v6090
  %v6092 = vpop.f32.mrb[0].mxu0
  %v6093 = vadd.f32 %v5963, %v6092
  %v6094 = vpop.f32.mrb[0].mxu0
  %v6095 = vadd.f32 %v5959, %v6094
  %v6096 = vpop.f32.mrb[0].mxu0
  %v6097 = vadd.f32 %v5963, %v6096
  %6098 = vmatprep.mubr.bf16.mxu0 0
  %6099 = vmatmul.mubr.bf16.gmra.mrb[0].mxu0 %v5934
  %v6100 = vpop.f32.mrb[0].mxu0
  %v6101 = vadd.f32 %v5959, %v6100
  %v6102 = vpop.f32.mrb[0].mxu0
  %v6103 = vadd.f32 %v5963, %v6102
  %v6104 = vpop.f32.mrb[0].mxu0
  %v6105 = vadd.f32 %v5959, %v6104
  %v6106 = vpop.f32.mrb[0].mxu0
  %v6107 = vadd.f32 %v5963, %v6106
  %6108 = vmatprep.mubr.bf16.mxu0 0
  %6109 = vmatmul.mubr.bf16.gmra.mrb[0].mxu0 %v5935
  %v6110 = vpop.f32.mrb[0].mxu0
  %v6111 = vadd.f32 %v5959, %v6110
  %v6112 = vpop.f32.mrb[0].mxu0
  %v6113 = vadd.f32 %v5963, %v6112
  %v6114 = vpop.f32.mrb[0].mxu0
  %v6115 = vadd.f32 %v5959, %v6114
  %v6116 = vpop.f32.mrb[0].mxu0
  %v6117 = vadd.f32 %v5963, %v6116
  %6118 = vdwg.mxu0
  %v6119 = vmul.f32 %v6081, 0.5
  %v6120 = vmul.f32 %v6083, 0.5
  %v6121 = vmul.f32 %v6085, 0.5
  %v6122 = vmul.f32 %v6087, 0.5
  %v6123 = vmul.f32 %v6091, 0.5
  %v6124 = vmul.f32 %v6093, 0.5
  %v6125 = vmul.f32 %v6095, 0.5
  %v6126 = vmul.f32 %v6097, 0.5
  %v6127 = vmul.f32 %v6101, 0.5
  %v6128 = vmul.f32 %v6103, 0.5
  %v6129 = vmul.f32 %v6105, 0.5
  %v6130 = vmul.f32 %v6107, 0.5
  %v6131 = vmul.f32 %v6111, 0.5
  %v6132 = vmul.f32 %v6113, 0.5
  %v6133 = vmul.f32 %v6115, 0.5
  %v6134 = vmul.f32 %v6117, 0.5
  %v6135 = vmul.f32 %v6081, 0.044715
  %v6136 = vmul.f32 %v6083, 0.044715
  %v6137 = vmul.f32 %v6085, 0.044715
  %v6138 = vmul.f32 %v6087, 0.044715
  %v6139 = vmul.f32 %v6091, 0.044715
  %v6140 = vmul.f32 %v6093, 0.044715
  %v6141 = vmul.f32 %v6095, 0.044715
  %v6142 = vmul.f32 %v6097, 0.044715
  %v6143 = vmul.f32 %v6101, 0.044715
  %v6144 = vmul.f32 %v6103, 0.044715
  %v6145 = vmul.f32 %v6105, 0.044715
  %v6146 = vmul.f32 %v6107, 0.044715
  %v6147 = vmul.f32 %v6111, 0.044715
  %v6148 = vmul.f32 %v6113, 0.044715
  %v6149 = vmul.f32 %v6115, 0.044715
  %v6150 = vmul.f32 %v6117, 0.044715
  %v6151 = vmul.f32 %v6135, %v6081
  %v6152 = vmul.f32 %v6136, %v6083
  %v6153 = vmul.f32 %v6137, %v6085
  %v6154 = vmul.f32 %v6138, %v6087
  %v6155 = vmul.f32 %v6139, %v6091
  %v6156 = vmul.f32 %v6140, %v6093
  %v6157 = vmul.f32 %v6141, %v6095
  %v6158 = vmul.f32 %v6142, %v6097
  %v6159 = vmul.f32 %v6143, %v6101
  %v6160 = vmul.f32 %v6144, %v6103
  %v6161 = vmul.f32 %v6145, %v6105
  %v6162 = vmul.f32 %v6146, %v6107
  %v6163 = vmul.f32 %v6147, %v6111
  %v6164 = vmul.f32 %v6148, %v6113
  %v6165 = vmul.f32 %v6149, %v6115
  %v6166 = vmul.f32 %v6150, %v6117
  %v6167 = vmul.f32 %v6151, %v6081
  %v6168 = vmul.f32 %v6152, %v6083
  %v6169 = vmul.f32 %v6153, %v6085
  %v6170 = vmul.f32 %v6154, %v6087
  %v6171 = vmul.f32 %v6155, %v6091
  %v6172 = vmul.f32 %v6156, %v6093
  %v6173 = vmul.f32 %v6157, %v6095
  %v6174 = vmul.f32 %v6158, %v6097
  %v6175 = vmul.f32 %v6159, %v6101
  %v6176 = vmul.f32 %v6160, %v6103
  %v6177 = vmul.f32 %v6161, %v6105
  %v6178 = vmul.f32 %v6162, %v6107
  %v6179 = vmul.f32 %v6163, %v6111
  %v6180 = vmul.f32 %v6164, %v6113
  %v6181 = vmul.f32 %v6165, %v6115
  %v6182 = vmul.f32 %v6166, %v6117
  %v6183 = vadd.f32 %v6081, %v6167
  %v6184 = vadd.f32 %v6083, %v6168
  %v6185 = vadd.f32 %v6085, %v6169
  %v6186 = vadd.f32 %v6087, %v6170
  %v6187 = vadd.f32 %v6091, %v6171
  %v6188 = vadd.f32 %v6093, %v6172
  %v6189 = vadd.f32 %v6095, %v6173
  %v6190 = vadd.f32 %v6097, %v6174
  %v6191 = vadd.f32 %v6101, %v6175
  %v6192 = vadd.f32 %v6103, %v6176
  %v6193 = vadd.f32 %v6105, %v6177
  %v6194 = vadd.f32 %v6107, %v6178
  %v6195 = vadd.f32 %v6111, %v6179
  %v6196 = vadd.f32 %v6113, %v6180
  %v6197 = vadd.f32 %v6115, %v6181
  %v6198 = vadd.f32 %v6117, %v6182
  %v6199 = vmul.f32 %v6183, 0.7978846
  %v6200 = vmul.f32 %v6184, 0.7978846
  %v6201 = vmul.f32 %v6185, 0.7978846
  %v6202 = vmul.f32 %v6186, 0.7978846
  %v6203 = vmul.f32 %v6187, 0.7978846
  %v6204 = vmul.f32 %v6188, 0.7978846
  %v6205 = vmul.f32 %v6189, 0.7978846
  %v6206 = vmul.f32 %v6190, 0.7978846
  %v6207 = vmul.f32 %v6191, 0.7978846
  %v6208 = vmul.f32 %v6192, 0.7978846
  %v6209 = vmul.f32 %v6193, 0.7978846
  %v6210 = vmul.f32 %v6194, 0.7978846
  %v6211 = vmul.f32 %v6195, 0.7978846
  %v6212 = vmul.f32 %v6196, 0.7978846
  %v6213 = vmul.f32 %v6197, 0.7978846
  %v6214 = vmul.f32 %v6198, 0.7978846
  %v6215 = vtanh.pop %v6199
  %v6216 = vtanh.pop %v6200
  %v6217 = vtanh.pop %v6201
  %v6218 = vtanh.pop %v6202
  %v6219 = vtanh.pop %v6203
  %v6220 = vtanh.pop %v6204
  %v6221 = vtanh.pop %v6205
  %v6222 = vtanh.pop %v6206
  %v6223 = vtanh.pop %v6207
  %v6224 = vtanh.pop %v6208
  %v6225 = vtanh.pop %v6209
  %v6226 = vtanh.pop %v6210
  %v6227 = vtanh.pop %v6211
  %v6228 = vtanh.pop %v6212
  %v6229 = vtanh.pop %v6213
  %v6230 = vtanh.pop %v6214
  %v6231 = vadd.f32 %v6215, 1.0
  %v6232 = vadd.f32 %v6216, 1.0
  %v6233 = vadd.f32 %v6217, 1.0
  %v6234 = vadd.f32 %v6218, 1.0
  %v6235 = vadd.f32 %v6219, 1.0
  %v6236 = vadd.f32 %v6220, 1.0
  %v6237 = vadd.f32 %v6221, 1.0
  %v6238 = vadd.f32 %v6222, 1.0
  %v6239 = vadd.f32 %v6223, 1.0
  %v6240 = vadd.f32 %v6224, 1.0
  %v6241 = vadd.f32 %v6225, 1.0
  %v6242 = vadd.f32 %v6226, 1.0
  %v6243 = vadd.f32 %v6227, 1.0
  %v6244 = vadd.f32 %v6228, 1.0
  %v6245 = vadd.f32 %v6229, 1.0
  %v6246 = vadd.f32 %v6230, 1.0
  %v6247 = vmul.f32 %v6119, %v6231
  %v6248 = vmul.f32 %v6120, %v6232
  %v6249 = vmul.f32 %v6121, %v6233
  %v6250 = vmul.f32 %v6122, %v6234
  %v6251 = vmul.f32 %v6123, %v6235
  %v6252 = vmul.f32 %v6124, %v6236
  %v6253 = vmul.f32 %v6125, %v6237
  %v6254 = vmul.f32 %v6126, %v6238
  %v6255 = vmul.f32 %v6127, %v6239
  %v6256 = vmul.f32 %v6128, %v6240
  %v6257 = vmul.f32 %v6129, %v6241
  %v6258 = vmul.f32 %v6130, %v6242
  %v6259 = vmul.f32 %v6131, %v6243
  %v6260 = vmul.f32 %v6132, %v6244
  %v6261 = vmul.f32 %v6133, %v6245
  %v6262 = vmul.f32 %v6134, %v6246
  %v6263 = vpack.c.bf16 %v6249, %v6247
  %v6264 = vpack.c.bf16 %v6250, %v6248
  %v6265 = vpack.c.bf16 %v6253, %v6251
  %v6266 = vpack.c.bf16 %v6254, %v6252
  %v6267 = vpack.c.bf16 %v6257, %v6255
  %v6268 = vpack.c.bf16 %v6258, %v6256
  %v6269 = vpack.c.bf16 %v6261, %v6259
  %v6270 = vpack.c.bf16 %v6262, %v6260
  %s6271 = scalar_lea.vmem %s13, 128
  %v6272 = vld [vmem:[%s6271] sm:$0xf]
  %v6273 = vld [vmem:[%s6271 + $0x4] sm:$0xf]
  %v6274 = vld [vmem:[%s6271 + $0x8] sm:$0xf]
  %v6275 = vld [vmem:[%s6271 + $0xc] sm:$0xf]
  %v6276 = vld [vmem:[%s6271 + $0x10] sm:$0xf]
  %v6277 = vld [vmem:[%s6271 + $0x14] sm:$0xf]
  %v6278 = vld [vmem:[%s6271 + $0x18] sm:$0xf]
  %v6279 = vld [vmem:[%s6271 + $0x1c] sm:$0xf]
  %v6280 = vld [vmem:[%s6271 + $0x20] sm:$0xf]
  %v6281 = vld [vmem:[%s6271 + $0x24] sm:$0xf]
  %v6282 = vld [vmem:[%s6271 + $0x28] sm:$0xf]
  %v6283 = vld [vmem:[%s6271 + $0x2c] sm:$0xf]
  %v6284 = vld [vmem:[%s6271 + $0x30] sm:$0xf]
  %v6285 = vld [vmem:[%s6271 + $0x34] sm:$0xf]
  %v6286 = vld [vmem:[%s6271 + $0x38] sm:$0xf]
  %v6287 = vld [vmem:[%s6271 + $0x3c] sm:$0xf]
  %v6288 = vld [vmem:[%s6271 + $0x40] sm:$0xf]
  %v6289 = vld [vmem:[%s6271 + $0x44] sm:$0xf]
  %v6290 = vld [vmem:[%s6271 + $0x48] sm:$0xf]
  %v6291 = vld [vmem:[%s6271 + $0x4c] sm:$0xf]
  %v6292 = vld [vmem:[%s6271 + $0x50] sm:$0xf]
  %v6293 = vld [vmem:[%s6271 + $0x54] sm:$0xf]
  %v6294 = vld [vmem:[%s6271 + $0x58] sm:$0xf]
  %v6295 = vld [vmem:[%s6271 + $0x5c] sm:$0xf]
  %v6296 = vld [vmem:[%s6271 + $0x60] sm:$0xf]
  %v6297 = vld [vmem:[%s6271 + $0x64] sm:$0xf]
  %v6298 = vld [vmem:[%s6271 + $0x68] sm:$0xf]
  %v6299 = vld [vmem:[%s6271 + $0x6c] sm:$0xf]
  %v6300 = vld [vmem:[%s6271 + $0x70] sm:$0xf]
  %v6301 = vld [vmem:[%s6271 + $0x74] sm:$0xf]
  %v6302 = vld [vmem:[%s6271 + $0x78] sm:$0xf]
  %v6303 = vld [vmem:[%s6271 + $0x7c] sm:$0xf]
  %s6304 = scalar_lea.vmem %s14, 1
  %v6305 = vld [vmem:[%s6304] sm:$0x1]
  %v6307 = vlaneseq
  %v6308 = vshrl.u32 %v6307, 7
  %v6309 = vsub.s32 0, %v6308
  %v6310 = vrot.slane %v6305, %v6309
  %v6344 = vunpack.c.l.b16 %v6272
  %v6345 = vunpack.c.l.b16 %v6273
  %v6346 = vunpack.c.l.b16 %v6274
  %v6347 = vunpack.c.l.b16 %v6275
  %v6348 = vunpack.c.l.b16 %v6276
  %v6349 = vunpack.c.l.b16 %v6277
  %v6350 = vunpack.c.l.b16 %v6278
  %v6351 = vunpack.c.l.b16 %v6279
  %v6352 = vunpack.c.l.b16 %v6280
  %v6353 = vunpack.c.l.b16 %v6281
  %v6354 = vunpack.c.l.b16 %v6282
  %v6355 = vunpack.c.l.b16 %v6283
  %v6356 = vunpack.c.l.b16 %v6284
  %v6357 = vunpack.c.l.b16 %v6285
  %v6358 = vunpack.c.l.b16 %v6286
  %v6359 = vunpack.c.l.b16 %v6287
  %v6360 = vunpack.c.l.b16 %v6288
  %v6361 = vunpack.c.l.b16 %v6289
  %v6362 = vunpack.c.l.b16 %v6290
  %v6363 = vunpack.c.l.b16 %v6291
  %v6364 = vunpack.c.l.b16 %v6292
  %v6365 = vunpack.c.l.b16 %v6293
  %v6366 = vunpack.c.l.b16 %v6294
  %v6367 = vunpack.c.l.b16 %v6295
  %v6368 = vunpack.c.l.b16 %v6296
  %v6369 = vunpack.c.l.b16 %v6297
  %v6370 = vunpack.c.l.b16 %v6298
  %v6371 = vunpack.c.l.b16 %v6299
  %v6372 = vunpack.c.l.b16 %v6300
  %v6373 = vunpack.c.l.b16 %v6301
  %v6374 = vunpack.c.l.b16 %v6302
  %v6375 = vunpack.c.l.b16 %v6303
  %v6376 = vpack.c.b16 %v6345, %v6344
  %v6377 = vpack.c.b16 %v6347, %v6346
  %v6378 = vpack.c.b16 %v6349, %v6348
  %v6379 = vpack.c.b16 %v6351, %v6350
  %v6380 = vpack.c.b16 %v6353, %v6352
  %v6381 = vpack.c.b16 %v6355, %v6354
  %v6382 = vpack.c.b16 %v6357, %v6356
  %v6383 = vpack.c.b16 %v6359, %v6358
  %v6384 = vpack.c.b16 %v6361, %v6360
  %v6385 = vpack.c.b16 %v6363, %v6362
  %v6386 = vpack.c.b16 %v6365, %v6364
  %v6387 = vpack.c.b16 %v6367, %v6366
  %v6388 = vpack.c.b16 %v6369, %v6368
  %v6389 = vpack.c.b16 %v6371, %v6370
  %v6390 = vpack.c.b16 %v6373, %v6372
  %v6391 = vpack.c.b16 %v6375, %v6374
  %6408 = vmatprep.subr.bf16.mxu0 0
  %6409 = vmatpush1.bf16.msra.mxu0 %v6376
  %6410 = vmatprep.subr.bf16.mxu0 0
  %6411 = vmatpush1.bf16.msra.mxu0 %v6377
  %6412 = vmatprep.subr.bf16.mxu0 0
  %6413 = vmatpush1.bf16.msra.mxu0 %v6378
  %6414 = vmatprep.subr.bf16.mxu0 0
  %6415 = vmatpush1.bf16.msra.mxu0 %v6379
  %6416 = vmatprep.subr.bf16.mxu0 0
  %6417 = vmatpush1.bf16.msra.mxu0 %v6380
  %6418 = vmatprep.subr.bf16.mxu0 0
  %6419 = vmatpush1.bf16.msra.mxu0 %v6381
  %6420 = vmatprep.subr.bf16.mxu0 0
  %6421 = vmatpush1.bf16.msra.mxu0 %v6382
  %6422 = vmatprep.subr.bf16.mxu0 0
  %6423 = vmatpush1.bf16.msra.mxu0 %v6383
  %6424 = vmatprep.subr.bf16.mxu0 0
  %6425 = vmatpush1.bf16.msra.mxu0 %v6384
  %6426 = vmatprep.subr.bf16.mxu0 0
  %6427 = vmatpush1.bf16.msra.mxu0 %v6385
  %6428 = vmatprep.subr.bf16.mxu0 0
  %6429 = vmatpush1.bf16.msra.mxu0 %v6386
  %6430 = vmatprep.subr.bf16.mxu0 0
  %6431 = vmatpush1.bf16.msra.mxu0 %v6387
  %6432 = vmatprep.subr.bf16.mxu0 0
  %6433 = vmatpush1.bf16.msra.mxu0 %v6388
  %6434 = vmatprep.subr.bf16.mxu0 0
  %6435 = vmatpush1.bf16.msra.mxu0 %v6389
  %6436 = vmatprep.subr.bf16.mxu0 0
  %6437 = vmatpush1.bf16.msra.mxu0 %v6390
  %6438 = vmatprep.subr.bf16.mxu0 0
  %6439 = vmatpush1.bf16.msra.mxu0 %v6391
  %6440 = vmatprep.mubr.bf16.mxu0 %v6264
  %6441 = vmatmul.mubr.bf16.gmra.mrb[0].mxu0 %v6263
  %v6442 = vpop.f32.mrb[0].mxu0
  %v6443 = vadd.f32 %v6310, %v6442
  %v6444 = vpop.f32.mrb[0].mxu0
  %v6445 = vpop.f32.mrb[0].mxu0
  %v6446 = vadd.f32 %v6310, %v6445
  %v6447 = vpop.f32.mrb[0].mxu0
  %6448 = vmatprep.mubr.bf16.mxu0 %v6266
  %6449 = vmatmul.mubr.bf16.gmra.mrb[0].mxu0 %v6265
  %v6450 = vpop.f32.mrb[0].mxu0
  %v6451 = vadd.f32 %v6310, %v6450
  %v6452 = vpop.f32.mrb[0].mxu0
  %v6453 = vpop.f32.mrb[0].mxu0
  %v6454 = vadd.f32 %v6310, %v6453
  %v6455 = vpop.f32.mrb[0].mxu0
  %6456 = vmatprep.mubr.bf16.mxu0 %v6268
  %6457 = vmatmul.mubr.bf16.gmra.mrb[0].mxu0 %v6267
  %v6458 = vpop.f32.mrb[0].mxu0
  %v6459 = vadd.f32 %v6310, %v6458
  %v6460 = vpop.f32.mrb[0].mxu0
  %v6461 = vpop.f32.mrb[0].mxu0
  %v6462 = vadd.f32 %v6310, %v6461
  %v6463 = vpop.f32.mrb[0].mxu0
  %6464 = vmatprep.mubr.bf16.mxu0 %v6270
  %6465 = vmatmul.mubr.bf16.gmra.mrb[0].mxu0 %v6269
  %v6466 = vpop.f32.mrb[0].mxu0
  %v6467 = vadd.f32 %v6310, %v6466
  %v6468 = vpop.f32.mrb[0].mxu0
  %v6469 = vpop.f32.mrb[0].mxu0
  %v6470 = vadd.f32 %v6310, %v6469
  %v6471 = vpop.f32.mrb[0].mxu0
  %6472 = vdwg.mxu0
  %v6473 = vadd.f32 %v6443, %v5924
  %v6474 = vadd.f32 %v6446, %v5925
  %v6475 = vadd.f32 %v6451, %v5926
  %v6476 = vadd.f32 %v6454, %v5927
  %v6477 = vadd.f32 %v6459, %v5928
  %v6478 = vadd.f32 %v6462, %v5929
  %v6479 = vadd.f32 %v6467, %v5930
  %v6480 = vadd.f32 %v6470, %v5931
  %s6481 = scalar_lea.vmem %s15, 1
  %v6482 = vld [vmem:[%s6481] sm:$0x1]
  %s6483 = scalar_lea.vmem %s16, 1
  %v6484 = vld [vmem:[%s6483] sm:$0x1]
  %6485 = vadd.xlane.f32.xlu0 %v6473
  %v6486 = vpop.xlane.xlu0 %6485
  %6487 = vadd.xlane.f32.xlu0 %v6474
  %v6488 = vpop.xlane.xlu0 %6487
  %6489 = vadd.xlane.f32.xlu0 %v6475
  %v6490 = vpop.xlane.xlu0 %6489
  %6491 = vadd.xlane.f32.xlu0 %v6476
  %v6492 = vpop.xlane.xlu0 %6491
  %6493 = vadd.xlane.f32.xlu0 %v6477
  %v6494 = vpop.xlane.xlu0 %6493
  %6495 = vadd.xlane.f32.xlu0 %v6478
  %v6496 = vpop.xlane.xlu0 %6495
  %6497 = vadd.xlane.f32.xlu0 %v6479
  %v6498 = vpop.xlane.xlu0 %6497
  %6499 = vadd.xlane.f32.xlu0 %v6480
  %v6500 = vpop.xlane.xlu0 %6499
  %v6501 = vmul.f32 %v6486, %v112
  %v6502 = vmul.f32 %v6488, %v112
  %v6503 = vmul.f32 %v6490, %v112
  %v6504 = vmul.f32 %v6492, %v112
  %v6505 = vmul.f32 %v6494, %v112
  %v6506 = vmul.f32 %v6496, %v112
  %v6507 = vmul.f32 %v6498, %v112
  %v6508 = vmul.f32 %v6500, %v112
  %v6509 = vsub.f32 %v6473, %v6501
  %v6510 = vsub.f32 %v6474, %v6502
  %v6511 = vsub.f32 %v6475, %v6503
  %v6512 = vsub.f32 %v6476, %v6504
  %v6513 = vsub.f32 %v6477, %v6505
  %v6514 = vsub.f32 %v6478, %v6506
  %v6515 = vsub.f32 %v6479, %v6507
  %v6516 = vsub.f32 %v6480, %v6508
  %v6517 = vmul.f32 %v6509, %v6509
  %v6518 = vmul.f32 %v6510, %v6510
  %v6519 = vmul.f32 %v6511, %v6511
  %v6520 = vmul.f32 %v6512, %v6512
  %v6521 = vmul.f32 %v6513, %v6513
  %v6522 = vmul.f32 %v6514, %v6514
  %v6523 = vmul.f32 %v6515, %v6515
  %v6524 = vmul.f32 %v6516, %v6516
  %6525 = vadd.xlane.f32.xlu0 %v6517
  %v6526 = vpop.xlane.xlu0 %6525
  %6527 = vadd.xlane.f32.xlu0 %v6518
  %v6528 = vpop.xlane.xlu0 %6527
  %6529 = vadd.xlane.f32.xlu0 %v6519
  %v6530 = vpop.xlane.xlu0 %6529
  %6531 = vadd.xlane.f32.xlu0 %v6520
  %v6532 = vpop.xlane.xlu0 %6531
  %6533 = vadd.xlane.f32.xlu0 %v6521
  %v6534 = vpop.xlane.xlu0 %6533
  %6535 = vadd.xlane.f32.xlu0 %v6522
  %v6536 = vpop.xlane.xlu0 %6535
  %6537 = vadd.xlane.f32.xlu0 %v6523
  %v6538 = vpop.xlane.xlu0 %6537
  %6539 = vadd.xlane.f32.xlu0 %v6524
  %v6540 = vpop.xlane.xlu0 %6539
  %v6541 = vmul.f32 %v6526, %v112
  %v6542 = vmul.f32 %v6528, %v112
  %v6543 = vmul.f32 %v6530, %v112
  %v6544 = vmul.f32 %v6532, %v112
  %v6545 = vmul.f32 %v6534, %v112
  %v6546 = vmul.f32 %v6536, %v112
  %v6547 = vmul.f32 %v6538, %v112
  %v6548 = vmul.f32 %v6540, %v112
  %v6549 = vadd.f32 %v6541, 1e-12
  %v6550 = vadd.f32 %v6542, 1e-12
  %v6551 = vadd.f32 %v6543, 1e-12
  %v6552 = vadd.f32 %v6544, 1e-12
  %v6553 = vadd.f32 %v6545, 1e-12
  %v6554 = vadd.f32 %v6546, 1e-12
  %v6555 = vadd.f32 %v6547, 1e-12
  %v6556 = vadd.f32 %v6548, 1e-12
  %v6557 = vrsqrt.pop %v6549
  %v6558 = vrsqrt.pop %v6550
  %v6559 = vrsqrt.pop %v6551
  %v6560 = vrsqrt.pop %v6552
  %v6561 = vrsqrt.pop %v6553
  %v6562 = vrsqrt.pop %v6554
  %v6563 = vrsqrt.pop %v6555
  %v6564 = vrsqrt.pop %v6556
  %v6565 = vmul.f32 %v6509, %v6557
  %v6566 = vmul.f32 %v6510, %v6558
  %v6567 = vmul.f32 %v6511, %v6559
  %v6568 = vmul.f32 %v6512, %v6560
  %v6569 = vmul.f32 %v6513, %v6561
  %v6570 = vmul.f32 %v6514, %v6562
  %v6571 = vmul.f32 %v6515, %v6563
  %v6572 = vmul.f32 %v6516, %v6564
  %v6574 = vlaneseq
  %v6575 = vshrl.u32 %v6574, 7
  %v6576 = vsub.s32 0, %v6575
  %v6577 = vrot.slane %v6482, %v6576
  %v6579 = vmul.f32 %v6565, %v6577
  %v6580 = vmul.f32 %v6566, %v6577
  %v6581 = vmul.f32 %v6567, %v6577
  %v6582 = vmul.f32 %v6568, %v6577
  %v6583 = vmul.f32 %v6569, %v6577
  %v6584 = vmul.f32 %v6570, %v6577
  %v6585 = vmul.f32 %v6571, %v6577
  %v6586 = vmul.f32 %v6572, %v6577
  %v6588 = vlaneseq
  %v6589 = vshrl.u32 %v6588, 7
  %v6590 = vsub.s32 0, %v6589
  %v6591 = vrot.slane %v6484, %v6590
  %v6593 = vadd.f32 %v6579, %v6591
  %v6594 = vadd.f32 %v6580, %v6591
  %v6595 = vadd.f32 %v6581, %v6591
  %v6596 = vadd.f32 %v6582, %v6591
  %v6597 = vadd.f32 %v6583, %v6591
  %v6598 = vadd.f32 %v6584, %v6591
  %v6599 = vadd.f32 %v6585, %v6591
  %v6600 = vadd.f32 %v6586, %v6591
  %v6601 = vpack.c.bf16 %v6593, %v6593
  %v6602 = vpack.c.bf16 %v6594, %v6594
  %v6603 = vpack.c.bf16 %v6595, %v6595
  %v6604 = vpack.c.bf16 %v6596, %v6596
  %v6605 = vpack.c.bf16 %v6597, %v6597
  %v6606 = vpack.c.bf16 %v6598, %v6598
  %v6607 = vpack.c.bf16 %v6599, %v6599
  %v6608 = vpack.c.bf16 %v6600, %v6600
  %v6609 = vld [vmem:[%s17] sm:$0xf]
  %v6610 = vld [vmem:[%s17 + $0x4] sm:$0xf]
  %v6611 = vld [vmem:[%s17 + $0x8] sm:$0xf]
  %v6612 = vld [vmem:[%s17 + $0xc] sm:$0xf]
  %v6613 = vld [vmem:[%s17 + $0x10] sm:$0xf]
  %v6614 = vld [vmem:[%s17 + $0x14] sm:$0xf]
  %v6615 = vld [vmem:[%s17 + $0x18] sm:$0xf]
  %v6616 = vld [vmem:[%s17 + $0x1c] sm:$0xf]
  %v6617 = vld [vmem:[%s17 + $0x20] sm:$0xf]
  %v6618 = vld [vmem:[%s17 + $0x24] sm:$0xf]
  %v6619 = vld [vmem:[%s17 + $0x28] sm:$0xf]
  %v6620 = vld [vmem:[%s17 + $0x2c] sm:$0xf]
  %v6621 = vld [vmem:[%s17 + $0x30] sm:$0xf]
  %v6622 = vld [vmem:[%s17 + $0x34] sm:$0xf]
  %v6623 = vld [vmem:[%s17 + $0x38] sm:$0xf]
  %v6624 = vld [vmem:[%s17 + $0x3c] sm:$0xf]
  %v6625 = vld [vmem:[%s18] sm:$0x1]
  %v6627 = vlaneseq
  %v6628 = vshrl.u32 %v6627, 7
  %v6629 = vsub.s32 0, %v6628
  %v6630 = vrot.slane %v6625, %v6629
  %v6640 = vunpack.c.l.b16 %v6601
  %v6641 = vunpack.c.l.b16 %v6602
  %v6642 = vunpack.c.l.b16 %v6603
  %v6643 = vunpack.c.l.b16 %v6604
  %v6644 = vunpack.c.l.b16 %v6605
  %v6645 = vunpack.c.l.b16 %v6606
  %v6646 = vunpack.c.l.b16 %v6607
  %v6647 = vunpack.c.l.b16 %v6608
  %v6648 = vrot.slane %v6641, 7
  %vm6649 = vcmask 1041409
  %v6650 = vsel %vm6649, %v6648, %v6640
  %v6651 = vrot.slane %v6642, 6
  %vm6652 = vcmask 1042434
  %v6653 = vsel %vm6652, %v6651, %v6650
  %v6654 = vrot.slane %v6643, 5
  %vm6655 = vcmask 1043459
  %v6656 = vsel %vm6655, %v6654, %v6653
  %v6657 = vrot.slane %v6644, 4
  %vm6658 = vcmask 1044484
  %v6659 = vsel %vm6658, %v6657, %v6656
  %v6660 = vrot.slane %v6645, 3
  %vm6661 = vcmask 1045509
  %v6662 = vsel %vm6661, %v6660, %v6659
  %v6663 = vrot.slane %v6646, 2
  %vm6664 = vcmask 1046534
  %v6665 = vsel %vm6664, %v6663, %v6662
  %v6666 = vrot.slane %v6647, 1
  %vm6667 = vcmask 1047559
  %v6668 = vsel %vm6667, %v6666, %v6665
  %v6669 = vpack.c.b16 %v6668, %v6668
  %v6687 = vunpack.c.l.b16 %v6609
  %v6688 = vunpack.c.l.b16 %v6610
  %v6689 = vunpack.c.l.b16 %v6611
  %v6690 = vunpack.c.l.b16 %v6612
  %v6691 = vunpack.c.l.b16 %v6613
  %v6692 = vunpack.c.l.b16 %v6614
  %v6693 = vunpack.c.l.b16 %v6615
  %v6694 = vunpack.c.l.b16 %v6616
  %v6695 = vunpack.c.l.b16 %v6617
  %v6696 = vunpack.c.l.b16 %v6618
  %v6697 = vunpack.c.l.b16 %v6619
  %v6698 = vunpack.c.l.b16 %v6620
  %v6699 = vunpack.c.l.b16 %v6621
  %v6700 = vunpack.c.l.b16 %v6622
  %v6701 = vunpack.c.l.b16 %v6623
  %v6702 = vunpack.c.l.b16 %v6624
  %v6703 = vpack.c.b16 %v6688, %v6687
  %v6704 = vpack.c.b16 %v6690, %v6689
  %v6705 = vpack.c.b16 %v6692, %v6691
  %v6706 = vpack.c.b16 %v6694, %v6693
  %v6707 = vpack.c.b16 %v6696, %v6695
  %v6708 = vpack.c.b16 %v6698, %v6697
  %v6709 = vpack.c.b16 %v6700, %v6699
  %v6710 = vpack.c.b16 %v6702, %v6701
  %6719 = vmatprep.subr.bf16.mxu0 0
  %6720 = vmatpush1.bf16.msra.mxu0 %v6703
  %6721 = vmatprep.subr.bf16.mxu0 0
  %6722 = vmatpush1.bf16.msra.mxu0 %v6704
  %6723 = vmatprep.subr.bf16.mxu0 0
  %6724 = vmatpush1.bf16.msra.mxu0 %v6705
  %6725 = vmatprep.subr.bf16.mxu0 0
  %6726 = vmatpush1.bf16.msra.mxu0 %v6706
  %6727 = vmatprep.subr.bf16.mxu0 0
  %6728 = vmatpush1.bf16.msra.mxu0 %v6707
  %6729 = vmatprep.subr.bf16.mxu0 0
  %6730 = vmatpush1.bf16.msra.mxu0 %v6708
  %6731 = vmatprep.subr.bf16.mxu0 0
  %6732 = vmatpush1.bf16.msra.mxu0 %v6709
  %6733 = vmatprep.subr.bf16.mxu0 0
  %6734 = vmatpush1.bf16.msra.mxu0 %v6710
  %6735 = vmatprep.subr.bf16.mxu0 0
  %6736 = vmatpush1.bf16.msra.mxu0 0
  %6737 = vmatprep.subr.bf16.mxu0 0
  %6738 = vmatpush1.bf16.msra.mxu0 0
  %6739 = vmatprep.subr.bf16.mxu0 0
  %6740 = vmatpush1.bf16.msra.mxu0 0
  %6741 = vmatprep.subr.bf16.mxu0 0
  %6742 = vmatpush1.bf16.msra.mxu0 0
  %6743 = vmatprep.subr.bf16.mxu0 0
  %6744 = vmatpush1.bf16.msra.mxu0 0
  %6745 = vmatprep.subr.bf16.mxu0 0
  %6746 = vmatpush1.bf16.msra.mxu0 0
  %6747 = vmatprep.subr.bf16.mxu0 0
  %6748 = vmatpush1.bf16.msra.mxu0 0
  %6749 = vmatprep.subr.bf16.mxu0 0
  %6750 = vmatpush1.bf16.msra.mxu0 0
  %6751 = vmatprep.mubr.bf16.mxu0 0
  %6752 = vmatmul.mubr.bf16.gmra.mrb[0].mxu0 %v6669
  %v6753 = vpop.f32.mrb[0].mxu0
  %v6754 = vadd.f32 %v6630, %v6753
  %v6755 = vpop.f32.mrb[0].mxu0
  %v6756 = vpop.f32.mrb[0].mxu0
  %v6757 = vpop.f32.mrb[0].mxu0
  %6758 = vdwg.mxu0
  %v6759 = vtanh.pop %v6754
  %v6760 = vpack.c.bf16 %v6759, %v6759
  %v6761 = vld [vmem:[%s21] sm:$0xf]
  %v6762 = vld [vmem:[%s21 + $0x4] sm:$0xf]
  %v6763 = vld [vmem:[%s21 + $0x8] sm:$0xf]
  %v6764 = vld [vmem:[%s21 + $0xc] sm:$0xf]
  %v6765 = vld [vmem:[%s21 + $0x10] sm:$0xf]
  %v6766 = vld [vmem:[%s21 + $0x14] sm:$0xf]
  %v6767 = vld [vmem:[%s21 + $0x18] sm:$0xf]
  %v6768 = vld [vmem:[%s21 + $0x1c] sm:$0xf]
  %v6769 = vld [vmem:[%s21 + $0x20] sm:$0xf]
  %v6770 = vld [vmem:[%s21 + $0x24] sm:$0xf]
  %v6771 = vld [vmem:[%s21 + $0x28] sm:$0xf]
  %v6772 = vld [vmem:[%s21 + $0x2c] sm:$0xf]
  %v6773 = vld [vmem:[%s21 + $0x30] sm:$0xf]
  %v6774 = vld [vmem:[%s21 + $0x34] sm:$0xf]
  %v6775 = vld [vmem:[%s21 + $0x38] sm:$0xf]
  %v6776 = vld [vmem:[%s21 + $0x3c] sm:$0xf]
  %v6777 = vld [vmem:[%s22] sm:$0x1]
  %v6779 = vlaneseq
  %v6780 = vshrl.u32 %v6779, 7
  %v6781 = vsub.s32 0, %v6780
  %v6782 = vrot.slane %v6777, %v6781
  %v6800 = vunpack.c.l.b16 %v6761
  %v6801 = vunpack.c.l.b16 %v6762
  %v6802 = vunpack.c.l.b16 %v6763
  %v6803 = vunpack.c.l.b16 %v6764
  %v6804 = vunpack.c.l.b16 %v6765
  %v6805 = vunpack.c.l.b16 %v6766
  %v6806 = vunpack.c.l.b16 %v6767
  %v6807 = vunpack.c.l.b16 %v6768
  %v6808 = vunpack.c.l.b16 %v6769
  %v6809 = vunpack.c.l.b16 %v6770
  %v6810 = vunpack.c.l.b16 %v6771
  %v6811 = vunpack.c.l.b16 %v6772
  %v6812 = vunpack.c.l.b16 %v6773
  %v6813 = vunpack.c.l.b16 %v6774
  %v6814 = vunpack.c.l.b16 %v6775
  %v6815 = vunpack.c.l.b16 %v6776
  %v6816 = vpack.c.b16 %v6801, %v6800
  %v6817 = vpack.c.b16 %v6803, %v6802
  %v6818 = vpack.c.b16 %v6805, %v6804
  %v6819 = vpack.c.b16 %v6807, %v6806
  %v6820 = vpack.c.b16 %v6809, %v6808
  %v6821 = vpack.c.b16 %v6811, %v6810
  %v6822 = vpack.c.b16 %v6813, %v6812
  %v6823 = vpack.c.b16 %v6815, %v6814
  %6832 = vmatprep.subr.bf16.mxu0 0
  %6833 = vmatpush1.bf16.msra.mxu0 %v6816
  %6834 = vmatprep.subr.bf16.mxu0 0
  %6835 = vmatpush1.bf16.msra.mxu0 %v6817
  %6836 = vmatprep.subr.bf16.mxu0 0
  %6837 = vmatpush1.bf16.msra.mxu0 %v6818
  %6838 = vmatprep.subr.bf16.mxu0 0
  %6839 = vmatpush1.bf16.msra.mxu0 %v6819
  %6840 = vmatprep.subr.bf16.mxu0 0
  %6841 = vmatpush1.bf16.msra.mxu0 %v6820
  %6842 = vmatprep.subr.bf16.mxu0 0
  %6843 = vmatpush1.bf16.msra.mxu0 %v6821
  %6844 = vmatprep.subr.bf16.mxu0 0
  %6845 = vmatpush1.bf16.msra.mxu0 %v6822
  %6846 = vmatprep.subr.bf16.mxu0 0
  %6847 = vmatpush1.bf16.msra.mxu0 %v6823
  %6848 = vmatprep.subr.bf16.mxu0 0
  %6849 = vmatpush1.bf16.msra.mxu0 0
  %6850 = vmatprep.subr.bf16.mxu0 0
  %6851 = vmatpush1.bf16.msra.mxu0 0
  %6852 = vmatprep.subr.bf16.mxu0 0
  %6853 = vmatpush1.bf16.msra.mxu0 0
  %6854 = vmatprep.subr.bf16.mxu0 0
  %6855 = vmatpush1.bf16.msra.mxu0 0
  %6856 = vmatprep.subr.bf16.mxu0 0
  %6857 = vmatpush1.bf16.msra.mxu0 0
  %6858 = vmatprep.subr.bf16.mxu0 0
  %6859 = vmatpush1.bf16.msra.mxu0 0
  %6860 = vmatprep.subr.bf16.mxu0 0
  %6861 = vmatpush1.bf16.msra.mxu0 0
  %6862 = vmatprep.subr.bf16.mxu0 0
  %6863 = vmatpush1.bf16.msra.mxu0 0
  %6864 = vmatprep.mubr.bf16.mxu0 0
  %6865 = vmatmul.mubr.bf16.gmra.mrb[0].mxu0 %v6760
  %v6866 = vpop.f32.mrb[0].mxu0
  %v6867 = vadd.f32 %v6782, %v6866
  %v6868 = vpop.f32.mrb[0].mxu0
  %v6869 = vpop.f32.mrb[0].mxu0
  %v6870 = vpop.f32.mrb[0].mxu0
  %6871 = vdwg.mxu0
  %6872 = vst [vmem:[%s24] sm:$0xff] %v6867
  %v6873 = vpack.c.bf16 %v6594, %v6593
  %v6874 = vpack.c.bf16 %v6596, %v6595
  %v6875 = vpack.c.bf16 %v6598, %v6597
  %v6876 = vpack.c.bf16 %v6600, %v6599
  %v6877 = vld [vmem:[%s19] sm:$0xf]
  %v6878 = vld [vmem:[%s19 + $0x4] sm:$0xf]
  %v6879 = vld [vmem:[%s19 + $0x8] sm:$0xf]
  %v6880 = vld [vmem:[%s19 + $0xc] sm:$0xf]
  %v6881 = vld [vmem:[%s19 + $0x10] sm:$0xf]
  %v6882 = vld [vmem:[%s19 + $0x14] sm:$0xf]
  %v6883 = vld [vmem:[%s19 + $0x18] sm:$0xf]
  %v6884 = vld [vmem:[%s19 + $0x1c] sm:$0xf]
  %v6885 = vld [vmem:[%s19 + $0x20] sm:$0xf]
  %v6886 = vld [vmem:[%s19 + $0x24] sm:$0xf]
  %v6887 = vld [vmem:[%s19 + $0x28] sm:$0xf]
  %v6888 = vld [vmem:[%s19 + $0x2c] sm:$0xf]
  %v6889 = vld [vmem:[%s19 + $0x30] sm:$0xf]
  %v6890 = vld [vmem:[%s19 + $0x34] sm:$0xf]
  %v6891 = vld [vmem:[%s19 + $0x38] sm:$0xf]
  %v6892 = vld [vmem:[%s19 + $0x3c] sm:$0xf]
  %v6893 = vld [vmem:[%s20] sm:$0x1]
  %v6895 = vlaneseq
  %v6896 = vshrl.u32 %v6895, 7
  %v6897 = vsub.s32 0, %v6896
  %v6898 = vrot.slane %v6893, %v6897
  %v6916 = vunpack.c.l.b16 %v6877
  %v6917 = vunpack.c.l.b16 %v6878
  %v6918 = vunpack.c.l.b16 %v6879
  %v6919 = vunpack.c.l.b16 %v6880
  %v6920 = vunpack.c.l.b16 %v6881
  %v6921 = vunpack.c.l.b16 %v6882
  %v6922 = vunpack.c.l.b16 %v6883
  %v6923 = vunpack.c.l.b16 %v6884
  %v6924 = vunpack.c.l.b16 %v6885
  %v6925 = vunpack.c.l.b16 %v6886
  %v6926 = vunpack.c.l.b16 %v6887
  %v6927 = vunpack.c.l.b16 %v6888
  %v6928 = vunpack.c.l.b16 %v6889
  %v6929 = vunpack.c.l.b16 %v6890
  %v6930 = vunpack.c.l.b16 %v6891
  %v6931 = vunpack.c.l.b16 %v6892
  %v6932 = vpack.c.b16 %v6917, %v6916
  %v6933 = vpack.c.b16 %v6919, %v6918
  %v6934 = vpack.c.b16 %v6921, %v6920
  %v6935 = vpack.c.b16 %v6923, %v6922
  %v6936 = vpack.c.b16 %v6925, %v6924
  %v6937 = vpack.c.b16 %v6927, %v6926
  %v6938 = vpack.c.b16 %v6929, %v6928
  %v6939 = vpack.c.b16 %v6931, %v6930
  %6948 = vmatprep.subr.bf16.mxu0 0
  %6949 = vmatpush1.bf16.msra.mxu0 %v6932
  %6950 = vmatprep.subr.bf16.mxu0 0
  %6951 = vmatpush1.bf16.msra.mxu0 %v6933
  %6952 = vmatprep.subr.bf16.mxu0 0
  %6953 = vmatpush1.bf16.msra.mxu0 %v6934
  %6954 = vmatprep.subr.bf16.mxu0 0
  %6955 = vmatpush1.bf16.msra.mxu0 %v6935
  %6956 = vmatprep.subr.bf16.mxu0 0
  %6957 = vmatpush1.bf16.msra.mxu0 %v6936
  %6958 = vmatprep.subr.bf16.mxu0 0
  %6959 = vmatpush1.bf16.msra.mxu0 %v6937
  %6960 = vmatprep.subr.bf16.mxu0 0
  %6961 = vmatpush1.bf16.msra.mxu0 %v6938
  %6962 = vmatprep.subr.bf16.mxu0 0
  %6963 = vmatpush1.bf16.msra.mxu0 %v6939
  %6964 = vmatprep.subr.bf16.mxu0 0
  %6965 = vmatpush1.bf16.msra.mxu0 0
  %6966 = vmatprep.subr.bf16.mxu0 0
  %6967 = vmatpush1.bf16.msra.mxu0 0
  %6968 = vmatprep.subr.bf16.mxu0 0
  %6969 = vmatpush1.bf16.msra.mxu0 0
  %6970 = vmatprep.subr.bf16.mxu0 0
  %6971 = vmatpush1.bf16.msra.mxu0 0
  %6972 = vmatprep.subr.bf16.mxu0 0
  %6973 = vmatpush1.bf16.msra.mxu0 0
  %6974 = vmatprep.subr.bf16.mxu0 0
  %6975 = vmatpush1.bf16.msra.mxu0 0
  %6976 = vmatprep.subr.bf16.mxu0 0
  %6977 = vmatpush1.bf16.msra.mxu0 0
  %6978 = vmatprep.subr.bf16.mxu0 0
  %6979 = vmatpush1.bf16.msra.mxu0 0
  %6980 = vmatprep.mubr.bf16.mxu0 0
  %6981 = vmatmul.mubr.bf16.gmra.mrb[0].mxu0 %v6873
  %v6982 = vpop.f32.mrb[0].mxu0
  %v6983 = vadd.f32 %v6898, %v6982
  %v6984 = vpop.f32.mrb[0].mxu0
  %v6985 = vpop.f32.mrb[0].mxu0
  %v6986 = vadd.f32 %v6898, %v6985
  %v6987 = vpop.f32.mrb[0].mxu0
  %6988 = vmatprep.mubr.bf16.mxu0 0
  %6989 = vmatmul.mubr.bf16.gmra.mrb[0].mxu0 %v6874
  %v6990 = vpop.f32.mrb[0].mxu0
  %v6991 = vadd.f32 %v6898, %v6990
  %v6992 = vpop.f32.mrb[0].mxu0
  %v6993 = vpop.f32.mrb[0].mxu0
  %v6994 = vadd.f32 %v6898, %v6993
  %v6995 = vpop.f32.mrb[0].mxu0
  %6996 = vmatprep.mubr.bf16.mxu0 0
  %6997 = vmatmul.mubr.bf16.gmra.mrb[0].mxu0 %v6875
  %v6998 = vpop.f32.mrb[0].mxu0
  %v6999 = vadd.f32 %v6898, %v6998
  %v7000 = vpop.f32.mrb[0].mxu0
  %v7001 = vpop.f32.mrb[0].mxu0
  %v7002 = vadd.f32 %v6898, %v7001
  %v7003 = vpop.f32.mrb[0].mxu0
  %7004 = vmatprep.mubr.bf16.mxu0 0
  %7005 = vmatmul.mubr.bf16.gmra.mrb[0].mxu0 %v6876
  %v7006 = vpop.f32.mrb[0].mxu0
  %v7007 = vadd.f32 %v6898, %v7006
  %v7008 = vpop.f32.mrb[0].mxu0
  %v7009 = vpop.f32.mrb[0].mxu0
  %v7010 = vadd.f32 %v6898, %v7009
  %v7011 = vpop.f32.mrb[0].mxu0
  %7012 = vdwg.mxu0
  %7013 = vst [vmem:[%s23] sm:$0xff] %v6983
  %7014 = vst [vmem:[%s23 + $0x8] sm:$0xff] %v6986
  %7015 = vst [vmem:[%s23 + $0x10] sm:$0xff] %v6991
  %7016 = vst [vmem:[%s23 + $0x18] sm:$0xff] %v6994
  %7017 = vst [vmem:[%s23 + $0x20] sm:$0xff] %v6999
  %7018 = vst [vmem:[%s23 + $0x28] sm:$0xff] %v7002
  %7019 = vst [vmem:[%s23 + $0x30] sm:$0xff] %v7007
  %7020 = vst [vmem:[%s23 + $0x38] sm:$0xff] %v7010
  // Predicated region
  $region94: #{bert_ias_forward.1} parent=0 // pred_check
    _
  $region95: #{bert_ias_forward.1} parent=0 // pred_check_branch
    %7022 = sbr.rel (0) target = $region97
  $region96: #{bert_ias_forward.1} parent=0 // pred_region
    _
  $region97: #{bert_ias_forward.1} parent=0 // pred_fallthru
    _
  // Predicated region
  $region98: #{bert_ias_forward.1} parent=0 // pred_check
    _
  $region99: #{bert_ias_forward.1} parent=0 // pred_check_branch
    %7024 = sbr.rel (0) target = $region101
  $region100: #{bert_ias_forward.1} parent=0 // pred_region
    _
  $region101: #{bert_ias_forward.1} parent=0 // pred_fallthru
    _
  // Predicated region
  $region102: #{bert_ias_forward.1} parent=0 // pred_check
    _
  $region103: #{bert_ias_forward.1} parent=0 // pred_check_branch
    %7026 = sbr.rel (0) target = $region105
  $region104: #{bert_ias_forward.1} parent=0 // pred_region
    _
  $region105: #{bert_ias_forward.1} parent=0 // pred_fallthru
    _
  // Predicated region
  $region106: #{bert_ias_forward.1} parent=0 // pred_check
    _
  $region107: #{bert_ias_forward.1} parent=0 // pred_check_branch
    %7028 = sbr.rel (0) target = $region109
  $region108: #{bert_ias_forward.1} parent=0 // pred_region
    _
  $region109: #{bert_ias_forward.1} parent=0 // pred_fallthru
    _

</llo_original>
